<compile_context>
chip_gen: v7x
topology: tpu7x:2x2x1
jax: 0.10.0
libtpu: 0.0.40
codegen_flags: <defaults>
</compile_context>

<pallas_src>
import functools
import math

import numpy as np
import jax
import jax.numpy as jnp
from jax.experimental import pallas as pl
from jax.experimental.pallas import tpu as pltpu

LANES = 128      # TPU lane width
_SLOPE = 0.15    # LeakyReLU negative slope used by the module
_C1 = 128        # b00 output channels
_C2 = 64         # b10 output channels


def _leaky(x, slope=_SLOPE):
    return jnp.where(x > 0, x, slope * x)


def _fold_bn(bn, eps=1e-5):
    scale = bn["gamma"] / jnp.sqrt(bn["var"] + eps)
    shift = bn["beta"] - bn["mean"] * scale
    return scale, shift


# ------------------------------- Pallas kernel ------------------------------

def _decoder_kernel(z_ref, w0_ref, b0_ref, w1_ref, b1_ref, w2_ref, o_ref,
                    x1_ref, y1_ref, *, nb):
    """One batch tile (NB samples) of the whole decoder.

    x1_ref: [NB, 6, 6*128] f32  -- 1-padded 4x4x128 map, lanes = (padded col, c)
    y1_ref: [NB, 6, 6*256] f32  -- 1-padded 4x4 block grid of the 8x8x64 map,
                                   lanes = (padded block-col, (ry,rx)*64 + c)
    o_ref : [4*NB, 512] f32     -- rows (nb, A); lanes = B*128 + (osub*4+oxsub)*8 + c
    """
    f32, bf16 = jnp.float32, jnp.bfloat16

    # ---- b00: ConvTranspose(64 -> 128, k4 s1 p0) + BN + LeakyReLU -----------
    h0 = jnp.dot(z_ref[...].astype(bf16), w0_ref[...],
                 preferred_element_type=f32)                  # [NB, 2048]
    h0 = _leaky(h0 + b0_ref[...])

    # zero only the 1-pixel halo (interior fully overwritten below)
    x1_ref[:, 0, :] = jnp.zeros((nb, 768), f32)
    x1_ref[:, 5, :] = jnp.zeros((nb, 768), f32)
    x1_ref[:, 1:5, 0:128] = jnp.zeros((nb, 4, 128), f32)
    x1_ref[:, 1:5, 640:768] = jnp.zeros((nb, 4, 128), f32)
    for i in range(4):                       # 4 lane-dense stores of [NB, 512]
        x1_ref[:, 1 + i, 128:640] = h0[:, i * 512:(i + 1) * 512]

    # ---- b10: ConvTranspose(128 -> 64, k4 s2 p1) + BN + LeakyReLU -----------
    b1 = b1_ref[...]                                          # [1, 256]
    w1s = [w1_ref[r] for r in range(3)]                       # 3 x [384, 256] bf16
    # three shifted row chunks, rows = (nb, output block-row a)
    c_rows = [x1_ref[:, r:r + 4, :].reshape(4 * nb, 768).astype(bf16)
              for r in range(3)]

    y1_ref[:, 0, :] = jnp.zeros((nb, 1536), f32)
    y1_ref[:, 5, :] = jnp.zeros((nb, 1536), f32)
    y1_ref[:, 1:5, 0:256] = jnp.zeros((nb, 4, 256), f32)
    y1_ref[:, 1:5, 1280:1536] = jnp.zeros((nb, 4, 256), f32)

    for b in range(4):                       # output block-column
        acc = jnp.zeros((4 * nb, 256), f32)
        for r in range(3):                   # kernel-tap row offset
            acc += jnp.dot(c_rows[r][:, b * 128:(b + 3) * 128], w1s[r],
                           preferred_element_type=f32)
        act = _leaky(acc + b1)               # [4NB, 256] = (ry,rx) x 64 channels
        y1_ref[:, 1:5, (1 + b) * 256:(2 + b) * 256] = act.reshape(nb, 4, 256)

    # ---- b20: ConvTranspose(64 -> 3, k4 s2 p1) + Tanh ------------------------
    w2s = [w2_ref[r] for r in range(3)]                       # 3 x [768, 128] bf16
    d_rows = [y1_ref[:, r:r + 4, :].reshape(4 * nb, 1536).astype(bf16)
              for r in range(3)]
    for B in range(4):                       # output block-column
        acc = jnp.zeros((4 * nb, 128), f32)
        for r in range(3):
            acc += jnp.dot(d_rows[r][:, B * 256:(B + 3) * 256], w2s[r],
                           preferred_element_type=f32)
        o_ref[:, B * 128:(B + 1) * 128] = jnp.tanh(acc)


def animal_decoder_pallas(z_pad, prep, *, nb):
    npad = z_pad.shape[0]
    assert npad % nb == 0
    kernel = functools.partial(_decoder_kernel, nb=nb)
    return pl.pallas_call(
        kernel,
        grid=(npad // nb,),
        in_specs=[
            pl.BlockSpec((nb, LANES), lambda t: (t, 0)),           # z tile
            pl.BlockSpec((LANES, 16 * _C1), lambda t: (0, 0)),      # w0 (resident)
            pl.BlockSpec((1, 16 * _C1), lambda t: (0, 0)),          # b0
            pl.BlockSpec((3, 3 * _C1, 4 * _C2), lambda t: (0, 0, 0)),  # w1
            pl.BlockSpec((1, 4 * _C2), lambda t: (0, 0)),           # b1
            pl.BlockSpec((3, 12 * _C2, 128), lambda t: (0, 0, 0)),  # w2
        ],
        out_specs=pl.BlockSpec((4 * nb, 512), lambda t: (t, 0)),
        out_shape=jax.ShapeDtypeStruct((4 * npad, 512), jnp.float32),
        scratch_shapes=[
            pltpu.VMEM((nb, 6, 6 * _C1), jnp.float32),   # padded 4x4x128 map
            pltpu.VMEM((nb, 6, 6 * 4 * _C2), jnp.float32),  # padded parity-packed 8x8x64
        ],
        compiler_params=pltpu.CompilerParams(
            dimension_semantics=("parallel",)),
    )(z_pad, prep["w0"], prep["b0"], prep["w1"], prep["b1"], prep["w2"])


# --------------------------- parameters / weight prep ------------------------

def init_animal_decoder_params(key, config):
    """Random parameters in the PyTorch AnimalDecoderOLD layout (inference BN)."""
    latent = config["encoder_latent_dim"] * (2 if config["encoder_2"] else 1)
    ipt_size = int(config["resize_to"])
    n_blocks = int(math.log2(ipt_size) - 1)
    complexity = 64
    nc_out = config["n_channels"]
    assert n_blocks == 3, "fused Pallas decoder implemented for resize_to=16"
    c1 = complexity * 2 ** (n_blocks - 2)    # 128
    c2 = complexity                           # 64
    ks = jax.random.split(key, 5)

    def _ct(k, cin, cout, kh, kw):
        std = 1.0 / math.sqrt(cin * kh * kw)
        return std * jax.random.normal(k, (cin, cout, kh, kw), jnp.float32)

    def _bn(k, c):
        k1, k2, k3, k4 = jax.random.split(k, 4)
        return {"gamma": 1.0 + 0.1 * jax.random.normal(k1, (c,), jnp.float32),
                "beta": 0.1 * jax.random.normal(k2, (c,), jnp.float32),
                "mean": 0.1 * jax.random.normal(k3, (c,), jnp.float32),
                "var": 1.0 + 0.1 * jax.random.uniform(k4, (c,), jnp.float32)}

    return {"latent": latent, "nc_out": nc_out,
            "w0": _ct(ks[0], latent, c1, 4, 4), "bn0": _bn(ks[1], c1),
            "w1": _ct(ks[2], c1, c2, 4, 4),     "bn1": _bn(ks[3], c2),
            "w2": _ct(ks[4], c2, nc_out, 4, 4)}


def prepare_decoder_weights(params):
    """Host-side: fold BN, build implicit-GEMM tap-packed weights, cast to bf16."""
    latent, nc_out = params["latent"], int(params["nc_out"])
    assert latent <= LANES and nc_out <= 8
    scale0, shift0 = _fold_bn(params["bn0"])
    scale1, shift1 = _fold_bn(params["bn1"])

    # -- b00: [128, 2048]; columns ordered (i, j, c_out)
    w0 = np.asarray(params["w0"]) * np.asarray(scale0)[None, :, None, None]
    w0 = np.transpose(w0, (0, 2, 3, 1)).reshape(latent, 16 * _C1)
    w0p = np.zeros((LANES, 16 * _C1), np.float32)
    w0p[:latent] = w0
    b0 = np.tile(np.asarray(shift0), 16)[None, :].astype(np.float32)

    # kernel-tap bookkeeping for ConvTranspose2d(k=4, s=2, p=1):
    #   k = out_row - 2*in_row + 1
    def tap1(off, parity):                     # 4x4 -> 8x8 stage (in = blk+off-1)
        k = 3 - 2 * off + parity
        return k if 0 <= k <= 3 else None

    def tap2(osub, off, parity):               # 8x8 -> 16x16 stage
        k = osub + 5 - 4 * off - 2 * parity
        return k if 0 <= k <= 3 else None

    # -- b10: [3, 384, 256]; K = (col_off, c_in), N = ((ry,rx), c_out)
    w1_ct = np.asarray(params["w1"]) * np.asarray(scale1)[None, :, None, None]
    w1 = np.zeros((3, 3 * _C1, 4 * _C2), np.float32)
    for r in range(3):
        for ry in range(2):
            ky = tap1(r, ry)
            if ky is None:
                continue
            for co in range(3):
                for rx in range(2):
                    kx = tap1(co, rx)
                    if kx is None:
                        continue
                    n0 = (ry * 2 + rx) * _C2
                    w1[r, co * _C1:(co + 1) * _C1, n0:n0 + _C2] = w1_ct[:, :, ky, kx]
    b1 = np.tile(np.asarray(shift1), 4)[None, :].astype(np.float32)

    # -- b20: [3, 768, 128]; K = (col_off q, (ry,rx), c_in), N = ((osub,oxsub), c8)
    w2_pt = np.asarray(params["w2"])                       # [64, nc_out, 4, 4]
    w2 = np.zeros((3, 12 * _C2, 128), np.float32)
    for r in range(3):
        for osub in range(4):
            for ry in range(2):
                ky = tap2(osub, r, ry)
                if ky is None:
                    continue
                for q in range(3):
                    for oxsub in range(4):
                        for rx in range(2):
                            kx = tap2(oxsub, q, rx)
                            if kx is None:
                                continue
                            k0 = q * 256 + (ry * 2 + rx) * _C2
                            n0 = (osub * 4 + oxsub) * 8
                            w2[r, k0:k0 + _C2, n0:n0 + nc_out] = w2_pt[:, :, ky, kx]

    return {"w0": jnp.asarray(w0p, jnp.bfloat16), "b0": jnp.asarray(b0),
            "w1": jnp.asarray(w1, jnp.bfloat16), "b1": jnp.asarray(b1),
            "w2": jnp.asarray(w2, jnp.bfloat16)}


# ------------------------------- forward / glue ------------------------------

def animal_decoder_forward(params, prep, x, *, nb=8):
    """x: [N, latent, 1, 1] (as in the PyTorch module) -> [N, nc, 16, 16]."""
    n, latent = x.shape[0], params["latent"]
    assert x.shape[1] == latent and x.shape[2:] == (1, 1)
    npad = ((n + nb - 1) // nb) * nb
    z = x.reshape(n, latent).astype(jnp.float32)
    z_pad = jnp.zeros((npad, LANES), jnp.float32).at[:n, :latent].set(z)
    packed = animal_decoder_pallas(z_pad, prep, nb=nb)       # [4*npad, 512]
    # decode: rows (n, A); lanes = B*128 + (osub*4 + oxsub)*8 + c;
    # oy = 4*A + osub, ox = 4*B + oxsub.
    out = packed.reshape(npad, 4, 4, 4, 4, 8)                # (n, A, B, osub, oxsub, c)
    out = out.transpose(0, 1, 3, 2, 4, 5).reshape(npad, 16, 16, 8)
    out = out[:n, :, :, :params["nc_out"]]
    return out.transpose(0, 3, 1, 2)                          # NCHW


# -------------------------- pure-JAX reference check -------------------------

def _conv_transpose2d_ref(x, w, stride, padding):
    """PyTorch ConvTranspose2d (no bias): x [N,Cin,H,W], w [Cin,Cout,kh,kw]."""
    n, _, h, wdt = x.shape
    _, cout, kh, kw = w.shape
    hf, wf = (h - 1) * stride + kh, (wdt - 1) * stride + kw
    full = jnp.zeros((n, cout, hf, wf), jnp.float32)
    for ky in range(kh):
        for kx in range(kw):
            contrib = jnp.einsum("ncij,cd->ndij", x, w[:, :, ky, kx])
            full = full.at[:, :, ky:ky + (h - 1) * stride + 1:stride,
                           kx:kx + (wdt - 1) * stride + 1:stride].add(contrib)
    ho = (h - 1) * stride - 2 * padding + kh
    wo = (wdt - 1) * stride - 2 * padding + kw
    return full[:, :, padding:padding + ho, padding:padding + wo]


def animal_decoder_reference(params, x):
    """Module forward in plain JAX, with the same bf16-rounded folded weights."""
    def q(v):
        return v.astype(jnp.bfloat16).astype(jnp.float32)
    s0, t0 = _fold_bn(params["bn0"])
    s1, t1 = _fold_bn(params["bn1"])
    h = _conv_transpose2d_ref(x, q(params["w0"] * s0[None, :, None, None]), 1, 0)
    h = _leaky(h + t0[None, :, None, None])
    h = _conv_transpose2d_ref(h, q(params["w1"] * s1[None, :, None, None]), 2, 1)
    h = _leaky(h + t1[None, :, None, None])
    h = _conv_transpose2d_ref(h, q(params["w2"]), 2, 1)
    return jnp.tanh(h)


# ------------------------------------ main ------------------------------------

if __name__ == "__main__":
    config = {
        "encoder_latent_dim": 32,
        "encoder_2": True,
        "resize_to": 16,
        "n_channels": 3,
        "load_decoder_pretrained": {"active": False},
    }
    root = jax.random.PRNGKey(0)
    k_params, k_x = jax.random.split(root)
    params = init_animal_decoder_params(k_params, config)
    prep = prepare_decoder_weights(params)

    # n=2 exercises a single batch tile; n=10 exercises a multi-step grid.
    for n in (2, 10):
        x = jax.random.normal(jax.random.fold_in(k_x, n),
                              (n, params["latent"], 1, 1), jnp.float32)
        out = jax.block_until_ready(animal_decoder_forward(params, prep, x))
        assert out.shape == (n, config["n_channels"], 16, 16), out.shape
        assert bool(jnp.all(jnp.isfinite(out)))
        ref = jax.block_until_ready(animal_decoder_reference(params, x))
        err = float(jnp.max(jnp.abs(out - ref)))
        assert err < 5e-2, f"kernel/reference mismatch at n={n}: max abs err = {err}"

    print("KERNEL_OK")
</pallas_src>

<mosaic_0001>
module attributes {stable_mosaic.version = 11 : i64} {
  func.func @_decoder_kernel(%arg0: i32, %arg1: memref<8x128xf32, #tpu.memory_space<vmem>>, %arg2: memref<128x2048xbf16, #tpu.memory_space<vmem>>, %arg3: memref<1x2048xf32, #tpu.memory_space<vmem>>, %arg4: memref<3x384x256xbf16, #tpu.memory_space<vmem>>, %arg5: memref<1x256xf32, #tpu.memory_space<vmem>>, %arg6: memref<3x768x128xbf16, #tpu.memory_space<vmem>>, %arg7: memref<32x512xf32, #tpu.memory_space<vmem>>, %arg8: memref<8x6x768xf32, #tpu.memory_space<vmem>>, %arg9: memref<8x6x1536xf32, #tpu.memory_space<vmem>>) attributes {dimension_semantics = [#tpu.dimension_semantics<parallel>], iteration_bounds = array<i64: 1>, scalar_prefetch = 0 : i64, scratch_operands = 2 : i64, tpu.core_type = #tpu.core_type<tc>, window_params = [{transform_indices = @transform_0, window_bounds = array<i64: 8, 128>}, {pipeline_mode = #tpu.pipeline_mode<synchronous>, transform_indices = @transform_1, window_bounds = array<i64: 128, 2048>}, {pipeline_mode = #tpu.pipeline_mode<synchronous>, transform_indices = @transform_2, window_bounds = array<i64: 1, 2048>}, {pipeline_mode = #tpu.pipeline_mode<synchronous>, transform_indices = @transform_3, window_bounds = array<i64: 3, 384, 256>}, {pipeline_mode = #tpu.pipeline_mode<synchronous>, transform_indices = @transform_4, window_bounds = array<i64: 1, 256>}, {pipeline_mode = #tpu.pipeline_mode<synchronous>, transform_indices = @transform_5, window_bounds = array<i64: 3, 768, 128>}, {transform_indices = @transform_6, window_bounds = array<i64: 32, 512>}]} {
    %c0 = arith.constant 0 : index
    %c0_0 = arith.constant 0 : index
    %0 = vector.load %arg1[%c0, %c0_0] : memref<8x128xf32, #tpu.memory_space<vmem>>, vector<8x128xf32>
    %1 = arith.truncf %0 : vector<8x128xf32> to vector<8x128xbf16>
    %c0_1 = arith.constant 0 : index
    %c0_2 = arith.constant 0 : index
    %2 = vector.load %arg2[%c0_1, %c0_2] : memref<128x2048xbf16, #tpu.memory_space<vmem>>, vector<128x2048xbf16>
    %cst = arith.constant dense<0.000000e+00> : vector<8x2048xf32>
    %3 = tpu.matmul %1, %2, %cst {dimension_numbers = #tpu.dot_dimension_numbers<[1], [0], [0], [1], [0, 0, 1, 1], [], []>} : vector<8x128xbf16>, vector<128x2048xbf16>, vector<8x2048xf32> -> vector<8x2048xf32>
    %c0_3 = arith.constant 0 : index
    %c0_4 = arith.constant 0 : index
    %4 = vector.load %arg3[%c0_3, %c0_4] : memref<1x2048xf32, #tpu.memory_space<vmem>>, vector<1x2048xf32>
    %5 = vector.broadcast %4 : vector<1x2048xf32> to vector<8x2048xf32>
    %6 = arith.addf %3, %5 : vector<8x2048xf32>
    %cst_5 = arith.constant 0.000000e+00 : f32
    %7 = vector.broadcast %cst_5 : f32 to vector<8x2048xf32>
    %8 = arith.cmpf ogt, %6, %7 : vector<8x2048xf32>
    %cst_6 = arith.constant 1.500000e-01 : f32
    %9 = vector.broadcast %cst_6 : f32 to vector<8x2048xf32>
    %10 = arith.mulf %9, %6 : vector<8x2048xf32>
    %11 = arith.select %8, %6, %10 : vector<8x2048xi1>, vector<8x2048xf32>
    %cst_7 = arith.constant 0.000000e+00 : f32
    %12 = vector.broadcast %cst_7 : f32 to vector<8x768xf32>
    %c0_8 = arith.constant 0 : index
    %c0_9 = arith.constant 0 : index
    %c0_10 = arith.constant 0 : index
    %13 = vector.load %arg8[%c0_8, %c0_9, %c0_10] : memref<8x6x768xf32, #tpu.memory_space<vmem>>, vector<8x1x768xf32>
    %14 = vector.shape_cast %13 : vector<8x1x768xf32> to vector<8x768xf32>
    %15 = vector.shape_cast %12 : vector<8x768xf32> to vector<8x1x768xf32>
    tpu.vector_store %arg8[%c0_8, %c0_9, %c0_10], %15 {strides = array<i32>} : memref<8x6x768xf32, #tpu.memory_space<vmem>>, vector<8x1x768xf32>,
    %cst_11 = arith.constant 0.000000e+00 : f32
    %16 = vector.broadcast %cst_11 : f32 to vector<8x768xf32>
    %c0_12 = arith.constant 0 : index
    %c5 = arith.constant 5 : index
    %c0_13 = arith.constant 0 : index
    %17 = vector.load %arg8[%c0_12, %c5, %c0_13] : memref<8x6x768xf32, #tpu.memory_space<vmem>>, vector<8x1x768xf32>
    %18 = vector.shape_cast %17 : vector<8x1x768xf32> to vector<8x768xf32>
    %19 = vector.shape_cast %16 : vector<8x768xf32> to vector<8x1x768xf32>
    tpu.vector_store %arg8[%c0_12, %c5, %c0_13], %19 {strides = array<i32>} : memref<8x6x768xf32, #tpu.memory_space<vmem>>, vector<8x1x768xf32>,
    %cst_14 = arith.constant 0.000000e+00 : f32
    %20 = vector.broadcast %cst_14 : f32 to vector<8x4x128xf32>
    %c0_15 = arith.constant 0 : index
    %c1 = arith.constant 1 : index
    %c0_16 = arith.constant 0 : index
    %21 = vector.load %arg8[%c0_15, %c1, %c0_16] : memref<8x6x768xf32, #tpu.memory_space<vmem>>, vector<8x4x128xf32>
    tpu.vector_store %arg8[%c0_15, %c1, %c0_16], %20 {strides = array<i32>} : memref<8x6x768xf32, #tpu.memory_space<vmem>>, vector<8x4x128xf32>,
    %cst_17 = arith.constant 0.000000e+00 : f32
    %22 = vector.broadcast %cst_17 : f32 to vector<8x4x128xf32>
    %c0_18 = arith.constant 0 : index
    %c1_19 = arith.constant 1 : index
    %c640 = arith.constant 640 : index
    %23 = vector.load %arg8[%c0_18, %c1_19, %c640] : memref<8x6x768xf32, #tpu.memory_space<vmem>>, vector<8x4x128xf32>
    tpu.vector_store %arg8[%c0_18, %c1_19, %c640], %22 {strides = array<i32>} : memref<8x6x768xf32, #tpu.memory_space<vmem>>, vector<8x4x128xf32>,
    %24 = vector.extract_strided_slice %11 {offsets = [0, 0], sizes = [8, 512], strides = [1, 1]} : vector<8x2048xf32> to vector<8x512xf32>
    %c0_20 = arith.constant 0 : index
    %c1_21 = arith.constant 1 : index
    %c128 = arith.constant 128 : index
    %25 = vector.load %arg8[%c0_20, %c1_21, %c128] : memref<8x6x768xf32, #tpu.memory_space<vmem>>, vector<8x1x512xf32>
    %26 = vector.shape_cast %25 : vector<8x1x512xf32> to vector<8x512xf32>
    %27 = vector.shape_cast %24 : vector<8x512xf32> to vector<8x1x512xf32>
    tpu.vector_store %arg8[%c0_20, %c1_21, %c128], %27 {strides = array<i32>} : memref<8x6x768xf32, #tpu.memory_space<vmem>>, vector<8x1x512xf32>,
    %28 = vector.extract_strided_slice %11 {offsets = [0, 512], sizes = [8, 512], strides = [1, 1]} : vector<8x2048xf32> to vector<8x512xf32>
    %c0_22 = arith.constant 0 : index
    %c2 = arith.constant 2 : index
    %c128_23 = arith.constant 128 : index
    %29 = vector.load %arg8[%c0_22, %c2, %c128_23] : memref<8x6x768xf32, #tpu.memory_space<vmem>>, vector<8x1x512xf32>
    %30 = vector.shape_cast %29 : vector<8x1x512xf32> to vector<8x512xf32>
    %31 = vector.shape_cast %28 : vector<8x512xf32> to vector<8x1x512xf32>
    tpu.vector_store %arg8[%c0_22, %c2, %c128_23], %31 {strides = array<i32>} : memref<8x6x768xf32, #tpu.memory_space<vmem>>, vector<8x1x512xf32>,
    %32 = vector.extract_strided_slice %11 {offsets = [0, 1024], sizes = [8, 512], strides = [1, 1]} : vector<8x2048xf32> to vector<8x512xf32>
    %c0_24 = arith.constant 0 : index
    %c3 = arith.constant 3 : index
    %c128_25 = arith.constant 128 : index
    %33 = vector.load %arg8[%c0_24, %c3, %c128_25] : memref<8x6x768xf32, #tpu.memory_space<vmem>>, vector<8x1x512xf32>
    %34 = vector.shape_cast %33 : vector<8x1x512xf32> to vector<8x512xf32>
    %35 = vector.shape_cast %32 : vector<8x512xf32> to vector<8x1x512xf32>
    tpu.vector_store %arg8[%c0_24, %c3, %c128_25], %35 {strides = array<i32>} : memref<8x6x768xf32, #tpu.memory_space<vmem>>, vector<8x1x512xf32>,
    %36 = vector.extract_strided_slice %11 {offsets = [0, 1536], sizes = [8, 512], strides = [1, 1]} : vector<8x2048xf32> to vector<8x512xf32>
    %c0_26 = arith.constant 0 : index
    %c4 = arith.constant 4 : index
    %c128_27 = arith.constant 128 : index
    %37 = vector.load %arg8[%c0_26, %c4, %c128_27] : memref<8x6x768xf32, #tpu.memory_space<vmem>>, vector<8x1x512xf32>
    %38 = vector.shape_cast %37 : vector<8x1x512xf32> to vector<8x512xf32>
    %39 = vector.shape_cast %36 : vector<8x512xf32> to vector<8x1x512xf32>
    tpu.vector_store %arg8[%c0_26, %c4, %c128_27], %39 {strides = array<i32>} : memref<8x6x768xf32, #tpu.memory_space<vmem>>, vector<8x1x512xf32>,
    %c0_28 = arith.constant 0 : index
    %c0_29 = arith.constant 0 : index
    %40 = vector.load %arg5[%c0_28, %c0_29] : memref<1x256xf32, #tpu.memory_space<vmem>>, vector<1x256xf32>
    %c0_30 = arith.constant 0 : index
    %c0_31 = arith.constant 0 : index
    %c0_32 = arith.constant 0 : index
    %41 = vector.load %arg4[%c0_30, %c0_31, %c0_32] : memref<3x384x256xbf16, #tpu.memory_space<vmem>>, vector<1x384x256xbf16>
    %42 = vector.shape_cast %41 : vector<1x384x256xbf16> to vector<384x256xbf16>
    %c1_33 = arith.constant 1 : index
    %c0_34 = arith.constant 0 : index
    %c0_35 = arith.constant 0 : index
    %43 = vector.load %arg4[%c1_33, %c0_34, %c0_35] : memref<3x384x256xbf16, #tpu.memory_space<vmem>>, vector<1x384x256xbf16>
    %44 = vector.shape_cast %43 : vector<1x384x256xbf16> to vector<384x256xbf16>
    %c2_36 = arith.constant 2 : index
    %c0_37 = arith.constant 0 : index
    %c0_38 = arith.constant 0 : index
    %45 = vector.load %arg4[%c2_36, %c0_37, %c0_38] : memref<3x384x256xbf16, #tpu.memory_space<vmem>>, vector<1x384x256xbf16>
    %46 = vector.shape_cast %45 : vector<1x384x256xbf16> to vector<384x256xbf16>
    %c0_39 = arith.constant 0 : index
    %c0_40 = arith.constant 0 : index
    %c0_41 = arith.constant 0 : index
    %47 = vector.load %arg8[%c0_39, %c0_40, %c0_41] : memref<8x6x768xf32, #tpu.memory_space<vmem>>, vector<8x4x768xf32>
    %48 = vector.shape_cast %47 : vector<8x4x768xf32> to vector<32x768xf32>
    %49 = arith.truncf %48 : vector<32x768xf32> to vector<32x768xbf16>
    %c0_42 = arith.constant 0 : index
    %c1_43 = arith.constant 1 : index
    %c0_44 = arith.constant 0 : index
    %50 = vector.load %arg8[%c0_42, %c1_43, %c0_44] : memref<8x6x768xf32, #tpu.memory_space<vmem>>, vector<8x4x768xf32>
    %51 = vector.shape_cast %50 : vector<8x4x768xf32> to vector<32x768xf32>
    %52 = arith.truncf %51 : vector<32x768xf32> to vector<32x768xbf16>
    %c0_45 = arith.constant 0 : index
    %c2_46 = arith.constant 2 : index
    %c0_47 = arith.constant 0 : index
    %53 = vector.load %arg8[%c0_45, %c2_46, %c0_47] : memref<8x6x768xf32, #tpu.memory_space<vmem>>, vector<8x4x768xf32>
    %54 = vector.shape_cast %53 : vector<8x4x768xf32> to vector<32x768xf32>
    %55 = arith.truncf %54 : vector<32x768xf32> to vector<32x768xbf16>
    %cst_48 = arith.constant 0.000000e+00 : f32
    %56 = vector.broadcast %cst_48 : f32 to vector<8x1536xf32>
    %c0_49 = arith.constant 0 : index
    %c0_50 = arith.constant 0 : index
    %c0_51 = arith.constant 0 : index
    %57 = vector.load %arg9[%c0_49, %c0_50, %c0_51] : memref<8x6x1536xf32, #tpu.memory_space<vmem>>, vector<8x1x1536xf32>
    %58 = vector.shape_cast %57 : vector<8x1x1536xf32> to vector<8x1536xf32>
    %59 = vector.shape_cast %56 : vector<8x1536xf32> to vector<8x1x1536xf32>
    tpu.vector_store %arg9[%c0_49, %c0_50, %c0_51], %59 {strides = array<i32>} : memref<8x6x1536xf32, #tpu.memory_space<vmem>>, vector<8x1x1536xf32>,
    %cst_52 = arith.constant 0.000000e+00 : f32
    %60 = vector.broadcast %cst_52 : f32 to vector<8x1536xf32>
    %c0_53 = arith.constant 0 : index
    %c5_54 = arith.constant 5 : index
    %c0_55 = arith.constant 0 : index
    %61 = vector.load %arg9[%c0_53, %c5_54, %c0_55] : memref<8x6x1536xf32, #tpu.memory_space<vmem>>, vector<8x1x1536xf32>
    %62 = vector.shape_cast %61 : vector<8x1x1536xf32> to vector<8x1536xf32>
    %63 = vector.shape_cast %60 : vector<8x1536xf32> to vector<8x1x1536xf32>
    tpu.vector_store %arg9[%c0_53, %c5_54, %c0_55], %63 {strides = array<i32>} : memref<8x6x1536xf32, #tpu.memory_space<vmem>>, vector<8x1x1536xf32>,
    %cst_56 = arith.constant 0.000000e+00 : f32
    %64 = vector.broadcast %cst_56 : f32 to vector<8x4x256xf32>
    %c0_57 = arith.constant 0 : index
    %c1_58 = arith.constant 1 : index
    %c0_59 = arith.constant 0 : index
    %65 = vector.load %arg9[%c0_57, %c1_58, %c0_59] : memref<8x6x1536xf32, #tpu.memory_space<vmem>>, vector<8x4x256xf32>
    tpu.vector_store %arg9[%c0_57, %c1_58, %c0_59], %64 {strides = array<i32>} : memref<8x6x1536xf32, #tpu.memory_space<vmem>>, vector<8x4x256xf32>,
    %cst_60 = arith.constant 0.000000e+00 : f32
    %66 = vector.broadcast %cst_60 : f32 to vector<8x4x256xf32>
    %c0_61 = arith.constant 0 : index
    %c1_62 = arith.constant 1 : index
    %c1280 = arith.constant 1280 : index
    %67 = vector.load %arg9[%c0_61, %c1_62, %c1280] : memref<8x6x1536xf32, #tpu.memory_space<vmem>>, vector<8x4x256xf32>
    tpu.vector_store %arg9[%c0_61, %c1_62, %c1280], %66 {strides = array<i32>} : memref<8x6x1536xf32, #tpu.memory_space<vmem>>, vector<8x4x256xf32>,
    %cst_63 = arith.constant 0.000000e+00 : f32
    %68 = vector.broadcast %cst_63 : f32 to vector<32x256xf32>
    %69 = vector.extract_strided_slice %49 {offsets = [0, 0], sizes = [32, 384], strides = [1, 1]} : vector<32x768xbf16> to vector<32x384xbf16>
    %cst_64 = arith.constant dense<0.000000e+00> : vector<32x256xf32>
    %70 = tpu.matmul %69, %42, %cst_64 {dimension_numbers = #tpu.dot_dimension_numbers<[1], [0], [0], [1], [0, 0, 1, 1], [], []>} : vector<32x384xbf16>, vector<384x256xbf16>, vector<32x256xf32> -> vector<32x256xf32>
    %71 = arith.addf %68, %70 : vector<32x256xf32>
    %72 = vector.extract_strided_slice %52 {offsets = [0, 0], sizes = [32, 384], strides = [1, 1]} : vector<32x768xbf16> to vector<32x384xbf16>
    %cst_65 = arith.constant dense<0.000000e+00> : vector<32x256xf32>
    %73 = tpu.matmul %72, %44, %cst_65 {dimension_numbers = #tpu.dot_dimension_numbers<[1], [0], [0], [1], [0, 0, 1, 1], [], []>} : vector<32x384xbf16>, vector<384x256xbf16>, vector<32x256xf32> -> vector<32x256xf32>
    %74 = arith.addf %71, %73 : vector<32x256xf32>
    %75 = vector.extract_strided_slice %55 {offsets = [0, 0], sizes = [32, 384], strides = [1, 1]} : vector<32x768xbf16> to vector<32x384xbf16>
    %cst_66 = arith.constant dense<0.000000e+00> : vector<32x256xf32>
    %76 = tpu.matmul %75, %46, %cst_66 {dimension_numbers = #tpu.dot_dimension_numbers<[1], [0], [0], [1], [0, 0, 1, 1], [], []>} : vector<32x384xbf16>, vector<384x256xbf16>, vector<32x256xf32> -> vector<32x256xf32>
    %77 = arith.addf %74, %76 : vector<32x256xf32>
    %78 = vector.broadcast %40 : vector<1x256xf32> to vector<32x256xf32>
    %79 = arith.addf %77, %78 : vector<32x256xf32>
    %cst_67 = arith.constant 0.000000e+00 : f32
    %80 = vector.broadcast %cst_67 : f32 to vector<32x256xf32>
    %81 = arith.cmpf ogt, %79, %80 : vector<32x256xf32>
    %cst_68 = arith.constant 1.500000e-01 : f32
    %82 = vector.broadcast %cst_68 : f32 to vector<32x256xf32>
    %83 = arith.mulf %82, %79 : vector<32x256xf32>
    %84 = arith.select %81, %79, %83 : vector<32x256xi1>, vector<32x256xf32>
    %85 = vector.shape_cast %84 : vector<32x256xf32> to vector<8x4x256xf32>
    %c0_69 = arith.constant 0 : index
    %c1_70 = arith.constant 1 : index
    %c256 = arith.constant 256 : index
    %86 = vector.load %arg9[%c0_69, %c1_70, %c256] : memref<8x6x1536xf32, #tpu.memory_space<vmem>>, vector<8x4x256xf32>
    tpu.vector_store %arg9[%c0_69, %c1_70, %c256], %85 {strides = array<i32>} : memref<8x6x1536xf32, #tpu.memory_space<vmem>>, vector<8x4x256xf32>,
    %cst_71 = arith.constant 0.000000e+00 : f32
    %87 = vector.broadcast %cst_71 : f32 to vector<32x256xf32>
    %88 = vector.extract_strided_slice %49 {offsets = [0, 128], sizes = [32, 384], strides = [1, 1]} : vector<32x768xbf16> to vector<32x384xbf16>
    %cst_72 = arith.constant dense<0.000000e+00> : vector<32x256xf32>
    %89 = tpu.matmul %88, %42, %cst_72 {dimension_numbers = #tpu.dot_dimension_numbers<[1], [0], [0], [1], [0, 0, 1, 1], [], []>} : vector<32x384xbf16>, vector<384x256xbf16>, vector<32x256xf32> -> vector<32x256xf32>
    %90 = arith.addf %87, %89 : vector<32x256xf32>
    %91 = vector.extract_strided_slice %52 {offsets = [0, 128], sizes = [32, 384], strides = [1, 1]} : vector<32x768xbf16> to vector<32x384xbf16>
    %cst_73 = arith.constant dense<0.000000e+00> : vector<32x256xf32>
    %92 = tpu.matmul %91, %44, %cst_73 {dimension_numbers = #tpu.dot_dimension_numbers<[1], [0], [0], [1], [0, 0, 1, 1], [], []>} : vector<32x384xbf16>, vector<384x256xbf16>, vector<32x256xf32> -> vector<32x256xf32>
    %93 = arith.addf %90, %92 : vector<32x256xf32>
    %94 = vector.extract_strided_slice %55 {offsets = [0, 128], sizes = [32, 384], strides = [1, 1]} : vector<32x768xbf16> to vector<32x384xbf16>
    %cst_74 = arith.constant dense<0.000000e+00> : vector<32x256xf32>
    %95 = tpu.matmul %94, %46, %cst_74 {dimension_numbers = #tpu.dot_dimension_numbers<[1], [0], [0], [1], [0, 0, 1, 1], [], []>} : vector<32x384xbf16>, vector<384x256xbf16>, vector<32x256xf32> -> vector<32x256xf32>
    %96 = arith.addf %93, %95 : vector<32x256xf32>
    %97 = vector.broadcast %40 : vector<1x256xf32> to vector<32x256xf32>
    %98 = arith.addf %96, %97 : vector<32x256xf32>
    %cst_75 = arith.constant 0.000000e+00 : f32
    %99 = vector.broadcast %cst_75 : f32 to vector<32x256xf32>
    %100 = arith.cmpf ogt, %98, %99 : vector<32x256xf32>
    %cst_76 = arith.constant 1.500000e-01 : f32
    %101 = vector.broadcast %cst_76 : f32 to vector<32x256xf32>
    %102 = arith.mulf %101, %98 : vector<32x256xf32>
    %103 = arith.select %100, %98, %102 : vector<32x256xi1>, vector<32x256xf32>
    %104 = vector.shape_cast %103 : vector<32x256xf32> to vector<8x4x256xf32>
    %c0_77 = arith.constant 0 : index
    %c1_78 = arith.constant 1 : index
    %c512 = arith.constant 512 : index
    %105 = vector.load %arg9[%c0_77, %c1_78, %c512] : memref<8x6x1536xf32, #tpu.memory_space<vmem>>, vector<8x4x256xf32>
    tpu.vector_store %arg9[%c0_77, %c1_78, %c512], %104 {strides = array<i32>} : memref<8x6x1536xf32, #tpu.memory_space<vmem>>, vector<8x4x256xf32>,
    %cst_79 = arith.constant 0.000000e+00 : f32
    %106 = vector.broadcast %cst_79 : f32 to vector<32x256xf32>
    %107 = vector.extract_strided_slice %49 {offsets = [0, 256], sizes = [32, 384], strides = [1, 1]} : vector<32x768xbf16> to vector<32x384xbf16>
    %cst_80 = arith.constant dense<0.000000e+00> : vector<32x256xf32>
    %108 = tpu.matmul %107, %42, %cst_80 {dimension_numbers = #tpu.dot_dimension_numbers<[1], [0], [0], [1], [0, 0, 1, 1], [], []>} : vector<32x384xbf16>, vector<384x256xbf16>, vector<32x256xf32> -> vector<32x256xf32>
    %109 = arith.addf %106, %108 : vector<32x256xf32>
    %110 = vector.extract_strided_slice %52 {offsets = [0, 256], sizes = [32, 384], strides = [1, 1]} : vector<32x768xbf16> to vector<32x384xbf16>
    %cst_81 = arith.constant dense<0.000000e+00> : vector<32x256xf32>
    %111 = tpu.matmul %110, %44, %cst_81 {dimension_numbers = #tpu.dot_dimension_numbers<[1], [0], [0], [1], [0, 0, 1, 1], [], []>} : vector<32x384xbf16>, vector<384x256xbf16>, vector<32x256xf32> -> vector<32x256xf32>
    %112 = arith.addf %109, %111 : vector<32x256xf32>
    %113 = vector.extract_strided_slice %55 {offsets = [0, 256], sizes = [32, 384], strides = [1, 1]} : vector<32x768xbf16> to vector<32x384xbf16>
    %cst_82 = arith.constant dense<0.000000e+00> : vector<32x256xf32>
    %114 = tpu.matmul %113, %46, %cst_82 {dimension_numbers = #tpu.dot_dimension_numbers<[1], [0], [0], [1], [0, 0, 1, 1], [], []>} : vector<32x384xbf16>, vector<384x256xbf16>, vector<32x256xf32> -> vector<32x256xf32>
    %115 = arith.addf %112, %114 : vector<32x256xf32>
    %116 = vector.broadcast %40 : vector<1x256xf32> to vector<32x256xf32>
    %117 = arith.addf %115, %116 : vector<32x256xf32>
    %cst_83 = arith.constant 0.000000e+00 : f32
    %118 = vector.broadcast %cst_83 : f32 to vector<32x256xf32>
    %119 = arith.cmpf ogt, %117, %118 : vector<32x256xf32>
    %cst_84 = arith.constant 1.500000e-01 : f32
    %120 = vector.broadcast %cst_84 : f32 to vector<32x256xf32>
    %121 = arith.mulf %120, %117 : vector<32x256xf32>
    %122 = arith.select %119, %117, %121 : vector<32x256xi1>, vector<32x256xf32>
    %123 = vector.shape_cast %122 : vector<32x256xf32> to vector<8x4x256xf32>
    %c0_85 = arith.constant 0 : index
    %c1_86 = arith.constant 1 : index
    %c768 = arith.constant 768 : index
    %124 = vector.load %arg9[%c0_85, %c1_86, %c768] : memref<8x6x1536xf32, #tpu.memory_space<vmem>>, vector<8x4x256xf32>
    tpu.vector_store %arg9[%c0_85, %c1_86, %c768], %123 {strides = array<i32>} : memref<8x6x1536xf32, #tpu.memory_space<vmem>>, vector<8x4x256xf32>,
    %cst_87 = arith.constant 0.000000e+00 : f32
    %125 = vector.broadcast %cst_87 : f32 to vector<32x256xf32>
    %126 = vector.extract_strided_slice %49 {offsets = [0, 384], sizes = [32, 384], strides = [1, 1]} : vector<32x768xbf16> to vector<32x384xbf16>
    %cst_88 = arith.constant dense<0.000000e+00> : vector<32x256xf32>
    %127 = tpu.matmul %126, %42, %cst_88 {dimension_numbers = #tpu.dot_dimension_numbers<[1], [0], [0], [1], [0, 0, 1, 1], [], []>} : vector<32x384xbf16>, vector<384x256xbf16>, vector<32x256xf32> -> vector<32x256xf32>
    %128 = arith.addf %125, %127 : vector<32x256xf32>
    %129 = vector.extract_strided_slice %52 {offsets = [0, 384], sizes = [32, 384], strides = [1, 1]} : vector<32x768xbf16> to vector<32x384xbf16>
    %cst_89 = arith.constant dense<0.000000e+00> : vector<32x256xf32>
    %130 = tpu.matmul %129, %44, %cst_89 {dimension_numbers = #tpu.dot_dimension_numbers<[1], [0], [0], [1], [0, 0, 1, 1], [], []>} : vector<32x384xbf16>, vector<384x256xbf16>, vector<32x256xf32> -> vector<32x256xf32>
    %131 = arith.addf %128, %130 : vector<32x256xf32>
    %132 = vector.extract_strided_slice %55 {offsets = [0, 384], sizes = [32, 384], strides = [1, 1]} : vector<32x768xbf16> to vector<32x384xbf16>
    %cst_90 = arith.constant dense<0.000000e+00> : vector<32x256xf32>
    %133 = tpu.matmul %132, %46, %cst_90 {dimension_numbers = #tpu.dot_dimension_numbers<[1], [0], [0], [1], [0, 0, 1, 1], [], []>} : vector<32x384xbf16>, vector<384x256xbf16>, vector<32x256xf32> -> vector<32x256xf32>
    %134 = arith.addf %131, %133 : vector<32x256xf32>
    %135 = vector.broadcast %40 : vector<1x256xf32> to vector<32x256xf32>
    %136 = arith.addf %134, %135 : vector<32x256xf32>
    %cst_91 = arith.constant 0.000000e+00 : f32
    %137 = vector.broadcast %cst_91 : f32 to vector<32x256xf32>
    %138 = arith.cmpf ogt, %136, %137 : vector<32x256xf32>
    %cst_92 = arith.constant 1.500000e-01 : f32
    %139 = vector.broadcast %cst_92 : f32 to vector<32x256xf32>
    %140 = arith.mulf %139, %136 : vector<32x256xf32>
    %141 = arith.select %138, %136, %140 : vector<32x256xi1>, vector<32x256xf32>
    %142 = vector.shape_cast %141 : vector<32x256xf32> to vector<8x4x256xf32>
    %c0_93 = arith.constant 0 : index
    %c1_94 = arith.constant 1 : index
    %c1024 = arith.constant 1024 : index
    %143 = vector.load %arg9[%c0_93, %c1_94, %c1024] : memref<8x6x1536xf32, #tpu.memory_space<vmem>>, vector<8x4x256xf32>
    tpu.vector_store %arg9[%c0_93, %c1_94, %c1024], %142 {strides = array<i32>} : memref<8x6x1536xf32, #tpu.memory_space<vmem>>, vector<8x4x256xf32>,
    %c0_95 = arith.constant 0 : index
    %c0_96 = arith.constant 0 : index
    %c0_97 = arith.constant 0 : index
    %144 = vector.load %arg6[%c0_95, %c0_96, %c0_97] : memref<3x768x128xbf16, #tpu.memory_space<vmem>>, vector<1x768x128xbf16>
    %145 = vector.shape_cast %144 : vector<1x768x128xbf16> to vector<768x128xbf16>
    %c1_98 = arith.constant 1 : index
    %c0_99 = arith.constant 0 : index
    %c0_100 = arith.constant 0 : index
    %146 = vector.load %arg6[%c1_98, %c0_99, %c0_100] : memref<3x768x128xbf16, #tpu.memory_space<vmem>>, vector<1x768x128xbf16>
    %147 = vector.shape_cast %146 : vector<1x768x128xbf16> to vector<768x128xbf16>
    %c2_101 = arith.constant 2 : index
    %c0_102 = arith.constant 0 : index
    %c0_103 = arith.constant 0 : index
    %148 = vector.load %arg6[%c2_101, %c0_102, %c0_103] : memref<3x768x128xbf16, #tpu.memory_space<vmem>>, vector<1x768x128xbf16>
    %149 = vector.shape_cast %148 : vector<1x768x128xbf16> to vector<768x128xbf16>
    %c0_104 = arith.constant 0 : index
    %c0_105 = arith.constant 0 : index
    %c0_106 = arith.constant 0 : index
    %150 = vector.load %arg9[%c0_104, %c0_105, %c0_106] : memref<8x6x1536xf32, #tpu.memory_space<vmem>>, vector<8x4x1536xf32>
    %151 = vector.shape_cast %150 : vector<8x4x1536xf32> to vector<32x1536xf32>
    %152 = arith.truncf %151 : vector<32x1536xf32> to vector<32x1536xbf16>
    %c0_107 = arith.constant 0 : index
    %c1_108 = arith.constant 1 : index
    %c0_109 = arith.constant 0 : index
    %153 = vector.load %arg9[%c0_107, %c1_108, %c0_109] : memref<8x6x1536xf32, #tpu.memory_space<vmem>>, vector<8x4x1536xf32>
    %154 = vector.shape_cast %153 : vector<8x4x1536xf32> to vector<32x1536xf32>
    %155 = arith.truncf %154 : vector<32x1536xf32> to vector<32x1536xbf16>
    %c0_110 = arith.constant 0 : index
    %c2_111 = arith.constant 2 : index
    %c0_112 = arith.constant 0 : index
    %156 = vector.load %arg9[%c0_110, %c2_111, %c0_112] : memref<8x6x1536xf32, #tpu.memory_space<vmem>>, vector<8x4x1536xf32>
    %157 = vector.shape_cast %156 : vector<8x4x1536xf32> to vector<32x1536xf32>
    %158 = arith.truncf %157 : vector<32x1536xf32> to vector<32x1536xbf16>
    %cst_113 = arith.constant 0.000000e+00 : f32
    %159 = vector.broadcast %cst_113 : f32 to vector<32x128xf32>
    %160 = vector.extract_strided_slice %152 {offsets = [0, 0], sizes = [32, 768], strides = [1, 1]} : vector<32x1536xbf16> to vector<32x768xbf16>
    %cst_114 = arith.constant dense<0.000000e+00> : vector<32x128xf32>
    %161 = tpu.matmul %160, %145, %cst_114 {dimension_numbers = #tpu.dot_dimension_numbers<[1], [0], [0], [1], [0, 0, 1, 1], [], []>} : vector<32x768xbf16>, vector<768x128xbf16>, vector<32x128xf32> -> vector<32x128xf32>
    %162 = arith.addf %159, %161 : vector<32x128xf32>
    %163 = vector.extract_strided_slice %155 {offsets = [0, 0], sizes = [32, 768], strides = [1, 1]} : vector<32x1536xbf16> to vector<32x768xbf16>
    %cst_115 = arith.constant dense<0.000000e+00> : vector<32x128xf32>
    %164 = tpu.matmul %163, %147, %cst_115 {dimension_numbers = #tpu.dot_dimension_numbers<[1], [0], [0], [1], [0, 0, 1, 1], [], []>} : vector<32x768xbf16>, vector<768x128xbf16>, vector<32x128xf32> -> vector<32x128xf32>
    %165 = arith.addf %162, %164 : vector<32x128xf32>
    %166 = vector.extract_strided_slice %158 {offsets = [0, 0], sizes = [32, 768], strides = [1, 1]} : vector<32x1536xbf16> to vector<32x768xbf16>
    %cst_116 = arith.constant dense<0.000000e+00> : vector<32x128xf32>
    %167 = tpu.matmul %166, %149, %cst_116 {dimension_numbers = #tpu.dot_dimension_numbers<[1], [0], [0], [1], [0, 0, 1, 1], [], []>} : vector<32x768xbf16>, vector<768x128xbf16>, vector<32x128xf32> -> vector<32x128xf32>
    %168 = arith.addf %165, %167 : vector<32x128xf32>
    %169 = math.tanh %168 : vector<32x128xf32>
    %c0_117 = arith.constant 0 : index
    %c0_118 = arith.constant 0 : index
    %170 = vector.load %arg7[%c0_117, %c0_118] : memref<32x512xf32, #tpu.memory_space<vmem>>, vector<32x128xf32>
    tpu.vector_store %arg7[%c0_117, %c0_118], %169 {strides = array<i32>} : memref<32x512xf32, #tpu.memory_space<vmem>>, vector<32x128xf32>,
    %cst_119 = arith.constant 0.000000e+00 : f32
    %171 = vector.broadcast %cst_119 : f32 to vector<32x128xf32>
    %172 = vector.extract_strided_slice %152 {offsets = [0, 256], sizes = [32, 768], strides = [1, 1]} : vector<32x1536xbf16> to vector<32x768xbf16>
    %cst_120 = arith.constant dense<0.000000e+00> : vector<32x128xf32>
    %173 = tpu.matmul %172, %145, %cst_120 {dimension_numbers = #tpu.dot_dimension_numbers<[1], [0], [0], [1], [0, 0, 1, 1], [], []>} : vector<32x768xbf16>, vector<768x128xbf16>, vector<32x128xf32> -> vector<32x128xf32>
    %174 = arith.addf %171, %173 : vector<32x128xf32>
    %175 = vector.extract_strided_slice %155 {offsets = [0, 256], sizes = [32, 768], strides = [1, 1]} : vector<32x1536xbf16> to vector<32x768xbf16>
    %cst_121 = arith.constant dense<0.000000e+00> : vector<32x128xf32>
    %176 = tpu.matmul %175, %147, %cst_121 {dimension_numbers = #tpu.dot_dimension_numbers<[1], [0], [0], [1], [0, 0, 1, 1], [], []>} : vector<32x768xbf16>, vector<768x128xbf16>, vector<32x128xf32> -> vector<32x128xf32>
    %177 = arith.addf %174, %176 : vector<32x128xf32>
    %178 = vector.extract_strided_slice %158 {offsets = [0, 256], sizes = [32, 768], strides = [1, 1]} : vector<32x1536xbf16> to vector<32x768xbf16>
    %cst_122 = arith.constant dense<0.000000e+00> : vector<32x128xf32>
    %179 = tpu.matmul %178, %149, %cst_122 {dimension_numbers = #tpu.dot_dimension_numbers<[1], [0], [0], [1], [0, 0, 1, 1], [], []>} : vector<32x768xbf16>, vector<768x128xbf16>, vector<32x128xf32> -> vector<32x128xf32>
    %180 = arith.addf %177, %179 : vector<32x128xf32>
    %181 = math.tanh %180 : vector<32x128xf32>
    %c0_123 = arith.constant 0 : index
    %c128_124 = arith.constant 128 : index
    %182 = vector.load %arg7[%c0_123, %c128_124] : memref<32x512xf32, #tpu.memory_space<vmem>>, vector<32x128xf32>
    tpu.vector_store %arg7[%c0_123, %c128_124], %181 {strides = array<i32>} : memref<32x512xf32, #tpu.memory_space<vmem>>, vector<32x128xf32>,
    %cst_125 = arith.constant 0.000000e+00 : f32
    %183 = vector.broadcast %cst_125 : f32 to vector<32x128xf32>
    %184 = vector.extract_strided_slice %152 {offsets = [0, 512], sizes = [32, 768], strides = [1, 1]} : vector<32x1536xbf16> to vector<32x768xbf16>
    %cst_126 = arith.constant dense<0.000000e+00> : vector<32x128xf32>
    %185 = tpu.matmul %184, %145, %cst_126 {dimension_numbers = #tpu.dot_dimension_numbers<[1], [0], [0], [1], [0, 0, 1, 1], [], []>} : vector<32x768xbf16>, vector<768x128xbf16>, vector<32x128xf32> -> vector<32x128xf32>
    %186 = arith.addf %183, %185 : vector<32x128xf32>
    %187 = vector.extract_strided_slice %155 {offsets = [0, 512], sizes = [32, 768], strides = [1, 1]} : vector<32x1536xbf16> to vector<32x768xbf16>
    %cst_127 = arith.constant dense<0.000000e+00> : vector<32x128xf32>
    %188 = tpu.matmul %187, %147, %cst_127 {dimension_numbers = #tpu.dot_dimension_numbers<[1], [0], [0], [1], [0, 0, 1, 1], [], []>} : vector<32x768xbf16>, vector<768x128xbf16>, vector<32x128xf32> -> vector<32x128xf32>
    %189 = arith.addf %186, %188 : vector<32x128xf32>
    %190 = vector.extract_strided_slice %158 {offsets = [0, 512], sizes = [32, 768], strides = [1, 1]} : vector<32x1536xbf16> to vector<32x768xbf16>
    %cst_128 = arith.constant dense<0.000000e+00> : vector<32x128xf32>
    %191 = tpu.matmul %190, %149, %cst_128 {dimension_numbers = #tpu.dot_dimension_numbers<[1], [0], [0], [1], [0, 0, 1, 1], [], []>} : vector<32x768xbf16>, vector<768x128xbf16>, vector<32x128xf32> -> vector<32x128xf32>
    %192 = arith.addf %189, %191 : vector<32x128xf32>
    %193 = math.tanh %192 : vector<32x128xf32>
    %c0_129 = arith.constant 0 : index
    %c256_130 = arith.constant 256 : index
    %194 = vector.load %arg7[%c0_129, %c256_130] : memref<32x512xf32, #tpu.memory_space<vmem>>, vector<32x128xf32>
    tpu.vector_store %arg7[%c0_129, %c256_130], %193 {strides = array<i32>} : memref<32x512xf32, #tpu.memory_space<vmem>>, vector<32x128xf32>,
    %cst_131 = arith.constant 0.000000e+00 : f32
    %195 = vector.broadcast %cst_131 : f32 to vector<32x128xf32>
    %196 = vector.extract_strided_slice %152 {offsets = [0, 768], sizes = [32, 768], strides = [1, 1]} : vector<32x1536xbf16> to vector<32x768xbf16>
    %cst_132 = arith.constant dense<0.000000e+00> : vector<32x128xf32>
    %197 = tpu.matmul %196, %145, %cst_132 {dimension_numbers = #tpu.dot_dimension_numbers<[1], [0], [0], [1], [0, 0, 1, 1], [], []>} : vector<32x768xbf16>, vector<768x128xbf16>, vector<32x128xf32> -> vector<32x128xf32>
    %198 = arith.addf %195, %197 : vector<32x128xf32>
    %199 = vector.extract_strided_slice %155 {offsets = [0, 768], sizes = [32, 768], strides = [1, 1]} : vector<32x1536xbf16> to vector<32x768xbf16>
    %cst_133 = arith.constant dense<0.000000e+00> : vector<32x128xf32>
    %200 = tpu.matmul %199, %147, %cst_133 {dimension_numbers = #tpu.dot_dimension_numbers<[1], [0], [0], [1], [0, 0, 1, 1], [], []>} : vector<32x768xbf16>, vector<768x128xbf16>, vector<32x128xf32> -> vector<32x128xf32>
    %201 = arith.addf %198, %200 : vector<32x128xf32>
    %202 = vector.extract_strided_slice %158 {offsets = [0, 768], sizes = [32, 768], strides = [1, 1]} : vector<32x1536xbf16> to vector<32x768xbf16>
    %cst_134 = arith.constant dense<0.000000e+00> : vector<32x128xf32>
    %203 = tpu.matmul %202, %149, %cst_134 {dimension_numbers = #tpu.dot_dimension_numbers<[1], [0], [0], [1], [0, 0, 1, 1], [], []>} : vector<32x768xbf16>, vector<768x128xbf16>, vector<32x128xf32> -> vector<32x128xf32>
    %204 = arith.addf %201, %203 : vector<32x128xf32>
    %205 = math.tanh %204 : vector<32x128xf32>
    %c0_135 = arith.constant 0 : index
    %c384 = arith.constant 384 : index
    %206 = vector.load %arg7[%c0_135, %c384] : memref<32x512xf32, #tpu.memory_space<vmem>>, vector<32x128xf32>
    tpu.vector_store %arg7[%c0_135, %c384], %205 {strides = array<i32>} : memref<32x512xf32, #tpu.memory_space<vmem>>, vector<32x128xf32>,
    return
  }
  func.func @transform_0(%arg0: i32) -> (i32, i32) {
    %c0_i32 = arith.constant 0 : i32
    %c0_i32_0 = arith.constant 0 : i32
    return %arg0, %c0_i32 : i32, i32
  }
  func.func @transform_1(%arg0: i32) -> (i32, i32) {
    %c0_i32 = arith.constant 0 : i32
    %c0_i32_0 = arith.constant 0 : i32
    %c0_i32_1 = arith.constant 0 : i32
    return %c0_i32, %c0_i32_0 : i32, i32
  }
  func.func @transform_2(%arg0: i32) -> (i32, i32) {
    %c0_i32 = arith.constant 0 : i32
    %c0_i32_0 = arith.constant 0 : i32
    %c0_i32_1 = arith.constant 0 : i32
    return %c0_i32, %c0_i32_0 : i32, i32
  }
  func.func @transform_3(%arg0: i32) -> (i32, i32, i32) {
    %c0_i32 = arith.constant 0 : i32
    %c0_i32_0 = arith.constant 0 : i32
    %c0_i32_1 = arith.constant 0 : i32
    %c0_i32_2 = arith.constant 0 : i32
    return %c0_i32, %c0_i32_0, %c0_i32_1 : i32, i32, i32
  }
  func.func @transform_4(%arg0: i32) -> (i32, i32) {
    %c0_i32 = arith.constant 0 : i32
    %c0_i32_0 = arith.constant 0 : i32
    %c0_i32_1 = arith.constant 0 : i32
    return %c0_i32, %c0_i32_0 : i32, i32
  }
  func.func @transform_5(%arg0: i32) -> (i32, i32, i32) {
    %c0_i32 = arith.constant 0 : i32
    %c0_i32_0 = arith.constant 0 : i32
    %c0_i32_1 = arith.constant 0 : i32
    %c0_i32_2 = arith.constant 0 : i32
    return %c0_i32, %c0_i32_0, %c0_i32_1 : i32, i32, i32
  }
  func.func @transform_6(%arg0: i32) -> (i32, i32) {
    %c0_i32 = arith.constant 0 : i32
    %c0_i32_0 = arith.constant 0 : i32
    return %arg0, %c0_i32 : i32, i32
  }
}

</mosaic_0001>

<llo_original>
// kernel: tpu_custom_call.1
$region0: #{tpu_custom_call.1}
  #allocation0 [shape = 'u32[]', space=smem, size = 0x4, offset = 0x4, fixed_abs, tag = 'smem constant byte address 0x4 - core index']
  #allocation1 [shape = 'u32[144,128]{1,0:T(1,128)}', space=vmem, size = 0x12000, scoped, tag = 'internal scratch']
  #allocation2 [shape = 'f32[8,6,768]{2,1,0:T(8,128)}', space=vmem, size = 0x30000, scoped, tag = 'scratch operand']
  #allocation3 [shape = 'f32[8,6,1536]{2,1,0:T(8,128)}', space=vmem, size = 0x60000, scoped, tag = 'scratch operand']
  %s0 = inlined_call_operand.hbm [shape: f32[8,128], index: 0, kind: input, shape index: {}]
  %s1 = inlined_call_operand.hbm [shape: bf16[128,2048], index: 1, kind: input, shape index: {}]
  %s2 = inlined_call_operand.hbm [shape: f32[1,2048], index: 2, kind: input, shape index: {}]
  %s3 = inlined_call_operand.hbm [shape: bf16[3,384,256], index: 3, kind: input, shape index: {}]
  %s4 = inlined_call_operand.vmem [shape: f32[1,256], index: 4, kind: input, shape index: {}]
  %s5 = inlined_call_operand.hbm [shape: bf16[3,768,128], index: 5, kind: input, shape index: {}]
  %s6 = inlined_call_operand.hbm [shape: f32[32,512], index: 6, kind: output, shape index: {}]
  %s7 = sld [smem:[#allocation0]]
  $region54: #{tpu_custom_call.1} parent=0
    _
  %s9 = ssub.s32 1, %s7
  %s10 = scalar_select 0, %s9, %s7
  $region1: #{tpu_custom_call.1} parent=0
    #allocation4 [shape = 'u8[4096]{0}', space=vmem, size = 0x1000, scoped, tag = 'input window, operand 0, single buffered']
    #allocation5 [shape = 's32[1]{0}', space=sflag, size = 0x4, scoped, tag = 'scoped memory for tpu_custom_call.1']
    #allocation6 [shape = 's32[1]{0}', space=sflag, size = 0x4, scoped, tag = 'scoped memory for tpu_custom_call.1']
    #allocation7 [shape = 'u8[524288]{0}', space=vmem, size = 0x80000, scoped, tag = 'input window, operand 1, single buffered']
    #allocation8 [shape = 's32[1]{0}', space=sflag, size = 0x4, scoped, tag = 'scoped memory for tpu_custom_call.1']
    #allocation9 [shape = 'u8[8192]{0}', space=vmem, size = 0x2000, scoped, tag = 'input window, operand 2, single buffered']
    #allocation10 [shape = 'u8[589824]{0}', space=vmem, size = 0x90000, scoped, tag = 'input window, operand 3, single buffered']
    #allocation11 [shape = 's32[1]{0}', space=sflag, size = 0x4, scoped, tag = 'scoped memory for tpu_custom_call.1']
    #allocation12 [shape = 'u8[589824]{0}', space=vmem, size = 0x90000, scoped, tag = 'input window, operand 5, single buffered']
    #allocation13 [shape = 'u8[65536]{0}', space=vmem, size = 0x10000, scoped, tag = 'output window, operand 0, single buffered']
    %11 = vsyncpa [#allocation5], 0
    %12 = vsyncpa [#allocation8], 0
    %13 = vsyncpa [#allocation11], 0
    %14 = vsyncpa [#allocation6], 0
    // Predicated region
    $region2: #{tpu_custom_call.1} parent=1 // pred_check
      _
    $region3: #{tpu_custom_call.1} parent=1 // pred_check_branch
      %16 = sbr.rel (0) target = $region5
    $region4: #{tpu_custom_call.1} parent=1 // pred_region
      %s18 = ssub.s32 128, 128
      %19 = vsyncadd [#allocation5], %s18
      %s21 = sshll.u32 [#allocation4], 4
      %s22 = int_to_ptr.vmem [resolvable:$true] %s21
      %24 = dma.hbm_to_vmem [thread:$0]  %s0, 128, %s22, [#allocation5]
    $region5: #{tpu_custom_call.1} parent=1 // pred_fallthru
      _
    // Predicated region
    $region6: #{tpu_custom_call.1} parent=1 // pred_check
      _
    $region7: #{tpu_custom_call.1} parent=1 // pred_check_branch
      %26 = sbr.rel (0) target = $region9
    $region8: #{tpu_custom_call.1} parent=1 // pred_region
      %s28 = ssub.s32 16384, 16384
      %29 = vsyncadd [#allocation8], %s28
      %s30 = sshll.u32 [#allocation7], 4
      %s31 = int_to_ptr.vmem [resolvable:$true] %s30
      %36 = dma.hbm_to_vmem [thread:$0]  %s1, 16384, %s31, [#allocation8], 1024, 1024, 64
    $region9: #{tpu_custom_call.1} parent=1 // pred_fallthru
      _
    // Predicated region
    $region10: #{tpu_custom_call.1} parent=1 // pred_check
      _
    $region11: #{tpu_custom_call.1} parent=1 // pred_check_branch
      %38 = sbr.rel (0) target = $region13
    $region12: #{tpu_custom_call.1} parent=1 // pred_region
      %s40 = ssub.s32 256, 256
      %41 = vsyncadd [#allocation8], %s40
      %s43 = sshll.u32 [#allocation9], 4
      %s44 = int_to_ptr.vmem [resolvable:$true] %s43
      %46 = dma.hbm_to_vmem [thread:$0]  %s2, 256, %s44, [#allocation8]
    $region13: #{tpu_custom_call.1} parent=1 // pred_fallthru
      _
    // Predicated region
    $region14: #{tpu_custom_call.1} parent=1 // pred_check
      _
    $region15: #{tpu_custom_call.1} parent=1 // pred_check_branch
      %48 = sbr.rel (0) target = $region17
    $region16: #{tpu_custom_call.1} parent=1 // pred_region
      %s50 = ssub.s32 18432, 18432
      %51 = vsyncadd [#allocation11], %s50
      %s52 = sshll.u32 [#allocation10], 4
      %s53 = int_to_ptr.vmem [resolvable:$true] %s52
      %58 = dma.hbm_to_vmem [thread:$0]  %s3, 18432, %s53, [#allocation11], 128, 128, 8
    $region17: #{tpu_custom_call.1} parent=1 // pred_fallthru
      _
    // Predicated region
    $region18: #{tpu_custom_call.1} parent=1 // pred_check
      _
    $region19: #{tpu_custom_call.1} parent=1 // pred_check_branch
      %60 = sbr.rel (0) target = $region21
    $region20: #{tpu_custom_call.1} parent=1 // pred_region
      _
    $region21: #{tpu_custom_call.1} parent=1 // pred_fallthru
      _
    // Predicated region
    $region22: #{tpu_custom_call.1} parent=1 // pred_check
      _
    $region23: #{tpu_custom_call.1} parent=1 // pred_check_branch
      %62 = sbr.rel (0) target = $region25
    $region24: #{tpu_custom_call.1} parent=1 // pred_region
      %s64 = ssub.s32 18432, 18432
      %65 = vsyncadd [#allocation11], %s64
      %s66 = sshll.u32 [#allocation12], 4
      %s67 = int_to_ptr.vmem [resolvable:$true] %s66
      %72 = dma.hbm_to_vmem [thread:$0]  %s5, 18432, %s67, [#allocation11], 64, 64, 4
    $region25: #{tpu_custom_call.1} parent=1 // pred_fallthru
      _
    // Predicated region
    $region26: #{tpu_custom_call.1} parent=1 // pred_check
      _
    $region27: #{tpu_custom_call.1} parent=1 // pred_check_branch
      %74 = sbr.rel (0) target = $region29
    $region28: #{tpu_custom_call.1} parent=1 // pred_region
      %75 = dma.done [#allocation5], 128
    $region29: #{tpu_custom_call.1} parent=1 // pred_fallthru
      _
    // Predicated region
    $region30: #{tpu_custom_call.1} parent=1 // pred_check
      _
    $region31: #{tpu_custom_call.1} parent=1 // pred_check_branch
      %77 = sbr.rel (0) target = $region33
    $region32: #{tpu_custom_call.1} parent=1 // pred_region
      %78 = dma.done [#allocation8], 16384
    $region33: #{tpu_custom_call.1} parent=1 // pred_fallthru
      _
    // Predicated region
    $region34: #{tpu_custom_call.1} parent=1 // pred_check
      _
    $region35: #{tpu_custom_call.1} parent=1 // pred_check_branch
      %80 = sbr.rel (0) target = $region37
    $region36: #{tpu_custom_call.1} parent=1 // pred_region
      %81 = dma.done [#allocation8], 256
    $region37: #{tpu_custom_call.1} parent=1 // pred_fallthru
      _
    // Predicated region
    $region38: #{tpu_custom_call.1} parent=1 // pred_check
      _
    $region39: #{tpu_custom_call.1} parent=1 // pred_check_branch
      %83 = sbr.rel (0) target = $region41
    $region40: #{tpu_custom_call.1} parent=1 // pred_region
      %84 = dma.done [#allocation11], 18432
    $region41: #{tpu_custom_call.1} parent=1 // pred_fallthru
      _
    // Predicated region
    $region42: #{tpu_custom_call.1} parent=1 // pred_check
      _
    $region43: #{tpu_custom_call.1} parent=1 // pred_check_branch
      %86 = sbr.rel (0) target = $region45
    $region44: #{tpu_custom_call.1} parent=1 // pred_region
      %87 = dma.done [#allocation11], 18432
    $region45: #{tpu_custom_call.1} parent=1 // pred_fallthru
      _
    %v89 = vld [vmem:[#allocation4] sm:$0xff]
    %v90 = vpack.c.bf16 %v89, %v89
    %v91 = vld [vmem:[#allocation7] sm:$0xff]
    %v92 = vld [vmem:[#allocation7 + $0x8] sm:$0xff]
    %v93 = vld [vmem:[#allocation7 + $0x10] sm:$0xff]
    %v94 = vld [vmem:[#allocation7 + $0x18] sm:$0xff]
    %v95 = vld [vmem:[#allocation7 + $0x20] sm:$0xff]
    %v96 = vld [vmem:[#allocation7 + $0x28] sm:$0xff]
    %v97 = vld [vmem:[#allocation7 + $0x30] sm:$0xff]
    %v98 = vld [vmem:[#allocation7 + $0x38] sm:$0xff]
    %v99 = vld [vmem:[#allocation7 + $0x40] sm:$0xff]
    %v100 = vld [vmem:[#allocation7 + $0x48] sm:$0xff]
    %v101 = vld [vmem:[#allocation7 + $0x50] sm:$0xff]
    %v102 = vld [vmem:[#allocation7 + $0x58] sm:$0xff]
    %v103 = vld [vmem:[#allocation7 + $0x60] sm:$0xff]
    %v104 = vld [vmem:[#allocation7 + $0x68] sm:$0xff]
    %v105 = vld [vmem:[#allocation7 + $0x70] sm:$0xff]
    %v106 = vld [vmem:[#allocation7 + $0x78] sm:$0xff]
    %v107 = vld [vmem:[#allocation7 + $0x80] sm:$0xff]
    %v108 = vld [vmem:[#allocation7 + $0x88] sm:$0xff]
    %v109 = vld [vmem:[#allocation7 + $0x90] sm:$0xff]
    %v110 = vld [vmem:[#allocation7 + $0x98] sm:$0xff]
    %v111 = vld [vmem:[#allocation7 + $0xa0] sm:$0xff]
    %v112 = vld [vmem:[#allocation7 + $0xa8] sm:$0xff]
    %v113 = vld [vmem:[#allocation7 + $0xb0] sm:$0xff]
    %v114 = vld [vmem:[#allocation7 + $0xb8] sm:$0xff]
    %v115 = vld [vmem:[#allocation7 + $0xc0] sm:$0xff]
    %v116 = vld [vmem:[#allocation7 + $0xc8] sm:$0xff]
    %v117 = vld [vmem:[#allocation7 + $0xd0] sm:$0xff]
    %v118 = vld [vmem:[#allocation7 + $0xd8] sm:$0xff]
    %v119 = vld [vmem:[#allocation7 + $0xe0] sm:$0xff]
    %v120 = vld [vmem:[#allocation7 + $0xe8] sm:$0xff]
    %v121 = vld [vmem:[#allocation7 + $0xf0] sm:$0xff]
    %v122 = vld [vmem:[#allocation7 + $0xf8] sm:$0xff]
    %v123 = vld [vmem:[#allocation7 + $0x100] sm:$0xff]
    %v124 = vld [vmem:[#allocation7 + $0x108] sm:$0xff]
    %v125 = vld [vmem:[#allocation7 + $0x110] sm:$0xff]
    %v126 = vld [vmem:[#allocation7 + $0x118] sm:$0xff]
    %v127 = vld [vmem:[#allocation7 + $0x120] sm:$0xff]
    %v128 = vld [vmem:[#allocation7 + $0x128] sm:$0xff]
    %v129 = vld [vmem:[#allocation7 + $0x130] sm:$0xff]
    %v130 = vld [vmem:[#allocation7 + $0x138] sm:$0xff]
    %v131 = vld [vmem:[#allocation7 + $0x140] sm:$0xff]
    %v132 = vld [vmem:[#allocation7 + $0x148] sm:$0xff]
    %v133 = vld [vmem:[#allocation7 + $0x150] sm:$0xff]
    %v134 = vld [vmem:[#allocation7 + $0x158] sm:$0xff]
    %v135 = vld [vmem:[#allocation7 + $0x160] sm:$0xff]
    %v136 = vld [vmem:[#allocation7 + $0x168] sm:$0xff]
    %v137 = vld [vmem:[#allocation7 + $0x170] sm:$0xff]
    %v138 = vld [vmem:[#allocation7 + $0x178] sm:$0xff]
    %v139 = vld [vmem:[#allocation7 + $0x180] sm:$0xff]
    %v140 = vld [vmem:[#allocation7 + $0x188] sm:$0xff]
    %v141 = vld [vmem:[#allocation7 + $0x190] sm:$0xff]
    %v142 = vld [vmem:[#allocation7 + $0x198] sm:$0xff]
    %v143 = vld [vmem:[#allocation7 + $0x1a0] sm:$0xff]
    %v144 = vld [vmem:[#allocation7 + $0x1a8] sm:$0xff]
    %v145 = vld [vmem:[#allocation7 + $0x1b0] sm:$0xff]
    %v146 = vld [vmem:[#allocation7 + $0x1b8] sm:$0xff]
    %v147 = vld [vmem:[#allocation7 + $0x1c0] sm:$0xff]
    %v148 = vld [vmem:[#allocation7 + $0x1c8] sm:$0xff]
    %v149 = vld [vmem:[#allocation7 + $0x1d0] sm:$0xff]
    %v150 = vld [vmem:[#allocation7 + $0x1d8] sm:$0xff]
    %v151 = vld [vmem:[#allocation7 + $0x1e0] sm:$0xff]
    %v152 = vld [vmem:[#allocation7 + $0x1e8] sm:$0xff]
    %v153 = vld [vmem:[#allocation7 + $0x1f0] sm:$0xff]
    %v154 = vld [vmem:[#allocation7 + $0x1f8] sm:$0xff]
    %v155 = vld [vmem:[#allocation7 + $0x200] sm:$0xff]
    %v156 = vld [vmem:[#allocation7 + $0x208] sm:$0xff]
    %v157 = vld [vmem:[#allocation7 + $0x210] sm:$0xff]
    %v158 = vld [vmem:[#allocation7 + $0x218] sm:$0xff]
    %v159 = vld [vmem:[#allocation7 + $0x220] sm:$0xff]
    %v160 = vld [vmem:[#allocation7 + $0x228] sm:$0xff]
    %v161 = vld [vmem:[#allocation7 + $0x230] sm:$0xff]
    %v162 = vld [vmem:[#allocation7 + $0x238] sm:$0xff]
    %v163 = vld [vmem:[#allocation7 + $0x240] sm:$0xff]
    %v164 = vld [vmem:[#allocation7 + $0x248] sm:$0xff]
    %v165 = vld [vmem:[#allocation7 + $0x250] sm:$0xff]
    %v166 = vld [vmem:[#allocation7 + $0x258] sm:$0xff]
    %v167 = vld [vmem:[#allocation7 + $0x260] sm:$0xff]
    %v168 = vld [vmem:[#allocation7 + $0x268] sm:$0xff]
    %v169 = vld [vmem:[#allocation7 + $0x270] sm:$0xff]
    %v170 = vld [vmem:[#allocation7 + $0x278] sm:$0xff]
    %v171 = vld [vmem:[#allocation7 + $0x280] sm:$0xff]
    %v172 = vld [vmem:[#allocation7 + $0x288] sm:$0xff]
    %v173 = vld [vmem:[#allocation7 + $0x290] sm:$0xff]
    %v174 = vld [vmem:[#allocation7 + $0x298] sm:$0xff]
    %v175 = vld [vmem:[#allocation7 + $0x2a0] sm:$0xff]
    %v176 = vld [vmem:[#allocation7 + $0x2a8] sm:$0xff]
    %v177 = vld [vmem:[#allocation7 + $0x2b0] sm:$0xff]
    %v178 = vld [vmem:[#allocation7 + $0x2b8] sm:$0xff]
    %v179 = vld [vmem:[#allocation7 + $0x2c0] sm:$0xff]
    %v180 = vld [vmem:[#allocation7 + $0x2c8] sm:$0xff]
    %v181 = vld [vmem:[#allocation7 + $0x2d0] sm:$0xff]
    %v182 = vld [vmem:[#allocation7 + $0x2d8] sm:$0xff]
    %v183 = vld [vmem:[#allocation7 + $0x2e0] sm:$0xff]
    %v184 = vld [vmem:[#allocation7 + $0x2e8] sm:$0xff]
    %v185 = vld [vmem:[#allocation7 + $0x2f0] sm:$0xff]
    %v186 = vld [vmem:[#allocation7 + $0x2f8] sm:$0xff]
    %v187 = vld [vmem:[#allocation7 + $0x300] sm:$0xff]
    %v188 = vld [vmem:[#allocation7 + $0x308] sm:$0xff]
    %v189 = vld [vmem:[#allocation7 + $0x310] sm:$0xff]
    %v190 = vld [vmem:[#allocation7 + $0x318] sm:$0xff]
    %v191 = vld [vmem:[#allocation7 + $0x320] sm:$0xff]
    %v192 = vld [vmem:[#allocation7 + $0x328] sm:$0xff]
    %v193 = vld [vmem:[#allocation7 + $0x330] sm:$0xff]
    %v194 = vld [vmem:[#allocation7 + $0x338] sm:$0xff]
    %v195 = vld [vmem:[#allocation7 + $0x340] sm:$0xff]
    %v196 = vld [vmem:[#allocation7 + $0x348] sm:$0xff]
    %v197 = vld [vmem:[#allocation7 + $0x350] sm:$0xff]
    %v198 = vld [vmem:[#allocation7 + $0x358] sm:$0xff]
    %v199 = vld [vmem:[#allocation7 + $0x360] sm:$0xff]
    %v200 = vld [vmem:[#allocation7 + $0x368] sm:$0xff]
    %v201 = vld [vmem:[#allocation7 + $0x370] sm:$0xff]
    %v202 = vld [vmem:[#allocation7 + $0x378] sm:$0xff]
    %v203 = vld [vmem:[#allocation7 + $0x380] sm:$0xff]
    %v204 = vld [vmem:[#allocation7 + $0x388] sm:$0xff]
    %v205 = vld [vmem:[#allocation7 + $0x390] sm:$0xff]
    %v206 = vld [vmem:[#allocation7 + $0x398] sm:$0xff]
    %v207 = vld [vmem:[#allocation7 + $0x3a0] sm:$0xff]
    %v208 = vld [vmem:[#allocation7 + $0x3a8] sm:$0xff]
    %v209 = vld [vmem:[#allocation7 + $0x3b0] sm:$0xff]
    %v210 = vld [vmem:[#allocation7 + $0x3b8] sm:$0xff]
    %v211 = vld [vmem:[#allocation7 + $0x3c0] sm:$0xff]
    %v212 = vld [vmem:[#allocation7 + $0x3c8] sm:$0xff]
    %v213 = vld [vmem:[#allocation7 + $0x3d0] sm:$0xff]
    %v214 = vld [vmem:[#allocation7 + $0x3d8] sm:$0xff]
    %v215 = vld [vmem:[#allocation7 + $0x3e0] sm:$0xff]
    %v216 = vld [vmem:[#allocation7 + $0x3e8] sm:$0xff]
    %v217 = vld [vmem:[#allocation7 + $0x3f0] sm:$0xff]
    %v218 = vld [vmem:[#allocation7 + $0x3f8] sm:$0xff]
    %v219 = vld [vmem:[#allocation9] sm:$0xff]
    %v220 = vld [vmem:[#allocation9 + $0x8] sm:$0xff]
    %v223 = vlaneseq
    %v224 = vshrl.u32 %v223, 7
    %v225 = vsub.s32 0, %v224
    %v226 = vrot.slane %v219, %v225
    %v227 = vlaneseq
    %v228 = vshrl.u32 %v227, 7
    %v229 = vsub.s32 1, %v228
    %v230 = vrot.slane %v219, %v229
    %v231 = vlaneseq
    %v232 = vshrl.u32 %v231, 7
    %v233 = vsub.s32 2, %v232
    %v234 = vrot.slane %v219, %v233
    %v235 = vlaneseq
    %v236 = vshrl.u32 %v235, 7
    %v237 = vsub.s32 3, %v236
    %v238 = vrot.slane %v219, %v237
    %v239 = vlaneseq
    %v240 = vshrl.u32 %v239, 7
    %v241 = vsub.s32 4, %v240
    %v242 = vrot.slane %v219, %v241
    %v243 = vlaneseq
    %v244 = vshrl.u32 %v243, 7
    %v245 = vsub.s32 5, %v244
    %v246 = vrot.slane %v219, %v245
    %v247 = vlaneseq
    %v248 = vshrl.u32 %v247, 7
    %v249 = vsub.s32 6, %v248
    %v250 = vrot.slane %v219, %v249
    %v251 = vlaneseq
    %v252 = vshrl.u32 %v251, 7
    %v253 = vsub.s32 7, %v252
    %v254 = vrot.slane %v219, %v253
    %v255 = vlaneseq
    %v256 = vshrl.u32 %v255, 7
    %v257 = vsub.s32 0, %v256
    %v258 = vrot.slane %v220, %v257
    %v259 = vlaneseq
    %v260 = vshrl.u32 %v259, 7
    %v261 = vsub.s32 1, %v260
    %v262 = vrot.slane %v220, %v261
    %v263 = vlaneseq
    %v264 = vshrl.u32 %v263, 7
    %v265 = vsub.s32 2, %v264
    %v266 = vrot.slane %v220, %v265
    %v267 = vlaneseq
    %v268 = vshrl.u32 %v267, 7
    %v269 = vsub.s32 3, %v268
    %v270 = vrot.slane %v220, %v269
    %v271 = vlaneseq
    %v272 = vshrl.u32 %v271, 7
    %v273 = vsub.s32 4, %v272
    %v274 = vrot.slane %v220, %v273
    %v275 = vlaneseq
    %v276 = vshrl.u32 %v275, 7
    %v277 = vsub.s32 5, %v276
    %v278 = vrot.slane %v220, %v277
    %v279 = vlaneseq
    %v280 = vshrl.u32 %v279, 7
    %v281 = vsub.s32 6, %v280
    %v282 = vrot.slane %v220, %v281
    %v283 = vlaneseq
    %v284 = vshrl.u32 %v283, 7
    %v285 = vsub.s32 7, %v284
    %v286 = vrot.slane %v220, %v285
    %v431 = vunpack.c.l.b16 %v91
    %v432 = vunpack.c.h.b16 %v91
    %v433 = vunpack.c.l.b16 %v92
    %v434 = vunpack.c.h.b16 %v92
    %v435 = vunpack.c.l.b16 %v93
    %v436 = vunpack.c.h.b16 %v93
    %v437 = vunpack.c.l.b16 %v94
    %v438 = vunpack.c.h.b16 %v94
    %v439 = vunpack.c.l.b16 %v95
    %v440 = vunpack.c.h.b16 %v95
    %v441 = vunpack.c.l.b16 %v96
    %v442 = vunpack.c.h.b16 %v96
    %v443 = vunpack.c.l.b16 %v97
    %v444 = vunpack.c.h.b16 %v97
    %v445 = vunpack.c.l.b16 %v98
    %v446 = vunpack.c.h.b16 %v98
    %v447 = vunpack.c.l.b16 %v99
    %v448 = vunpack.c.h.b16 %v99
    %v449 = vunpack.c.l.b16 %v100
    %v450 = vunpack.c.h.b16 %v100
    %v451 = vunpack.c.l.b16 %v101
    %v452 = vunpack.c.h.b16 %v101
    %v453 = vunpack.c.l.b16 %v102
    %v454 = vunpack.c.h.b16 %v102
    %v455 = vunpack.c.l.b16 %v103
    %v456 = vunpack.c.h.b16 %v103
    %v457 = vunpack.c.l.b16 %v104
    %v458 = vunpack.c.h.b16 %v104
    %v459 = vunpack.c.l.b16 %v105
    %v460 = vunpack.c.h.b16 %v105
    %v461 = vunpack.c.l.b16 %v106
    %v462 = vunpack.c.h.b16 %v106
    %v463 = vunpack.c.l.b16 %v107
    %v464 = vunpack.c.h.b16 %v107
    %v465 = vunpack.c.l.b16 %v108
    %v466 = vunpack.c.h.b16 %v108
    %v467 = vunpack.c.l.b16 %v109
    %v468 = vunpack.c.h.b16 %v109
    %v469 = vunpack.c.l.b16 %v110
    %v470 = vunpack.c.h.b16 %v110
    %v471 = vunpack.c.l.b16 %v111
    %v472 = vunpack.c.h.b16 %v111
    %v473 = vunpack.c.l.b16 %v112
    %v474 = vunpack.c.h.b16 %v112
    %v475 = vunpack.c.l.b16 %v113
    %v476 = vunpack.c.h.b16 %v113
    %v477 = vunpack.c.l.b16 %v114
    %v478 = vunpack.c.h.b16 %v114
    %v479 = vunpack.c.l.b16 %v115
    %v480 = vunpack.c.h.b16 %v115
    %v481 = vunpack.c.l.b16 %v116
    %v482 = vunpack.c.h.b16 %v116
    %v483 = vunpack.c.l.b16 %v117
    %v484 = vunpack.c.h.b16 %v117
    %v485 = vunpack.c.l.b16 %v118
    %v486 = vunpack.c.h.b16 %v118
    %v487 = vunpack.c.l.b16 %v119
    %v488 = vunpack.c.h.b16 %v119
    %v489 = vunpack.c.l.b16 %v120
    %v490 = vunpack.c.h.b16 %v120
    %v491 = vunpack.c.l.b16 %v121
    %v492 = vunpack.c.h.b16 %v121
    %v493 = vunpack.c.l.b16 %v122
    %v494 = vunpack.c.h.b16 %v122
    %v495 = vunpack.c.l.b16 %v123
    %v496 = vunpack.c.h.b16 %v123
    %v497 = vunpack.c.l.b16 %v124
    %v498 = vunpack.c.h.b16 %v124
    %v499 = vunpack.c.l.b16 %v125
    %v500 = vunpack.c.h.b16 %v125
    %v501 = vunpack.c.l.b16 %v126
    %v502 = vunpack.c.h.b16 %v126
    %v503 = vunpack.c.l.b16 %v127
    %v504 = vunpack.c.h.b16 %v127
    %v505 = vunpack.c.l.b16 %v128
    %v506 = vunpack.c.h.b16 %v128
    %v507 = vunpack.c.l.b16 %v129
    %v508 = vunpack.c.h.b16 %v129
    %v509 = vunpack.c.l.b16 %v130
    %v510 = vunpack.c.h.b16 %v130
    %v511 = vunpack.c.l.b16 %v131
    %v512 = vunpack.c.h.b16 %v131
    %v513 = vunpack.c.l.b16 %v132
    %v514 = vunpack.c.h.b16 %v132
    %v515 = vunpack.c.l.b16 %v133
    %v516 = vunpack.c.h.b16 %v133
    %v517 = vunpack.c.l.b16 %v134
    %v518 = vunpack.c.h.b16 %v134
    %v519 = vunpack.c.l.b16 %v135
    %v520 = vunpack.c.h.b16 %v135
    %v521 = vunpack.c.l.b16 %v136
    %v522 = vunpack.c.h.b16 %v136
    %v523 = vunpack.c.l.b16 %v137
    %v524 = vunpack.c.h.b16 %v137
    %v525 = vunpack.c.l.b16 %v138
    %v526 = vunpack.c.h.b16 %v138
    %v527 = vunpack.c.l.b16 %v139
    %v528 = vunpack.c.h.b16 %v139
    %v529 = vunpack.c.l.b16 %v140
    %v530 = vunpack.c.h.b16 %v140
    %v531 = vunpack.c.l.b16 %v141
    %v532 = vunpack.c.h.b16 %v141
    %v533 = vunpack.c.l.b16 %v142
    %v534 = vunpack.c.h.b16 %v142
    %v535 = vunpack.c.l.b16 %v143
    %v536 = vunpack.c.h.b16 %v143
    %v537 = vunpack.c.l.b16 %v144
    %v538 = vunpack.c.h.b16 %v144
    %v539 = vunpack.c.l.b16 %v145
    %v540 = vunpack.c.h.b16 %v145
    %v541 = vunpack.c.l.b16 %v146
    %v542 = vunpack.c.h.b16 %v146
    %v543 = vunpack.c.l.b16 %v147
    %v544 = vunpack.c.h.b16 %v147
    %v545 = vunpack.c.l.b16 %v148
    %v546 = vunpack.c.h.b16 %v148
    %v547 = vunpack.c.l.b16 %v149
    %v548 = vunpack.c.h.b16 %v149
    %v549 = vunpack.c.l.b16 %v150
    %v550 = vunpack.c.h.b16 %v150
    %v551 = vunpack.c.l.b16 %v151
    %v552 = vunpack.c.h.b16 %v151
    %v553 = vunpack.c.l.b16 %v152
    %v554 = vunpack.c.h.b16 %v152
    %v555 = vunpack.c.l.b16 %v153
    %v556 = vunpack.c.h.b16 %v153
    %v557 = vunpack.c.l.b16 %v154
    %v558 = vunpack.c.h.b16 %v154
    %v559 = vunpack.c.l.b16 %v155
    %v560 = vunpack.c.h.b16 %v155
    %v561 = vunpack.c.l.b16 %v156
    %v562 = vunpack.c.h.b16 %v156
    %v563 = vunpack.c.l.b16 %v157
    %v564 = vunpack.c.h.b16 %v157
    %v565 = vunpack.c.l.b16 %v158
    %v566 = vunpack.c.h.b16 %v158
    %v567 = vunpack.c.l.b16 %v159
    %v568 = vunpack.c.h.b16 %v159
    %v569 = vunpack.c.l.b16 %v160
    %v570 = vunpack.c.h.b16 %v160
    %v571 = vunpack.c.l.b16 %v161
    %v572 = vunpack.c.h.b16 %v161
    %v573 = vunpack.c.l.b16 %v162
    %v574 = vunpack.c.h.b16 %v162
    %v575 = vunpack.c.l.b16 %v163
    %v576 = vunpack.c.h.b16 %v163
    %v577 = vunpack.c.l.b16 %v164
    %v578 = vunpack.c.h.b16 %v164
    %v579 = vunpack.c.l.b16 %v165
    %v580 = vunpack.c.h.b16 %v165
    %v581 = vunpack.c.l.b16 %v166
    %v582 = vunpack.c.h.b16 %v166
    %v583 = vunpack.c.l.b16 %v167
    %v584 = vunpack.c.h.b16 %v167
    %v585 = vunpack.c.l.b16 %v168
    %v586 = vunpack.c.h.b16 %v168
    %v587 = vunpack.c.l.b16 %v169
    %v588 = vunpack.c.h.b16 %v169
    %v589 = vunpack.c.l.b16 %v170
    %v590 = vunpack.c.h.b16 %v170
    %v591 = vunpack.c.l.b16 %v171
    %v592 = vunpack.c.h.b16 %v171
    %v593 = vunpack.c.l.b16 %v172
    %v594 = vunpack.c.h.b16 %v172
    %v595 = vunpack.c.l.b16 %v173
    %v596 = vunpack.c.h.b16 %v173
    %v597 = vunpack.c.l.b16 %v174
    %v598 = vunpack.c.h.b16 %v174
    %v599 = vunpack.c.l.b16 %v175
    %v600 = vunpack.c.h.b16 %v175
    %v601 = vunpack.c.l.b16 %v176
    %v602 = vunpack.c.h.b16 %v176
    %v603 = vunpack.c.l.b16 %v177
    %v604 = vunpack.c.h.b16 %v177
    %v605 = vunpack.c.l.b16 %v178
    %v606 = vunpack.c.h.b16 %v178
    %v607 = vunpack.c.l.b16 %v179
    %v608 = vunpack.c.h.b16 %v179
    %v609 = vunpack.c.l.b16 %v180
    %v610 = vunpack.c.h.b16 %v180
    %v611 = vunpack.c.l.b16 %v181
    %v612 = vunpack.c.h.b16 %v181
    %v613 = vunpack.c.l.b16 %v182
    %v614 = vunpack.c.h.b16 %v182
    %v615 = vunpack.c.l.b16 %v183
    %v616 = vunpack.c.h.b16 %v183
    %v617 = vunpack.c.l.b16 %v184
    %v618 = vunpack.c.h.b16 %v184
    %v619 = vunpack.c.l.b16 %v185
    %v620 = vunpack.c.h.b16 %v185
    %v621 = vunpack.c.l.b16 %v186
    %v622 = vunpack.c.h.b16 %v186
    %v623 = vunpack.c.l.b16 %v187
    %v624 = vunpack.c.h.b16 %v187
    %v625 = vunpack.c.l.b16 %v188
    %v626 = vunpack.c.h.b16 %v188
    %v627 = vunpack.c.l.b16 %v189
    %v628 = vunpack.c.h.b16 %v189
    %v629 = vunpack.c.l.b16 %v190
    %v630 = vunpack.c.h.b16 %v190
    %v631 = vunpack.c.l.b16 %v191
    %v632 = vunpack.c.h.b16 %v191
    %v633 = vunpack.c.l.b16 %v192
    %v634 = vunpack.c.h.b16 %v192
    %v635 = vunpack.c.l.b16 %v193
    %v636 = vunpack.c.h.b16 %v193
    %v637 = vunpack.c.l.b16 %v194
    %v638 = vunpack.c.h.b16 %v194
    %v639 = vunpack.c.l.b16 %v195
    %v640 = vunpack.c.h.b16 %v195
    %v641 = vunpack.c.l.b16 %v196
    %v642 = vunpack.c.h.b16 %v196
    %v643 = vunpack.c.l.b16 %v197
    %v644 = vunpack.c.h.b16 %v197
    %v645 = vunpack.c.l.b16 %v198
    %v646 = vunpack.c.h.b16 %v198
    %v647 = vunpack.c.l.b16 %v199
    %v648 = vunpack.c.h.b16 %v199
    %v649 = vunpack.c.l.b16 %v200
    %v650 = vunpack.c.h.b16 %v200
    %v651 = vunpack.c.l.b16 %v201
    %v652 = vunpack.c.h.b16 %v201
    %v653 = vunpack.c.l.b16 %v202
    %v654 = vunpack.c.h.b16 %v202
    %v655 = vunpack.c.l.b16 %v203
    %v656 = vunpack.c.h.b16 %v203
    %v657 = vunpack.c.l.b16 %v204
    %v658 = vunpack.c.h.b16 %v204
    %v659 = vunpack.c.l.b16 %v205
    %v660 = vunpack.c.h.b16 %v205
    %v661 = vunpack.c.l.b16 %v206
    %v662 = vunpack.c.h.b16 %v206
    %v663 = vunpack.c.l.b16 %v207
    %v664 = vunpack.c.h.b16 %v207
    %v665 = vunpack.c.l.b16 %v208
    %v666 = vunpack.c.h.b16 %v208
    %v667 = vunpack.c.l.b16 %v209
    %v668 = vunpack.c.h.b16 %v209
    %v669 = vunpack.c.l.b16 %v210
    %v670 = vunpack.c.h.b16 %v210
    %v671 = vunpack.c.l.b16 %v211
    %v672 = vunpack.c.h.b16 %v211
    %v673 = vunpack.c.l.b16 %v212
    %v674 = vunpack.c.h.b16 %v212
    %v675 = vunpack.c.l.b16 %v213
    %v676 = vunpack.c.h.b16 %v213
    %v677 = vunpack.c.l.b16 %v214
    %v678 = vunpack.c.h.b16 %v214
    %v679 = vunpack.c.l.b16 %v215
    %v680 = vunpack.c.h.b16 %v215
    %v681 = vunpack.c.l.b16 %v216
    %v682 = vunpack.c.h.b16 %v216
    %v683 = vunpack.c.l.b16 %v217
    %v684 = vunpack.c.h.b16 %v217
    %v685 = vunpack.c.l.b16 %v218
    %v686 = vunpack.c.h.b16 %v218
    %v687 = vpack.c.b16 %v447, %v431
    %v688 = vpack.c.b16 %v448, %v432
    %v689 = vpack.c.b16 %v449, %v433
    %v690 = vpack.c.b16 %v450, %v434
    %v691 = vpack.c.b16 %v451, %v435
    %v692 = vpack.c.b16 %v452, %v436
    %v693 = vpack.c.b16 %v453, %v437
    %v694 = vpack.c.b16 %v454, %v438
    %v695 = vpack.c.b16 %v455, %v439
    %v696 = vpack.c.b16 %v456, %v440
    %v697 = vpack.c.b16 %v457, %v441
    %v698 = vpack.c.b16 %v458, %v442
    %v699 = vpack.c.b16 %v459, %v443
    %v700 = vpack.c.b16 %v460, %v444
    %v701 = vpack.c.b16 %v461, %v445
    %v702 = vpack.c.b16 %v462, %v446
    %v703 = vpack.c.b16 %v479, %v463
    %v704 = vpack.c.b16 %v480, %v464
    %v705 = vpack.c.b16 %v481, %v465
    %v706 = vpack.c.b16 %v482, %v466
    %v707 = vpack.c.b16 %v483, %v467
    %v708 = vpack.c.b16 %v484, %v468
    %v709 = vpack.c.b16 %v485, %v469
    %v710 = vpack.c.b16 %v486, %v470
    %v711 = vpack.c.b16 %v487, %v471
    %v712 = vpack.c.b16 %v488, %v472
    %v713 = vpack.c.b16 %v489, %v473
    %v714 = vpack.c.b16 %v490, %v474
    %v715 = vpack.c.b16 %v491, %v475
    %v716 = vpack.c.b16 %v492, %v476
    %v717 = vpack.c.b16 %v493, %v477
    %v718 = vpack.c.b16 %v494, %v478
    %v719 = vpack.c.b16 %v511, %v495
    %v720 = vpack.c.b16 %v512, %v496
    %v721 = vpack.c.b16 %v513, %v497
    %v722 = vpack.c.b16 %v514, %v498
    %v723 = vpack.c.b16 %v515, %v499
    %v724 = vpack.c.b16 %v516, %v500
    %v725 = vpack.c.b16 %v517, %v501
    %v726 = vpack.c.b16 %v518, %v502
    %v727 = vpack.c.b16 %v519, %v503
    %v728 = vpack.c.b16 %v520, %v504
    %v729 = vpack.c.b16 %v521, %v505
    %v730 = vpack.c.b16 %v522, %v506
    %v731 = vpack.c.b16 %v523, %v507
    %v732 = vpack.c.b16 %v524, %v508
    %v733 = vpack.c.b16 %v525, %v509
    %v734 = vpack.c.b16 %v526, %v510
    %v735 = vpack.c.b16 %v543, %v527
    %v736 = vpack.c.b16 %v544, %v528
    %v737 = vpack.c.b16 %v545, %v529
    %v738 = vpack.c.b16 %v546, %v530
    %v739 = vpack.c.b16 %v547, %v531
    %v740 = vpack.c.b16 %v548, %v532
    %v741 = vpack.c.b16 %v549, %v533
    %v742 = vpack.c.b16 %v550, %v534
    %v743 = vpack.c.b16 %v551, %v535
    %v744 = vpack.c.b16 %v552, %v536
    %v745 = vpack.c.b16 %v553, %v537
    %v746 = vpack.c.b16 %v554, %v538
    %v747 = vpack.c.b16 %v555, %v539
    %v748 = vpack.c.b16 %v556, %v540
    %v749 = vpack.c.b16 %v557, %v541
    %v750 = vpack.c.b16 %v558, %v542
    %v751 = vpack.c.b16 %v575, %v559
    %v752 = vpack.c.b16 %v576, %v560
    %v753 = vpack.c.b16 %v577, %v561
    %v754 = vpack.c.b16 %v578, %v562
    %v755 = vpack.c.b16 %v579, %v563
    %v756 = vpack.c.b16 %v580, %v564
    %v757 = vpack.c.b16 %v581, %v565
    %v758 = vpack.c.b16 %v582, %v566
    %v759 = vpack.c.b16 %v583, %v567
    %v760 = vpack.c.b16 %v584, %v568
    %v761 = vpack.c.b16 %v585, %v569
    %v762 = vpack.c.b16 %v586, %v570
    %v763 = vpack.c.b16 %v587, %v571
    %v764 = vpack.c.b16 %v588, %v572
    %v765 = vpack.c.b16 %v589, %v573
    %v766 = vpack.c.b16 %v590, %v574
    %v767 = vpack.c.b16 %v607, %v591
    %v768 = vpack.c.b16 %v608, %v592
    %v769 = vpack.c.b16 %v609, %v593
    %v770 = vpack.c.b16 %v610, %v594
    %v771 = vpack.c.b16 %v611, %v595
    %v772 = vpack.c.b16 %v612, %v596
    %v773 = vpack.c.b16 %v613, %v597
    %v774 = vpack.c.b16 %v614, %v598
    %v775 = vpack.c.b16 %v615, %v599
    %v776 = vpack.c.b16 %v616, %v600
    %v777 = vpack.c.b16 %v617, %v601
    %v778 = vpack.c.b16 %v618, %v602
    %v779 = vpack.c.b16 %v619, %v603
    %v780 = vpack.c.b16 %v620, %v604
    %v781 = vpack.c.b16 %v621, %v605
    %v782 = vpack.c.b16 %v622, %v606
    %v783 = vpack.c.b16 %v639, %v623
    %v784 = vpack.c.b16 %v640, %v624
    %v785 = vpack.c.b16 %v641, %v625
    %v786 = vpack.c.b16 %v642, %v626
    %v787 = vpack.c.b16 %v643, %v627
    %v788 = vpack.c.b16 %v644, %v628
    %v789 = vpack.c.b16 %v645, %v629
    %v790 = vpack.c.b16 %v646, %v630
    %v791 = vpack.c.b16 %v647, %v631
    %v792 = vpack.c.b16 %v648, %v632
    %v793 = vpack.c.b16 %v649, %v633
    %v794 = vpack.c.b16 %v650, %v634
    %v795 = vpack.c.b16 %v651, %v635
    %v796 = vpack.c.b16 %v652, %v636
    %v797 = vpack.c.b16 %v653, %v637
    %v798 = vpack.c.b16 %v654, %v638
    %v799 = vpack.c.b16 %v671, %v655
    %v800 = vpack.c.b16 %v672, %v656
    %v801 = vpack.c.b16 %v673, %v657
    %v802 = vpack.c.b16 %v674, %v658
    %v803 = vpack.c.b16 %v675, %v659
    %v804 = vpack.c.b16 %v676, %v660
    %v805 = vpack.c.b16 %v677, %v661
    %v806 = vpack.c.b16 %v678, %v662
    %v807 = vpack.c.b16 %v679, %v663
    %v808 = vpack.c.b16 %v680, %v664
    %v809 = vpack.c.b16 %v681, %v665
    %v810 = vpack.c.b16 %v682, %v666
    %v811 = vpack.c.b16 %v683, %v667
    %v812 = vpack.c.b16 %v684, %v668
    %v813 = vpack.c.b16 %v685, %v669
    %v814 = vpack.c.b16 %v686, %v670
    %943 = vmatprep.subr.bf16.mxu0 %v688
    %944 = vmatpush1.bf16.msra.mxu0 %v687
    %945 = vmatprep.subr.bf16.mxu0 %v704
    %946 = vmatpush1.bf16.msra.mxu0 %v703
    %947 = vmatprep.subr.bf16.mxu0 %v720
    %948 = vmatpush1.bf16.msra.mxu0 %v719
    %949 = vmatprep.subr.bf16.mxu0 %v736
    %950 = vmatpush1.bf16.msra.mxu0 %v735
    %951 = vmatprep.subr.bf16.mxu0 %v752
    %952 = vmatpush1.bf16.msra.mxu0 %v751
    %953 = vmatprep.subr.bf16.mxu0 %v768
    %954 = vmatpush1.bf16.msra.mxu0 %v767
    %955 = vmatprep.subr.bf16.mxu0 %v784
    %956 = vmatpush1.bf16.msra.mxu0 %v783
    %957 = vmatprep.subr.bf16.mxu0 %v800
    %958 = vmatpush1.bf16.msra.mxu0 %v799
    %959 = vmatprep.subr.bf16.mxu0 0
    %960 = vmatpush1.bf16.msra.mxu0 0
    %961 = vmatprep.subr.bf16.mxu0 0
    %962 = vmatpush1.bf16.msra.mxu0 0
    %963 = vmatprep.subr.bf16.mxu0 0
    %964 = vmatpush1.bf16.msra.mxu0 0
    %965 = vmatprep.subr.bf16.mxu0 0
    %966 = vmatpush1.bf16.msra.mxu0 0
    %967 = vmatprep.subr.bf16.mxu0 0
    %968 = vmatpush1.bf16.msra.mxu0 0
    %969 = vmatprep.subr.bf16.mxu0 0
    %970 = vmatpush1.bf16.msra.mxu0 0
    %971 = vmatprep.subr.bf16.mxu0 0
    %972 = vmatpush1.bf16.msra.mxu0 0
    %973 = vmatprep.subr.bf16.mxu0 0
    %974 = vmatpush1.bf16.msra.mxu0 0
    %975 = vmatprep.mubr.bf16.mxu0 0
    %976 = vmatmul.mubr.bf16.gmra.mrb[0].mxu0 %v90
    %v977 = vpop.f32.mrb[0].mxu0
    %v978 = vadd.f32 %v226, %v977
    %v979 = vpop.f32.mrb[0].mxu0
    %v980 = vadd.f32 %v230, %v979
    %v981 = vpop.f32.mrb[0].mxu0
    %v982 = vpop.f32.mrb[0].mxu0
    %983 = vdwg.mxu0
    %984 = vmatprep.subr.bf16.mxu0 %v690
    %985 = vmatpush1.bf16.msra.mxu0 %v689
    %986 = vmatprep.subr.bf16.mxu0 %v706
    %987 = vmatpush1.bf16.msra.mxu0 %v705
    %988 = vmatprep.subr.bf16.mxu0 %v722
    %989 = vmatpush1.bf16.msra.mxu0 %v721
    %990 = vmatprep.subr.bf16.mxu0 %v738
    %991 = vmatpush1.bf16.msra.mxu0 %v737
    %992 = vmatprep.subr.bf16.mxu0 %v754
    %993 = vmatpush1.bf16.msra.mxu0 %v753
    %994 = vmatprep.subr.bf16.mxu0 %v770
    %995 = vmatpush1.bf16.msra.mxu0 %v769
    %996 = vmatprep.subr.bf16.mxu0 %v786
    %997 = vmatpush1.bf16.msra.mxu0 %v785
    %998 = vmatprep.subr.bf16.mxu0 %v802
    %999 = vmatpush1.bf16.msra.mxu0 %v801
    %1000 = vmatprep.subr.bf16.mxu0 0
    %1001 = vmatpush1.bf16.msra.mxu0 0
    %1002 = vmatprep.subr.bf16.mxu0 0
    %1003 = vmatpush1.bf16.msra.mxu0 0
    %1004 = vmatprep.subr.bf16.mxu0 0
    %1005 = vmatpush1.bf16.msra.mxu0 0
    %1006 = vmatprep.subr.bf16.mxu0 0
    %1007 = vmatpush1.bf16.msra.mxu0 0
    %1008 = vmatprep.subr.bf16.mxu0 0
    %1009 = vmatpush1.bf16.msra.mxu0 0
    %1010 = vmatprep.subr.bf16.mxu0 0
    %1011 = vmatpush1.bf16.msra.mxu0 0
    %1012 = vmatprep.subr.bf16.mxu0 0
    %1013 = vmatpush1.bf16.msra.mxu0 0
    %1014 = vmatprep.subr.bf16.mxu0 0
    %1015 = vmatpush1.bf16.msra.mxu0 0
    %1016 = vmatprep.mubr.bf16.mxu0 0
    %1017 = vmatmul.mubr.bf16.gmra.mrb[0].mxu0 %v90
    %v1018 = vpop.f32.mrb[0].mxu0
    %v1019 = vadd.f32 %v234, %v1018
    %v1020 = vpop.f32.mrb[0].mxu0
    %v1021 = vadd.f32 %v238, %v1020
    %v1022 = vpop.f32.mrb[0].mxu0
    %v1023 = vpop.f32.mrb[0].mxu0
    %1024 = vdwg.mxu0
    %1025 = vmatprep.subr.bf16.mxu0 %v692
    %1026 = vmatpush1.bf16.msra.mxu0 %v691
    %1027 = vmatprep.subr.bf16.mxu0 %v708
    %1028 = vmatpush1.bf16.msra.mxu0 %v707
    %1029 = vmatprep.subr.bf16.mxu0 %v724
    %1030 = vmatpush1.bf16.msra.mxu0 %v723
    %1031 = vmatprep.subr.bf16.mxu0 %v740
    %1032 = vmatpush1.bf16.msra.mxu0 %v739
    %1033 = vmatprep.subr.bf16.mxu0 %v756
    %1034 = vmatpush1.bf16.msra.mxu0 %v755
    %1035 = vmatprep.subr.bf16.mxu0 %v772
    %1036 = vmatpush1.bf16.msra.mxu0 %v771
    %1037 = vmatprep.subr.bf16.mxu0 %v788
    %1038 = vmatpush1.bf16.msra.mxu0 %v787
    %1039 = vmatprep.subr.bf16.mxu0 %v804
    %1040 = vmatpush1.bf16.msra.mxu0 %v803
    %1041 = vmatprep.subr.bf16.mxu0 0
    %1042 = vmatpush1.bf16.msra.mxu0 0
    %1043 = vmatprep.subr.bf16.mxu0 0
    %1044 = vmatpush1.bf16.msra.mxu0 0
    %1045 = vmatprep.subr.bf16.mxu0 0
    %1046 = vmatpush1.bf16.msra.mxu0 0
    %1047 = vmatprep.subr.bf16.mxu0 0
    %1048 = vmatpush1.bf16.msra.mxu0 0
    %1049 = vmatprep.subr.bf16.mxu0 0
    %1050 = vmatpush1.bf16.msra.mxu0 0
    %1051 = vmatprep.subr.bf16.mxu0 0
    %1052 = vmatpush1.bf16.msra.mxu0 0
    %1053 = vmatprep.subr.bf16.mxu0 0
    %1054 = vmatpush1.bf16.msra.mxu0 0
    %1055 = vmatprep.subr.bf16.mxu0 0
    %1056 = vmatpush1.bf16.msra.mxu0 0
    %1057 = vmatprep.mubr.bf16.mxu0 0
    %1058 = vmatmul.mubr.bf16.gmra.mrb[0].mxu0 %v90
    %v1059 = vpop.f32.mrb[0].mxu0
    %v1060 = vadd.f32 %v242, %v1059
    %v1061 = vpop.f32.mrb[0].mxu0
    %v1062 = vadd.f32 %v246, %v1061
    %v1063 = vpop.f32.mrb[0].mxu0
    %v1064 = vpop.f32.mrb[0].mxu0
    %1065 = vdwg.mxu0
    %1066 = vmatprep.subr.bf16.mxu0 %v694
    %1067 = vmatpush1.bf16.msra.mxu0 %v693
    %1068 = vmatprep.subr.bf16.mxu0 %v710
    %1069 = vmatpush1.bf16.msra.mxu0 %v709
    %1070 = vmatprep.subr.bf16.mxu0 %v726
    %1071 = vmatpush1.bf16.msra.mxu0 %v725
    %1072 = vmatprep.subr.bf16.mxu0 %v742
    %1073 = vmatpush1.bf16.msra.mxu0 %v741
    %1074 = vmatprep.subr.bf16.mxu0 %v758
    %1075 = vmatpush1.bf16.msra.mxu0 %v757
    %1076 = vmatprep.subr.bf16.mxu0 %v774
    %1077 = vmatpush1.bf16.msra.mxu0 %v773
    %1078 = vmatprep.subr.bf16.mxu0 %v790
    %1079 = vmatpush1.bf16.msra.mxu0 %v789
    %1080 = vmatprep.subr.bf16.mxu0 %v806
    %1081 = vmatpush1.bf16.msra.mxu0 %v805
    %1082 = vmatprep.subr.bf16.mxu0 0
    %1083 = vmatpush1.bf16.msra.mxu0 0
    %1084 = vmatprep.subr.bf16.mxu0 0
    %1085 = vmatpush1.bf16.msra.mxu0 0
    %1086 = vmatprep.subr.bf16.mxu0 0
    %1087 = vmatpush1.bf16.msra.mxu0 0
    %1088 = vmatprep.subr.bf16.mxu0 0
    %1089 = vmatpush1.bf16.msra.mxu0 0
    %1090 = vmatprep.subr.bf16.mxu0 0
    %1091 = vmatpush1.bf16.msra.mxu0 0
    %1092 = vmatprep.subr.bf16.mxu0 0
    %1093 = vmatpush1.bf16.msra.mxu0 0
    %1094 = vmatprep.subr.bf16.mxu0 0
    %1095 = vmatpush1.bf16.msra.mxu0 0
    %1096 = vmatprep.subr.bf16.mxu0 0
    %1097 = vmatpush1.bf16.msra.mxu0 0
    %1098 = vmatprep.mubr.bf16.mxu0 0
    %1099 = vmatmul.mubr.bf16.gmra.mrb[0].mxu0 %v90
    %v1100 = vpop.f32.mrb[0].mxu0
    %v1101 = vadd.f32 %v250, %v1100
    %v1102 = vpop.f32.mrb[0].mxu0
    %v1103 = vadd.f32 %v254, %v1102
    %v1104 = vpop.f32.mrb[0].mxu0
    %v1105 = vpop.f32.mrb[0].mxu0
    %1106 = vdwg.mxu0
    %1107 = vmatprep.subr.bf16.mxu0 %v696
    %1108 = vmatpush1.bf16.msra.mxu0 %v695
    %1109 = vmatprep.subr.bf16.mxu0 %v712
    %1110 = vmatpush1.bf16.msra.mxu0 %v711
    %1111 = vmatprep.subr.bf16.mxu0 %v728
    %1112 = vmatpush1.bf16.msra.mxu0 %v727
    %1113 = vmatprep.subr.bf16.mxu0 %v744
    %1114 = vmatpush1.bf16.msra.mxu0 %v743
    %1115 = vmatprep.subr.bf16.mxu0 %v760
    %1116 = vmatpush1.bf16.msra.mxu0 %v759
    %1117 = vmatprep.subr.bf16.mxu0 %v776
    %1118 = vmatpush1.bf16.msra.mxu0 %v775
    %1119 = vmatprep.subr.bf16.mxu0 %v792
    %1120 = vmatpush1.bf16.msra.mxu0 %v791
    %1121 = vmatprep.subr.bf16.mxu0 %v808
    %1122 = vmatpush1.bf16.msra.mxu0 %v807
    %1123 = vmatprep.subr.bf16.mxu0 0
    %1124 = vmatpush1.bf16.msra.mxu0 0
    %1125 = vmatprep.subr.bf16.mxu0 0
    %1126 = vmatpush1.bf16.msra.mxu0 0
    %1127 = vmatprep.subr.bf16.mxu0 0
    %1128 = vmatpush1.bf16.msra.mxu0 0
    %1129 = vmatprep.subr.bf16.mxu0 0
    %1130 = vmatpush1.bf16.msra.mxu0 0
    %1131 = vmatprep.subr.bf16.mxu0 0
    %1132 = vmatpush1.bf16.msra.mxu0 0
    %1133 = vmatprep.subr.bf16.mxu0 0
    %1134 = vmatpush1.bf16.msra.mxu0 0
    %1135 = vmatprep.subr.bf16.mxu0 0
    %1136 = vmatpush1.bf16.msra.mxu0 0
    %1137 = vmatprep.subr.bf16.mxu0 0
    %1138 = vmatpush1.bf16.msra.mxu0 0
    %1139 = vmatprep.mubr.bf16.mxu0 0
    %1140 = vmatmul.mubr.bf16.gmra.mrb[0].mxu0 %v90
    %v1141 = vpop.f32.mrb[0].mxu0
    %v1142 = vadd.f32 %v258, %v1141
    %v1143 = vpop.f32.mrb[0].mxu0
    %v1144 = vadd.f32 %v262, %v1143
    %v1145 = vpop.f32.mrb[0].mxu0
    %v1146 = vpop.f32.mrb[0].mxu0
    %1147 = vdwg.mxu0
    %1148 = vmatprep.subr.bf16.mxu0 %v698
    %1149 = vmatpush1.bf16.msra.mxu0 %v697
    %1150 = vmatprep.subr.bf16.mxu0 %v714
    %1151 = vmatpush1.bf16.msra.mxu0 %v713
    %1152 = vmatprep.subr.bf16.mxu0 %v730
    %1153 = vmatpush1.bf16.msra.mxu0 %v729
    %1154 = vmatprep.subr.bf16.mxu0 %v746
    %1155 = vmatpush1.bf16.msra.mxu0 %v745
    %1156 = vmatprep.subr.bf16.mxu0 %v762
    %1157 = vmatpush1.bf16.msra.mxu0 %v761
    %1158 = vmatprep.subr.bf16.mxu0 %v778
    %1159 = vmatpush1.bf16.msra.mxu0 %v777
    %1160 = vmatprep.subr.bf16.mxu0 %v794
    %1161 = vmatpush1.bf16.msra.mxu0 %v793
    %1162 = vmatprep.subr.bf16.mxu0 %v810
    %1163 = vmatpush1.bf16.msra.mxu0 %v809
    %1164 = vmatprep.subr.bf16.mxu0 0
    %1165 = vmatpush1.bf16.msra.mxu0 0
    %1166 = vmatprep.subr.bf16.mxu0 0
    %1167 = vmatpush1.bf16.msra.mxu0 0
    %1168 = vmatprep.subr.bf16.mxu0 0
    %1169 = vmatpush1.bf16.msra.mxu0 0
    %1170 = vmatprep.subr.bf16.mxu0 0
    %1171 = vmatpush1.bf16.msra.mxu0 0
    %1172 = vmatprep.subr.bf16.mxu0 0
    %1173 = vmatpush1.bf16.msra.mxu0 0
    %1174 = vmatprep.subr.bf16.mxu0 0
    %1175 = vmatpush1.bf16.msra.mxu0 0
    %1176 = vmatprep.subr.bf16.mxu0 0
    %1177 = vmatpush1.bf16.msra.mxu0 0
    %1178 = vmatprep.subr.bf16.mxu0 0
    %1179 = vmatpush1.bf16.msra.mxu0 0
    %1180 = vmatprep.mubr.bf16.mxu0 0
    %1181 = vmatmul.mubr.bf16.gmra.mrb[0].mxu0 %v90
    %v1182 = vpop.f32.mrb[0].mxu0
    %v1183 = vadd.f32 %v266, %v1182
    %v1184 = vpop.f32.mrb[0].mxu0
    %v1185 = vadd.f32 %v270, %v1184
    %v1186 = vpop.f32.mrb[0].mxu0
    %v1187 = vpop.f32.mrb[0].mxu0
    %1188 = vdwg.mxu0
    %1189 = vmatprep.subr.bf16.mxu0 %v700
    %1190 = vmatpush1.bf16.msra.mxu0 %v699
    %1191 = vmatprep.subr.bf16.mxu0 %v716
    %1192 = vmatpush1.bf16.msra.mxu0 %v715
    %1193 = vmatprep.subr.bf16.mxu0 %v732
    %1194 = vmatpush1.bf16.msra.mxu0 %v731
    %1195 = vmatprep.subr.bf16.mxu0 %v748
    %1196 = vmatpush1.bf16.msra.mxu0 %v747
    %1197 = vmatprep.subr.bf16.mxu0 %v764
    %1198 = vmatpush1.bf16.msra.mxu0 %v763
    %1199 = vmatprep.subr.bf16.mxu0 %v780
    %1200 = vmatpush1.bf16.msra.mxu0 %v779
    %1201 = vmatprep.subr.bf16.mxu0 %v796
    %1202 = vmatpush1.bf16.msra.mxu0 %v795
    %1203 = vmatprep.subr.bf16.mxu0 %v812
    %1204 = vmatpush1.bf16.msra.mxu0 %v811
    %1205 = vmatprep.subr.bf16.mxu0 0
    %1206 = vmatpush1.bf16.msra.mxu0 0
    %1207 = vmatprep.subr.bf16.mxu0 0
    %1208 = vmatpush1.bf16.msra.mxu0 0
    %1209 = vmatprep.subr.bf16.mxu0 0
    %1210 = vmatpush1.bf16.msra.mxu0 0
    %1211 = vmatprep.subr.bf16.mxu0 0
    %1212 = vmatpush1.bf16.msra.mxu0 0
    %1213 = vmatprep.subr.bf16.mxu0 0
    %1214 = vmatpush1.bf16.msra.mxu0 0
    %1215 = vmatprep.subr.bf16.mxu0 0
    %1216 = vmatpush1.bf16.msra.mxu0 0
    %1217 = vmatprep.subr.bf16.mxu0 0
    %1218 = vmatpush1.bf16.msra.mxu0 0
    %1219 = vmatprep.subr.bf16.mxu0 0
    %1220 = vmatpush1.bf16.msra.mxu0 0
    %1221 = vmatprep.mubr.bf16.mxu0 0
    %1222 = vmatmul.mubr.bf16.gmra.mrb[0].mxu0 %v90
    %v1223 = vpop.f32.mrb[0].mxu0
    %v1224 = vadd.f32 %v274, %v1223
    %v1225 = vpop.f32.mrb[0].mxu0
    %v1226 = vadd.f32 %v278, %v1225
    %v1227 = vpop.f32.mrb[0].mxu0
    %v1228 = vpop.f32.mrb[0].mxu0
    %1229 = vdwg.mxu0
    %1230 = vmatprep.subr.bf16.mxu0 %v702
    %1231 = vmatpush1.bf16.msra.mxu0 %v701
    %1232 = vmatprep.subr.bf16.mxu0 %v718
    %1233 = vmatpush1.bf16.msra.mxu0 %v717
    %1234 = vmatprep.subr.bf16.mxu0 %v734
    %1235 = vmatpush1.bf16.msra.mxu0 %v733
    %1236 = vmatprep.subr.bf16.mxu0 %v750
    %1237 = vmatpush1.bf16.msra.mxu0 %v749
    %1238 = vmatprep.subr.bf16.mxu0 %v766
    %1239 = vmatpush1.bf16.msra.mxu0 %v765
    %1240 = vmatprep.subr.bf16.mxu0 %v782
    %1241 = vmatpush1.bf16.msra.mxu0 %v781
    %1242 = vmatprep.subr.bf16.mxu0 %v798
    %1243 = vmatpush1.bf16.msra.mxu0 %v797
    %1244 = vmatprep.subr.bf16.mxu0 %v814
    %1245 = vmatpush1.bf16.msra.mxu0 %v813
    %1246 = vmatprep.subr.bf16.mxu0 0
    %1247 = vmatpush1.bf16.msra.mxu0 0
    %1248 = vmatprep.subr.bf16.mxu0 0
    %1249 = vmatpush1.bf16.msra.mxu0 0
    %1250 = vmatprep.subr.bf16.mxu0 0
    %1251 = vmatpush1.bf16.msra.mxu0 0
    %1252 = vmatprep.subr.bf16.mxu0 0
    %1253 = vmatpush1.bf16.msra.mxu0 0
    %1254 = vmatprep.subr.bf16.mxu0 0
    %1255 = vmatpush1.bf16.msra.mxu0 0
    %1256 = vmatprep.subr.bf16.mxu0 0
    %1257 = vmatpush1.bf16.msra.mxu0 0
    %1258 = vmatprep.subr.bf16.mxu0 0
    %1259 = vmatpush1.bf16.msra.mxu0 0
    %1260 = vmatprep.subr.bf16.mxu0 0
    %1261 = vmatpush1.bf16.msra.mxu0 0
    %1262 = vmatprep.mubr.bf16.mxu0 0
    %1263 = vmatmul.mubr.bf16.gmra.mrb[0].mxu0 %v90
    %v1264 = vpop.f32.mrb[0].mxu0
    %v1265 = vadd.f32 %v282, %v1264
    %v1266 = vpop.f32.mrb[0].mxu0
    %v1267 = vadd.f32 %v286, %v1266
    %v1268 = vpop.f32.mrb[0].mxu0
    %v1269 = vpop.f32.mrb[0].mxu0
    %1270 = vdwg.mxu0
    %vm1271 = vcmp.gt.f32.partialorder %v978, 0.0
    %vm1272 = vcmp.gt.f32.partialorder %v980, 0.0
    %vm1273 = vcmp.gt.f32.partialorder %v1019, 0.0
    %vm1274 = vcmp.gt.f32.partialorder %v1021, 0.0
    %vm1275 = vcmp.gt.f32.partialorder %v1060, 0.0
    %vm1276 = vcmp.gt.f32.partialorder %v1062, 0.0
    %vm1277 = vcmp.gt.f32.partialorder %v1101, 0.0
    %vm1278 = vcmp.gt.f32.partialorder %v1103, 0.0
    %vm1279 = vcmp.gt.f32.partialorder %v1142, 0.0
    %vm1280 = vcmp.gt.f32.partialorder %v1144, 0.0
    %vm1281 = vcmp.gt.f32.partialorder %v1183, 0.0
    %vm1282 = vcmp.gt.f32.partialorder %v1185, 0.0
    %vm1283 = vcmp.gt.f32.partialorder %v1224, 0.0
    %vm1284 = vcmp.gt.f32.partialorder %v1226, 0.0
    %vm1285 = vcmp.gt.f32.partialorder %v1265, 0.0
    %vm1286 = vcmp.gt.f32.partialorder %v1267, 0.0
    %v1287 = vmul.f32 %v978, 0.15
    %v1288 = vmul.f32 %v980, 0.15
    %v1289 = vmul.f32 %v1019, 0.15
    %v1290 = vmul.f32 %v1021, 0.15
    %v1291 = vmul.f32 %v1060, 0.15
    %v1292 = vmul.f32 %v1062, 0.15
    %v1293 = vmul.f32 %v1101, 0.15
    %v1294 = vmul.f32 %v1103, 0.15
    %v1295 = vmul.f32 %v1142, 0.15
    %v1296 = vmul.f32 %v1144, 0.15
    %v1297 = vmul.f32 %v1183, 0.15
    %v1298 = vmul.f32 %v1185, 0.15
    %v1299 = vmul.f32 %v1224, 0.15
    %v1300 = vmul.f32 %v1226, 0.15
    %v1301 = vmul.f32 %v1265, 0.15
    %v1302 = vmul.f32 %v1267, 0.15
    %v1303 = vsel %vm1271, %v978, %v1287
    %v1304 = vsel %vm1272, %v980, %v1288
    %v1305 = vsel %vm1273, %v1019, %v1289
    %v1306 = vsel %vm1274, %v1021, %v1290
    %v1307 = vsel %vm1275, %v1060, %v1291
    %v1308 = vsel %vm1276, %v1062, %v1292
    %v1309 = vsel %vm1277, %v1101, %v1293
    %v1310 = vsel %vm1278, %v1103, %v1294
    %v1311 = vsel %vm1279, %v1142, %v1295
    %v1312 = vsel %vm1280, %v1144, %v1296
    %v1313 = vsel %vm1281, %v1183, %v1297
    %v1314 = vsel %vm1282, %v1185, %v1298
    %v1315 = vsel %vm1283, %v1224, %v1299
    %v1316 = vsel %vm1284, %v1226, %v1300
    %v1317 = vsel %vm1285, %v1265, %v1301
    %v1318 = vsel %vm1286, %v1267, %v1302
    %v1319 = vlaneseq
    %vm1320 = vcmp.ge.s32.totalorder %v1319, 0
    %vm1321 = vcmp.lt.s32.totalorder %v1319, 768
    %vm1322 = vmand %vm1320, %vm1321
    %1323 = vst.msk [vmem:[#allocation2] ss:$8 sm:$0xf] %vm1322, 0.0
    %1324 = vst.msk [vmem:[#allocation2] ss:$8 sm:$0x30] %vm1322, 0.0
    %s1325 = scalar_lea.vmem [#allocation2], 48
    %1326 = vst.msk [vmem:[%s1325] ss:$8 sm:$0xf] %vm1322, 0.0
    %1327 = vst.msk [vmem:[%s1325] ss:$8 sm:$0x30] %vm1322, 0.0
    %s1328 = scalar_lea.vmem [#allocation2], 96
    %1329 = vst.msk [vmem:[%s1328] ss:$8 sm:$0xf] %vm1322, 0.0
    %1330 = vst.msk [vmem:[%s1328] ss:$8 sm:$0x30] %vm1322, 0.0
    %s1331 = scalar_lea.vmem [#allocation2], 144
    %1332 = vst.msk [vmem:[%s1331] ss:$8 sm:$0xf] %vm1322, 0.0
    %1333 = vst.msk [vmem:[%s1331] ss:$8 sm:$0x30] %vm1322, 0.0
    %s1334 = scalar_lea.vmem [#allocation2], 192
    %1335 = vst.msk [vmem:[%s1334] ss:$8 sm:$0xf] %vm1322, 0.0
    %1336 = vst.msk [vmem:[%s1334] ss:$8 sm:$0x30] %vm1322, 0.0
    %s1337 = scalar_lea.vmem [#allocation2], 240
    %1338 = vst.msk [vmem:[%s1337] ss:$8 sm:$0xf] %vm1322, 0.0
    %1339 = vst.msk [vmem:[%s1337] ss:$8 sm:$0x30] %vm1322, 0.0
    %s1340 = scalar_lea.vmem [#allocation2], 288
    %1341 = vst.msk [vmem:[%s1340] ss:$8 sm:$0xf] %vm1322, 0.0
    %1342 = vst.msk [vmem:[%s1340] ss:$8 sm:$0x30] %vm1322, 0.0
    %s1343 = scalar_lea.vmem [#allocation2], 336
    %1344 = vst.msk [vmem:[%s1343] ss:$8 sm:$0xf] %vm1322, 0.0
    %1345 = vst.msk [vmem:[%s1343] ss:$8 sm:$0x30] %vm1322, 0.0
    %s1346 = scalar_lea.vmem [#allocation2], 5
    %1347 = vst.msk [vmem:[%s1346] ss:$8 sm:$0xf] %vm1322, 0.0
    %1348 = vst.msk [vmem:[%s1346] ss:$8 sm:$0x30] %vm1322, 0.0
    %s1349 = scalar_lea.vmem [#allocation2], 53
    %1350 = vst.msk [vmem:[%s1349] ss:$8 sm:$0xf] %vm1322, 0.0
    %1351 = vst.msk [vmem:[%s1349] ss:$8 sm:$0x30] %vm1322, 0.0
    %s1352 = scalar_lea.vmem [#allocation2], 101
    %1353 = vst.msk [vmem:[%s1352] ss:$8 sm:$0xf] %vm1322, 0.0
    %1354 = vst.msk [vmem:[%s1352] ss:$8 sm:$0x30] %vm1322, 0.0
    %s1355 = scalar_lea.vmem [#allocation2], 149
    %1356 = vst.msk [vmem:[%s1355] ss:$8 sm:$0xf] %vm1322, 0.0
    %1357 = vst.msk [vmem:[%s1355] ss:$8 sm:$0x30] %vm1322, 0.0
    %s1358 = scalar_lea.vmem [#allocation2], 197
    %1359 = vst.msk [vmem:[%s1358] ss:$8 sm:$0xf] %vm1322, 0.0
    %1360 = vst.msk [vmem:[%s1358] ss:$8 sm:$0x30] %vm1322, 0.0
    %s1361 = scalar_lea.vmem [#allocation2], 245
    %1362 = vst.msk [vmem:[%s1361] ss:$8 sm:$0xf] %vm1322, 0.0
    %1363 = vst.msk [vmem:[%s1361] ss:$8 sm:$0x30] %vm1322, 0.0
    %s1364 = scalar_lea.vmem [#allocation2], 293
    %1365 = vst.msk [vmem:[%s1364] ss:$8 sm:$0xf] %vm1322, 0.0
    %1366 = vst.msk [vmem:[%s1364] ss:$8 sm:$0x30] %vm1322, 0.0
    %s1367 = scalar_lea.vmem [#allocation2], 341
    %1368 = vst.msk [vmem:[%s1367] ss:$8 sm:$0xf] %vm1322, 0.0
    %1369 = vst.msk [vmem:[%s1367] ss:$8 sm:$0x30] %vm1322, 0.0
    %1370 = vst [vmem:[#allocation2] sm:$0x1e] 0.0
    %1371 = vst [vmem:[#allocation2 + $0x30] sm:$0x1e] 0.0
    %1372 = vst [vmem:[#allocation2 + $0x60] sm:$0x1e] 0.0
    %1373 = vst [vmem:[#allocation2 + $0x90] sm:$0x1e] 0.0
    %1374 = vst [vmem:[#allocation2 + $0xc0] sm:$0x1e] 0.0
    %1375 = vst [vmem:[#allocation2 + $0xf0] sm:$0x1e] 0.0
    %1376 = vst [vmem:[#allocation2 + $0x120] sm:$0x1e] 0.0
    %1377 = vst [vmem:[#allocation2 + $0x150] sm:$0x1e] 0.0
    %1378 = vst [vmem:[#allocation2 + $0x28] sm:$0x1e] 0.0
    %1379 = vst [vmem:[#allocation2 + $0x58] sm:$0x1e] 0.0
    %1380 = vst [vmem:[#allocation2 + $0x88] sm:$0x1e] 0.0
    %1381 = vst [vmem:[#allocation2 + $0xb8] sm:$0x1e] 0.0
    %1382 = vst [vmem:[#allocation2 + $0xe8] sm:$0x1e] 0.0
    %1383 = vst [vmem:[#allocation2 + $0x118] sm:$0x1e] 0.0
    %1384 = vst [vmem:[#allocation2 + $0x148] sm:$0x1e] 0.0
    %1385 = vst [vmem:[#allocation2 + $0x178] sm:$0x1e] 0.0
    %v1390 = vcombine.low %v1303, %v1304
    %v1391 = vcombine.high %v1303, %v1304
    %v1392 = vcombine.low %v1305, %v1306
    %v1393 = vcombine.high %v1305, %v1306
    %v1395 = vunpack.c.l.s4 1966171168
    %v1396 = vunpack.c.0.s8 %v1395
    %v1397 = vlaneseq
    %v1398 = vshrl.u32 %v1397, 7
    %v1399 = vsub.s32 %v1396, %v1398
    %v1400 = vrot.slane %v1390, %v1399
    %v1402 = vunpack.c.l.s4 1966171168
    %v1403 = vunpack.c.0.s8 %v1402
    %v1404 = vlaneseq
    %v1405 = vshrl.u32 %v1404, 7
    %v1406 = vsub.s32 %v1403, %v1405
    %v1407 = vrot.slane %v1391, %v1406
    %v1409 = vunpack.c.l.s4 1966171168
    %v1410 = vunpack.c.0.s8 %v1409
    %v1411 = vlaneseq
    %v1412 = vshrl.u32 %v1411, 7
    %v1413 = vsub.s32 %v1410, %v1412
    %v1414 = vrot.slane %v1392, %v1413
    %v1416 = vunpack.c.l.s4 1966171168
    %v1417 = vunpack.c.0.s8 %v1416
    %v1418 = vlaneseq
    %v1419 = vshrl.u32 %v1418, 7
    %v1420 = vsub.s32 %v1417, %v1419
    %v1421 = vrot.slane %v1393, %v1420
    %v1422 = vcombine.low %v1400, %v1414
    %v1423 = vcombine.high %v1400, %v1414
    %v1424 = vcombine.low %v1407, %v1421
    %v1425 = vcombine.high %v1407, %v1421
    %v1427 = vunpack.c.l.s4 1966171168
    %v1428 = vunpack.c.0.s8 %v1427
    %v1429 = vlaneseq
    %v1430 = vshrl.u32 %v1429, 7
    %v1431 = vsub.s32 %v1428, %v1430
    %v1432 = vrot.slane %v1422, %v1431
    %v1434 = vunpack.c.l.s4 1966171168
    %v1435 = vunpack.c.0.s8 %v1434
    %v1436 = vlaneseq
    %v1437 = vshrl.u32 %v1436, 7
    %v1438 = vsub.s32 %v1435, %v1437
    %v1439 = vrot.slane %v1424, %v1438
    %v1441 = vunpack.c.l.s4 1966171168
    %v1442 = vunpack.c.0.s8 %v1441
    %v1443 = vlaneseq
    %v1444 = vshrl.u32 %v1443, 7
    %v1445 = vsub.s32 %v1442, %v1444
    %v1446 = vrot.slane %v1423, %v1445
    %v1448 = vunpack.c.l.s4 1966171168
    %v1449 = vunpack.c.0.s8 %v1448
    %v1450 = vlaneseq
    %v1451 = vshrl.u32 %v1450, 7
    %v1452 = vsub.s32 %v1449, %v1451
    %v1453 = vrot.slane %v1425, %v1452
    %v1454 = vcombine.high %v1432, %v1432
    %v1455 = vcombine.high %v1439, %v1439
    %v1456 = vcombine.high %v1446, %v1446
    %v1457 = vcombine.high %v1453, %v1453
    %vm1466 = vcmp.lt.s32.totalorder %v1319, 512
    %vm1467 = vmand %vm1320, %vm1466
    %s1468 = scalar_lea.vmem [#allocation2], 9
    %1469 = vst.msk [vmem:[%s1468] ss:$8 sm:$0xf] %vm1467, %v1432
    %1470 = vst.msk [vmem:[%s1468] ss:$8 sm:$0x0] %vm1467, %v1432
    %s1471 = scalar_lea.vmem [#allocation2], 57
    %1472 = vst.msk [vmem:[%s1471] ss:$8 sm:$0xf] %vm1467, %v1446
    %1473 = vst.msk [vmem:[%s1471] ss:$8 sm:$0x0] %vm1467, %v1446
    %s1474 = scalar_lea.vmem [#allocation2], 105
    %1475 = vst.msk [vmem:[%s1474] ss:$8 sm:$0xf] %vm1467, %v1454
    %1476 = vst.msk [vmem:[%s1474] ss:$8 sm:$0x0] %vm1467, %v1454
    %s1477 = scalar_lea.vmem [#allocation2], 153
    %1478 = vst.msk [vmem:[%s1477] ss:$8 sm:$0xf] %vm1467, %v1456
    %1479 = vst.msk [vmem:[%s1477] ss:$8 sm:$0x0] %vm1467, %v1456
    %s1480 = scalar_lea.vmem [#allocation2], 201
    %1481 = vst.msk [vmem:[%s1480] ss:$8 sm:$0xf] %vm1467, %v1439
    %1482 = vst.msk [vmem:[%s1480] ss:$8 sm:$0x0] %vm1467, %v1439
    %s1483 = scalar_lea.vmem [#allocation2], 249
    %1484 = vst.msk [vmem:[%s1483] ss:$8 sm:$0xf] %vm1467, %v1453
    %1485 = vst.msk [vmem:[%s1483] ss:$8 sm:$0x0] %vm1467, %v1453
    %s1486 = scalar_lea.vmem [#allocation2], 297
    %1487 = vst.msk [vmem:[%s1486] ss:$8 sm:$0xf] %vm1467, %v1455
    %1488 = vst.msk [vmem:[%s1486] ss:$8 sm:$0x0] %vm1467, %v1455
    %s1489 = scalar_lea.vmem [#allocation2], 345
    %1490 = vst.msk [vmem:[%s1489] ss:$8 sm:$0xf] %vm1467, %v1457
    %1491 = vst.msk [vmem:[%s1489] ss:$8 sm:$0x0] %vm1467, %v1457
    %v1496 = vcombine.low %v1307, %v1308
    %v1497 = vcombine.high %v1307, %v1308
    %v1498 = vcombine.low %v1309, %v1310
    %v1499 = vcombine.high %v1309, %v1310
    %v1501 = vunpack.c.l.s4 1966171168
    %v1502 = vunpack.c.0.s8 %v1501
    %v1503 = vlaneseq
    %v1504 = vshrl.u32 %v1503, 7
    %v1505 = vsub.s32 %v1502, %v1504
    %v1506 = vrot.slane %v1496, %v1505
    %v1508 = vunpack.c.l.s4 1966171168
    %v1509 = vunpack.c.0.s8 %v1508
    %v1510 = vlaneseq
    %v1511 = vshrl.u32 %v1510, 7
    %v1512 = vsub.s32 %v1509, %v1511
    %v1513 = vrot.slane %v1497, %v1512
    %v1515 = vunpack.c.l.s4 1966171168
    %v1516 = vunpack.c.0.s8 %v1515
    %v1517 = vlaneseq
    %v1518 = vshrl.u32 %v1517, 7
    %v1519 = vsub.s32 %v1516, %v1518
    %v1520 = vrot.slane %v1498, %v1519
    %v1522 = vunpack.c.l.s4 1966171168
    %v1523 = vunpack.c.0.s8 %v1522
    %v1524 = vlaneseq
    %v1525 = vshrl.u32 %v1524, 7
    %v1526 = vsub.s32 %v1523, %v1525
    %v1527 = vrot.slane %v1499, %v1526
    %v1528 = vcombine.low %v1506, %v1520
    %v1529 = vcombine.high %v1506, %v1520
    %v1530 = vcombine.low %v1513, %v1527
    %v1531 = vcombine.high %v1513, %v1527
    %v1533 = vunpack.c.l.s4 1966171168
    %v1534 = vunpack.c.0.s8 %v1533
    %v1535 = vlaneseq
    %v1536 = vshrl.u32 %v1535, 7
    %v1537 = vsub.s32 %v1534, %v1536
    %v1538 = vrot.slane %v1528, %v1537
    %v1540 = vunpack.c.l.s4 1966171168
    %v1541 = vunpack.c.0.s8 %v1540
    %v1542 = vlaneseq
    %v1543 = vshrl.u32 %v1542, 7
    %v1544 = vsub.s32 %v1541, %v1543
    %v1545 = vrot.slane %v1530, %v1544
    %v1547 = vunpack.c.l.s4 1966171168
    %v1548 = vunpack.c.0.s8 %v1547
    %v1549 = vlaneseq
    %v1550 = vshrl.u32 %v1549, 7
    %v1551 = vsub.s32 %v1548, %v1550
    %v1552 = vrot.slane %v1529, %v1551
    %v1554 = vunpack.c.l.s4 1966171168
    %v1555 = vunpack.c.0.s8 %v1554
    %v1556 = vlaneseq
    %v1557 = vshrl.u32 %v1556, 7
    %v1558 = vsub.s32 %v1555, %v1557
    %v1559 = vrot.slane %v1531, %v1558
    %v1560 = vcombine.high %v1538, %v1538
    %v1561 = vcombine.high %v1545, %v1545
    %v1562 = vcombine.high %v1552, %v1552
    %v1563 = vcombine.high %v1559, %v1559
    %s1572 = scalar_lea.vmem [#allocation2], 10
    %1573 = vst.msk [vmem:[%s1572] ss:$8 sm:$0xf] %vm1467, %v1538
    %1574 = vst.msk [vmem:[%s1572] ss:$8 sm:$0x0] %vm1467, %v1538
    %s1575 = scalar_lea.vmem [#allocation2], 58
    %1576 = vst.msk [vmem:[%s1575] ss:$8 sm:$0xf] %vm1467, %v1552
    %1577 = vst.msk [vmem:[%s1575] ss:$8 sm:$0x0] %vm1467, %v1552
    %s1578 = scalar_lea.vmem [#allocation2], 106
    %1579 = vst.msk [vmem:[%s1578] ss:$8 sm:$0xf] %vm1467, %v1560
    %1580 = vst.msk [vmem:[%s1578] ss:$8 sm:$0x0] %vm1467, %v1560
    %s1581 = scalar_lea.vmem [#allocation2], 154
    %1582 = vst.msk [vmem:[%s1581] ss:$8 sm:$0xf] %vm1467, %v1562
    %1583 = vst.msk [vmem:[%s1581] ss:$8 sm:$0x0] %vm1467, %v1562
    %s1584 = scalar_lea.vmem [#allocation2], 202
    %1585 = vst.msk [vmem:[%s1584] ss:$8 sm:$0xf] %vm1467, %v1545
    %1586 = vst.msk [vmem:[%s1584] ss:$8 sm:$0x0] %vm1467, %v1545
    %s1587 = scalar_lea.vmem [#allocation2], 250
    %1588 = vst.msk [vmem:[%s1587] ss:$8 sm:$0xf] %vm1467, %v1559
    %1589 = vst.msk [vmem:[%s1587] ss:$8 sm:$0x0] %vm1467, %v1559
    %s1590 = scalar_lea.vmem [#allocation2], 298
    %1591 = vst.msk [vmem:[%s1590] ss:$8 sm:$0xf] %vm1467, %v1561
    %1592 = vst.msk [vmem:[%s1590] ss:$8 sm:$0x0] %vm1467, %v1561
    %s1593 = scalar_lea.vmem [#allocation2], 346
    %1594 = vst.msk [vmem:[%s1593] ss:$8 sm:$0xf] %vm1467, %v1563
    %1595 = vst.msk [vmem:[%s1593] ss:$8 sm:$0x0] %vm1467, %v1563
    %v1600 = vcombine.low %v1311, %v1312
    %v1601 = vcombine.high %v1311, %v1312
    %v1602 = vcombine.low %v1313, %v1314
    %v1603 = vcombine.high %v1313, %v1314
    %v1605 = vunpack.c.l.s4 1966171168
    %v1606 = vunpack.c.0.s8 %v1605
    %v1607 = vlaneseq
    %v1608 = vshrl.u32 %v1607, 7
    %v1609 = vsub.s32 %v1606, %v1608
    %v1610 = vrot.slane %v1600, %v1609
    %v1612 = vunpack.c.l.s4 1966171168
    %v1613 = vunpack.c.0.s8 %v1612
    %v1614 = vlaneseq
    %v1615 = vshrl.u32 %v1614, 7
    %v1616 = vsub.s32 %v1613, %v1615
    %v1617 = vrot.slane %v1601, %v1616
    %v1619 = vunpack.c.l.s4 1966171168
    %v1620 = vunpack.c.0.s8 %v1619
    %v1621 = vlaneseq
    %v1622 = vshrl.u32 %v1621, 7
    %v1623 = vsub.s32 %v1620, %v1622
    %v1624 = vrot.slane %v1602, %v1623
    %v1626 = vunpack.c.l.s4 1966171168
    %v1627 = vunpack.c.0.s8 %v1626
    %v1628 = vlaneseq
    %v1629 = vshrl.u32 %v1628, 7
    %v1630 = vsub.s32 %v1627, %v1629
    %v1631 = vrot.slane %v1603, %v1630
    %v1632 = vcombine.low %v1610, %v1624
    %v1633 = vcombine.high %v1610, %v1624
    %v1634 = vcombine.low %v1617, %v1631
    %v1635 = vcombine.high %v1617, %v1631
    %v1637 = vunpack.c.l.s4 1966171168
    %v1638 = vunpack.c.0.s8 %v1637
    %v1639 = vlaneseq
    %v1640 = vshrl.u32 %v1639, 7
    %v1641 = vsub.s32 %v1638, %v1640
    %v1642 = vrot.slane %v1632, %v1641
    %v1644 = vunpack.c.l.s4 1966171168
    %v1645 = vunpack.c.0.s8 %v1644
    %v1646 = vlaneseq
    %v1647 = vshrl.u32 %v1646, 7
    %v1648 = vsub.s32 %v1645, %v1647
    %v1649 = vrot.slane %v1634, %v1648
    %v1651 = vunpack.c.l.s4 1966171168
    %v1652 = vunpack.c.0.s8 %v1651
    %v1653 = vlaneseq
    %v1654 = vshrl.u32 %v1653, 7
    %v1655 = vsub.s32 %v1652, %v1654
    %v1656 = vrot.slane %v1633, %v1655
    %v1658 = vunpack.c.l.s4 1966171168
    %v1659 = vunpack.c.0.s8 %v1658
    %v1660 = vlaneseq
    %v1661 = vshrl.u32 %v1660, 7
    %v1662 = vsub.s32 %v1659, %v1661
    %v1663 = vrot.slane %v1635, %v1662
    %v1664 = vcombine.high %v1642, %v1642
    %v1665 = vcombine.high %v1649, %v1649
    %v1666 = vcombine.high %v1656, %v1656
    %v1667 = vcombine.high %v1663, %v1663
    %s1676 = scalar_lea.vmem [#allocation2], 11
    %1677 = vst.msk [vmem:[%s1676] ss:$8 sm:$0xf] %vm1467, %v1642
    %1678 = vst.msk [vmem:[%s1676] ss:$8 sm:$0x0] %vm1467, %v1642
    %s1679 = scalar_lea.vmem [#allocation2], 59
    %1680 = vst.msk [vmem:[%s1679] ss:$8 sm:$0xf] %vm1467, %v1656
    %1681 = vst.msk [vmem:[%s1679] ss:$8 sm:$0x0] %vm1467, %v1656
    %s1682 = scalar_lea.vmem [#allocation2], 107
    %1683 = vst.msk [vmem:[%s1682] ss:$8 sm:$0xf] %vm1467, %v1664
    %1684 = vst.msk [vmem:[%s1682] ss:$8 sm:$0x0] %vm1467, %v1664
    %s1685 = scalar_lea.vmem [#allocation2], 155
    %1686 = vst.msk [vmem:[%s1685] ss:$8 sm:$0xf] %vm1467, %v1666
    %1687 = vst.msk [vmem:[%s1685] ss:$8 sm:$0x0] %vm1467, %v1666
    %s1688 = scalar_lea.vmem [#allocation2], 203
    %1689 = vst.msk [vmem:[%s1688] ss:$8 sm:$0xf] %vm1467, %v1649
    %1690 = vst.msk [vmem:[%s1688] ss:$8 sm:$0x0] %vm1467, %v1649
    %s1691 = scalar_lea.vmem [#allocation2], 251
    %1692 = vst.msk [vmem:[%s1691] ss:$8 sm:$0xf] %vm1467, %v1663
    %1693 = vst.msk [vmem:[%s1691] ss:$8 sm:$0x0] %vm1467, %v1663
    %s1694 = scalar_lea.vmem [#allocation2], 299
    %1695 = vst.msk [vmem:[%s1694] ss:$8 sm:$0xf] %vm1467, %v1665
    %1696 = vst.msk [vmem:[%s1694] ss:$8 sm:$0x0] %vm1467, %v1665
    %s1697 = scalar_lea.vmem [#allocation2], 347
    %1698 = vst.msk [vmem:[%s1697] ss:$8 sm:$0xf] %vm1467, %v1667
    %1699 = vst.msk [vmem:[%s1697] ss:$8 sm:$0x0] %vm1467, %v1667
    %v1704 = vcombine.low %v1315, %v1316
    %v1705 = vcombine.high %v1315, %v1316
    %v1706 = vcombine.low %v1317, %v1318
    %v1707 = vcombine.high %v1317, %v1318
    %v1709 = vunpack.c.l.s4 1966171168
    %v1710 = vunpack.c.0.s8 %v1709
    %v1711 = vlaneseq
    %v1712 = vshrl.u32 %v1711, 7
    %v1713 = vsub.s32 %v1710, %v1712
    %v1714 = vrot.slane %v1704, %v1713
    %v1716 = vunpack.c.l.s4 1966171168
    %v1717 = vunpack.c.0.s8 %v1716
    %v1718 = vlaneseq
    %v1719 = vshrl.u32 %v1718, 7
    %v1720 = vsub.s32 %v1717, %v1719
    %v1721 = vrot.slane %v1705, %v1720
    %v1723 = vunpack.c.l.s4 1966171168
    %v1724 = vunpack.c.0.s8 %v1723
    %v1725 = vlaneseq
    %v1726 = vshrl.u32 %v1725, 7
    %v1727 = vsub.s32 %v1724, %v1726
    %v1728 = vrot.slane %v1706, %v1727
    %v1730 = vunpack.c.l.s4 1966171168
    %v1731 = vunpack.c.0.s8 %v1730
    %v1732 = vlaneseq
    %v1733 = vshrl.u32 %v1732, 7
    %v1734 = vsub.s32 %v1731, %v1733
    %v1735 = vrot.slane %v1707, %v1734
    %v1736 = vcombine.low %v1714, %v1728
    %v1737 = vcombine.high %v1714, %v1728
    %v1738 = vcombine.low %v1721, %v1735
    %v1739 = vcombine.high %v1721, %v1735
    %v1741 = vunpack.c.l.s4 1966171168
    %v1742 = vunpack.c.0.s8 %v1741
    %v1743 = vlaneseq
    %v1744 = vshrl.u32 %v1743, 7
    %v1745 = vsub.s32 %v1742, %v1744
    %v1746 = vrot.slane %v1736, %v1745
    %v1748 = vunpack.c.l.s4 1966171168
    %v1749 = vunpack.c.0.s8 %v1748
    %v1750 = vlaneseq
    %v1751 = vshrl.u32 %v1750, 7
    %v1752 = vsub.s32 %v1749, %v1751
    %v1753 = vrot.slane %v1738, %v1752
    %v1755 = vunpack.c.l.s4 1966171168
    %v1756 = vunpack.c.0.s8 %v1755
    %v1757 = vlaneseq
    %v1758 = vshrl.u32 %v1757, 7
    %v1759 = vsub.s32 %v1756, %v1758
    %v1760 = vrot.slane %v1737, %v1759
    %v1762 = vunpack.c.l.s4 1966171168
    %v1763 = vunpack.c.0.s8 %v1762
    %v1764 = vlaneseq
    %v1765 = vshrl.u32 %v1764, 7
    %v1766 = vsub.s32 %v1763, %v1765
    %v1767 = vrot.slane %v1739, %v1766
    %v1768 = vcombine.high %v1746, %v1746
    %v1769 = vcombine.high %v1753, %v1753
    %v1770 = vcombine.high %v1760, %v1760
    %v1771 = vcombine.high %v1767, %v1767
    %s1780 = scalar_lea.vmem [#allocation2], 12
    %1781 = vst.msk [vmem:[%s1780] ss:$8 sm:$0xf] %vm1467, %v1746
    %1782 = vst.msk [vmem:[%s1780] ss:$8 sm:$0x0] %vm1467, %v1746
    %s1783 = scalar_lea.vmem [#allocation2], 60
    %1784 = vst.msk [vmem:[%s1783] ss:$8 sm:$0xf] %vm1467, %v1760
    %1785 = vst.msk [vmem:[%s1783] ss:$8 sm:$0x0] %vm1467, %v1760
    %s1786 = scalar_lea.vmem [#allocation2], 108
    %1787 = vst.msk [vmem:[%s1786] ss:$8 sm:$0xf] %vm1467, %v1768
    %1788 = vst.msk [vmem:[%s1786] ss:$8 sm:$0x0] %vm1467, %v1768
    %s1789 = scalar_lea.vmem [#allocation2], 156
    %1790 = vst.msk [vmem:[%s1789] ss:$8 sm:$0xf] %vm1467, %v1770
    %1791 = vst.msk [vmem:[%s1789] ss:$8 sm:$0x0] %vm1467, %v1770
    %s1792 = scalar_lea.vmem [#allocation2], 204
    %1793 = vst.msk [vmem:[%s1792] ss:$8 sm:$0xf] %vm1467, %v1753
    %1794 = vst.msk [vmem:[%s1792] ss:$8 sm:$0x0] %vm1467, %v1753
    %s1795 = scalar_lea.vmem [#allocation2], 252
    %1796 = vst.msk [vmem:[%s1795] ss:$8 sm:$0xf] %vm1467, %v1767
    %1797 = vst.msk [vmem:[%s1795] ss:$8 sm:$0x0] %vm1467, %v1767
    %s1798 = scalar_lea.vmem [#allocation2], 300
    %1799 = vst.msk [vmem:[%s1798] ss:$8 sm:$0xf] %vm1467, %v1769
    %1800 = vst.msk [vmem:[%s1798] ss:$8 sm:$0x0] %vm1467, %v1769
    %s1801 = scalar_lea.vmem [#allocation2], 348
    %1802 = vst.msk [vmem:[%s1801] ss:$8 sm:$0xf] %vm1467, %v1771
    %1803 = vst.msk [vmem:[%s1801] ss:$8 sm:$0x0] %vm1467, %v1771
    %v1804 = vld [vmem:[%s4] sm:$0x3]
    %v1805 = vld [vmem:[#allocation10] sm:$0xff]
    %v1806 = vld [vmem:[#allocation10 + $0x8] sm:$0xff]
    %v1807 = vld [vmem:[#allocation10 + $0x10] sm:$0xff]
    %v1808 = vld [vmem:[#allocation10 + $0x18] sm:$0xff]
    %v1809 = vld [vmem:[#allocation10 + $0x20] sm:$0xff]
    %v1810 = vld [vmem:[#allocation10 + $0x28] sm:$0xff]
    %v1811 = vld [vmem:[#allocation10 + $0x30] sm:$0xff]
    %v1812 = vld [vmem:[#allocation10 + $0x38] sm:$0xff]
    %v1813 = vld [vmem:[#allocation10 + $0x40] sm:$0xff]
    %v1814 = vld [vmem:[#allocation10 + $0x48] sm:$0xff]
    %v1815 = vld [vmem:[#allocation10 + $0x50] sm:$0xff]
    %v1816 = vld [vmem:[#allocation10 + $0x58] sm:$0xff]
    %v1817 = vld [vmem:[#allocation10 + $0x60] sm:$0xff]
    %v1818 = vld [vmem:[#allocation10 + $0x68] sm:$0xff]
    %v1819 = vld [vmem:[#allocation10 + $0x70] sm:$0xff]
    %v1820 = vld [vmem:[#allocation10 + $0x78] sm:$0xff]
    %v1821 = vld [vmem:[#allocation10 + $0x80] sm:$0xff]
    %v1822 = vld [vmem:[#allocation10 + $0x88] sm:$0xff]
    %v1823 = vld [vmem:[#allocation10 + $0x90] sm:$0xff]
    %v1824 = vld [vmem:[#allocation10 + $0x98] sm:$0xff]
    %v1825 = vld [vmem:[#allocation10 + $0xa0] sm:$0xff]
    %v1826 = vld [vmem:[#allocation10 + $0xa8] sm:$0xff]
    %v1827 = vld [vmem:[#allocation10 + $0xb0] sm:$0xff]
    %v1828 = vld [vmem:[#allocation10 + $0xb8] sm:$0xff]
    %v1829 = vld [vmem:[#allocation10 + $0xc0] sm:$0xff]
    %v1830 = vld [vmem:[#allocation10 + $0xc8] sm:$0xff]
    %v1831 = vld [vmem:[#allocation10 + $0xd0] sm:$0xff]
    %v1832 = vld [vmem:[#allocation10 + $0xd8] sm:$0xff]
    %v1833 = vld [vmem:[#allocation10 + $0xe0] sm:$0xff]
    %v1834 = vld [vmem:[#allocation10 + $0xe8] sm:$0xff]
    %v1835 = vld [vmem:[#allocation10 + $0xf0] sm:$0xff]
    %v1836 = vld [vmem:[#allocation10 + $0xf8] sm:$0xff]
    %v1837 = vld [vmem:[#allocation10 + $0x100] sm:$0xff]
    %v1838 = vld [vmem:[#allocation10 + $0x108] sm:$0xff]
    %v1839 = vld [vmem:[#allocation10 + $0x110] sm:$0xff]
    %v1840 = vld [vmem:[#allocation10 + $0x118] sm:$0xff]
    %v1841 = vld [vmem:[#allocation10 + $0x120] sm:$0xff]
    %v1842 = vld [vmem:[#allocation10 + $0x128] sm:$0xff]
    %v1843 = vld [vmem:[#allocation10 + $0x130] sm:$0xff]
    %v1844 = vld [vmem:[#allocation10 + $0x138] sm:$0xff]
    %v1845 = vld [vmem:[#allocation10 + $0x140] sm:$0xff]
    %v1846 = vld [vmem:[#allocation10 + $0x148] sm:$0xff]
    %v1847 = vld [vmem:[#allocation10 + $0x150] sm:$0xff]
    %v1848 = vld [vmem:[#allocation10 + $0x158] sm:$0xff]
    %v1849 = vld [vmem:[#allocation10 + $0x160] sm:$0xff]
    %v1850 = vld [vmem:[#allocation10 + $0x168] sm:$0xff]
    %v1851 = vld [vmem:[#allocation10 + $0x170] sm:$0xff]
    %v1852 = vld [vmem:[#allocation10 + $0x178] sm:$0xff]
    %s1853 = scalar_lea.vmem [#allocation10], 384
    %v1854 = vld [vmem:[%s1853] sm:$0xff]
    %v1855 = vld [vmem:[%s1853 + $0x8] sm:$0xff]
    %v1856 = vld [vmem:[%s1853 + $0x10] sm:$0xff]
    %v1857 = vld [vmem:[%s1853 + $0x18] sm:$0xff]
    %v1858 = vld [vmem:[%s1853 + $0x20] sm:$0xff]
    %v1859 = vld [vmem:[%s1853 + $0x28] sm:$0xff]
    %v1860 = vld [vmem:[%s1853 + $0x30] sm:$0xff]
    %v1861 = vld [vmem:[%s1853 + $0x38] sm:$0xff]
    %v1862 = vld [vmem:[%s1853 + $0x40] sm:$0xff]
    %v1863 = vld [vmem:[%s1853 + $0x48] sm:$0xff]
    %v1864 = vld [vmem:[%s1853 + $0x50] sm:$0xff]
    %v1865 = vld [vmem:[%s1853 + $0x58] sm:$0xff]
    %v1866 = vld [vmem:[%s1853 + $0x60] sm:$0xff]
    %v1867 = vld [vmem:[%s1853 + $0x68] sm:$0xff]
    %v1868 = vld [vmem:[%s1853 + $0x70] sm:$0xff]
    %v1869 = vld [vmem:[%s1853 + $0x78] sm:$0xff]
    %v1870 = vld [vmem:[%s1853 + $0x80] sm:$0xff]
    %v1871 = vld [vmem:[%s1853 + $0x88] sm:$0xff]
    %v1872 = vld [vmem:[%s1853 + $0x90] sm:$0xff]
    %v1873 = vld [vmem:[%s1853 + $0x98] sm:$0xff]
    %v1874 = vld [vmem:[%s1853 + $0xa0] sm:$0xff]
    %v1875 = vld [vmem:[%s1853 + $0xa8] sm:$0xff]
    %v1876 = vld [vmem:[%s1853 + $0xb0] sm:$0xff]
    %v1877 = vld [vmem:[%s1853 + $0xb8] sm:$0xff]
    %v1878 = vld [vmem:[%s1853 + $0xc0] sm:$0xff]
    %v1879 = vld [vmem:[%s1853 + $0xc8] sm:$0xff]
    %v1880 = vld [vmem:[%s1853 + $0xd0] sm:$0xff]
    %v1881 = vld [vmem:[%s1853 + $0xd8] sm:$0xff]
    %v1882 = vld [vmem:[%s1853 + $0xe0] sm:$0xff]
    %v1883 = vld [vmem:[%s1853 + $0xe8] sm:$0xff]
    %v1884 = vld [vmem:[%s1853 + $0xf0] sm:$0xff]
    %v1885 = vld [vmem:[%s1853 + $0xf8] sm:$0xff]
    %v1886 = vld [vmem:[%s1853 + $0x100] sm:$0xff]
    %v1887 = vld [vmem:[%s1853 + $0x108] sm:$0xff]
    %v1888 = vld [vmem:[%s1853 + $0x110] sm:$0xff]
    %v1889 = vld [vmem:[%s1853 + $0x118] sm:$0xff]
    %v1890 = vld [vmem:[%s1853 + $0x120] sm:$0xff]
    %v1891 = vld [vmem:[%s1853 + $0x128] sm:$0xff]
    %v1892 = vld [vmem:[%s1853 + $0x130] sm:$0xff]
    %v1893 = vld [vmem:[%s1853 + $0x138] sm:$0xff]
    %v1894 = vld [vmem:[%s1853 + $0x140] sm:$0xff]
    %v1895 = vld [vmem:[%s1853 + $0x148] sm:$0xff]
    %v1896 = vld [vmem:[%s1853 + $0x150] sm:$0xff]
    %v1897 = vld [vmem:[%s1853 + $0x158] sm:$0xff]
    %v1898 = vld [vmem:[%s1853 + $0x160] sm:$0xff]
    %v1899 = vld [vmem:[%s1853 + $0x168] sm:$0xff]
    %v1900 = vld [vmem:[%s1853 + $0x170] sm:$0xff]
    %v1901 = vld [vmem:[%s1853 + $0x178] sm:$0xff]
    %s1902 = scalar_lea.vmem [#allocation10], 768
    %v1903 = vld [vmem:[%s1902] sm:$0xff]
    %v1904 = vld [vmem:[%s1902 + $0x8] sm:$0xff]
    %v1905 = vld [vmem:[%s1902 + $0x10] sm:$0xff]
    %v1906 = vld [vmem:[%s1902 + $0x18] sm:$0xff]
    %v1907 = vld [vmem:[%s1902 + $0x20] sm:$0xff]
    %v1908 = vld [vmem:[%s1902 + $0x28] sm:$0xff]
    %v1909 = vld [vmem:[%s1902 + $0x30] sm:$0xff]
    %v1910 = vld [vmem:[%s1902 + $0x38] sm:$0xff]
    %v1911 = vld [vmem:[%s1902 + $0x40] sm:$0xff]
    %v1912 = vld [vmem:[%s1902 + $0x48] sm:$0xff]
    %v1913 = vld [vmem:[%s1902 + $0x50] sm:$0xff]
    %v1914 = vld [vmem:[%s1902 + $0x58] sm:$0xff]
    %v1915 = vld [vmem:[%s1902 + $0x60] sm:$0xff]
    %v1916 = vld [vmem:[%s1902 + $0x68] sm:$0xff]
    %v1917 = vld [vmem:[%s1902 + $0x70] sm:$0xff]
    %v1918 = vld [vmem:[%s1902 + $0x78] sm:$0xff]
    %v1919 = vld [vmem:[%s1902 + $0x80] sm:$0xff]
    %v1920 = vld [vmem:[%s1902 + $0x88] sm:$0xff]
    %v1921 = vld [vmem:[%s1902 + $0x90] sm:$0xff]
    %v1922 = vld [vmem:[%s1902 + $0x98] sm:$0xff]
    %v1923 = vld [vmem:[%s1902 + $0xa0] sm:$0xff]
    %v1924 = vld [vmem:[%s1902 + $0xa8] sm:$0xff]
    %v1925 = vld [vmem:[%s1902 + $0xb0] sm:$0xff]
    %v1926 = vld [vmem:[%s1902 + $0xb8] sm:$0xff]
    %v1927 = vld [vmem:[%s1902 + $0xc0] sm:$0xff]
    %v1928 = vld [vmem:[%s1902 + $0xc8] sm:$0xff]
    %v1929 = vld [vmem:[%s1902 + $0xd0] sm:$0xff]
    %v1930 = vld [vmem:[%s1902 + $0xd8] sm:$0xff]
    %v1931 = vld [vmem:[%s1902 + $0xe0] sm:$0xff]
    %v1932 = vld [vmem:[%s1902 + $0xe8] sm:$0xff]
    %v1933 = vld [vmem:[%s1902 + $0xf0] sm:$0xff]
    %v1934 = vld [vmem:[%s1902 + $0xf8] sm:$0xff]
    %v1935 = vld [vmem:[%s1902 + $0x100] sm:$0xff]
    %v1936 = vld [vmem:[%s1902 + $0x108] sm:$0xff]
    %v1937 = vld [vmem:[%s1902 + $0x110] sm:$0xff]
    %v1938 = vld [vmem:[%s1902 + $0x118] sm:$0xff]
    %v1939 = vld [vmem:[%s1902 + $0x120] sm:$0xff]
    %v1940 = vld [vmem:[%s1902 + $0x128] sm:$0xff]
    %v1941 = vld [vmem:[%s1902 + $0x130] sm:$0xff]
    %v1942 = vld [vmem:[%s1902 + $0x138] sm:$0xff]
    %v1943 = vld [vmem:[%s1902 + $0x140] sm:$0xff]
    %v1944 = vld [vmem:[%s1902 + $0x148] sm:$0xff]
    %v1945 = vld [vmem:[%s1902 + $0x150] sm:$0xff]
    %v1946 = vld [vmem:[%s1902 + $0x158] sm:$0xff]
    %v1947 = vld [vmem:[%s1902 + $0x160] sm:$0xff]
    %v1948 = vld [vmem:[%s1902 + $0x168] sm:$0xff]
    %v1949 = vld [vmem:[%s1902 + $0x170] sm:$0xff]
    %v1950 = vld [vmem:[%s1902 + $0x178] sm:$0xff]
    %v1951 = vld [vmem:[#allocation2] sm:$0xf]
    %v1952 = vld [vmem:[#allocation2 + $0x8] sm:$0xf]
    %v1953 = vld [vmem:[#allocation2 + $0x10] sm:$0xf]
    %v1954 = vld [vmem:[#allocation2 + $0x18] sm:$0xf]
    %v1955 = vld [vmem:[#allocation2 + $0x20] sm:$0xf]
    %v1956 = vld [vmem:[#allocation2 + $0x28] sm:$0xf]
    %v1957 = vld [vmem:[#allocation2 + $0x30] sm:$0xf]
    %v1958 = vld [vmem:[#allocation2 + $0x38] sm:$0xf]
    %v1959 = vld [vmem:[#allocation2 + $0x40] sm:$0xf]
    %v1960 = vld [vmem:[#allocation2 + $0x48] sm:$0xf]
    %v1961 = vld [vmem:[#allocation2 + $0x50] sm:$0xf]
    %v1962 = vld [vmem:[#allocation2 + $0x58] sm:$0xf]
    %v1963 = vld [vmem:[#allocation2 + $0x60] sm:$0xf]
    %v1964 = vld [vmem:[#allocation2 + $0x68] sm:$0xf]
    %v1965 = vld [vmem:[#allocation2 + $0x70] sm:$0xf]
    %v1966 = vld [vmem:[#allocation2 + $0x78] sm:$0xf]
    %v1967 = vld [vmem:[#allocation2 + $0x80] sm:$0xf]
    %v1968 = vld [vmem:[#allocation2 + $0x88] sm:$0xf]
    %v1969 = vld [vmem:[#allocation2 + $0x90] sm:$0xf]
    %v1970 = vld [vmem:[#allocation2 + $0x98] sm:$0xf]
    %v1971 = vld [vmem:[#allocation2 + $0xa0] sm:$0xf]
    %v1972 = vld [vmem:[#allocation2 + $0xa8] sm:$0xf]
    %v1973 = vld [vmem:[#allocation2 + $0xb0] sm:$0xf]
    %v1974 = vld [vmem:[#allocation2 + $0xb8] sm:$0xf]
    %v1975 = vld [vmem:[#allocation2 + $0xc0] sm:$0xf]
    %v1976 = vld [vmem:[#allocation2 + $0xc8] sm:$0xf]
    %v1977 = vld [vmem:[#allocation2 + $0xd0] sm:$0xf]
    %v1978 = vld [vmem:[#allocation2 + $0xd8] sm:$0xf]
    %v1979 = vld [vmem:[#allocation2 + $0xe0] sm:$0xf]
    %v1980 = vld [vmem:[#allocation2 + $0xe8] sm:$0xf]
    %v1981 = vld [vmem:[#allocation2 + $0xf0] sm:$0xf]
    %v1982 = vld [vmem:[#allocation2 + $0xf8] sm:$0xf]
    %v1983 = vld [vmem:[#allocation2 + $0x100] sm:$0xf]
    %v1984 = vld [vmem:[#allocation2 + $0x108] sm:$0xf]
    %v1985 = vld [vmem:[#allocation2 + $0x110] sm:$0xf]
    %v1986 = vld [vmem:[#allocation2 + $0x118] sm:$0xf]
    %v1987 = vld [vmem:[#allocation2 + $0x120] sm:$0xf]
    %v1988 = vld [vmem:[#allocation2 + $0x128] sm:$0xf]
    %v1989 = vld [vmem:[#allocation2 + $0x130] sm:$0xf]
    %v1990 = vld [vmem:[#allocation2 + $0x138] sm:$0xf]
    %v1991 = vld [vmem:[#allocation2 + $0x140] sm:$0xf]
    %v1992 = vld [vmem:[#allocation2 + $0x148] sm:$0xf]
    %v1993 = vld [vmem:[#allocation2 + $0x150] sm:$0xf]
    %v1994 = vld [vmem:[#allocation2 + $0x158] sm:$0xf]
    %v1995 = vld [vmem:[#allocation2 + $0x160] sm:$0xf]
    %v1996 = vld [vmem:[#allocation2 + $0x168] sm:$0xf]
    %v1997 = vld [vmem:[#allocation2 + $0x170] sm:$0xf]
    %v1998 = vld [vmem:[#allocation2 + $0x178] sm:$0xf]
    %v2047 = vcombine.low %v1951, %v1952
    %v2048 = vcombine.low %v1953, %v1954
    %v2049 = vcombine.low %v1955, %v1956
    %v2050 = vcombine.low %v1957, %v1958
    %v2051 = vcombine.low %v1959, %v1960
    %v2052 = vcombine.low %v1961, %v1962
    %v2053 = vcombine.low %v1963, %v1964
    %v2054 = vcombine.low %v1965, %v1966
    %v2055 = vcombine.low %v1967, %v1968
    %v2056 = vcombine.low %v1969, %v1970
    %v2057 = vcombine.low %v1971, %v1972
    %v2058 = vcombine.low %v1973, %v1974
    %v2059 = vcombine.low %v1975, %v1976
    %v2060 = vcombine.low %v1977, %v1978
    %v2061 = vcombine.low %v1979, %v1980
    %v2062 = vcombine.low %v1981, %v1982
    %v2063 = vcombine.low %v1983, %v1984
    %v2064 = vcombine.low %v1985, %v1986
    %v2065 = vcombine.low %v1987, %v1988
    %v2066 = vcombine.low %v1989, %v1990
    %v2067 = vcombine.low %v1991, %v1992
    %v2068 = vcombine.low %v1993, %v1994
    %v2069 = vcombine.low %v1995, %v1996
    %v2070 = vcombine.low %v1997, %v1998
    %v2071 = vcombine.low %v2047, %v2050
    %v2072 = vcombine.high %v2047, %v2050
    %v2073 = vcombine.low %v2048, %v2051
    %v2074 = vcombine.high %v2048, %v2051
    %v2075 = vcombine.low %v2049, %v2052
    %v2076 = vcombine.high %v2049, %v2052
    %v2077 = vcombine.low %v2053, %v2056
    %v2078 = vcombine.high %v2053, %v2056
    %v2079 = vcombine.low %v2054, %v2057
    %v2080 = vcombine.high %v2054, %v2057
    %v2081 = vcombine.low %v2055, %v2058
    %v2082 = vcombine.high %v2055, %v2058
    %v2083 = vcombine.low %v2059, %v2062
    %v2084 = vcombine.high %v2059, %v2062
    %v2085 = vcombine.low %v2060, %v2063
    %v2086 = vcombine.high %v2060, %v2063
    %v2087 = vcombine.low %v2061, %v2064
    %v2088 = vcombine.high %v2061, %v2064
    %v2089 = vcombine.low %v2065, %v2068
    %v2090 = vcombine.high %v2065, %v2068
    %v2091 = vcombine.low %v2066, %v2069
    %v2092 = vcombine.high %v2066, %v2069
    %v2093 = vcombine.low %v2067, %v2070
    %v2094 = vcombine.high %v2067, %v2070
    %v2119 = vpack.c.bf16 %v2077, %v2071
    %v2120 = vpack.c.bf16 %v2078, %v2072
    %v2121 = vpack.c.bf16 %v2079, %v2073
    %v2122 = vpack.c.bf16 %v2080, %v2074
    %v2123 = vpack.c.bf16 %v2081, %v2075
    %v2124 = vpack.c.bf16 %v2082, %v2076
    %v2125 = vpack.c.bf16 %v2089, %v2083
    %v2126 = vpack.c.bf16 %v2090, %v2084
    %v2127 = vpack.c.bf16 %v2091, %v2085
    %v2128 = vpack.c.bf16 %v2092, %v2086
    %v2129 = vpack.c.bf16 %v2093, %v2087
    %v2130 = vpack.c.bf16 %v2094, %v2088
    %v2131 = vld [vmem:[#allocation2] sm:$0x1e]
    %v2132 = vld [vmem:[#allocation2 + $0x8] sm:$0x1e]
    %v2133 = vld [vmem:[#allocation2 + $0x10] sm:$0x1e]
    %v2134 = vld [vmem:[#allocation2 + $0x18] sm:$0x1e]
    %v2135 = vld [vmem:[#allocation2 + $0x20] sm:$0x1e]
    %v2136 = vld [vmem:[#allocation2 + $0x28] sm:$0x1e]
    %v2137 = vld [vmem:[#allocation2 + $0x30] sm:$0x1e]
    %v2138 = vld [vmem:[#allocation2 + $0x38] sm:$0x1e]
    %v2139 = vld [vmem:[#allocation2 + $0x40] sm:$0x1e]
    %v2140 = vld [vmem:[#allocation2 + $0x48] sm:$0x1e]
    %v2141 = vld [vmem:[#allocation2 + $0x50] sm:$0x1e]
    %v2142 = vld [vmem:[#allocation2 + $0x58] sm:$0x1e]
    %v2143 = vld [vmem:[#allocation2 + $0x60] sm:$0x1e]
    %v2144 = vld [vmem:[#allocation2 + $0x68] sm:$0x1e]
    %v2145 = vld [vmem:[#allocation2 + $0x70] sm:$0x1e]
    %v2146 = vld [vmem:[#allocation2 + $0x78] sm:$0x1e]
    %v2147 = vld [vmem:[#allocation2 + $0x80] sm:$0x1e]
    %v2148 = vld [vmem:[#allocation2 + $0x88] sm:$0x1e]
    %v2149 = vld [vmem:[#allocation2 + $0x90] sm:$0x1e]
    %v2150 = vld [vmem:[#allocation2 + $0x98] sm:$0x1e]
    %v2151 = vld [vmem:[#allocation2 + $0xa0] sm:$0x1e]
    %v2152 = vld [vmem:[#allocation2 + $0xa8] sm:$0x1e]
    %v2153 = vld [vmem:[#allocation2 + $0xb0] sm:$0x1e]
    %v2154 = vld [vmem:[#allocation2 + $0xb8] sm:$0x1e]
    %v2155 = vld [vmem:[#allocation2 + $0xc0] sm:$0x1e]
    %v2156 = vld [vmem:[#allocation2 + $0xc8] sm:$0x1e]
    %v2157 = vld [vmem:[#allocation2 + $0xd0] sm:$0x1e]
    %v2158 = vld [vmem:[#allocation2 + $0xd8] sm:$0x1e]
    %v2159 = vld [vmem:[#allocation2 + $0xe0] sm:$0x1e]
    %v2160 = vld [vmem:[#allocation2 + $0xe8] sm:$0x1e]
    %v2161 = vld [vmem:[#allocation2 + $0xf0] sm:$0x1e]
    %v2162 = vld [vmem:[#allocation2 + $0xf8] sm:$0x1e]
    %v2163 = vld [vmem:[#allocation2 + $0x100] sm:$0x1e]
    %v2164 = vld [vmem:[#allocation2 + $0x108] sm:$0x1e]
    %v2165 = vld [vmem:[#allocation2 + $0x110] sm:$0x1e]
    %v2166 = vld [vmem:[#allocation2 + $0x118] sm:$0x1e]
    %v2167 = vld [vmem:[#allocation2 + $0x120] sm:$0x1e]
    %v2168 = vld [vmem:[#allocation2 + $0x128] sm:$0x1e]
    %v2169 = vld [vmem:[#allocation2 + $0x130] sm:$0x1e]
    %v2170 = vld [vmem:[#allocation2 + $0x138] sm:$0x1e]
    %v2171 = vld [vmem:[#allocation2 + $0x140] sm:$0x1e]
    %v2172 = vld [vmem:[#allocation2 + $0x148] sm:$0x1e]
    %v2173 = vld [vmem:[#allocation2 + $0x150] sm:$0x1e]
    %v2174 = vld [vmem:[#allocation2 + $0x158] sm:$0x1e]
    %v2175 = vld [vmem:[#allocation2 + $0x160] sm:$0x1e]
    %v2176 = vld [vmem:[#allocation2 + $0x168] sm:$0x1e]
    %v2177 = vld [vmem:[#allocation2 + $0x170] sm:$0x1e]
    %v2178 = vld [vmem:[#allocation2 + $0x178] sm:$0x1e]
    %v2227 = vcombine.low %v2131, %v2132
    %v2228 = vcombine.high %v2131, %v2132
    %v2229 = vcombine.low %v2133, %v2134
    %v2230 = vcombine.high %v2133, %v2134
    %v2231 = vcombine.low %v2135, %v2136
    %v2232 = vcombine.high %v2135, %v2136
    %v2233 = vcombine.low %v2137, %v2138
    %v2234 = vcombine.high %v2137, %v2138
    %v2235 = vcombine.low %v2139, %v2140
    %v2236 = vcombine.high %v2139, %v2140
    %v2237 = vcombine.low %v2141, %v2142
    %v2238 = vcombine.high %v2141, %v2142
    %v2239 = vcombine.low %v2143, %v2144
    %v2240 = vcombine.high %v2143, %v2144
    %v2241 = vcombine.low %v2145, %v2146
    %v2242 = vcombine.high %v2145, %v2146
    %v2243 = vcombine.low %v2147, %v2148
    %v2244 = vcombine.high %v2147, %v2148
    %v2245 = vcombine.low %v2149, %v2150
    %v2246 = vcombine.high %v2149, %v2150
    %v2247 = vcombine.low %v2151, %v2152
    %v2248 = vcombine.high %v2151, %v2152
    %v2249 = vcombine.low %v2153, %v2154
    %v2250 = vcombine.high %v2153, %v2154
    %v2251 = vcombine.low %v2155, %v2156
    %v2252 = vcombine.high %v2155, %v2156
    %v2253 = vcombine.low %v2157, %v2158
    %v2254 = vcombine.high %v2157, %v2158
    %v2255 = vcombine.low %v2159, %v2160
    %v2256 = vcombine.high %v2159, %v2160
    %v2257 = vcombine.low %v2161, %v2162
    %v2258 = vcombine.high %v2161, %v2162
    %v2259 = vcombine.low %v2163, %v2164
    %v2260 = vcombine.high %v2163, %v2164
    %v2261 = vcombine.low %v2165, %v2166
    %v2262 = vcombine.high %v2165, %v2166
    %v2263 = vcombine.low %v2167, %v2168
    %v2264 = vcombine.high %v2167, %v2168
    %v2265 = vcombine.low %v2169, %v2170
    %v2266 = vcombine.high %v2169, %v2170
    %v2267 = vcombine.low %v2171, %v2172
    %v2268 = vcombine.high %v2171, %v2172
    %v2269 = vcombine.low %v2173, %v2174
    %v2270 = vcombine.high %v2173, %v2174
    %v2271 = vcombine.low %v2175, %v2176
    %v2272 = vcombine.high %v2175, %v2176
    %v2273 = vcombine.low %v2177, %v2178
    %v2274 = vcombine.high %v2177, %v2178
    %vm2275 = vcmask 1042432
    %vm2276 = vcmask 1046532
    %vm2277 = vmor %vm2275, %vm2276
    %v2278 = vrot.slane %v2227, 5
    %v2279 = vrot.slane %v2278, 4
    %v2280 = vrot.slane %v2228, 5
    %v2281 = vsel %vm2277, %v2279, %v2280
    %v2282 = vrot.slane %v2229, 5
    %v2283 = vrot.slane %v2282, 4
    %v2284 = vrot.slane %v2230, 5
    %v2285 = vsel %vm2277, %v2283, %v2284
    %v2286 = vrot.slane %v2231, 5
    %v2287 = vrot.slane %v2286, 4
    %v2288 = vrot.slane %v2232, 5
    %v2289 = vsel %vm2277, %v2287, %v2288
    %v2290 = vrot.slane %v2233, 5
    %v2291 = vrot.slane %v2290, 4
    %v2292 = vrot.slane %v2234, 5
    %v2293 = vsel %vm2277, %v2291, %v2292
    %v2294 = vrot.slane %v2235, 5
    %v2295 = vrot.slane %v2294, 4
    %v2296 = vrot.slane %v2236, 5
    %v2297 = vsel %vm2277, %v2295, %v2296
    %v2298 = vrot.slane %v2237, 5
    %v2299 = vrot.slane %v2298, 4
    %v2300 = vrot.slane %v2238, 5
    %v2301 = vsel %vm2277, %v2299, %v2300
    %v2302 = vrot.slane %v2239, 5
    %v2303 = vrot.slane %v2302, 4
    %v2304 = vrot.slane %v2240, 5
    %v2305 = vsel %vm2277, %v2303, %v2304
    %v2306 = vrot.slane %v2241, 5
    %v2307 = vrot.slane %v2306, 4
    %v2308 = vrot.slane %v2242, 5
    %v2309 = vsel %vm2277, %v2307, %v2308
    %v2310 = vrot.slane %v2243, 5
    %v2311 = vrot.slane %v2310, 4
    %v2312 = vrot.slane %v2244, 5
    %v2313 = vsel %vm2277, %v2311, %v2312
    %v2314 = vrot.slane %v2245, 5
    %v2315 = vrot.slane %v2314, 4
    %v2316 = vrot.slane %v2246, 5
    %v2317 = vsel %vm2277, %v2315, %v2316
    %v2318 = vrot.slane %v2247, 5
    %v2319 = vrot.slane %v2318, 4
    %v2320 = vrot.slane %v2248, 5
    %v2321 = vsel %vm2277, %v2319, %v2320
    %v2322 = vrot.slane %v2249, 5
    %v2323 = vrot.slane %v2322, 4
    %v2324 = vrot.slane %v2250, 5
    %v2325 = vsel %vm2277, %v2323, %v2324
    %v2326 = vrot.slane %v2251, 5
    %v2327 = vrot.slane %v2326, 4
    %v2328 = vrot.slane %v2252, 5
    %v2329 = vsel %vm2277, %v2327, %v2328
    %v2330 = vrot.slane %v2253, 5
    %v2331 = vrot.slane %v2330, 4
    %v2332 = vrot.slane %v2254, 5
    %v2333 = vsel %vm2277, %v2331, %v2332
    %v2334 = vrot.slane %v2255, 5
    %v2335 = vrot.slane %v2334, 4
    %v2336 = vrot.slane %v2256, 5
    %v2337 = vsel %vm2277, %v2335, %v2336
    %v2338 = vrot.slane %v2257, 5
    %v2339 = vrot.slane %v2338, 4
    %v2340 = vrot.slane %v2258, 5
    %v2341 = vsel %vm2277, %v2339, %v2340
    %v2342 = vrot.slane %v2259, 5
    %v2343 = vrot.slane %v2342, 4
    %v2344 = vrot.slane %v2260, 5
    %v2345 = vsel %vm2277, %v2343, %v2344
    %v2346 = vrot.slane %v2261, 5
    %v2347 = vrot.slane %v2346, 4
    %v2348 = vrot.slane %v2262, 5
    %v2349 = vsel %vm2277, %v2347, %v2348
    %v2350 = vrot.slane %v2263, 5
    %v2351 = vrot.slane %v2350, 4
    %v2352 = vrot.slane %v2264, 5
    %v2353 = vsel %vm2277, %v2351, %v2352
    %v2354 = vrot.slane %v2265, 5
    %v2355 = vrot.slane %v2354, 4
    %v2356 = vrot.slane %v2266, 5
    %v2357 = vsel %vm2277, %v2355, %v2356
    %v2358 = vrot.slane %v2267, 5
    %v2359 = vrot.slane %v2358, 4
    %v2360 = vrot.slane %v2268, 5
    %v2361 = vsel %vm2277, %v2359, %v2360
    %v2362 = vrot.slane %v2269, 5
    %v2363 = vrot.slane %v2362, 4
    %v2364 = vrot.slane %v2270, 5
    %v2365 = vsel %vm2277, %v2363, %v2364
    %v2366 = vrot.slane %v2271, 5
    %v2367 = vrot.slane %v2366, 4
    %v2368 = vrot.slane %v2272, 5
    %v2369 = vsel %vm2277, %v2367, %v2368
    %v2370 = vrot.slane %v2273, 5
    %v2371 = vrot.slane %v2370, 4
    %v2372 = vrot.slane %v2274, 5
    %v2373 = vsel %vm2277, %v2371, %v2372
    %v2374 = vcombine.low %v2281, %v2293
    %v2375 = vcombine.high %v2281, %v2293
    %v2376 = vcombine.low %v2285, %v2297
    %v2377 = vcombine.high %v2285, %v2297
    %v2378 = vcombine.low %v2289, %v2301
    %v2379 = vcombine.high %v2289, %v2301
    %v2380 = vcombine.low %v2305, %v2317
    %v2381 = vcombine.high %v2305, %v2317
    %v2382 = vcombine.low %v2309, %v2321
    %v2383 = vcombine.high %v2309, %v2321
    %v2384 = vcombine.low %v2313, %v2325
    %v2385 = vcombine.high %v2313, %v2325
    %v2386 = vcombine.low %v2329, %v2341
    %v2387 = vcombine.high %v2329, %v2341
    %v2388 = vcombine.low %v2333, %v2345
    %v2389 = vcombine.high %v2333, %v2345
    %v2390 = vcombine.low %v2337, %v2349
    %v2391 = vcombine.high %v2337, %v2349
    %v2392 = vcombine.low %v2353, %v2365
    %v2393 = vcombine.high %v2353, %v2365
    %v2394 = vcombine.low %v2357, %v2369
    %v2395 = vcombine.high %v2357, %v2369
    %v2396 = vcombine.low %v2361, %v2373
    %v2397 = vcombine.high %v2361, %v2373
    %v2422 = vpack.c.bf16 %v2380, %v2374
    %v2423 = vpack.c.bf16 %v2381, %v2375
    %v2424 = vpack.c.bf16 %v2382, %v2376
    %v2425 = vpack.c.bf16 %v2383, %v2377
    %v2426 = vpack.c.bf16 %v2384, %v2378
    %v2427 = vpack.c.bf16 %v2385, %v2379
    %v2428 = vpack.c.bf16 %v2392, %v2386
    %v2429 = vpack.c.bf16 %v2393, %v2387
    %v2430 = vpack.c.bf16 %v2394, %v2388
    %v2431 = vpack.c.bf16 %v2395, %v2389
    %v2432 = vpack.c.bf16 %v2396, %v2390
    %v2433 = vpack.c.bf16 %v2397, %v2391
    %v2434 = vld [vmem:[#allocation2] sm:$0x3c]
    %v2435 = vld [vmem:[#allocation2 + $0x8] sm:$0x3c]
    %v2436 = vld [vmem:[#allocation2 + $0x10] sm:$0x3c]
    %v2437 = vld [vmem:[#allocation2 + $0x18] sm:$0x3c]
    %v2438 = vld [vmem:[#allocation2 + $0x20] sm:$0x3c]
    %v2439 = vld [vmem:[#allocation2 + $0x28] sm:$0x3c]
    %v2440 = vld [vmem:[#allocation2 + $0x30] sm:$0x3c]
    %v2441 = vld [vmem:[#allocation2 + $0x38] sm:$0x3c]
    %v2442 = vld [vmem:[#allocation2 + $0x40] sm:$0x3c]
    %v2443 = vld [vmem:[#allocation2 + $0x48] sm:$0x3c]
    %v2444 = vld [vmem:[#allocation2 + $0x50] sm:$0x3c]
    %v2445 = vld [vmem:[#allocation2 + $0x58] sm:$0x3c]
    %v2446 = vld [vmem:[#allocation2 + $0x60] sm:$0x3c]
    %v2447 = vld [vmem:[#allocation2 + $0x68] sm:$0x3c]
    %v2448 = vld [vmem:[#allocation2 + $0x70] sm:$0x3c]
    %v2449 = vld [vmem:[#allocation2 + $0x78] sm:$0x3c]
    %v2450 = vld [vmem:[#allocation2 + $0x80] sm:$0x3c]
    %v2451 = vld [vmem:[#allocation2 + $0x88] sm:$0x3c]
    %v2452 = vld [vmem:[#allocation2 + $0x90] sm:$0x3c]
    %v2453 = vld [vmem:[#allocation2 + $0x98] sm:$0x3c]
    %v2454 = vld [vmem:[#allocation2 + $0xa0] sm:$0x3c]
    %v2455 = vld [vmem:[#allocation2 + $0xa8] sm:$0x3c]
    %v2456 = vld [vmem:[#allocation2 + $0xb0] sm:$0x3c]
    %v2457 = vld [vmem:[#allocation2 + $0xb8] sm:$0x3c]
    %v2458 = vld [vmem:[#allocation2 + $0xc0] sm:$0x3c]
    %v2459 = vld [vmem:[#allocation2 + $0xc8] sm:$0x3c]
    %v2460 = vld [vmem:[#allocation2 + $0xd0] sm:$0x3c]
    %v2461 = vld [vmem:[#allocation2 + $0xd8] sm:$0x3c]
    %v2462 = vld [vmem:[#allocation2 + $0xe0] sm:$0x3c]
    %v2463 = vld [vmem:[#allocation2 + $0xe8] sm:$0x3c]
    %v2464 = vld [vmem:[#allocation2 + $0xf0] sm:$0x3c]
    %v2465 = vld [vmem:[#allocation2 + $0xf8] sm:$0x3c]
    %v2466 = vld [vmem:[#allocation2 + $0x100] sm:$0x3c]
    %v2467 = vld [vmem:[#allocation2 + $0x108] sm:$0x3c]
    %v2468 = vld [vmem:[#allocation2 + $0x110] sm:$0x3c]
    %v2469 = vld [vmem:[#allocation2 + $0x118] sm:$0x3c]
    %v2470 = vld [vmem:[#allocation2 + $0x120] sm:$0x3c]
    %v2471 = vld [vmem:[#allocation2 + $0x128] sm:$0x3c]
    %v2472 = vld [vmem:[#allocation2 + $0x130] sm:$0x3c]
    %v2473 = vld [vmem:[#allocation2 + $0x138] sm:$0x3c]
    %v2474 = vld [vmem:[#allocation2 + $0x140] sm:$0x3c]
    %v2475 = vld [vmem:[#allocation2 + $0x148] sm:$0x3c]
    %v2476 = vld [vmem:[#allocation2 + $0x150] sm:$0x3c]
    %v2477 = vld [vmem:[#allocation2 + $0x158] sm:$0x3c]
    %v2478 = vld [vmem:[#allocation2 + $0x160] sm:$0x3c]
    %v2479 = vld [vmem:[#allocation2 + $0x168] sm:$0x3c]
    %v2480 = vld [vmem:[#allocation2 + $0x170] sm:$0x3c]
    %v2481 = vld [vmem:[#allocation2 + $0x178] sm:$0x3c]
    %v2530 = vcombine.low %v2434, %v2435
    %v2531 = vcombine.high %v2434, %v2435
    %v2532 = vcombine.low %v2436, %v2437
    %v2533 = vcombine.high %v2436, %v2437
    %v2534 = vcombine.low %v2438, %v2439
    %v2535 = vcombine.high %v2438, %v2439
    %v2536 = vcombine.low %v2440, %v2441
    %v2537 = vcombine.high %v2440, %v2441
    %v2538 = vcombine.low %v2442, %v2443
    %v2539 = vcombine.high %v2442, %v2443
    %v2540 = vcombine.low %v2444, %v2445
    %v2541 = vcombine.high %v2444, %v2445
    %v2542 = vcombine.low %v2446, %v2447
    %v2543 = vcombine.high %v2446, %v2447
    %v2544 = vcombine.low %v2448, %v2449
    %v2545 = vcombine.high %v2448, %v2449
    %v2546 = vcombine.low %v2450, %v2451
    %v2547 = vcombine.high %v2450, %v2451
    %v2548 = vcombine.low %v2452, %v2453
    %v2549 = vcombine.high %v2452, %v2453
    %v2550 = vcombine.low %v2454, %v2455
    %v2551 = vcombine.high %v2454, %v2455
    %v2552 = vcombine.low %v2456, %v2457
    %v2553 = vcombine.high %v2456, %v2457
    %v2554 = vcombine.low %v2458, %v2459
    %v2555 = vcombine.high %v2458, %v2459
    %v2556 = vcombine.low %v2460, %v2461
    %v2557 = vcombine.high %v2460, %v2461
    %v2558 = vcombine.low %v2462, %v2463
    %v2559 = vcombine.high %v2462, %v2463
    %v2560 = vcombine.low %v2464, %v2465
    %v2561 = vcombine.high %v2464, %v2465
    %v2562 = vcombine.low %v2466, %v2467
    %v2563 = vcombine.high %v2466, %v2467
    %v2564 = vcombine.low %v2468, %v2469
    %v2565 = vcombine.high %v2468, %v2469
    %v2566 = vcombine.low %v2470, %v2471
    %v2567 = vcombine.high %v2470, %v2471
    %v2568 = vcombine.low %v2472, %v2473
    %v2569 = vcombine.high %v2472, %v2473
    %v2570 = vcombine.low %v2474, %v2475
    %v2571 = vcombine.high %v2474, %v2475
    %v2572 = vcombine.low %v2476, %v2477
    %v2573 = vcombine.high %v2476, %v2477
    %v2574 = vcombine.low %v2478, %v2479
    %v2575 = vcombine.high %v2478, %v2479
    %v2576 = vcombine.low %v2480, %v2481
    %v2577 = vcombine.high %v2480, %v2481
    %vm2578 = vcmask 1041408
    %vm2579 = vcmask 1045508
    %vm2580 = vmor %vm2578, %vm2579
    %v2581 = vrot.slane %v2530, 6
    %v2582 = vrot.slane %v2581, 4
    %v2583 = vrot.slane %v2531, 6
    %v2584 = vsel %vm2580, %v2582, %v2583
    %v2585 = vrot.slane %v2532, 6
    %v2586 = vrot.slane %v2585, 4
    %v2587 = vrot.slane %v2533, 6
    %v2588 = vsel %vm2580, %v2586, %v2587
    %v2589 = vrot.slane %v2534, 6
    %v2590 = vrot.slane %v2589, 4
    %v2591 = vrot.slane %v2535, 6
    %v2592 = vsel %vm2580, %v2590, %v2591
    %v2593 = vrot.slane %v2536, 6
    %v2594 = vrot.slane %v2593, 4
    %v2595 = vrot.slane %v2537, 6
    %v2596 = vsel %vm2580, %v2594, %v2595
    %v2597 = vrot.slane %v2538, 6
    %v2598 = vrot.slane %v2597, 4
    %v2599 = vrot.slane %v2539, 6
    %v2600 = vsel %vm2580, %v2598, %v2599
    %v2601 = vrot.slane %v2540, 6
    %v2602 = vrot.slane %v2601, 4
    %v2603 = vrot.slane %v2541, 6
    %v2604 = vsel %vm2580, %v2602, %v2603
    %v2605 = vrot.slane %v2542, 6
    %v2606 = vrot.slane %v2605, 4
    %v2607 = vrot.slane %v2543, 6
    %v2608 = vsel %vm2580, %v2606, %v2607
    %v2609 = vrot.slane %v2544, 6
    %v2610 = vrot.slane %v2609, 4
    %v2611 = vrot.slane %v2545, 6
    %v2612 = vsel %vm2580, %v2610, %v2611
    %v2613 = vrot.slane %v2546, 6
    %v2614 = vrot.slane %v2613, 4
    %v2615 = vrot.slane %v2547, 6
    %v2616 = vsel %vm2580, %v2614, %v2615
    %v2617 = vrot.slane %v2548, 6
    %v2618 = vrot.slane %v2617, 4
    %v2619 = vrot.slane %v2549, 6
    %v2620 = vsel %vm2580, %v2618, %v2619
    %v2621 = vrot.slane %v2550, 6
    %v2622 = vrot.slane %v2621, 4
    %v2623 = vrot.slane %v2551, 6
    %v2624 = vsel %vm2580, %v2622, %v2623
    %v2625 = vrot.slane %v2552, 6
    %v2626 = vrot.slane %v2625, 4
    %v2627 = vrot.slane %v2553, 6
    %v2628 = vsel %vm2580, %v2626, %v2627
    %v2629 = vrot.slane %v2554, 6
    %v2630 = vrot.slane %v2629, 4
    %v2631 = vrot.slane %v2555, 6
    %v2632 = vsel %vm2580, %v2630, %v2631
    %v2633 = vrot.slane %v2556, 6
    %v2634 = vrot.slane %v2633, 4
    %v2635 = vrot.slane %v2557, 6
    %v2636 = vsel %vm2580, %v2634, %v2635
    %v2637 = vrot.slane %v2558, 6
    %v2638 = vrot.slane %v2637, 4
    %v2639 = vrot.slane %v2559, 6
    %v2640 = vsel %vm2580, %v2638, %v2639
    %v2641 = vrot.slane %v2560, 6
    %v2642 = vrot.slane %v2641, 4
    %v2643 = vrot.slane %v2561, 6
    %v2644 = vsel %vm2580, %v2642, %v2643
    %v2645 = vrot.slane %v2562, 6
    %v2646 = vrot.slane %v2645, 4
    %v2647 = vrot.slane %v2563, 6
    %v2648 = vsel %vm2580, %v2646, %v2647
    %v2649 = vrot.slane %v2564, 6
    %v2650 = vrot.slane %v2649, 4
    %v2651 = vrot.slane %v2565, 6
    %v2652 = vsel %vm2580, %v2650, %v2651
    %v2653 = vrot.slane %v2566, 6
    %v2654 = vrot.slane %v2653, 4
    %v2655 = vrot.slane %v2567, 6
    %v2656 = vsel %vm2580, %v2654, %v2655
    %v2657 = vrot.slane %v2568, 6
    %v2658 = vrot.slane %v2657, 4
    %v2659 = vrot.slane %v2569, 6
    %v2660 = vsel %vm2580, %v2658, %v2659
    %v2661 = vrot.slane %v2570, 6
    %v2662 = vrot.slane %v2661, 4
    %v2663 = vrot.slane %v2571, 6
    %v2664 = vsel %vm2580, %v2662, %v2663
    %v2665 = vrot.slane %v2572, 6
    %v2666 = vrot.slane %v2665, 4
    %v2667 = vrot.slane %v2573, 6
    %v2668 = vsel %vm2580, %v2666, %v2667
    %v2669 = vrot.slane %v2574, 6
    %v2670 = vrot.slane %v2669, 4
    %v2671 = vrot.slane %v2575, 6
    %v2672 = vsel %vm2580, %v2670, %v2671
    %v2673 = vrot.slane %v2576, 6
    %v2674 = vrot.slane %v2673, 4
    %v2675 = vrot.slane %v2577, 6
    %v2676 = vsel %vm2580, %v2674, %v2675
    %v2677 = vcombine.low %v2584, %v2596
    %v2678 = vcombine.high %v2584, %v2596
    %v2679 = vcombine.low %v2588, %v2600
    %v2680 = vcombine.high %v2588, %v2600
    %v2681 = vcombine.low %v2592, %v2604
    %v2682 = vcombine.high %v2592, %v2604
    %v2683 = vcombine.low %v2608, %v2620
    %v2684 = vcombine.high %v2608, %v2620
    %v2685 = vcombine.low %v2612, %v2624
    %v2686 = vcombine.high %v2612, %v2624
    %v2687 = vcombine.low %v2616, %v2628
    %v2688 = vcombine.high %v2616, %v2628
    %v2689 = vcombine.low %v2632, %v2644
    %v2690 = vcombine.high %v2632, %v2644
    %v2691 = vcombine.low %v2636, %v2648
    %v2692 = vcombine.high %v2636, %v2648
    %v2693 = vcombine.low %v2640, %v2652
    %v2694 = vcombine.high %v2640, %v2652
    %v2695 = vcombine.low %v2656, %v2668
    %v2696 = vcombine.high %v2656, %v2668
    %v2697 = vcombine.low %v2660, %v2672
    %v2698 = vcombine.high %v2660, %v2672
    %v2699 = vcombine.low %v2664, %v2676
    %v2700 = vcombine.high %v2664, %v2676
    %v2725 = vpack.c.bf16 %v2683, %v2677
    %v2726 = vpack.c.bf16 %v2684, %v2678
    %v2727 = vpack.c.bf16 %v2685, %v2679
    %v2728 = vpack.c.bf16 %v2686, %v2680
    %v2729 = vpack.c.bf16 %v2687, %v2681
    %v2730 = vpack.c.bf16 %v2688, %v2682
    %v2731 = vpack.c.bf16 %v2695, %v2689
    %v2732 = vpack.c.bf16 %v2696, %v2690
    %v2733 = vpack.c.bf16 %v2697, %v2691
    %v2734 = vpack.c.bf16 %v2698, %v2692
    %v2735 = vpack.c.bf16 %v2699, %v2693
    %v2736 = vpack.c.bf16 %v2700, %v2694
    %2737 = vst [vmem:[#allocation3] ss:$8 sm:$0xf] 0.0
    %2738 = vst [vmem:[#allocation3] ss:$8 sm:$0xf0] 0.0
    %s2739 = scalar_lea.vmem [#allocation3], 64
    %2740 = vst.msk [vmem:[%s2739] ss:$8 sm:$0xf] %vm1467, 0.0
    %2741 = vst.msk [vmem:[%s2739] ss:$8 sm:$0x0] %vm1467, 0.0
    %s2742 = scalar_lea.vmem [#allocation3], 96
    %2743 = vst [vmem:[%s2742] ss:$8 sm:$0xf] 0.0
    %2744 = vst [vmem:[%s2742] ss:$8 sm:$0xf0] 0.0
    %s2745 = scalar_lea.vmem [#allocation3], 160
    %2746 = vst.msk [vmem:[%s2745] ss:$8 sm:$0xf] %vm1467, 0.0
    %2747 = vst.msk [vmem:[%s2745] ss:$8 sm:$0x0] %vm1467, 0.0
    %s2748 = scalar_lea.vmem [#allocation3], 192
    %2749 = vst [vmem:[%s2748] ss:$8 sm:$0xf] 0.0
    %2750 = vst [vmem:[%s2748] ss:$8 sm:$0xf0] 0.0
    %s2751 = scalar_lea.vmem [#allocation3], 256
    %2752 = vst.msk [vmem:[%s2751] ss:$8 sm:$0xf] %vm1467, 0.0
    %2753 = vst.msk [vmem:[%s2751] ss:$8 sm:$0x0] %vm1467, 0.0
    %s2754 = scalar_lea.vmem [#allocation3], 288
    %2755 = vst [vmem:[%s2754] ss:$8 sm:$0xf] 0.0
    %2756 = vst [vmem:[%s2754] ss:$8 sm:$0xf0] 0.0
    %s2757 = scalar_lea.vmem [#allocation3], 352
    %2758 = vst.msk [vmem:[%s2757] ss:$8 sm:$0xf] %vm1467, 0.0
    %2759 = vst.msk [vmem:[%s2757] ss:$8 sm:$0x0] %vm1467, 0.0
    %s2760 = scalar_lea.vmem [#allocation3], 384
    %2761 = vst [vmem:[%s2760] ss:$8 sm:$0xf] 0.0
    %2762 = vst [vmem:[%s2760] ss:$8 sm:$0xf0] 0.0
    %s2763 = scalar_lea.vmem [#allocation3], 448
    %2764 = vst.msk [vmem:[%s2763] ss:$8 sm:$0xf] %vm1467, 0.0
    %2765 = vst.msk [vmem:[%s2763] ss:$8 sm:$0x0] %vm1467, 0.0
    %s2766 = scalar_lea.vmem [#allocation3], 480
    %2767 = vst [vmem:[%s2766] ss:$8 sm:$0xf] 0.0
    %2768 = vst [vmem:[%s2766] ss:$8 sm:$0xf0] 0.0
    %s2769 = scalar_lea.vmem [#allocation3], 544
    %2770 = vst.msk [vmem:[%s2769] ss:$8 sm:$0xf] %vm1467, 0.0
    %2771 = vst.msk [vmem:[%s2769] ss:$8 sm:$0x0] %vm1467, 0.0
    %s2772 = scalar_lea.vmem [#allocation3], 576
    %2773 = vst [vmem:[%s2772] ss:$8 sm:$0xf] 0.0
    %2774 = vst [vmem:[%s2772] ss:$8 sm:$0xf0] 0.0
    %s2775 = scalar_lea.vmem [#allocation3], 640
    %2776 = vst.msk [vmem:[%s2775] ss:$8 sm:$0xf] %vm1467, 0.0
    %2777 = vst.msk [vmem:[%s2775] ss:$8 sm:$0x0] %vm1467, 0.0
    %s2778 = scalar_lea.vmem [#allocation3], 672
    %2779 = vst [vmem:[%s2778] ss:$8 sm:$0xf] 0.0
    %2780 = vst [vmem:[%s2778] ss:$8 sm:$0xf0] 0.0
    %s2781 = scalar_lea.vmem [#allocation3], 736
    %2782 = vst.msk [vmem:[%s2781] ss:$8 sm:$0xf] %vm1467, 0.0
    %2783 = vst.msk [vmem:[%s2781] ss:$8 sm:$0x0] %vm1467, 0.0
    %s2784 = scalar_lea.vmem [#allocation3], 5
    %2785 = vst [vmem:[%s2784] ss:$8 sm:$0xf] 0.0
    %2786 = vst [vmem:[%s2784] ss:$8 sm:$0xf0] 0.0
    %s2787 = scalar_lea.vmem [#allocation3], 69
    %2788 = vst.msk [vmem:[%s2787] ss:$8 sm:$0xf] %vm1467, 0.0
    %2789 = vst.msk [vmem:[%s2787] ss:$8 sm:$0x0] %vm1467, 0.0
    %s2790 = scalar_lea.vmem [#allocation3], 101
    %2791 = vst [vmem:[%s2790] ss:$8 sm:$0xf] 0.0
    %2792 = vst [vmem:[%s2790] ss:$8 sm:$0xf0] 0.0
    %s2793 = scalar_lea.vmem [#allocation3], 165
    %2794 = vst.msk [vmem:[%s2793] ss:$8 sm:$0xf] %vm1467, 0.0
    %2795 = vst.msk [vmem:[%s2793] ss:$8 sm:$0x0] %vm1467, 0.0
    %s2796 = scalar_lea.vmem [#allocation3], 197
    %2797 = vst [vmem:[%s2796] ss:$8 sm:$0xf] 0.0
    %2798 = vst [vmem:[%s2796] ss:$8 sm:$0xf0] 0.0
    %s2799 = scalar_lea.vmem [#allocation3], 261
    %2800 = vst.msk [vmem:[%s2799] ss:$8 sm:$0xf] %vm1467, 0.0
    %2801 = vst.msk [vmem:[%s2799] ss:$8 sm:$0x0] %vm1467, 0.0
    %s2802 = scalar_lea.vmem [#allocation3], 293
    %2803 = vst [vmem:[%s2802] ss:$8 sm:$0xf] 0.0
    %2804 = vst [vmem:[%s2802] ss:$8 sm:$0xf0] 0.0
    %s2805 = scalar_lea.vmem [#allocation3], 357
    %2806 = vst.msk [vmem:[%s2805] ss:$8 sm:$0xf] %vm1467, 0.0
    %2807 = vst.msk [vmem:[%s2805] ss:$8 sm:$0x0] %vm1467, 0.0
    %s2808 = scalar_lea.vmem [#allocation3], 389
    %2809 = vst [vmem:[%s2808] ss:$8 sm:$0xf] 0.0
    %2810 = vst [vmem:[%s2808] ss:$8 sm:$0xf0] 0.0
    %s2811 = scalar_lea.vmem [#allocation3], 453
    %2812 = vst.msk [vmem:[%s2811] ss:$8 sm:$0xf] %vm1467, 0.0
    %2813 = vst.msk [vmem:[%s2811] ss:$8 sm:$0x0] %vm1467, 0.0
    %s2814 = scalar_lea.vmem [#allocation3], 485
    %2815 = vst [vmem:[%s2814] ss:$8 sm:$0xf] 0.0
    %2816 = vst [vmem:[%s2814] ss:$8 sm:$0xf0] 0.0
    %s2817 = scalar_lea.vmem [#allocation3], 549
    %2818 = vst.msk [vmem:[%s2817] ss:$8 sm:$0xf] %vm1467, 0.0
    %2819 = vst.msk [vmem:[%s2817] ss:$8 sm:$0x0] %vm1467, 0.0
    %s2820 = scalar_lea.vmem [#allocation3], 581
    %2821 = vst [vmem:[%s2820] ss:$8 sm:$0xf] 0.0
    %2822 = vst [vmem:[%s2820] ss:$8 sm:$0xf0] 0.0
    %s2823 = scalar_lea.vmem [#allocation3], 645
    %2824 = vst.msk [vmem:[%s2823] ss:$8 sm:$0xf] %vm1467, 0.0
    %2825 = vst.msk [vmem:[%s2823] ss:$8 sm:$0x0] %vm1467, 0.0
    %s2826 = scalar_lea.vmem [#allocation3], 677
    %2827 = vst [vmem:[%s2826] ss:$8 sm:$0xf] 0.0
    %2828 = vst [vmem:[%s2826] ss:$8 sm:$0xf0] 0.0
    %s2829 = scalar_lea.vmem [#allocation3], 741
    %2830 = vst.msk [vmem:[%s2829] ss:$8 sm:$0xf] %vm1467, 0.0
    %2831 = vst.msk [vmem:[%s2829] ss:$8 sm:$0x0] %vm1467, 0.0
    %2832 = vst [vmem:[#allocation3] sm:$0x1e] 0.0
    %2833 = vst [vmem:[#allocation3 + $0x8] sm:$0x1e] 0.0
    %2834 = vst [vmem:[#allocation3 + $0x60] sm:$0x1e] 0.0
    %2835 = vst [vmem:[#allocation3 + $0x68] sm:$0x1e] 0.0
    %2836 = vst [vmem:[#allocation3 + $0xc0] sm:$0x1e] 0.0
    %2837 = vst [vmem:[#allocation3 + $0xc8] sm:$0x1e] 0.0
    %2838 = vst [vmem:[#allocation3 + $0x120] sm:$0x1e] 0.0
    %2839 = vst [vmem:[#allocation3 + $0x128] sm:$0x1e] 0.0
    %2840 = vst [vmem:[#allocation3 + $0x180] sm:$0x1e] 0.0
    %2841 = vst [vmem:[#allocation3 + $0x188] sm:$0x1e] 0.0
    %2842 = vst [vmem:[#allocation3 + $0x1e0] sm:$0x1e] 0.0
    %2843 = vst [vmem:[#allocation3 + $0x1e8] sm:$0x1e] 0.0
    %2844 = vst [vmem:[#allocation3 + $0x240] sm:$0x1e] 0.0
    %2845 = vst [vmem:[#allocation3 + $0x248] sm:$0x1e] 0.0
    %2846 = vst [vmem:[#allocation3 + $0x2a0] sm:$0x1e] 0.0
    %2847 = vst [vmem:[#allocation3 + $0x2a8] sm:$0x1e] 0.0
    %2848 = vst [vmem:[#allocation3 + $0x50] sm:$0x1e] 0.0
    %2849 = vst [vmem:[#allocation3 + $0x58] sm:$0x1e] 0.0
    %2850 = vst [vmem:[#allocation3 + $0xb0] sm:$0x1e] 0.0
    %2851 = vst [vmem:[#allocation3 + $0xb8] sm:$0x1e] 0.0
    %2852 = vst [vmem:[#allocation3 + $0x110] sm:$0x1e] 0.0
    %2853 = vst [vmem:[#allocation3 + $0x118] sm:$0x1e] 0.0
    %2854 = vst [vmem:[#allocation3 + $0x170] sm:$0x1e] 0.0
    %2855 = vst [vmem:[#allocation3 + $0x178] sm:$0x1e] 0.0
    %2856 = vst [vmem:[#allocation3 + $0x1d0] sm:$0x1e] 0.0
    %2857 = vst [vmem:[#allocation3 + $0x1d8] sm:$0x1e] 0.0
    %2858 = vst [vmem:[#allocation3 + $0x230] sm:$0x1e] 0.0
    %2859 = vst [vmem:[#allocation3 + $0x238] sm:$0x1e] 0.0
    %2860 = vst [vmem:[#allocation3 + $0x290] sm:$0x1e] 0.0
    %2861 = vst [vmem:[#allocation3 + $0x298] sm:$0x1e] 0.0
    %2862 = vst [vmem:[#allocation3 + $0x2f0] sm:$0x1e] 0.0
    %2863 = vst [vmem:[#allocation3 + $0x2f8] sm:$0x1e] 0.0
    %v2912 = vunpack.c.l.b16 %v1854
    %v2913 = vunpack.c.h.b16 %v1854
    %v2914 = vunpack.c.l.b16 %v1855
    %v2915 = vunpack.c.h.b16 %v1855
    %v2916 = vunpack.c.l.b16 %v1856
    %v2917 = vunpack.c.h.b16 %v1856
    %v2918 = vunpack.c.l.b16 %v1857
    %v2919 = vunpack.c.h.b16 %v1857
    %v2920 = vunpack.c.l.b16 %v1858
    %v2921 = vunpack.c.h.b16 %v1858
    %v2922 = vunpack.c.l.b16 %v1859
    %v2923 = vunpack.c.h.b16 %v1859
    %v2924 = vunpack.c.l.b16 %v1860
    %v2925 = vunpack.c.h.b16 %v1860
    %v2926 = vunpack.c.l.b16 %v1861
    %v2927 = vunpack.c.h.b16 %v1861
    %v2928 = vunpack.c.l.b16 %v1862
    %v2929 = vunpack.c.h.b16 %v1862
    %v2930 = vunpack.c.l.b16 %v1863
    %v2931 = vunpack.c.h.b16 %v1863
    %v2932 = vunpack.c.l.b16 %v1864
    %v2933 = vunpack.c.h.b16 %v1864
    %v2934 = vunpack.c.l.b16 %v1865
    %v2935 = vunpack.c.h.b16 %v1865
    %v2936 = vunpack.c.l.b16 %v1866
    %v2937 = vunpack.c.h.b16 %v1866
    %v2938 = vunpack.c.l.b16 %v1867
    %v2939 = vunpack.c.h.b16 %v1867
    %v2940 = vunpack.c.l.b16 %v1868
    %v2941 = vunpack.c.h.b16 %v1868
    %v2942 = vunpack.c.l.b16 %v1869
    %v2943 = vunpack.c.h.b16 %v1869
    %v2944 = vunpack.c.l.b16 %v1870
    %v2945 = vunpack.c.h.b16 %v1870
    %v2946 = vunpack.c.l.b16 %v1871
    %v2947 = vunpack.c.h.b16 %v1871
    %v2948 = vunpack.c.l.b16 %v1872
    %v2949 = vunpack.c.h.b16 %v1872
    %v2950 = vunpack.c.l.b16 %v1873
    %v2951 = vunpack.c.h.b16 %v1873
    %v2952 = vunpack.c.l.b16 %v1874
    %v2953 = vunpack.c.h.b16 %v1874
    %v2954 = vunpack.c.l.b16 %v1875
    %v2955 = vunpack.c.h.b16 %v1875
    %v2956 = vunpack.c.l.b16 %v1876
    %v2957 = vunpack.c.h.b16 %v1876
    %v2958 = vunpack.c.l.b16 %v1877
    %v2959 = vunpack.c.h.b16 %v1877
    %v2960 = vunpack.c.l.b16 %v1878
    %v2961 = vunpack.c.h.b16 %v1878
    %v2962 = vunpack.c.l.b16 %v1879
    %v2963 = vunpack.c.h.b16 %v1879
    %v2964 = vunpack.c.l.b16 %v1880
    %v2965 = vunpack.c.h.b16 %v1880
    %v2966 = vunpack.c.l.b16 %v1881
    %v2967 = vunpack.c.h.b16 %v1881
    %v2968 = vunpack.c.l.b16 %v1882
    %v2969 = vunpack.c.h.b16 %v1882
    %v2970 = vunpack.c.l.b16 %v1883
    %v2971 = vunpack.c.h.b16 %v1883
    %v2972 = vunpack.c.l.b16 %v1884
    %v2973 = vunpack.c.h.b16 %v1884
    %v2974 = vunpack.c.l.b16 %v1885
    %v2975 = vunpack.c.h.b16 %v1885
    %v2976 = vunpack.c.l.b16 %v1886
    %v2977 = vunpack.c.h.b16 %v1886
    %v2978 = vunpack.c.l.b16 %v1887
    %v2979 = vunpack.c.h.b16 %v1887
    %v2980 = vunpack.c.l.b16 %v1888
    %v2981 = vunpack.c.h.b16 %v1888
    %v2982 = vunpack.c.l.b16 %v1889
    %v2983 = vunpack.c.h.b16 %v1889
    %v2984 = vunpack.c.l.b16 %v1890
    %v2985 = vunpack.c.h.b16 %v1890
    %v2986 = vunpack.c.l.b16 %v1891
    %v2987 = vunpack.c.h.b16 %v1891
    %v2988 = vunpack.c.l.b16 %v1892
    %v2989 = vunpack.c.h.b16 %v1892
    %v2990 = vunpack.c.l.b16 %v1893
    %v2991 = vunpack.c.h.b16 %v1893
    %v2992 = vunpack.c.l.b16 %v1894
    %v2993 = vunpack.c.h.b16 %v1894
    %v2994 = vunpack.c.l.b16 %v1895
    %v2995 = vunpack.c.h.b16 %v1895
    %v2996 = vunpack.c.l.b16 %v1896
    %v2997 = vunpack.c.h.b16 %v1896
    %v2998 = vunpack.c.l.b16 %v1897
    %v2999 = vunpack.c.h.b16 %v1897
    %v3000 = vunpack.c.l.b16 %v1898
    %v3001 = vunpack.c.h.b16 %v1898
    %v3002 = vunpack.c.l.b16 %v1899
    %v3003 = vunpack.c.h.b16 %v1899
    %v3004 = vunpack.c.l.b16 %v1900
    %v3005 = vunpack.c.h.b16 %v1900
    %v3006 = vunpack.c.l.b16 %v1901
    %v3007 = vunpack.c.h.b16 %v1901
    %v3008 = vpack.c.b16 %v2914, %v2912
    %v3009 = vpack.c.b16 %v2915, %v2913
    %v3010 = vpack.c.b16 %v2918, %v2916
    %v3011 = vpack.c.b16 %v2919, %v2917
    %v3012 = vpack.c.b16 %v2922, %v2920
    %v3013 = vpack.c.b16 %v2923, %v2921
    %v3014 = vpack.c.b16 %v2926, %v2924
    %v3015 = vpack.c.b16 %v2927, %v2925
    %v3016 = vpack.c.b16 %v2930, %v2928
    %v3017 = vpack.c.b16 %v2931, %v2929
    %v3018 = vpack.c.b16 %v2934, %v2932
    %v3019 = vpack.c.b16 %v2935, %v2933
    %v3020 = vpack.c.b16 %v2938, %v2936
    %v3021 = vpack.c.b16 %v2939, %v2937
    %v3022 = vpack.c.b16 %v2942, %v2940
    %v3023 = vpack.c.b16 %v2943, %v2941
    %v3024 = vpack.c.b16 %v2946, %v2944
    %v3025 = vpack.c.b16 %v2947, %v2945
    %v3026 = vpack.c.b16 %v2950, %v2948
    %v3027 = vpack.c.b16 %v2951, %v2949
    %v3028 = vpack.c.b16 %v2954, %v2952
    %v3029 = vpack.c.b16 %v2955, %v2953
    %v3030 = vpack.c.b16 %v2958, %v2956
    %v3031 = vpack.c.b16 %v2959, %v2957
    %v3032 = vpack.c.b16 %v2962, %v2960
    %v3033 = vpack.c.b16 %v2963, %v2961
    %v3034 = vpack.c.b16 %v2966, %v2964
    %v3035 = vpack.c.b16 %v2967, %v2965
    %v3036 = vpack.c.b16 %v2970, %v2968
    %v3037 = vpack.c.b16 %v2971, %v2969
    %v3038 = vpack.c.b16 %v2974, %v2972
    %v3039 = vpack.c.b16 %v2975, %v2973
    %v3040 = vpack.c.b16 %v2978, %v2976
    %v3041 = vpack.c.b16 %v2979, %v2977
    %v3042 = vpack.c.b16 %v2982, %v2980
    %v3043 = vpack.c.b16 %v2983, %v2981
    %v3044 = vpack.c.b16 %v2986, %v2984
    %v3045 = vpack.c.b16 %v2987, %v2985
    %v3046 = vpack.c.b16 %v2990, %v2988
    %v3047 = vpack.c.b16 %v2991, %v2989
    %v3048 = vpack.c.b16 %v2994, %v2992
    %v3049 = vpack.c.b16 %v2995, %v2993
    %v3050 = vpack.c.b16 %v2998, %v2996
    %v3051 = vpack.c.b16 %v2999, %v2997
    %v3052 = vpack.c.b16 %v3002, %v3000
    %v3053 = vpack.c.b16 %v3003, %v3001
    %v3054 = vpack.c.b16 %v3006, %v3004
    %v3055 = vpack.c.b16 %v3007, %v3005
    %3104 = vmatprep.subr.bf16.mxu0 %v3009
    %3105 = vmatpush1.bf16.msra.mxu0 %v3008
    %3106 = vmatprep.subr.bf16.mxu0 %v3011
    %3107 = vmatpush1.bf16.msra.mxu0 %v3010
    %3108 = vmatprep.subr.bf16.mxu0 %v3013
    %3109 = vmatpush1.bf16.msra.mxu0 %v3012
    %3110 = vmatprep.subr.bf16.mxu0 %v3015
    %3111 = vmatpush1.bf16.msra.mxu0 %v3014
    %3112 = vmatprep.subr.bf16.mxu0 %v3017
    %3113 = vmatpush1.bf16.msra.mxu0 %v3016
    %3114 = vmatprep.subr.bf16.mxu0 %v3019
    %3115 = vmatpush1.bf16.msra.mxu0 %v3018
    %3116 = vmatprep.subr.bf16.mxu0 %v3021
    %3117 = vmatpush1.bf16.msra.mxu0 %v3020
    %3118 = vmatprep.subr.bf16.mxu0 %v3023
    %3119 = vmatpush1.bf16.msra.mxu0 %v3022
    %3120 = vmatprep.subr.bf16.mxu0 %v3025
    %3121 = vmatpush1.bf16.msra.mxu0 %v3024
    %3122 = vmatprep.subr.bf16.mxu0 %v3027
    %3123 = vmatpush1.bf16.msra.mxu0 %v3026
    %3124 = vmatprep.subr.bf16.mxu0 %v3029
    %3125 = vmatpush1.bf16.msra.mxu0 %v3028
    %3126 = vmatprep.subr.bf16.mxu0 %v3031
    %3127 = vmatpush1.bf16.msra.mxu0 %v3030
    %3128 = vmatprep.subr.bf16.mxu0 %v3033
    %3129 = vmatpush1.bf16.msra.mxu0 %v3032
    %3130 = vmatprep.subr.bf16.mxu0 %v3035
    %3131 = vmatpush1.bf16.msra.mxu0 %v3034
    %3132 = vmatprep.subr.bf16.mxu0 %v3037
    %3133 = vmatpush1.bf16.msra.mxu0 %v3036
    %3134 = vmatprep.subr.bf16.mxu0 %v3039
    %3135 = vmatpush1.bf16.msra.mxu0 %v3038
    %3136 = vmatprep.mubr.bf16.mxu0 %v2423
    %3137 = vmatmul.mubr.bf16.gmra.mrb[0].mxu0 %v2422
    %v3138 = vpop.f32.mrb[0].mxu0
    %v3139 = vadd.f32 0.0, %v3138
    %v3140 = vpop.f32.mrb[0].mxu0
    %v3141 = vadd.f32 0.0, %v3140
    %v3142 = vpop.f32.mrb[0].mxu0
    %v3143 = vadd.f32 0.0, %v3142
    %v3144 = vpop.f32.mrb[0].mxu0
    %v3145 = vadd.f32 0.0, %v3144
    %3146 = vmatprep.mubr.bf16.mxu0 %v2429
    %3147 = vmatmul.mubr.bf16.gmra.mrb[0].mxu0 %v2428
    %v3148 = vpop.f32.mrb[0].mxu0
    %v3149 = vadd.f32 0.0, %v3148
    %v3150 = vpop.f32.mrb[0].mxu0
    %v3151 = vadd.f32 0.0, %v3150
    %v3152 = vpop.f32.mrb[0].mxu0
    %v3153 = vadd.f32 0.0, %v3152
    %v3154 = vpop.f32.mrb[0].mxu0
    %v3155 = vadd.f32 0.0, %v3154
    %3156 = vdwg.mxu0
    %3157 = vmatprep.subr.bf16.mxu0 %v3041
    %3158 = vmatpush1.bf16.msra.mxu0 %v3040
    %3159 = vmatprep.subr.bf16.mxu0 %v3043
    %3160 = vmatpush1.bf16.msra.mxu0 %v3042
    %3161 = vmatprep.subr.bf16.mxu0 %v3045
    %3162 = vmatpush1.bf16.msra.mxu0 %v3044
    %3163 = vmatprep.subr.bf16.mxu0 %v3047
    %3164 = vmatpush1.bf16.msra.mxu0 %v3046
    %3165 = vmatprep.subr.bf16.mxu0 %v3049
    %3166 = vmatpush1.bf16.msra.mxu0 %v3048
    %3167 = vmatprep.subr.bf16.mxu0 %v3051
    %3168 = vmatpush1.bf16.msra.mxu0 %v3050
    %3169 = vmatprep.subr.bf16.mxu0 %v3053
    %3170 = vmatpush1.bf16.msra.mxu0 %v3052
    %3171 = vmatprep.subr.bf16.mxu0 %v3055
    %3172 = vmatpush1.bf16.msra.mxu0 %v3054
    %3173 = vmatprep.subr.bf16.mxu0 0
    %3174 = vmatpush1.bf16.msra.mxu0 0
    %3175 = vmatprep.subr.bf16.mxu0 0
    %3176 = vmatpush1.bf16.msra.mxu0 0
    %3177 = vmatprep.subr.bf16.mxu0 0
    %3178 = vmatpush1.bf16.msra.mxu0 0
    %3179 = vmatprep.subr.bf16.mxu0 0
    %3180 = vmatpush1.bf16.msra.mxu0 0
    %3181 = vmatprep.subr.bf16.mxu0 0
    %3182 = vmatpush1.bf16.msra.mxu0 0
    %3183 = vmatprep.subr.bf16.mxu0 0
    %3184 = vmatpush1.bf16.msra.mxu0 0
    %3185 = vmatprep.subr.bf16.mxu0 0
    %3186 = vmatpush1.bf16.msra.mxu0 0
    %3187 = vmatprep.subr.bf16.mxu0 0
    %3188 = vmatpush1.bf16.msra.mxu0 0
    %3189 = vmatprep.mubr.bf16.mxu0 0
    %3190 = vmatmul.mubr.bf16.gmra.mrb[0].mxu0 %v2424
    %v3191 = vpop.f32.mrb[0].mxu0
    %v3192 = vadd.f32 %v3139, %v3191
    %v3193 = vpop.f32.mrb[0].mxu0
    %v3194 = vadd.f32 %v3141, %v3193
    %v3195 = vpop.f32.mrb[0].mxu0
    %v3196 = vadd.f32 %v3143, %v3195
    %v3197 = vpop.f32.mrb[0].mxu0
    %v3198 = vadd.f32 %v3145, %v3197
    %3199 = vmatprep.mubr.bf16.mxu0 0
    %3200 = vmatmul.mubr.bf16.gmra.mrb[0].mxu0 %v2430
    %v3201 = vpop.f32.mrb[0].mxu0
    %v3202 = vadd.f32 %v3149, %v3201
    %v3203 = vpop.f32.mrb[0].mxu0
    %v3204 = vadd.f32 %v3151, %v3203
    %v3205 = vpop.f32.mrb[0].mxu0
    %v3206 = vadd.f32 %v3153, %v3205
    %v3207 = vpop.f32.mrb[0].mxu0
    %v3208 = vadd.f32 %v3155, %v3207
    %3209 = vdwg.mxu0
    %v3258 = vunpack.c.l.b16 %v1805
    %v3259 = vunpack.c.h.b16 %v1805
    %v3260 = vunpack.c.l.b16 %v1806
    %v3261 = vunpack.c.h.b16 %v1806
    %v3262 = vunpack.c.l.b16 %v1807
    %v3263 = vunpack.c.h.b16 %v1807
    %v3264 = vunpack.c.l.b16 %v1808
    %v3265 = vunpack.c.h.b16 %v1808
    %v3266 = vunpack.c.l.b16 %v1809
    %v3267 = vunpack.c.h.b16 %v1809
    %v3268 = vunpack.c.l.b16 %v1810
    %v3269 = vunpack.c.h.b16 %v1810
    %v3270 = vunpack.c.l.b16 %v1811
    %v3271 = vunpack.c.h.b16 %v1811
    %v3272 = vunpack.c.l.b16 %v1812
    %v3273 = vunpack.c.h.b16 %v1812
    %v3274 = vunpack.c.l.b16 %v1813
    %v3275 = vunpack.c.h.b16 %v1813
    %v3276 = vunpack.c.l.b16 %v1814
    %v3277 = vunpack.c.h.b16 %v1814
    %v3278 = vunpack.c.l.b16 %v1815
    %v3279 = vunpack.c.h.b16 %v1815
    %v3280 = vunpack.c.l.b16 %v1816
    %v3281 = vunpack.c.h.b16 %v1816
    %v3282 = vunpack.c.l.b16 %v1817
    %v3283 = vunpack.c.h.b16 %v1817
    %v3284 = vunpack.c.l.b16 %v1818
    %v3285 = vunpack.c.h.b16 %v1818
    %v3286 = vunpack.c.l.b16 %v1819
    %v3287 = vunpack.c.h.b16 %v1819
    %v3288 = vunpack.c.l.b16 %v1820
    %v3289 = vunpack.c.h.b16 %v1820
    %v3290 = vunpack.c.l.b16 %v1821
    %v3291 = vunpack.c.h.b16 %v1821
    %v3292 = vunpack.c.l.b16 %v1822
    %v3293 = vunpack.c.h.b16 %v1822
    %v3294 = vunpack.c.l.b16 %v1823
    %v3295 = vunpack.c.h.b16 %v1823
    %v3296 = vunpack.c.l.b16 %v1824
    %v3297 = vunpack.c.h.b16 %v1824
    %v3298 = vunpack.c.l.b16 %v1825
    %v3299 = vunpack.c.h.b16 %v1825
    %v3300 = vunpack.c.l.b16 %v1826
    %v3301 = vunpack.c.h.b16 %v1826
    %v3302 = vunpack.c.l.b16 %v1827
    %v3303 = vunpack.c.h.b16 %v1827
    %v3304 = vunpack.c.l.b16 %v1828
    %v3305 = vunpack.c.h.b16 %v1828
    %v3306 = vunpack.c.l.b16 %v1829
    %v3307 = vunpack.c.h.b16 %v1829
    %v3308 = vunpack.c.l.b16 %v1830
    %v3309 = vunpack.c.h.b16 %v1830
    %v3310 = vunpack.c.l.b16 %v1831
    %v3311 = vunpack.c.h.b16 %v1831
    %v3312 = vunpack.c.l.b16 %v1832
    %v3313 = vunpack.c.h.b16 %v1832
    %v3314 = vunpack.c.l.b16 %v1833
    %v3315 = vunpack.c.h.b16 %v1833
    %v3316 = vunpack.c.l.b16 %v1834
    %v3317 = vunpack.c.h.b16 %v1834
    %v3318 = vunpack.c.l.b16 %v1835
    %v3319 = vunpack.c.h.b16 %v1835
    %v3320 = vunpack.c.l.b16 %v1836
    %v3321 = vunpack.c.h.b16 %v1836
    %v3322 = vunpack.c.l.b16 %v1837
    %v3323 = vunpack.c.h.b16 %v1837
    %v3324 = vunpack.c.l.b16 %v1838
    %v3325 = vunpack.c.h.b16 %v1838
    %v3326 = vunpack.c.l.b16 %v1839
    %v3327 = vunpack.c.h.b16 %v1839
    %v3328 = vunpack.c.l.b16 %v1840
    %v3329 = vunpack.c.h.b16 %v1840
    %v3330 = vunpack.c.l.b16 %v1841
    %v3331 = vunpack.c.h.b16 %v1841
    %v3332 = vunpack.c.l.b16 %v1842
    %v3333 = vunpack.c.h.b16 %v1842
    %v3334 = vunpack.c.l.b16 %v1843
    %v3335 = vunpack.c.h.b16 %v1843
    %v3336 = vunpack.c.l.b16 %v1844
    %v3337 = vunpack.c.h.b16 %v1844
    %v3338 = vunpack.c.l.b16 %v1845
    %v3339 = vunpack.c.h.b16 %v1845
    %v3340 = vunpack.c.l.b16 %v1846
    %v3341 = vunpack.c.h.b16 %v1846
    %v3342 = vunpack.c.l.b16 %v1847
    %v3343 = vunpack.c.h.b16 %v1847
    %v3344 = vunpack.c.l.b16 %v1848
    %v3345 = vunpack.c.h.b16 %v1848
    %v3346 = vunpack.c.l.b16 %v1849
    %v3347 = vunpack.c.h.b16 %v1849
    %v3348 = vunpack.c.l.b16 %v1850
    %v3349 = vunpack.c.h.b16 %v1850
    %v3350 = vunpack.c.l.b16 %v1851
    %v3351 = vunpack.c.h.b16 %v1851
    %v3352 = vunpack.c.l.b16 %v1852
    %v3353 = vunpack.c.h.b16 %v1852
    %v3354 = vpack.c.b16 %v3260, %v3258
    %v3355 = vpack.c.b16 %v3261, %v3259
    %v3356 = vpack.c.b16 %v3264, %v3262
    %v3357 = vpack.c.b16 %v3265, %v3263
    %v3358 = vpack.c.b16 %v3268, %v3266
    %v3359 = vpack.c.b16 %v3269, %v3267
    %v3360 = vpack.c.b16 %v3272, %v3270
    %v3361 = vpack.c.b16 %v3273, %v3271
    %v3362 = vpack.c.b16 %v3276, %v3274
    %v3363 = vpack.c.b16 %v3277, %v3275
    %v3364 = vpack.c.b16 %v3280, %v3278
    %v3365 = vpack.c.b16 %v3281, %v3279
    %v3366 = vpack.c.b16 %v3284, %v3282
    %v3367 = vpack.c.b16 %v3285, %v3283
    %v3368 = vpack.c.b16 %v3288, %v3286
    %v3369 = vpack.c.b16 %v3289, %v3287
    %v3370 = vpack.c.b16 %v3292, %v3290
    %v3371 = vpack.c.b16 %v3293, %v3291
    %v3372 = vpack.c.b16 %v3296, %v3294
    %v3373 = vpack.c.b16 %v3297, %v3295
    %v3374 = vpack.c.b16 %v3300, %v3298
    %v3375 = vpack.c.b16 %v3301, %v3299
    %v3376 = vpack.c.b16 %v3304, %v3302
    %v3377 = vpack.c.b16 %v3305, %v3303
    %v3378 = vpack.c.b16 %v3308, %v3306
    %v3379 = vpack.c.b16 %v3309, %v3307
    %v3380 = vpack.c.b16 %v3312, %v3310
    %v3381 = vpack.c.b16 %v3313, %v3311
    %v3382 = vpack.c.b16 %v3316, %v3314
    %v3383 = vpack.c.b16 %v3317, %v3315
    %v3384 = vpack.c.b16 %v3320, %v3318
    %v3385 = vpack.c.b16 %v3321, %v3319
    %v3386 = vpack.c.b16 %v3324, %v3322
    %v3387 = vpack.c.b16 %v3325, %v3323
    %v3388 = vpack.c.b16 %v3328, %v3326
    %v3389 = vpack.c.b16 %v3329, %v3327
    %v3390 = vpack.c.b16 %v3332, %v3330
    %v3391 = vpack.c.b16 %v3333, %v3331
    %v3392 = vpack.c.b16 %v3336, %v3334
    %v3393 = vpack.c.b16 %v3337, %v3335
    %v3394 = vpack.c.b16 %v3340, %v3338
    %v3395 = vpack.c.b16 %v3341, %v3339
    %v3396 = vpack.c.b16 %v3344, %v3342
    %v3397 = vpack.c.b16 %v3345, %v3343
    %v3398 = vpack.c.b16 %v3348, %v3346
    %v3399 = vpack.c.b16 %v3349, %v3347
    %v3400 = vpack.c.b16 %v3352, %v3350
    %v3401 = vpack.c.b16 %v3353, %v3351
    %3450 = vmatprep.subr.bf16.mxu0 %v3355
    %3451 = vmatpush1.bf16.msra.mxu0 %v3354
    %3452 = vmatprep.subr.bf16.mxu0 %v3357
    %3453 = vmatpush1.bf16.msra.mxu0 %v3356
    %3454 = vmatprep.subr.bf16.mxu0 %v3359
    %3455 = vmatpush1.bf16.msra.mxu0 %v3358
    %3456 = vmatprep.subr.bf16.mxu0 %v3361
    %3457 = vmatpush1.bf16.msra.mxu0 %v3360
    %3458 = vmatprep.subr.bf16.mxu0 %v3363
    %3459 = vmatpush1.bf16.msra.mxu0 %v3362
    %3460 = vmatprep.subr.bf16.mxu0 %v3365
    %3461 = vmatpush1.bf16.msra.mxu0 %v3364
    %3462 = vmatprep.subr.bf16.mxu0 %v3367
    %3463 = vmatpush1.bf16.msra.mxu0 %v3366
    %3464 = vmatprep.subr.bf16.mxu0 %v3369
    %3465 = vmatpush1.bf16.msra.mxu0 %v3368
    %3466 = vmatprep.subr.bf16.mxu0 %v3371
    %3467 = vmatpush1.bf16.msra.mxu0 %v3370
    %3468 = vmatprep.subr.bf16.mxu0 %v3373
    %3469 = vmatpush1.bf16.msra.mxu0 %v3372
    %3470 = vmatprep.subr.bf16.mxu0 %v3375
    %3471 = vmatpush1.bf16.msra.mxu0 %v3374
    %3472 = vmatprep.subr.bf16.mxu0 %v3377
    %3473 = vmatpush1.bf16.msra.mxu0 %v3376
    %3474 = vmatprep.subr.bf16.mxu0 %v3379
    %3475 = vmatpush1.bf16.msra.mxu0 %v3378
    %3476 = vmatprep.subr.bf16.mxu0 %v3381
    %3477 = vmatpush1.bf16.msra.mxu0 %v3380
    %3478 = vmatprep.subr.bf16.mxu0 %v3383
    %3479 = vmatpush1.bf16.msra.mxu0 %v3382
    %3480 = vmatprep.subr.bf16.mxu0 %v3385
    %3481 = vmatpush1.bf16.msra.mxu0 %v3384
    %3482 = vmatprep.mubr.bf16.mxu0 %v2120
    %3483 = vmatmul.mubr.bf16.gmra.mrb[0].mxu0 %v2119
    %v3484 = vpop.f32.mrb[0].mxu0
    %v3485 = vadd.f32 %v3192, %v3484
    %v3486 = vpop.f32.mrb[0].mxu0
    %v3487 = vadd.f32 %v3194, %v3486
    %v3488 = vpop.f32.mrb[0].mxu0
    %v3489 = vadd.f32 %v3196, %v3488
    %v3490 = vpop.f32.mrb[0].mxu0
    %v3491 = vadd.f32 %v3198, %v3490
    %3492 = vmatprep.mubr.bf16.mxu0 %v2126
    %3493 = vmatmul.mubr.bf16.gmra.mrb[0].mxu0 %v2125
    %v3494 = vpop.f32.mrb[0].mxu0
    %v3495 = vadd.f32 %v3202, %v3494
    %v3496 = vpop.f32.mrb[0].mxu0
    %v3497 = vadd.f32 %v3204, %v3496
    %v3498 = vpop.f32.mrb[0].mxu0
    %v3499 = vadd.f32 %v3206, %v3498
    %v3500 = vpop.f32.mrb[0].mxu0
    %v3501 = vadd.f32 %v3208, %v3500
    %3502 = vdwg.mxu0
    %3503 = vmatprep.subr.bf16.mxu0 %v3387
    %3504 = vmatpush1.bf16.msra.mxu0 %v3386
    %3505 = vmatprep.subr.bf16.mxu0 %v3389
    %3506 = vmatpush1.bf16.msra.mxu0 %v3388
    %3507 = vmatprep.subr.bf16.mxu0 %v3391
    %3508 = vmatpush1.bf16.msra.mxu0 %v3390
    %3509 = vmatprep.subr.bf16.mxu0 %v3393
    %3510 = vmatpush1.bf16.msra.mxu0 %v3392
    %3511 = vmatprep.subr.bf16.mxu0 %v3395
    %3512 = vmatpush1.bf16.msra.mxu0 %v3394
    %3513 = vmatprep.subr.bf16.mxu0 %v3397
    %3514 = vmatpush1.bf16.msra.mxu0 %v3396
    %3515 = vmatprep.subr.bf16.mxu0 %v3399
    %3516 = vmatpush1.bf16.msra.mxu0 %v3398
    %3517 = vmatprep.subr.bf16.mxu0 %v3401
    %3518 = vmatpush1.bf16.msra.mxu0 %v3400
    %3519 = vmatprep.subr.bf16.mxu0 0
    %3520 = vmatpush1.bf16.msra.mxu0 0
    %3521 = vmatprep.subr.bf16.mxu0 0
    %3522 = vmatpush1.bf16.msra.mxu0 0
    %3523 = vmatprep.subr.bf16.mxu0 0
    %3524 = vmatpush1.bf16.msra.mxu0 0
    %3525 = vmatprep.subr.bf16.mxu0 0
    %3526 = vmatpush1.bf16.msra.mxu0 0
    %3527 = vmatprep.subr.bf16.mxu0 0
    %3528 = vmatpush1.bf16.msra.mxu0 0
    %3529 = vmatprep.subr.bf16.mxu0 0
    %3530 = vmatpush1.bf16.msra.mxu0 0
    %3531 = vmatprep.subr.bf16.mxu0 0
    %3532 = vmatpush1.bf16.msra.mxu0 0
    %3533 = vmatprep.subr.bf16.mxu0 0
    %3534 = vmatpush1.bf16.msra.mxu0 0
    %3535 = vmatprep.mubr.bf16.mxu0 0
    %3536 = vmatmul.mubr.bf16.gmra.mrb[0].mxu0 %v2121
    %v3537 = vpop.f32.mrb[0].mxu0
    %v3538 = vadd.f32 %v3485, %v3537
    %v3539 = vpop.f32.mrb[0].mxu0
    %v3540 = vadd.f32 %v3487, %v3539
    %v3541 = vpop.f32.mrb[0].mxu0
    %v3542 = vadd.f32 %v3489, %v3541
    %v3543 = vpop.f32.mrb[0].mxu0
    %v3544 = vadd.f32 %v3491, %v3543
    %3545 = vmatprep.mubr.bf16.mxu0 0
    %3546 = vmatmul.mubr.bf16.gmra.mrb[0].mxu0 %v2127
    %v3547 = vpop.f32.mrb[0].mxu0
    %v3548 = vadd.f32 %v3495, %v3547
    %v3549 = vpop.f32.mrb[0].mxu0
    %v3550 = vadd.f32 %v3497, %v3549
    %v3551 = vpop.f32.mrb[0].mxu0
    %v3552 = vadd.f32 %v3499, %v3551
    %v3553 = vpop.f32.mrb[0].mxu0
    %v3554 = vadd.f32 %v3501, %v3553
    %3555 = vdwg.mxu0
    %v3604 = vunpack.c.l.b16 %v1903
    %v3605 = vunpack.c.h.b16 %v1903
    %v3606 = vunpack.c.l.b16 %v1904
    %v3607 = vunpack.c.h.b16 %v1904
    %v3608 = vunpack.c.l.b16 %v1905
    %v3609 = vunpack.c.h.b16 %v1905
    %v3610 = vunpack.c.l.b16 %v1906
    %v3611 = vunpack.c.h.b16 %v1906
    %v3612 = vunpack.c.l.b16 %v1907
    %v3613 = vunpack.c.h.b16 %v1907
    %v3614 = vunpack.c.l.b16 %v1908
    %v3615 = vunpack.c.h.b16 %v1908
    %v3616 = vunpack.c.l.b16 %v1909
    %v3617 = vunpack.c.h.b16 %v1909
    %v3618 = vunpack.c.l.b16 %v1910
    %v3619 = vunpack.c.h.b16 %v1910
    %v3620 = vunpack.c.l.b16 %v1911
    %v3621 = vunpack.c.h.b16 %v1911
    %v3622 = vunpack.c.l.b16 %v1912
    %v3623 = vunpack.c.h.b16 %v1912
    %v3624 = vunpack.c.l.b16 %v1913
    %v3625 = vunpack.c.h.b16 %v1913
    %v3626 = vunpack.c.l.b16 %v1914
    %v3627 = vunpack.c.h.b16 %v1914
    %v3628 = vunpack.c.l.b16 %v1915
    %v3629 = vunpack.c.h.b16 %v1915
    %v3630 = vunpack.c.l.b16 %v1916
    %v3631 = vunpack.c.h.b16 %v1916
    %v3632 = vunpack.c.l.b16 %v1917
    %v3633 = vunpack.c.h.b16 %v1917
    %v3634 = vunpack.c.l.b16 %v1918
    %v3635 = vunpack.c.h.b16 %v1918
    %v3636 = vunpack.c.l.b16 %v1919
    %v3637 = vunpack.c.h.b16 %v1919
    %v3638 = vunpack.c.l.b16 %v1920
    %v3639 = vunpack.c.h.b16 %v1920
    %v3640 = vunpack.c.l.b16 %v1921
    %v3641 = vunpack.c.h.b16 %v1921
    %v3642 = vunpack.c.l.b16 %v1922
    %v3643 = vunpack.c.h.b16 %v1922
    %v3644 = vunpack.c.l.b16 %v1923
    %v3645 = vunpack.c.h.b16 %v1923
    %v3646 = vunpack.c.l.b16 %v1924
    %v3647 = vunpack.c.h.b16 %v1924
    %v3648 = vunpack.c.l.b16 %v1925
    %v3649 = vunpack.c.h.b16 %v1925
    %v3650 = vunpack.c.l.b16 %v1926
    %v3651 = vunpack.c.h.b16 %v1926
    %v3652 = vunpack.c.l.b16 %v1927
    %v3653 = vunpack.c.h.b16 %v1927
    %v3654 = vunpack.c.l.b16 %v1928
    %v3655 = vunpack.c.h.b16 %v1928
    %v3656 = vunpack.c.l.b16 %v1929
    %v3657 = vunpack.c.h.b16 %v1929
    %v3658 = vunpack.c.l.b16 %v1930
    %v3659 = vunpack.c.h.b16 %v1930
    %v3660 = vunpack.c.l.b16 %v1931
    %v3661 = vunpack.c.h.b16 %v1931
    %v3662 = vunpack.c.l.b16 %v1932
    %v3663 = vunpack.c.h.b16 %v1932
    %v3664 = vunpack.c.l.b16 %v1933
    %v3665 = vunpack.c.h.b16 %v1933
    %v3666 = vunpack.c.l.b16 %v1934
    %v3667 = vunpack.c.h.b16 %v1934
    %v3668 = vunpack.c.l.b16 %v1935
    %v3669 = vunpack.c.h.b16 %v1935
    %v3670 = vunpack.c.l.b16 %v1936
    %v3671 = vunpack.c.h.b16 %v1936
    %v3672 = vunpack.c.l.b16 %v1937
    %v3673 = vunpack.c.h.b16 %v1937
    %v3674 = vunpack.c.l.b16 %v1938
    %v3675 = vunpack.c.h.b16 %v1938
    %v3676 = vunpack.c.l.b16 %v1939
    %v3677 = vunpack.c.h.b16 %v1939
    %v3678 = vunpack.c.l.b16 %v1940
    %v3679 = vunpack.c.h.b16 %v1940
    %v3680 = vunpack.c.l.b16 %v1941
    %v3681 = vunpack.c.h.b16 %v1941
    %v3682 = vunpack.c.l.b16 %v1942
    %v3683 = vunpack.c.h.b16 %v1942
    %v3684 = vunpack.c.l.b16 %v1943
    %v3685 = vunpack.c.h.b16 %v1943
    %v3686 = vunpack.c.l.b16 %v1944
    %v3687 = vunpack.c.h.b16 %v1944
    %v3688 = vunpack.c.l.b16 %v1945
    %v3689 = vunpack.c.h.b16 %v1945
    %v3690 = vunpack.c.l.b16 %v1946
    %v3691 = vunpack.c.h.b16 %v1946
    %v3692 = vunpack.c.l.b16 %v1947
    %v3693 = vunpack.c.h.b16 %v1947
    %v3694 = vunpack.c.l.b16 %v1948
    %v3695 = vunpack.c.h.b16 %v1948
    %v3696 = vunpack.c.l.b16 %v1949
    %v3697 = vunpack.c.h.b16 %v1949
    %v3698 = vunpack.c.l.b16 %v1950
    %v3699 = vunpack.c.h.b16 %v1950
    %v3700 = vpack.c.b16 %v3606, %v3604
    %v3701 = vpack.c.b16 %v3607, %v3605
    %v3702 = vpack.c.b16 %v3610, %v3608
    %v3703 = vpack.c.b16 %v3611, %v3609
    %v3704 = vpack.c.b16 %v3614, %v3612
    %v3705 = vpack.c.b16 %v3615, %v3613
    %v3706 = vpack.c.b16 %v3618, %v3616
    %v3707 = vpack.c.b16 %v3619, %v3617
    %v3708 = vpack.c.b16 %v3622, %v3620
    %v3709 = vpack.c.b16 %v3623, %v3621
    %v3710 = vpack.c.b16 %v3626, %v3624
    %v3711 = vpack.c.b16 %v3627, %v3625
    %v3712 = vpack.c.b16 %v3630, %v3628
    %v3713 = vpack.c.b16 %v3631, %v3629
    %v3714 = vpack.c.b16 %v3634, %v3632
    %v3715 = vpack.c.b16 %v3635, %v3633
    %v3716 = vpack.c.b16 %v3638, %v3636
    %v3717 = vpack.c.b16 %v3639, %v3637
    %v3718 = vpack.c.b16 %v3642, %v3640
    %v3719 = vpack.c.b16 %v3643, %v3641
    %v3720 = vpack.c.b16 %v3646, %v3644
    %v3721 = vpack.c.b16 %v3647, %v3645
    %v3722 = vpack.c.b16 %v3650, %v3648
    %v3723 = vpack.c.b16 %v3651, %v3649
    %v3724 = vpack.c.b16 %v3654, %v3652
    %v3725 = vpack.c.b16 %v3655, %v3653
    %v3726 = vpack.c.b16 %v3658, %v3656
    %v3727 = vpack.c.b16 %v3659, %v3657
    %v3728 = vpack.c.b16 %v3662, %v3660
    %v3729 = vpack.c.b16 %v3663, %v3661
    %v3730 = vpack.c.b16 %v3666, %v3664
    %v3731 = vpack.c.b16 %v3667, %v3665
    %v3732 = vpack.c.b16 %v3670, %v3668
    %v3733 = vpack.c.b16 %v3671, %v3669
    %v3734 = vpack.c.b16 %v3674, %v3672
    %v3735 = vpack.c.b16 %v3675, %v3673
    %v3736 = vpack.c.b16 %v3678, %v3676
    %v3737 = vpack.c.b16 %v3679, %v3677
    %v3738 = vpack.c.b16 %v3682, %v3680
    %v3739 = vpack.c.b16 %v3683, %v3681
    %v3740 = vpack.c.b16 %v3686, %v3684
    %v3741 = vpack.c.b16 %v3687, %v3685
    %v3742 = vpack.c.b16 %v3690, %v3688
    %v3743 = vpack.c.b16 %v3691, %v3689
    %v3744 = vpack.c.b16 %v3694, %v3692
    %v3745 = vpack.c.b16 %v3695, %v3693
    %v3746 = vpack.c.b16 %v3698, %v3696
    %v3747 = vpack.c.b16 %v3699, %v3697
    %3796 = vmatprep.subr.bf16.mxu0 %v3701
    %3797 = vmatpush1.bf16.msra.mxu0 %v3700
    %3798 = vmatprep.subr.bf16.mxu0 %v3703
    %3799 = vmatpush1.bf16.msra.mxu0 %v3702
    %3800 = vmatprep.subr.bf16.mxu0 %v3705
    %3801 = vmatpush1.bf16.msra.mxu0 %v3704
    %3802 = vmatprep.subr.bf16.mxu0 %v3707
    %3803 = vmatpush1.bf16.msra.mxu0 %v3706
    %3804 = vmatprep.subr.bf16.mxu0 %v3709
    %3805 = vmatpush1.bf16.msra.mxu0 %v3708
    %3806 = vmatprep.subr.bf16.mxu0 %v3711
    %3807 = vmatpush1.bf16.msra.mxu0 %v3710
    %3808 = vmatprep.subr.bf16.mxu0 %v3713
    %3809 = vmatpush1.bf16.msra.mxu0 %v3712
    %3810 = vmatprep.subr.bf16.mxu0 %v3715
    %3811 = vmatpush1.bf16.msra.mxu0 %v3714
    %3812 = vmatprep.subr.bf16.mxu0 %v3717
    %3813 = vmatpush1.bf16.msra.mxu0 %v3716
    %3814 = vmatprep.subr.bf16.mxu0 %v3719
    %3815 = vmatpush1.bf16.msra.mxu0 %v3718
    %3816 = vmatprep.subr.bf16.mxu0 %v3721
    %3817 = vmatpush1.bf16.msra.mxu0 %v3720
    %3818 = vmatprep.subr.bf16.mxu0 %v3723
    %3819 = vmatpush1.bf16.msra.mxu0 %v3722
    %3820 = vmatprep.subr.bf16.mxu0 %v3725
    %3821 = vmatpush1.bf16.msra.mxu0 %v3724
    %3822 = vmatprep.subr.bf16.mxu0 %v3727
    %3823 = vmatpush1.bf16.msra.mxu0 %v3726
    %3824 = vmatprep.subr.bf16.mxu0 %v3729
    %3825 = vmatpush1.bf16.msra.mxu0 %v3728
    %3826 = vmatprep.subr.bf16.mxu0 %v3731
    %3827 = vmatpush1.bf16.msra.mxu0 %v3730
    %3828 = vmatprep.mubr.bf16.mxu0 %v2726
    %3829 = vmatmul.mubr.bf16.gmra.mrb[0].mxu0 %v2725
    %v3830 = vpop.f32.mrb[0].mxu0
    %v3831 = vadd.f32 0.0, %v3830
    %v3832 = vpop.f32.mrb[0].mxu0
    %v3833 = vadd.f32 0.0, %v3832
    %v3834 = vpop.f32.mrb[0].mxu0
    %v3835 = vadd.f32 0.0, %v3834
    %v3836 = vpop.f32.mrb[0].mxu0
    %v3837 = vadd.f32 0.0, %v3836
    %3838 = vmatprep.mubr.bf16.mxu0 %v2732
    %3839 = vmatmul.mubr.bf16.gmra.mrb[0].mxu0 %v2731
    %v3840 = vpop.f32.mrb[0].mxu0
    %v3841 = vadd.f32 0.0, %v3840
    %v3842 = vpop.f32.mrb[0].mxu0
    %v3843 = vadd.f32 0.0, %v3842
    %v3844 = vpop.f32.mrb[0].mxu0
    %v3845 = vadd.f32 0.0, %v3844
    %v3846 = vpop.f32.mrb[0].mxu0
    %v3847 = vadd.f32 0.0, %v3846
    %3848 = vdwg.mxu0
    %3849 = vmatprep.subr.bf16.mxu0 %v3733
    %3850 = vmatpush1.bf16.msra.mxu0 %v3732
    %3851 = vmatprep.subr.bf16.mxu0 %v3735
    %3852 = vmatpush1.bf16.msra.mxu0 %v3734
    %3853 = vmatprep.subr.bf16.mxu0 %v3737
    %3854 = vmatpush1.bf16.msra.mxu0 %v3736
    %3855 = vmatprep.subr.bf16.mxu0 %v3739
    %3856 = vmatpush1.bf16.msra.mxu0 %v3738
    %3857 = vmatprep.subr.bf16.mxu0 %v3741
    %3858 = vmatpush1.bf16.msra.mxu0 %v3740
    %3859 = vmatprep.subr.bf16.mxu0 %v3743
    %3860 = vmatpush1.bf16.msra.mxu0 %v3742
    %3861 = vmatprep.subr.bf16.mxu0 %v3745
    %3862 = vmatpush1.bf16.msra.mxu0 %v3744
    %3863 = vmatprep.subr.bf16.mxu0 %v3747
    %3864 = vmatpush1.bf16.msra.mxu0 %v3746
    %3865 = vmatprep.subr.bf16.mxu0 0
    %3866 = vmatpush1.bf16.msra.mxu0 0
    %3867 = vmatprep.subr.bf16.mxu0 0
    %3868 = vmatpush1.bf16.msra.mxu0 0
    %3869 = vmatprep.subr.bf16.mxu0 0
    %3870 = vmatpush1.bf16.msra.mxu0 0
    %3871 = vmatprep.subr.bf16.mxu0 0
    %3872 = vmatpush1.bf16.msra.mxu0 0
    %3873 = vmatprep.subr.bf16.mxu0 0
    %3874 = vmatpush1.bf16.msra.mxu0 0
    %3875 = vmatprep.subr.bf16.mxu0 0
    %3876 = vmatpush1.bf16.msra.mxu0 0
    %3877 = vmatprep.subr.bf16.mxu0 0
    %3878 = vmatpush1.bf16.msra.mxu0 0
    %3879 = vmatprep.subr.bf16.mxu0 0
    %3880 = vmatpush1.bf16.msra.mxu0 0
    %3881 = vmatprep.mubr.bf16.mxu0 0
    %3882 = vmatmul.mubr.bf16.gmra.mrb[0].mxu0 %v2727
    %v3883 = vpop.f32.mrb[0].mxu0
    %v3884 = vadd.f32 %v3831, %v3883
    %v3885 = vpop.f32.mrb[0].mxu0
    %v3886 = vadd.f32 %v3833, %v3885
    %v3887 = vpop.f32.mrb[0].mxu0
    %v3888 = vadd.f32 %v3835, %v3887
    %v3889 = vpop.f32.mrb[0].mxu0
    %v3890 = vadd.f32 %v3837, %v3889
    %3891 = vmatprep.mubr.bf16.mxu0 0
    %3892 = vmatmul.mubr.bf16.gmra.mrb[0].mxu0 %v2733
    %v3893 = vpop.f32.mrb[0].mxu0
    %v3894 = vadd.f32 %v3841, %v3893
    %v3895 = vpop.f32.mrb[0].mxu0
    %v3896 = vadd.f32 %v3843, %v3895
    %v3897 = vpop.f32.mrb[0].mxu0
    %v3898 = vadd.f32 %v3845, %v3897
    %v3899 = vpop.f32.mrb[0].mxu0
    %v3900 = vadd.f32 %v3847, %v3899
    %3901 = vdwg.mxu0
    %v3902 = vadd.f32 %v3538, %v3884
    %v3903 = vadd.f32 %v3540, %v3886
    %v3904 = vadd.f32 %v3542, %v3888
    %v3905 = vadd.f32 %v3544, %v3890
    %v3906 = vadd.f32 %v3548, %v3894
    %v3907 = vadd.f32 %v3550, %v3896
    %v3908 = vadd.f32 %v3552, %v3898
    %v3909 = vadd.f32 %v3554, %v3900
    %v3911 = vlaneseq
    %v3912 = vshrl.u32 %v3911, 7
    %v3913 = vsub.s32 0, %v3912
    %v3914 = vrot.slane %v1804, %v3913
    %v3915 = vlaneseq
    %v3916 = vshrl.u32 %v3915, 7
    %v3917 = vsub.s32 1, %v3916
    %v3918 = vrot.slane %v1804, %v3917
    %v3921 = vadd.f32 %v3902, %v3914
    %v3922 = vadd.f32 %v3903, %v3918
    %v3923 = vadd.f32 %v3904, %v3914
    %v3924 = vadd.f32 %v3905, %v3918
    %v3925 = vadd.f32 %v3906, %v3914
    %v3926 = vadd.f32 %v3907, %v3918
    %v3927 = vadd.f32 %v3908, %v3914
    %v3928 = vadd.f32 %v3909, %v3918
    %vm3929 = vcmp.gt.f32.partialorder %v3921, 0.0
    %vm3930 = vcmp.gt.f32.partialorder %v3922, 0.0
    %vm3931 = vcmp.gt.f32.partialorder %v3923, 0.0
    %vm3932 = vcmp.gt.f32.partialorder %v3924, 0.0
    %vm3933 = vcmp.gt.f32.partialorder %v3925, 0.0
    %vm3934 = vcmp.gt.f32.partialorder %v3926, 0.0
    %vm3935 = vcmp.gt.f32.partialorder %v3927, 0.0
    %vm3936 = vcmp.gt.f32.partialorder %v3928, 0.0
    %v3937 = vmul.f32 %v3921, 0.15
    %v3938 = vmul.f32 %v3922, 0.15
    %v3939 = vmul.f32 %v3923, 0.15
    %v3940 = vmul.f32 %v3924, 0.15
    %v3941 = vmul.f32 %v3925, 0.15
    %v3942 = vmul.f32 %v3926, 0.15
    %v3943 = vmul.f32 %v3927, 0.15
    %v3944 = vmul.f32 %v3928, 0.15
    %v3945 = vsel %vm3929, %v3921, %v3937
    %v3946 = vsel %vm3930, %v3922, %v3938
    %v3947 = vsel %vm3931, %v3923, %v3939
    %v3948 = vsel %vm3932, %v3924, %v3940
    %v3949 = vsel %vm3933, %v3925, %v3941
    %v3950 = vsel %vm3934, %v3926, %v3942
    %v3951 = vsel %vm3935, %v3927, %v3943
    %v3952 = vsel %vm3936, %v3928, %v3944
    %v3961 = vcombine.low %v3945, %v3946
    %v3962 = vcombine.high %v3945, %v3946
    %v3963 = vcombine.low %v3947, %v3948
    %v3964 = vcombine.high %v3947, %v3948
    %v3965 = vcombine.low %v3949, %v3950
    %v3966 = vcombine.high %v3949, %v3950
    %v3967 = vcombine.low %v3951, %v3952
    %v3968 = vcombine.high %v3951, %v3952
    %v3969 = vcombine.high %v3961, %v3961
    %v3970 = vcombine.high %v3962, %v3962
    %v3971 = vcombine.high %v3963, %v3963
    %v3972 = vcombine.high %v3964, %v3964
    %v3973 = vcombine.high %v3965, %v3965
    %v3974 = vcombine.high %v3966, %v3966
    %v3975 = vcombine.high %v3967, %v3967
    %v3976 = vcombine.high %v3968, %v3968
    %v3977 = vrot.slane %v3961, 7
    %v3978 = vrot.slane %v3969, 7
    %v3979 = vrot.slane %v3962, 7
    %v3980 = vrot.slane %v3970, 7
    %v3981 = vrot.slane %v3963, 7
    %v3982 = vrot.slane %v3971, 7
    %v3983 = vrot.slane %v3964, 7
    %v3984 = vrot.slane %v3972, 7
    %v3985 = vrot.slane %v3965, 7
    %v3986 = vrot.slane %v3973, 7
    %v3987 = vrot.slane %v3966, 7
    %v3988 = vrot.slane %v3974, 7
    %v3989 = vrot.slane %v3967, 7
    %v3990 = vrot.slane %v3975, 7
    %v3991 = vrot.slane %v3968, 7
    %v3992 = vrot.slane %v3976, 7
    %4009 = vst [vmem:[#allocation3 + $0x10] sm:$0x1e] %v3977
    %4010 = vst [vmem:[#allocation3 + $0x18] sm:$0x1e] %v3978
    %4011 = vst [vmem:[#allocation3 + $0x70] sm:$0x1e] %v3979
    %4012 = vst [vmem:[#allocation3 + $0x78] sm:$0x1e] %v3980
    %4013 = vst [vmem:[#allocation3 + $0xd0] sm:$0x1e] %v3981
    %4014 = vst [vmem:[#allocation3 + $0xd8] sm:$0x1e] %v3982
    %4015 = vst [vmem:[#allocation3 + $0x130] sm:$0x1e] %v3983
    %4016 = vst [vmem:[#allocation3 + $0x138] sm:$0x1e] %v3984
    %4017 = vst [vmem:[#allocation3 + $0x190] sm:$0x1e] %v3985
    %4018 = vst [vmem:[#allocation3 + $0x198] sm:$0x1e] %v3986
    %4019 = vst [vmem:[#allocation3 + $0x1f0] sm:$0x1e] %v3987
    %4020 = vst [vmem:[#allocation3 + $0x1f8] sm:$0x1e] %v3988
    %4021 = vst [vmem:[#allocation3 + $0x250] sm:$0x1e] %v3989
    %4022 = vst [vmem:[#allocation3 + $0x258] sm:$0x1e] %v3990
    %4023 = vst [vmem:[#allocation3 + $0x2b0] sm:$0x1e] %v3991
    %4024 = vst [vmem:[#allocation3 + $0x2b8] sm:$0x1e] %v3992
    %4025 = vmatprep.subr.bf16.mxu0 %v3009
    %4026 = vmatpush1.bf16.msra.mxu0 %v3008
    %4027 = vmatprep.subr.bf16.mxu0 %v3011
    %4028 = vmatpush1.bf16.msra.mxu0 %v3010
    %4029 = vmatprep.subr.bf16.mxu0 %v3013
    %4030 = vmatpush1.bf16.msra.mxu0 %v3012
    %4031 = vmatprep.subr.bf16.mxu0 %v3015
    %4032 = vmatpush1.bf16.msra.mxu0 %v3014
    %4033 = vmatprep.subr.bf16.mxu0 %v3017
    %4034 = vmatpush1.bf16.msra.mxu0 %v3016
    %4035 = vmatprep.subr.bf16.mxu0 %v3019
    %4036 = vmatpush1.bf16.msra.mxu0 %v3018
    %4037 = vmatprep.subr.bf16.mxu0 %v3021
    %4038 = vmatpush1.bf16.msra.mxu0 %v3020
    %4039 = vmatprep.subr.bf16.mxu0 %v3023
    %4040 = vmatpush1.bf16.msra.mxu0 %v3022
    %4041 = vmatprep.subr.bf16.mxu0 %v3025
    %4042 = vmatpush1.bf16.msra.mxu0 %v3024
    %4043 = vmatprep.subr.bf16.mxu0 %v3027
    %4044 = vmatpush1.bf16.msra.mxu0 %v3026
    %4045 = vmatprep.subr.bf16.mxu0 %v3029
    %4046 = vmatpush1.bf16.msra.mxu0 %v3028
    %4047 = vmatprep.subr.bf16.mxu0 %v3031
    %4048 = vmatpush1.bf16.msra.mxu0 %v3030
    %4049 = vmatprep.subr.bf16.mxu0 %v3033
    %4050 = vmatpush1.bf16.msra.mxu0 %v3032
    %4051 = vmatprep.subr.bf16.mxu0 %v3035
    %4052 = vmatpush1.bf16.msra.mxu0 %v3034
    %4053 = vmatprep.subr.bf16.mxu0 %v3037
    %4054 = vmatpush1.bf16.msra.mxu0 %v3036
    %4055 = vmatprep.subr.bf16.mxu0 %v3039
    %4056 = vmatpush1.bf16.msra.mxu0 %v3038
    %4057 = vmatprep.mubr.bf16.mxu0 %v2424
    %4058 = vmatmul.mubr.bf16.gmra.mrb[0].mxu0 %v2423
    %v4059 = vpop.f32.mrb[0].mxu0
    %v4060 = vadd.f32 0.0, %v4059
    %v4061 = vpop.f32.mrb[0].mxu0
    %v4062 = vadd.f32 0.0, %v4061
    %v4063 = vpop.f32.mrb[0].mxu0
    %v4064 = vadd.f32 0.0, %v4063
    %v4065 = vpop.f32.mrb[0].mxu0
    %v4066 = vadd.f32 0.0, %v4065
    %4067 = vmatprep.mubr.bf16.mxu0 %v2430
    %4068 = vmatmul.mubr.bf16.gmra.mrb[0].mxu0 %v2429
    %v4069 = vpop.f32.mrb[0].mxu0
    %v4070 = vadd.f32 0.0, %v4069
    %v4071 = vpop.f32.mrb[0].mxu0
    %v4072 = vadd.f32 0.0, %v4071
    %v4073 = vpop.f32.mrb[0].mxu0
    %v4074 = vadd.f32 0.0, %v4073
    %v4075 = vpop.f32.mrb[0].mxu0
    %v4076 = vadd.f32 0.0, %v4075
    %4077 = vdwg.mxu0
    %4078 = vmatprep.subr.bf16.mxu0 %v3041
    %4079 = vmatpush1.bf16.msra.mxu0 %v3040
    %4080 = vmatprep.subr.bf16.mxu0 %v3043
    %4081 = vmatpush1.bf16.msra.mxu0 %v3042
    %4082 = vmatprep.subr.bf16.mxu0 %v3045
    %4083 = vmatpush1.bf16.msra.mxu0 %v3044
    %4084 = vmatprep.subr.bf16.mxu0 %v3047
    %4085 = vmatpush1.bf16.msra.mxu0 %v3046
    %4086 = vmatprep.subr.bf16.mxu0 %v3049
    %4087 = vmatpush1.bf16.msra.mxu0 %v3048
    %4088 = vmatprep.subr.bf16.mxu0 %v3051
    %4089 = vmatpush1.bf16.msra.mxu0 %v3050
    %4090 = vmatprep.subr.bf16.mxu0 %v3053
    %4091 = vmatpush1.bf16.msra.mxu0 %v3052
    %4092 = vmatprep.subr.bf16.mxu0 %v3055
    %4093 = vmatpush1.bf16.msra.mxu0 %v3054
    %4094 = vmatprep.subr.bf16.mxu0 0
    %4095 = vmatpush1.bf16.msra.mxu0 0
    %4096 = vmatprep.subr.bf16.mxu0 0
    %4097 = vmatpush1.bf16.msra.mxu0 0
    %4098 = vmatprep.subr.bf16.mxu0 0
    %4099 = vmatpush1.bf16.msra.mxu0 0
    %4100 = vmatprep.subr.bf16.mxu0 0
    %4101 = vmatpush1.bf16.msra.mxu0 0
    %4102 = vmatprep.subr.bf16.mxu0 0
    %4103 = vmatpush1.bf16.msra.mxu0 0
    %4104 = vmatprep.subr.bf16.mxu0 0
    %4105 = vmatpush1.bf16.msra.mxu0 0
    %4106 = vmatprep.subr.bf16.mxu0 0
    %4107 = vmatpush1.bf16.msra.mxu0 0
    %4108 = vmatprep.subr.bf16.mxu0 0
    %4109 = vmatpush1.bf16.msra.mxu0 0
    %4110 = vmatprep.mubr.bf16.mxu0 0
    %4111 = vmatmul.mubr.bf16.gmra.mrb[0].mxu0 %v2425
    %v4112 = vpop.f32.mrb[0].mxu0
    %v4113 = vadd.f32 %v4060, %v4112
    %v4114 = vpop.f32.mrb[0].mxu0
    %v4115 = vadd.f32 %v4062, %v4114
    %v4116 = vpop.f32.mrb[0].mxu0
    %v4117 = vadd.f32 %v4064, %v4116
    %v4118 = vpop.f32.mrb[0].mxu0
    %v4119 = vadd.f32 %v4066, %v4118
    %4120 = vmatprep.mubr.bf16.mxu0 0
    %4121 = vmatmul.mubr.bf16.gmra.mrb[0].mxu0 %v2431
    %v4122 = vpop.f32.mrb[0].mxu0
    %v4123 = vadd.f32 %v4070, %v4122
    %v4124 = vpop.f32.mrb[0].mxu0
    %v4125 = vadd.f32 %v4072, %v4124
    %v4126 = vpop.f32.mrb[0].mxu0
    %v4127 = vadd.f32 %v4074, %v4126
    %v4128 = vpop.f32.mrb[0].mxu0
    %v4129 = vadd.f32 %v4076, %v4128
    %4130 = vdwg.mxu0
    %4131 = vmatprep.subr.bf16.mxu0 %v3355
    %4132 = vmatpush1.bf16.msra.mxu0 %v3354
    %4133 = vmatprep.subr.bf16.mxu0 %v3357
    %4134 = vmatpush1.bf16.msra.mxu0 %v3356
    %4135 = vmatprep.subr.bf16.mxu0 %v3359
    %4136 = vmatpush1.bf16.msra.mxu0 %v3358
    %4137 = vmatprep.subr.bf16.mxu0 %v3361
    %4138 = vmatpush1.bf16.msra.mxu0 %v3360
    %4139 = vmatprep.subr.bf16.mxu0 %v3363
    %4140 = vmatpush1.bf16.msra.mxu0 %v3362
    %4141 = vmatprep.subr.bf16.mxu0 %v3365
    %4142 = vmatpush1.bf16.msra.mxu0 %v3364
    %4143 = vmatprep.subr.bf16.mxu0 %v3367
    %4144 = vmatpush1.bf16.msra.mxu0 %v3366
    %4145 = vmatprep.subr.bf16.mxu0 %v3369
    %4146 = vmatpush1.bf16.msra.mxu0 %v3368
    %4147 = vmatprep.subr.bf16.mxu0 %v3371
    %4148 = vmatpush1.bf16.msra.mxu0 %v3370
    %4149 = vmatprep.subr.bf16.mxu0 %v3373
    %4150 = vmatpush1.bf16.msra.mxu0 %v3372
    %4151 = vmatprep.subr.bf16.mxu0 %v3375
    %4152 = vmatpush1.bf16.msra.mxu0 %v3374
    %4153 = vmatprep.subr.bf16.mxu0 %v3377
    %4154 = vmatpush1.bf16.msra.mxu0 %v3376
    %4155 = vmatprep.subr.bf16.mxu0 %v3379
    %4156 = vmatpush1.bf16.msra.mxu0 %v3378
    %4157 = vmatprep.subr.bf16.mxu0 %v3381
    %4158 = vmatpush1.bf16.msra.mxu0 %v3380
    %4159 = vmatprep.subr.bf16.mxu0 %v3383
    %4160 = vmatpush1.bf16.msra.mxu0 %v3382
    %4161 = vmatprep.subr.bf16.mxu0 %v3385
    %4162 = vmatpush1.bf16.msra.mxu0 %v3384
    %4163 = vmatprep.mubr.bf16.mxu0 %v2121
    %4164 = vmatmul.mubr.bf16.gmra.mrb[0].mxu0 %v2120
    %v4165 = vpop.f32.mrb[0].mxu0
    %v4166 = vadd.f32 %v4113, %v4165
    %v4167 = vpop.f32.mrb[0].mxu0
    %v4168 = vadd.f32 %v4115, %v4167
    %v4169 = vpop.f32.mrb[0].mxu0
    %v4170 = vadd.f32 %v4117, %v4169
    %v4171 = vpop.f32.mrb[0].mxu0
    %v4172 = vadd.f32 %v4119, %v4171
    %4173 = vmatprep.mubr.bf16.mxu0 %v2127
    %4174 = vmatmul.mubr.bf16.gmra.mrb[0].mxu0 %v2126
    %v4175 = vpop.f32.mrb[0].mxu0
    %v4176 = vadd.f32 %v4123, %v4175
    %v4177 = vpop.f32.mrb[0].mxu0
    %v4178 = vadd.f32 %v4125, %v4177
    %v4179 = vpop.f32.mrb[0].mxu0
    %v4180 = vadd.f32 %v4127, %v4179
    %v4181 = vpop.f32.mrb[0].mxu0
    %v4182 = vadd.f32 %v4129, %v4181
    %4183 = vdwg.mxu0
    %4184 = vmatprep.subr.bf16.mxu0 %v3387
    %4185 = vmatpush1.bf16.msra.mxu0 %v3386
    %4186 = vmatprep.subr.bf16.mxu0 %v3389
    %4187 = vmatpush1.bf16.msra.mxu0 %v3388
    %4188 = vmatprep.subr.bf16.mxu0 %v3391
    %4189 = vmatpush1.bf16.msra.mxu0 %v3390
    %4190 = vmatprep.subr.bf16.mxu0 %v3393
    %4191 = vmatpush1.bf16.msra.mxu0 %v3392
    %4192 = vmatprep.subr.bf16.mxu0 %v3395
    %4193 = vmatpush1.bf16.msra.mxu0 %v3394
    %4194 = vmatprep.subr.bf16.mxu0 %v3397
    %4195 = vmatpush1.bf16.msra.mxu0 %v3396
    %4196 = vmatprep.subr.bf16.mxu0 %v3399
    %4197 = vmatpush1.bf16.msra.mxu0 %v3398
    %4198 = vmatprep.subr.bf16.mxu0 %v3401
    %4199 = vmatpush1.bf16.msra.mxu0 %v3400
    %4200 = vmatprep.subr.bf16.mxu0 0
    %4201 = vmatpush1.bf16.msra.mxu0 0
    %4202 = vmatprep.subr.bf16.mxu0 0
    %4203 = vmatpush1.bf16.msra.mxu0 0
    %4204 = vmatprep.subr.bf16.mxu0 0
    %4205 = vmatpush1.bf16.msra.mxu0 0
    %4206 = vmatprep.subr.bf16.mxu0 0
    %4207 = vmatpush1.bf16.msra.mxu0 0
    %4208 = vmatprep.subr.bf16.mxu0 0
    %4209 = vmatpush1.bf16.msra.mxu0 0
    %4210 = vmatprep.subr.bf16.mxu0 0
    %4211 = vmatpush1.bf16.msra.mxu0 0
    %4212 = vmatprep.subr.bf16.mxu0 0
    %4213 = vmatpush1.bf16.msra.mxu0 0
    %4214 = vmatprep.subr.bf16.mxu0 0
    %4215 = vmatpush1.bf16.msra.mxu0 0
    %4216 = vmatprep.mubr.bf16.mxu0 0
    %4217 = vmatmul.mubr.bf16.gmra.mrb[0].mxu0 %v2122
    %v4218 = vpop.f32.mrb[0].mxu0
    %v4219 = vadd.f32 %v4166, %v4218
    %v4220 = vpop.f32.mrb[0].mxu0
    %v4221 = vadd.f32 %v4168, %v4220
    %v4222 = vpop.f32.mrb[0].mxu0
    %v4223 = vadd.f32 %v4170, %v4222
    %v4224 = vpop.f32.mrb[0].mxu0
    %v4225 = vadd.f32 %v4172, %v4224
    %4226 = vmatprep.mubr.bf16.mxu0 0
    %4227 = vmatmul.mubr.bf16.gmra.mrb[0].mxu0 %v2128
    %v4228 = vpop.f32.mrb[0].mxu0
    %v4229 = vadd.f32 %v4176, %v4228
    %v4230 = vpop.f32.mrb[0].mxu0
    %v4231 = vadd.f32 %v4178, %v4230
    %v4232 = vpop.f32.mrb[0].mxu0
    %v4233 = vadd.f32 %v4180, %v4232
    %v4234 = vpop.f32.mrb[0].mxu0
    %v4235 = vadd.f32 %v4182, %v4234
    %4236 = vdwg.mxu0
    %4237 = vmatprep.subr.bf16.mxu0 %v3701
    %4238 = vmatpush1.bf16.msra.mxu0 %v3700
    %4239 = vmatprep.subr.bf16.mxu0 %v3703
    %4240 = vmatpush1.bf16.msra.mxu0 %v3702
    %4241 = vmatprep.subr.bf16.mxu0 %v3705
    %4242 = vmatpush1.bf16.msra.mxu0 %v3704
    %4243 = vmatprep.subr.bf16.mxu0 %v3707
    %4244 = vmatpush1.bf16.msra.mxu0 %v3706
    %4245 = vmatprep.subr.bf16.mxu0 %v3709
    %4246 = vmatpush1.bf16.msra.mxu0 %v3708
    %4247 = vmatprep.subr.bf16.mxu0 %v3711
    %4248 = vmatpush1.bf16.msra.mxu0 %v3710
    %4249 = vmatprep.subr.bf16.mxu0 %v3713
    %4250 = vmatpush1.bf16.msra.mxu0 %v3712
    %4251 = vmatprep.subr.bf16.mxu0 %v3715
    %4252 = vmatpush1.bf16.msra.mxu0 %v3714
    %4253 = vmatprep.subr.bf16.mxu0 %v3717
    %4254 = vmatpush1.bf16.msra.mxu0 %v3716
    %4255 = vmatprep.subr.bf16.mxu0 %v3719
    %4256 = vmatpush1.bf16.msra.mxu0 %v3718
    %4257 = vmatprep.subr.bf16.mxu0 %v3721
    %4258 = vmatpush1.bf16.msra.mxu0 %v3720
    %4259 = vmatprep.subr.bf16.mxu0 %v3723
    %4260 = vmatpush1.bf16.msra.mxu0 %v3722
    %4261 = vmatprep.subr.bf16.mxu0 %v3725
    %4262 = vmatpush1.bf16.msra.mxu0 %v3724
    %4263 = vmatprep.subr.bf16.mxu0 %v3727
    %4264 = vmatpush1.bf16.msra.mxu0 %v3726
    %4265 = vmatprep.subr.bf16.mxu0 %v3729
    %4266 = vmatpush1.bf16.msra.mxu0 %v3728
    %4267 = vmatprep.subr.bf16.mxu0 %v3731
    %4268 = vmatpush1.bf16.msra.mxu0 %v3730
    %4269 = vmatprep.mubr.bf16.mxu0 %v2727
    %4270 = vmatmul.mubr.bf16.gmra.mrb[0].mxu0 %v2726
    %v4271 = vpop.f32.mrb[0].mxu0
    %v4272 = vadd.f32 0.0, %v4271
    %v4273 = vpop.f32.mrb[0].mxu0
    %v4274 = vadd.f32 0.0, %v4273
    %v4275 = vpop.f32.mrb[0].mxu0
    %v4276 = vadd.f32 0.0, %v4275
    %v4277 = vpop.f32.mrb[0].mxu0
    %v4278 = vadd.f32 0.0, %v4277
    %4279 = vmatprep.mubr.bf16.mxu0 %v2733
    %4280 = vmatmul.mubr.bf16.gmra.mrb[0].mxu0 %v2732
    %v4281 = vpop.f32.mrb[0].mxu0
    %v4282 = vadd.f32 0.0, %v4281
    %v4283 = vpop.f32.mrb[0].mxu0
    %v4284 = vadd.f32 0.0, %v4283
    %v4285 = vpop.f32.mrb[0].mxu0
    %v4286 = vadd.f32 0.0, %v4285
    %v4287 = vpop.f32.mrb[0].mxu0
    %v4288 = vadd.f32 0.0, %v4287
    %4289 = vdwg.mxu0
    %4290 = vmatprep.subr.bf16.mxu0 %v3733
    %4291 = vmatpush1.bf16.msra.mxu0 %v3732
    %4292 = vmatprep.subr.bf16.mxu0 %v3735
    %4293 = vmatpush1.bf16.msra.mxu0 %v3734
    %4294 = vmatprep.subr.bf16.mxu0 %v3737
    %4295 = vmatpush1.bf16.msra.mxu0 %v3736
    %4296 = vmatprep.subr.bf16.mxu0 %v3739
    %4297 = vmatpush1.bf16.msra.mxu0 %v3738
    %4298 = vmatprep.subr.bf16.mxu0 %v3741
    %4299 = vmatpush1.bf16.msra.mxu0 %v3740
    %4300 = vmatprep.subr.bf16.mxu0 %v3743
    %4301 = vmatpush1.bf16.msra.mxu0 %v3742
    %4302 = vmatprep.subr.bf16.mxu0 %v3745
    %4303 = vmatpush1.bf16.msra.mxu0 %v3744
    %4304 = vmatprep.subr.bf16.mxu0 %v3747
    %4305 = vmatpush1.bf16.msra.mxu0 %v3746
    %4306 = vmatprep.subr.bf16.mxu0 0
    %4307 = vmatpush1.bf16.msra.mxu0 0
    %4308 = vmatprep.subr.bf16.mxu0 0
    %4309 = vmatpush1.bf16.msra.mxu0 0
    %4310 = vmatprep.subr.bf16.mxu0 0
    %4311 = vmatpush1.bf16.msra.mxu0 0
    %4312 = vmatprep.subr.bf16.mxu0 0
    %4313 = vmatpush1.bf16.msra.mxu0 0
    %4314 = vmatprep.subr.bf16.mxu0 0
    %4315 = vmatpush1.bf16.msra.mxu0 0
    %4316 = vmatprep.subr.bf16.mxu0 0
    %4317 = vmatpush1.bf16.msra.mxu0 0
    %4318 = vmatprep.subr.bf16.mxu0 0
    %4319 = vmatpush1.bf16.msra.mxu0 0
    %4320 = vmatprep.subr.bf16.mxu0 0
    %4321 = vmatpush1.bf16.msra.mxu0 0
    %4322 = vmatprep.mubr.bf16.mxu0 0
    %4323 = vmatmul.mubr.bf16.gmra.mrb[0].mxu0 %v2728
    %v4324 = vpop.f32.mrb[0].mxu0
    %v4325 = vadd.f32 %v4272, %v4324
    %v4326 = vpop.f32.mrb[0].mxu0
    %v4327 = vadd.f32 %v4274, %v4326
    %v4328 = vpop.f32.mrb[0].mxu0
    %v4329 = vadd.f32 %v4276, %v4328
    %v4330 = vpop.f32.mrb[0].mxu0
    %v4331 = vadd.f32 %v4278, %v4330
    %4332 = vmatprep.mubr.bf16.mxu0 0
    %4333 = vmatmul.mubr.bf16.gmra.mrb[0].mxu0 %v2734
    %v4334 = vpop.f32.mrb[0].mxu0
    %v4335 = vadd.f32 %v4282, %v4334
    %v4336 = vpop.f32.mrb[0].mxu0
    %v4337 = vadd.f32 %v4284, %v4336
    %v4338 = vpop.f32.mrb[0].mxu0
    %v4339 = vadd.f32 %v4286, %v4338
    %v4340 = vpop.f32.mrb[0].mxu0
    %v4341 = vadd.f32 %v4288, %v4340
    %4342 = vdwg.mxu0
    %v4343 = vadd.f32 %v4219, %v4325
    %v4344 = vadd.f32 %v4221, %v4327
    %v4345 = vadd.f32 %v4223, %v4329
    %v4346 = vadd.f32 %v4225, %v4331
    %v4347 = vadd.f32 %v4229, %v4335
    %v4348 = vadd.f32 %v4231, %v4337
    %v4349 = vadd.f32 %v4233, %v4339
    %v4350 = vadd.f32 %v4235, %v4341
    %v4351 = vadd.f32 %v4343, %v3914
    %v4352 = vadd.f32 %v4344, %v3918
    %v4353 = vadd.f32 %v4345, %v3914
    %v4354 = vadd.f32 %v4346, %v3918
    %v4355 = vadd.f32 %v4347, %v3914
    %v4356 = vadd.f32 %v4348, %v3918
    %v4357 = vadd.f32 %v4349, %v3914
    %v4358 = vadd.f32 %v4350, %v3918
    %vm4359 = vcmp.gt.f32.partialorder %v4351, 0.0
    %vm4360 = vcmp.gt.f32.partialorder %v4352, 0.0
    %vm4361 = vcmp.gt.f32.partialorder %v4353, 0.0
    %vm4362 = vcmp.gt.f32.partialorder %v4354, 0.0
    %vm4363 = vcmp.gt.f32.partialorder %v4355, 0.0
    %vm4364 = vcmp.gt.f32.partialorder %v4356, 0.0
    %vm4365 = vcmp.gt.f32.partialorder %v4357, 0.0
    %vm4366 = vcmp.gt.f32.partialorder %v4358, 0.0
    %v4367 = vmul.f32 %v4351, 0.15
    %v4368 = vmul.f32 %v4352, 0.15
    %v4369 = vmul.f32 %v4353, 0.15
    %v4370 = vmul.f32 %v4354, 0.15
    %v4371 = vmul.f32 %v4355, 0.15
    %v4372 = vmul.f32 %v4356, 0.15
    %v4373 = vmul.f32 %v4357, 0.15
    %v4374 = vmul.f32 %v4358, 0.15
    %v4375 = vsel %vm4359, %v4351, %v4367
    %v4376 = vsel %vm4360, %v4352, %v4368
    %v4377 = vsel %vm4361, %v4353, %v4369
    %v4378 = vsel %vm4362, %v4354, %v4370
    %v4379 = vsel %vm4363, %v4355, %v4371
    %v4380 = vsel %vm4364, %v4356, %v4372
    %v4381 = vsel %vm4365, %v4357, %v4373
    %v4382 = vsel %vm4366, %v4358, %v4374
    %v4391 = vcombine.low %v4375, %v4376
    %v4392 = vcombine.high %v4375, %v4376
    %v4393 = vcombine.low %v4377, %v4378
    %v4394 = vcombine.high %v4377, %v4378
    %v4395 = vcombine.low %v4379, %v4380
    %v4396 = vcombine.high %v4379, %v4380
    %v4397 = vcombine.low %v4381, %v4382
    %v4398 = vcombine.high %v4381, %v4382
    %v4399 = vcombine.high %v4391, %v4391
    %v4400 = vcombine.high %v4392, %v4392
    %v4401 = vcombine.high %v4393, %v4393
    %v4402 = vcombine.high %v4394, %v4394
    %v4403 = vcombine.high %v4395, %v4395
    %v4404 = vcombine.high %v4396, %v4396
    %v4405 = vcombine.high %v4397, %v4397
    %v4406 = vcombine.high %v4398, %v4398
    %v4407 = vrot.slane %v4391, 7
    %v4408 = vrot.slane %v4399, 7
    %v4409 = vrot.slane %v4392, 7
    %v4410 = vrot.slane %v4400, 7
    %v4411 = vrot.slane %v4393, 7
    %v4412 = vrot.slane %v4401, 7
    %v4413 = vrot.slane %v4394, 7
    %v4414 = vrot.slane %v4402, 7
    %v4415 = vrot.slane %v4395, 7
    %v4416 = vrot.slane %v4403, 7
    %v4417 = vrot.slane %v4396, 7
    %v4418 = vrot.slane %v4404, 7
    %v4419 = vrot.slane %v4397, 7
    %v4420 = vrot.slane %v4405, 7
    %v4421 = vrot.slane %v4398, 7
    %v4422 = vrot.slane %v4406, 7
    %4439 = vst [vmem:[#allocation3 + $0x20] sm:$0x1e] %v4407
    %4440 = vst [vmem:[#allocation3 + $0x28] sm:$0x1e] %v4408
    %4441 = vst [vmem:[#allocation3 + $0x80] sm:$0x1e] %v4409
    %4442 = vst [vmem:[#allocation3 + $0x88] sm:$0x1e] %v4410
    %4443 = vst [vmem:[#allocation3 + $0xe0] sm:$0x1e] %v4411
    %4444 = vst [vmem:[#allocation3 + $0xe8] sm:$0x1e] %v4412
    %4445 = vst [vmem:[#allocation3 + $0x140] sm:$0x1e] %v4413
    %4446 = vst [vmem:[#allocation3 + $0x148] sm:$0x1e] %v4414
    %4447 = vst [vmem:[#allocation3 + $0x1a0] sm:$0x1e] %v4415
    %4448 = vst [vmem:[#allocation3 + $0x1a8] sm:$0x1e] %v4416
    %4449 = vst [vmem:[#allocation3 + $0x200] sm:$0x1e] %v4417
    %4450 = vst [vmem:[#allocation3 + $0x208] sm:$0x1e] %v4418
    %4451 = vst [vmem:[#allocation3 + $0x260] sm:$0x1e] %v4419
    %4452 = vst [vmem:[#allocation3 + $0x268] sm:$0x1e] %v4420
    %4453 = vst [vmem:[#allocation3 + $0x2c0] sm:$0x1e] %v4421
    %4454 = vst [vmem:[#allocation3 + $0x2c8] sm:$0x1e] %v4422
    %4455 = vmatprep.subr.bf16.mxu0 %v3009
    %4456 = vmatpush1.bf16.msra.mxu0 %v3008
    %4457 = vmatprep.subr.bf16.mxu0 %v3011
    %4458 = vmatpush1.bf16.msra.mxu0 %v3010
    %4459 = vmatprep.subr.bf16.mxu0 %v3013
    %4460 = vmatpush1.bf16.msra.mxu0 %v3012
    %4461 = vmatprep.subr.bf16.mxu0 %v3015
    %4462 = vmatpush1.bf16.msra.mxu0 %v3014
    %4463 = vmatprep.subr.bf16.mxu0 %v3017
    %4464 = vmatpush1.bf16.msra.mxu0 %v3016
    %4465 = vmatprep.subr.bf16.mxu0 %v3019
    %4466 = vmatpush1.bf16.msra.mxu0 %v3018
    %4467 = vmatprep.subr.bf16.mxu0 %v3021
    %4468 = vmatpush1.bf16.msra.mxu0 %v3020
    %4469 = vmatprep.subr.bf16.mxu0 %v3023
    %4470 = vmatpush1.bf16.msra.mxu0 %v3022
    %4471 = vmatprep.subr.bf16.mxu0 %v3025
    %4472 = vmatpush1.bf16.msra.mxu0 %v3024
    %4473 = vmatprep.subr.bf16.mxu0 %v3027
    %4474 = vmatpush1.bf16.msra.mxu0 %v3026
    %4475 = vmatprep.subr.bf16.mxu0 %v3029
    %4476 = vmatpush1.bf16.msra.mxu0 %v3028
    %4477 = vmatprep.subr.bf16.mxu0 %v3031
    %4478 = vmatpush1.bf16.msra.mxu0 %v3030
    %4479 = vmatprep.subr.bf16.mxu0 %v3033
    %4480 = vmatpush1.bf16.msra.mxu0 %v3032
    %4481 = vmatprep.subr.bf16.mxu0 %v3035
    %4482 = vmatpush1.bf16.msra.mxu0 %v3034
    %4483 = vmatprep.subr.bf16.mxu0 %v3037
    %4484 = vmatpush1.bf16.msra.mxu0 %v3036
    %4485 = vmatprep.subr.bf16.mxu0 %v3039
    %4486 = vmatpush1.bf16.msra.mxu0 %v3038
    %4487 = vmatprep.mubr.bf16.mxu0 %v2425
    %4488 = vmatmul.mubr.bf16.gmra.mrb[0].mxu0 %v2424
    %v4489 = vpop.f32.mrb[0].mxu0
    %v4490 = vadd.f32 0.0, %v4489
    %v4491 = vpop.f32.mrb[0].mxu0
    %v4492 = vadd.f32 0.0, %v4491
    %v4493 = vpop.f32.mrb[0].mxu0
    %v4494 = vadd.f32 0.0, %v4493
    %v4495 = vpop.f32.mrb[0].mxu0
    %v4496 = vadd.f32 0.0, %v4495
    %4497 = vmatprep.mubr.bf16.mxu0 %v2431
    %4498 = vmatmul.mubr.bf16.gmra.mrb[0].mxu0 %v2430
    %v4499 = vpop.f32.mrb[0].mxu0
    %v4500 = vadd.f32 0.0, %v4499
    %v4501 = vpop.f32.mrb[0].mxu0
    %v4502 = vadd.f32 0.0, %v4501
    %v4503 = vpop.f32.mrb[0].mxu0
    %v4504 = vadd.f32 0.0, %v4503
    %v4505 = vpop.f32.mrb[0].mxu0
    %v4506 = vadd.f32 0.0, %v4505
    %4507 = vdwg.mxu0
    %4508 = vmatprep.subr.bf16.mxu0 %v3041
    %4509 = vmatpush1.bf16.msra.mxu0 %v3040
    %4510 = vmatprep.subr.bf16.mxu0 %v3043
    %4511 = vmatpush1.bf16.msra.mxu0 %v3042
    %4512 = vmatprep.subr.bf16.mxu0 %v3045
    %4513 = vmatpush1.bf16.msra.mxu0 %v3044
    %4514 = vmatprep.subr.bf16.mxu0 %v3047
    %4515 = vmatpush1.bf16.msra.mxu0 %v3046
    %4516 = vmatprep.subr.bf16.mxu0 %v3049
    %4517 = vmatpush1.bf16.msra.mxu0 %v3048
    %4518 = vmatprep.subr.bf16.mxu0 %v3051
    %4519 = vmatpush1.bf16.msra.mxu0 %v3050
    %4520 = vmatprep.subr.bf16.mxu0 %v3053
    %4521 = vmatpush1.bf16.msra.mxu0 %v3052
    %4522 = vmatprep.subr.bf16.mxu0 %v3055
    %4523 = vmatpush1.bf16.msra.mxu0 %v3054
    %4524 = vmatprep.subr.bf16.mxu0 0
    %4525 = vmatpush1.bf16.msra.mxu0 0
    %4526 = vmatprep.subr.bf16.mxu0 0
    %4527 = vmatpush1.bf16.msra.mxu0 0
    %4528 = vmatprep.subr.bf16.mxu0 0
    %4529 = vmatpush1.bf16.msra.mxu0 0
    %4530 = vmatprep.subr.bf16.mxu0 0
    %4531 = vmatpush1.bf16.msra.mxu0 0
    %4532 = vmatprep.subr.bf16.mxu0 0
    %4533 = vmatpush1.bf16.msra.mxu0 0
    %4534 = vmatprep.subr.bf16.mxu0 0
    %4535 = vmatpush1.bf16.msra.mxu0 0
    %4536 = vmatprep.subr.bf16.mxu0 0
    %4537 = vmatpush1.bf16.msra.mxu0 0
    %4538 = vmatprep.subr.bf16.mxu0 0
    %4539 = vmatpush1.bf16.msra.mxu0 0
    %4540 = vmatprep.mubr.bf16.mxu0 0
    %4541 = vmatmul.mubr.bf16.gmra.mrb[0].mxu0 %v2426
    %v4542 = vpop.f32.mrb[0].mxu0
    %v4543 = vadd.f32 %v4490, %v4542
    %v4544 = vpop.f32.mrb[0].mxu0
    %v4545 = vadd.f32 %v4492, %v4544
    %v4546 = vpop.f32.mrb[0].mxu0
    %v4547 = vadd.f32 %v4494, %v4546
    %v4548 = vpop.f32.mrb[0].mxu0
    %v4549 = vadd.f32 %v4496, %v4548
    %4550 = vmatprep.mubr.bf16.mxu0 0
    %4551 = vmatmul.mubr.bf16.gmra.mrb[0].mxu0 %v2432
    %v4552 = vpop.f32.mrb[0].mxu0
    %v4553 = vadd.f32 %v4500, %v4552
    %v4554 = vpop.f32.mrb[0].mxu0
    %v4555 = vadd.f32 %v4502, %v4554
    %v4556 = vpop.f32.mrb[0].mxu0
    %v4557 = vadd.f32 %v4504, %v4556
    %v4558 = vpop.f32.mrb[0].mxu0
    %v4559 = vadd.f32 %v4506, %v4558
    %4560 = vdwg.mxu0
    %4561 = vmatprep.subr.bf16.mxu0 %v3355
    %4562 = vmatpush1.bf16.msra.mxu0 %v3354
    %4563 = vmatprep.subr.bf16.mxu0 %v3357
    %4564 = vmatpush1.bf16.msra.mxu0 %v3356
    %4565 = vmatprep.subr.bf16.mxu0 %v3359
    %4566 = vmatpush1.bf16.msra.mxu0 %v3358
    %4567 = vmatprep.subr.bf16.mxu0 %v3361
    %4568 = vmatpush1.bf16.msra.mxu0 %v3360
    %4569 = vmatprep.subr.bf16.mxu0 %v3363
    %4570 = vmatpush1.bf16.msra.mxu0 %v3362
    %4571 = vmatprep.subr.bf16.mxu0 %v3365
    %4572 = vmatpush1.bf16.msra.mxu0 %v3364
    %4573 = vmatprep.subr.bf16.mxu0 %v3367
    %4574 = vmatpush1.bf16.msra.mxu0 %v3366
    %4575 = vmatprep.subr.bf16.mxu0 %v3369
    %4576 = vmatpush1.bf16.msra.mxu0 %v3368
    %4577 = vmatprep.subr.bf16.mxu0 %v3371
    %4578 = vmatpush1.bf16.msra.mxu0 %v3370
    %4579 = vmatprep.subr.bf16.mxu0 %v3373
    %4580 = vmatpush1.bf16.msra.mxu0 %v3372
    %4581 = vmatprep.subr.bf16.mxu0 %v3375
    %4582 = vmatpush1.bf16.msra.mxu0 %v3374
    %4583 = vmatprep.subr.bf16.mxu0 %v3377
    %4584 = vmatpush1.bf16.msra.mxu0 %v3376
    %4585 = vmatprep.subr.bf16.mxu0 %v3379
    %4586 = vmatpush1.bf16.msra.mxu0 %v3378
    %4587 = vmatprep.subr.bf16.mxu0 %v3381
    %4588 = vmatpush1.bf16.msra.mxu0 %v3380
    %4589 = vmatprep.subr.bf16.mxu0 %v3383
    %4590 = vmatpush1.bf16.msra.mxu0 %v3382
    %4591 = vmatprep.subr.bf16.mxu0 %v3385
    %4592 = vmatpush1.bf16.msra.mxu0 %v3384
    %4593 = vmatprep.mubr.bf16.mxu0 %v2122
    %4594 = vmatmul.mubr.bf16.gmra.mrb[0].mxu0 %v2121
    %v4595 = vpop.f32.mrb[0].mxu0
    %v4596 = vadd.f32 %v4543, %v4595
    %v4597 = vpop.f32.mrb[0].mxu0
    %v4598 = vadd.f32 %v4545, %v4597
    %v4599 = vpop.f32.mrb[0].mxu0
    %v4600 = vadd.f32 %v4547, %v4599
    %v4601 = vpop.f32.mrb[0].mxu0
    %v4602 = vadd.f32 %v4549, %v4601
    %4603 = vmatprep.mubr.bf16.mxu0 %v2128
    %4604 = vmatmul.mubr.bf16.gmra.mrb[0].mxu0 %v2127
    %v4605 = vpop.f32.mrb[0].mxu0
    %v4606 = vadd.f32 %v4553, %v4605
    %v4607 = vpop.f32.mrb[0].mxu0
    %v4608 = vadd.f32 %v4555, %v4607
    %v4609 = vpop.f32.mrb[0].mxu0
    %v4610 = vadd.f32 %v4557, %v4609
    %v4611 = vpop.f32.mrb[0].mxu0
    %v4612 = vadd.f32 %v4559, %v4611
    %4613 = vdwg.mxu0
    %4614 = vmatprep.subr.bf16.mxu0 %v3387
    %4615 = vmatpush1.bf16.msra.mxu0 %v3386
    %4616 = vmatprep.subr.bf16.mxu0 %v3389
    %4617 = vmatpush1.bf16.msra.mxu0 %v3388
    %4618 = vmatprep.subr.bf16.mxu0 %v3391
    %4619 = vmatpush1.bf16.msra.mxu0 %v3390
    %4620 = vmatprep.subr.bf16.mxu0 %v3393
    %4621 = vmatpush1.bf16.msra.mxu0 %v3392
    %4622 = vmatprep.subr.bf16.mxu0 %v3395
    %4623 = vmatpush1.bf16.msra.mxu0 %v3394
    %4624 = vmatprep.subr.bf16.mxu0 %v3397
    %4625 = vmatpush1.bf16.msra.mxu0 %v3396
    %4626 = vmatprep.subr.bf16.mxu0 %v3399
    %4627 = vmatpush1.bf16.msra.mxu0 %v3398
    %4628 = vmatprep.subr.bf16.mxu0 %v3401
    %4629 = vmatpush1.bf16.msra.mxu0 %v3400
    %4630 = vmatprep.subr.bf16.mxu0 0
    %4631 = vmatpush1.bf16.msra.mxu0 0
    %4632 = vmatprep.subr.bf16.mxu0 0
    %4633 = vmatpush1.bf16.msra.mxu0 0
    %4634 = vmatprep.subr.bf16.mxu0 0
    %4635 = vmatpush1.bf16.msra.mxu0 0
    %4636 = vmatprep.subr.bf16.mxu0 0
    %4637 = vmatpush1.bf16.msra.mxu0 0
    %4638 = vmatprep.subr.bf16.mxu0 0
    %4639 = vmatpush1.bf16.msra.mxu0 0
    %4640 = vmatprep.subr.bf16.mxu0 0
    %4641 = vmatpush1.bf16.msra.mxu0 0
    %4642 = vmatprep.subr.bf16.mxu0 0
    %4643 = vmatpush1.bf16.msra.mxu0 0
    %4644 = vmatprep.subr.bf16.mxu0 0
    %4645 = vmatpush1.bf16.msra.mxu0 0
    %4646 = vmatprep.mubr.bf16.mxu0 0
    %4647 = vmatmul.mubr.bf16.gmra.mrb[0].mxu0 %v2123
    %v4648 = vpop.f32.mrb[0].mxu0
    %v4649 = vadd.f32 %v4596, %v4648
    %v4650 = vpop.f32.mrb[0].mxu0
    %v4651 = vadd.f32 %v4598, %v4650
    %v4652 = vpop.f32.mrb[0].mxu0
    %v4653 = vadd.f32 %v4600, %v4652
    %v4654 = vpop.f32.mrb[0].mxu0
    %v4655 = vadd.f32 %v4602, %v4654
    %4656 = vmatprep.mubr.bf16.mxu0 0
    %4657 = vmatmul.mubr.bf16.gmra.mrb[0].mxu0 %v2129
    %v4658 = vpop.f32.mrb[0].mxu0
    %v4659 = vadd.f32 %v4606, %v4658
    %v4660 = vpop.f32.mrb[0].mxu0
    %v4661 = vadd.f32 %v4608, %v4660
    %v4662 = vpop.f32.mrb[0].mxu0
    %v4663 = vadd.f32 %v4610, %v4662
    %v4664 = vpop.f32.mrb[0].mxu0
    %v4665 = vadd.f32 %v4612, %v4664
    %4666 = vdwg.mxu0
    %4667 = vmatprep.subr.bf16.mxu0 %v3701
    %4668 = vmatpush1.bf16.msra.mxu0 %v3700
    %4669 = vmatprep.subr.bf16.mxu0 %v3703
    %4670 = vmatpush1.bf16.msra.mxu0 %v3702
    %4671 = vmatprep.subr.bf16.mxu0 %v3705
    %4672 = vmatpush1.bf16.msra.mxu0 %v3704
    %4673 = vmatprep.subr.bf16.mxu0 %v3707
    %4674 = vmatpush1.bf16.msra.mxu0 %v3706
    %4675 = vmatprep.subr.bf16.mxu0 %v3709
    %4676 = vmatpush1.bf16.msra.mxu0 %v3708
    %4677 = vmatprep.subr.bf16.mxu0 %v3711
    %4678 = vmatpush1.bf16.msra.mxu0 %v3710
    %4679 = vmatprep.subr.bf16.mxu0 %v3713
    %4680 = vmatpush1.bf16.msra.mxu0 %v3712
    %4681 = vmatprep.subr.bf16.mxu0 %v3715
    %4682 = vmatpush1.bf16.msra.mxu0 %v3714
    %4683 = vmatprep.subr.bf16.mxu0 %v3717
    %4684 = vmatpush1.bf16.msra.mxu0 %v3716
    %4685 = vmatprep.subr.bf16.mxu0 %v3719
    %4686 = vmatpush1.bf16.msra.mxu0 %v3718
    %4687 = vmatprep.subr.bf16.mxu0 %v3721
    %4688 = vmatpush1.bf16.msra.mxu0 %v3720
    %4689 = vmatprep.subr.bf16.mxu0 %v3723
    %4690 = vmatpush1.bf16.msra.mxu0 %v3722
    %4691 = vmatprep.subr.bf16.mxu0 %v3725
    %4692 = vmatpush1.bf16.msra.mxu0 %v3724
    %4693 = vmatprep.subr.bf16.mxu0 %v3727
    %4694 = vmatpush1.bf16.msra.mxu0 %v3726
    %4695 = vmatprep.subr.bf16.mxu0 %v3729
    %4696 = vmatpush1.bf16.msra.mxu0 %v3728
    %4697 = vmatprep.subr.bf16.mxu0 %v3731
    %4698 = vmatpush1.bf16.msra.mxu0 %v3730
    %4699 = vmatprep.mubr.bf16.mxu0 %v2728
    %4700 = vmatmul.mubr.bf16.gmra.mrb[0].mxu0 %v2727
    %v4701 = vpop.f32.mrb[0].mxu0
    %v4702 = vadd.f32 0.0, %v4701
    %v4703 = vpop.f32.mrb[0].mxu0
    %v4704 = vadd.f32 0.0, %v4703
    %v4705 = vpop.f32.mrb[0].mxu0
    %v4706 = vadd.f32 0.0, %v4705
    %v4707 = vpop.f32.mrb[0].mxu0
    %v4708 = vadd.f32 0.0, %v4707
    %4709 = vmatprep.mubr.bf16.mxu0 %v2734
    %4710 = vmatmul.mubr.bf16.gmra.mrb[0].mxu0 %v2733
    %v4711 = vpop.f32.mrb[0].mxu0
    %v4712 = vadd.f32 0.0, %v4711
    %v4713 = vpop.f32.mrb[0].mxu0
    %v4714 = vadd.f32 0.0, %v4713
    %v4715 = vpop.f32.mrb[0].mxu0
    %v4716 = vadd.f32 0.0, %v4715
    %v4717 = vpop.f32.mrb[0].mxu0
    %v4718 = vadd.f32 0.0, %v4717
    %4719 = vdwg.mxu0
    %4720 = vmatprep.subr.bf16.mxu0 %v3733
    %4721 = vmatpush1.bf16.msra.mxu0 %v3732
    %4722 = vmatprep.subr.bf16.mxu0 %v3735
    %4723 = vmatpush1.bf16.msra.mxu0 %v3734
    %4724 = vmatprep.subr.bf16.mxu0 %v3737
    %4725 = vmatpush1.bf16.msra.mxu0 %v3736
    %4726 = vmatprep.subr.bf16.mxu0 %v3739
    %4727 = vmatpush1.bf16.msra.mxu0 %v3738
    %4728 = vmatprep.subr.bf16.mxu0 %v3741
    %4729 = vmatpush1.bf16.msra.mxu0 %v3740
    %4730 = vmatprep.subr.bf16.mxu0 %v3743
    %4731 = vmatpush1.bf16.msra.mxu0 %v3742
    %4732 = vmatprep.subr.bf16.mxu0 %v3745
    %4733 = vmatpush1.bf16.msra.mxu0 %v3744
    %4734 = vmatprep.subr.bf16.mxu0 %v3747
    %4735 = vmatpush1.bf16.msra.mxu0 %v3746
    %4736 = vmatprep.subr.bf16.mxu0 0
    %4737 = vmatpush1.bf16.msra.mxu0 0
    %4738 = vmatprep.subr.bf16.mxu0 0
    %4739 = vmatpush1.bf16.msra.mxu0 0
    %4740 = vmatprep.subr.bf16.mxu0 0
    %4741 = vmatpush1.bf16.msra.mxu0 0
    %4742 = vmatprep.subr.bf16.mxu0 0
    %4743 = vmatpush1.bf16.msra.mxu0 0
    %4744 = vmatprep.subr.bf16.mxu0 0
    %4745 = vmatpush1.bf16.msra.mxu0 0
    %4746 = vmatprep.subr.bf16.mxu0 0
    %4747 = vmatpush1.bf16.msra.mxu0 0
    %4748 = vmatprep.subr.bf16.mxu0 0
    %4749 = vmatpush1.bf16.msra.mxu0 0
    %4750 = vmatprep.subr.bf16.mxu0 0
    %4751 = vmatpush1.bf16.msra.mxu0 0
    %4752 = vmatprep.mubr.bf16.mxu0 0
    %4753 = vmatmul.mubr.bf16.gmra.mrb[0].mxu0 %v2729
    %v4754 = vpop.f32.mrb[0].mxu0
    %v4755 = vadd.f32 %v4702, %v4754
    %v4756 = vpop.f32.mrb[0].mxu0
    %v4757 = vadd.f32 %v4704, %v4756
    %v4758 = vpop.f32.mrb[0].mxu0
    %v4759 = vadd.f32 %v4706, %v4758
    %v4760 = vpop.f32.mrb[0].mxu0
    %v4761 = vadd.f32 %v4708, %v4760
    %4762 = vmatprep.mubr.bf16.mxu0 0
    %4763 = vmatmul.mubr.bf16.gmra.mrb[0].mxu0 %v2735
    %v4764 = vpop.f32.mrb[0].mxu0
    %v4765 = vadd.f32 %v4712, %v4764
    %v4766 = vpop.f32.mrb[0].mxu0
    %v4767 = vadd.f32 %v4714, %v4766
    %v4768 = vpop.f32.mrb[0].mxu0
    %v4769 = vadd.f32 %v4716, %v4768
    %v4770 = vpop.f32.mrb[0].mxu0
    %v4771 = vadd.f32 %v4718, %v4770
    %4772 = vdwg.mxu0
    %v4773 = vadd.f32 %v4649, %v4755
    %v4774 = vadd.f32 %v4651, %v4757
    %v4775 = vadd.f32 %v4653, %v4759
    %v4776 = vadd.f32 %v4655, %v4761
    %v4777 = vadd.f32 %v4659, %v4765
    %v4778 = vadd.f32 %v4661, %v4767
    %v4779 = vadd.f32 %v4663, %v4769
    %v4780 = vadd.f32 %v4665, %v4771
    %v4781 = vadd.f32 %v4773, %v3914
    %v4782 = vadd.f32 %v4774, %v3918
    %v4783 = vadd.f32 %v4775, %v3914
    %v4784 = vadd.f32 %v4776, %v3918
    %v4785 = vadd.f32 %v4777, %v3914
    %v4786 = vadd.f32 %v4778, %v3918
    %v4787 = vadd.f32 %v4779, %v3914
    %v4788 = vadd.f32 %v4780, %v3918
    %vm4789 = vcmp.gt.f32.partialorder %v4781, 0.0
    %vm4790 = vcmp.gt.f32.partialorder %v4782, 0.0
    %vm4791 = vcmp.gt.f32.partialorder %v4783, 0.0
    %vm4792 = vcmp.gt.f32.partialorder %v4784, 0.0
    %vm4793 = vcmp.gt.f32.partialorder %v4785, 0.0
    %vm4794 = vcmp.gt.f32.partialorder %v4786, 0.0
    %vm4795 = vcmp.gt.f32.partialorder %v4787, 0.0
    %vm4796 = vcmp.gt.f32.partialorder %v4788, 0.0
    %v4797 = vmul.f32 %v4781, 0.15
    %v4798 = vmul.f32 %v4782, 0.15
    %v4799 = vmul.f32 %v4783, 0.15
    %v4800 = vmul.f32 %v4784, 0.15
    %v4801 = vmul.f32 %v4785, 0.15
    %v4802 = vmul.f32 %v4786, 0.15
    %v4803 = vmul.f32 %v4787, 0.15
    %v4804 = vmul.f32 %v4788, 0.15
    %v4805 = vsel %vm4789, %v4781, %v4797
    %v4806 = vsel %vm4790, %v4782, %v4798
    %v4807 = vsel %vm4791, %v4783, %v4799
    %v4808 = vsel %vm4792, %v4784, %v4800
    %v4809 = vsel %vm4793, %v4785, %v4801
    %v4810 = vsel %vm4794, %v4786, %v4802
    %v4811 = vsel %vm4795, %v4787, %v4803
    %v4812 = vsel %vm4796, %v4788, %v4804
    %v4821 = vcombine.low %v4805, %v4806
    %v4822 = vcombine.high %v4805, %v4806
    %v4823 = vcombine.low %v4807, %v4808
    %v4824 = vcombine.high %v4807, %v4808
    %v4825 = vcombine.low %v4809, %v4810
    %v4826 = vcombine.high %v4809, %v4810
    %v4827 = vcombine.low %v4811, %v4812
    %v4828 = vcombine.high %v4811, %v4812
    %v4829 = vcombine.high %v4821, %v4821
    %v4830 = vcombine.high %v4822, %v4822
    %v4831 = vcombine.high %v4823, %v4823
    %v4832 = vcombine.high %v4824, %v4824
    %v4833 = vcombine.high %v4825, %v4825
    %v4834 = vcombine.high %v4826, %v4826
    %v4835 = vcombine.high %v4827, %v4827
    %v4836 = vcombine.high %v4828, %v4828
    %v4837 = vrot.slane %v4821, 7
    %v4838 = vrot.slane %v4829, 7
    %v4839 = vrot.slane %v4822, 7
    %v4840 = vrot.slane %v4830, 7
    %v4841 = vrot.slane %v4823, 7
    %v4842 = vrot.slane %v4831, 7
    %v4843 = vrot.slane %v4824, 7
    %v4844 = vrot.slane %v4832, 7
    %v4845 = vrot.slane %v4825, 7
    %v4846 = vrot.slane %v4833, 7
    %v4847 = vrot.slane %v4826, 7
    %v4848 = vrot.slane %v4834, 7
    %v4849 = vrot.slane %v4827, 7
    %v4850 = vrot.slane %v4835, 7
    %v4851 = vrot.slane %v4828, 7
    %v4852 = vrot.slane %v4836, 7
    %4869 = vst [vmem:[#allocation3 + $0x30] sm:$0x1e] %v4837
    %4870 = vst [vmem:[#allocation3 + $0x38] sm:$0x1e] %v4838
    %4871 = vst [vmem:[#allocation3 + $0x90] sm:$0x1e] %v4839
    %4872 = vst [vmem:[#allocation3 + $0x98] sm:$0x1e] %v4840
    %4873 = vst [vmem:[#allocation3 + $0xf0] sm:$0x1e] %v4841
    %4874 = vst [vmem:[#allocation3 + $0xf8] sm:$0x1e] %v4842
    %4875 = vst [vmem:[#allocation3 + $0x150] sm:$0x1e] %v4843
    %4876 = vst [vmem:[#allocation3 + $0x158] sm:$0x1e] %v4844
    %4877 = vst [vmem:[#allocation3 + $0x1b0] sm:$0x1e] %v4845
    %4878 = vst [vmem:[#allocation3 + $0x1b8] sm:$0x1e] %v4846
    %4879 = vst [vmem:[#allocation3 + $0x210] sm:$0x1e] %v4847
    %4880 = vst [vmem:[#allocation3 + $0x218] sm:$0x1e] %v4848
    %4881 = vst [vmem:[#allocation3 + $0x270] sm:$0x1e] %v4849
    %4882 = vst [vmem:[#allocation3 + $0x278] sm:$0x1e] %v4850
    %4883 = vst [vmem:[#allocation3 + $0x2d0] sm:$0x1e] %v4851
    %4884 = vst [vmem:[#allocation3 + $0x2d8] sm:$0x1e] %v4852
    %4885 = vmatprep.subr.bf16.mxu0 %v3009
    %4886 = vmatpush1.bf16.msra.mxu0 %v3008
    %4887 = vmatprep.subr.bf16.mxu0 %v3011
    %4888 = vmatpush1.bf16.msra.mxu0 %v3010
    %4889 = vmatprep.subr.bf16.mxu0 %v3013
    %4890 = vmatpush1.bf16.msra.mxu0 %v3012
    %4891 = vmatprep.subr.bf16.mxu0 %v3015
    %4892 = vmatpush1.bf16.msra.mxu0 %v3014
    %4893 = vmatprep.subr.bf16.mxu0 %v3017
    %4894 = vmatpush1.bf16.msra.mxu0 %v3016
    %4895 = vmatprep.subr.bf16.mxu0 %v3019
    %4896 = vmatpush1.bf16.msra.mxu0 %v3018
    %4897 = vmatprep.subr.bf16.mxu0 %v3021
    %4898 = vmatpush1.bf16.msra.mxu0 %v3020
    %4899 = vmatprep.subr.bf16.mxu0 %v3023
    %4900 = vmatpush1.bf16.msra.mxu0 %v3022
    %4901 = vmatprep.subr.bf16.mxu0 %v3025
    %4902 = vmatpush1.bf16.msra.mxu0 %v3024
    %4903 = vmatprep.subr.bf16.mxu0 %v3027
    %4904 = vmatpush1.bf16.msra.mxu0 %v3026
    %4905 = vmatprep.subr.bf16.mxu0 %v3029
    %4906 = vmatpush1.bf16.msra.mxu0 %v3028
    %4907 = vmatprep.subr.bf16.mxu0 %v3031
    %4908 = vmatpush1.bf16.msra.mxu0 %v3030
    %4909 = vmatprep.subr.bf16.mxu0 %v3033
    %4910 = vmatpush1.bf16.msra.mxu0 %v3032
    %4911 = vmatprep.subr.bf16.mxu0 %v3035
    %4912 = vmatpush1.bf16.msra.mxu0 %v3034
    %4913 = vmatprep.subr.bf16.mxu0 %v3037
    %4914 = vmatpush1.bf16.msra.mxu0 %v3036
    %4915 = vmatprep.subr.bf16.mxu0 %v3039
    %4916 = vmatpush1.bf16.msra.mxu0 %v3038
    %4917 = vmatprep.mubr.bf16.mxu0 %v2426
    %4918 = vmatmul.mubr.bf16.gmra.mrb[0].mxu0 %v2425
    %v4919 = vpop.f32.mrb[0].mxu0
    %v4920 = vadd.f32 0.0, %v4919
    %v4921 = vpop.f32.mrb[0].mxu0
    %v4922 = vadd.f32 0.0, %v4921
    %v4923 = vpop.f32.mrb[0].mxu0
    %v4924 = vadd.f32 0.0, %v4923
    %v4925 = vpop.f32.mrb[0].mxu0
    %v4926 = vadd.f32 0.0, %v4925
    %4927 = vmatprep.mubr.bf16.mxu0 %v2432
    %4928 = vmatmul.mubr.bf16.gmra.mrb[0].mxu0 %v2431
    %v4929 = vpop.f32.mrb[0].mxu0
    %v4930 = vadd.f32 0.0, %v4929
    %v4931 = vpop.f32.mrb[0].mxu0
    %v4932 = vadd.f32 0.0, %v4931
    %v4933 = vpop.f32.mrb[0].mxu0
    %v4934 = vadd.f32 0.0, %v4933
    %v4935 = vpop.f32.mrb[0].mxu0
    %v4936 = vadd.f32 0.0, %v4935
    %4937 = vdwg.mxu0
    %4938 = vmatprep.subr.bf16.mxu0 %v3041
    %4939 = vmatpush1.bf16.msra.mxu0 %v3040
    %4940 = vmatprep.subr.bf16.mxu0 %v3043
    %4941 = vmatpush1.bf16.msra.mxu0 %v3042
    %4942 = vmatprep.subr.bf16.mxu0 %v3045
    %4943 = vmatpush1.bf16.msra.mxu0 %v3044
    %4944 = vmatprep.subr.bf16.mxu0 %v3047
    %4945 = vmatpush1.bf16.msra.mxu0 %v3046
    %4946 = vmatprep.subr.bf16.mxu0 %v3049
    %4947 = vmatpush1.bf16.msra.mxu0 %v3048
    %4948 = vmatprep.subr.bf16.mxu0 %v3051
    %4949 = vmatpush1.bf16.msra.mxu0 %v3050
    %4950 = vmatprep.subr.bf16.mxu0 %v3053
    %4951 = vmatpush1.bf16.msra.mxu0 %v3052
    %4952 = vmatprep.subr.bf16.mxu0 %v3055
    %4953 = vmatpush1.bf16.msra.mxu0 %v3054
    %4954 = vmatprep.subr.bf16.mxu0 0
    %4955 = vmatpush1.bf16.msra.mxu0 0
    %4956 = vmatprep.subr.bf16.mxu0 0
    %4957 = vmatpush1.bf16.msra.mxu0 0
    %4958 = vmatprep.subr.bf16.mxu0 0
    %4959 = vmatpush1.bf16.msra.mxu0 0
    %4960 = vmatprep.subr.bf16.mxu0 0
    %4961 = vmatpush1.bf16.msra.mxu0 0
    %4962 = vmatprep.subr.bf16.mxu0 0
    %4963 = vmatpush1.bf16.msra.mxu0 0
    %4964 = vmatprep.subr.bf16.mxu0 0
    %4965 = vmatpush1.bf16.msra.mxu0 0
    %4966 = vmatprep.subr.bf16.mxu0 0
    %4967 = vmatpush1.bf16.msra.mxu0 0
    %4968 = vmatprep.subr.bf16.mxu0 0
    %4969 = vmatpush1.bf16.msra.mxu0 0
    %4970 = vmatprep.mubr.bf16.mxu0 0
    %4971 = vmatmul.mubr.bf16.gmra.mrb[0].mxu0 %v2427
    %v4972 = vpop.f32.mrb[0].mxu0
    %v4973 = vadd.f32 %v4920, %v4972
    %v4974 = vpop.f32.mrb[0].mxu0
    %v4975 = vadd.f32 %v4922, %v4974
    %v4976 = vpop.f32.mrb[0].mxu0
    %v4977 = vadd.f32 %v4924, %v4976
    %v4978 = vpop.f32.mrb[0].mxu0
    %v4979 = vadd.f32 %v4926, %v4978
    %4980 = vmatprep.mubr.bf16.mxu0 0
    %4981 = vmatmul.mubr.bf16.gmra.mrb[0].mxu0 %v2433
    %v4982 = vpop.f32.mrb[0].mxu0
    %v4983 = vadd.f32 %v4930, %v4982
    %v4984 = vpop.f32.mrb[0].mxu0
    %v4985 = vadd.f32 %v4932, %v4984
    %v4986 = vpop.f32.mrb[0].mxu0
    %v4987 = vadd.f32 %v4934, %v4986
    %v4988 = vpop.f32.mrb[0].mxu0
    %v4989 = vadd.f32 %v4936, %v4988
    %4990 = vdwg.mxu0
    %4991 = vmatprep.subr.bf16.mxu0 %v3355
    %4992 = vmatpush1.bf16.msra.mxu0 %v3354
    %4993 = vmatprep.subr.bf16.mxu0 %v3357
    %4994 = vmatpush1.bf16.msra.mxu0 %v3356
    %4995 = vmatprep.subr.bf16.mxu0 %v3359
    %4996 = vmatpush1.bf16.msra.mxu0 %v3358
    %4997 = vmatprep.subr.bf16.mxu0 %v3361
    %4998 = vmatpush1.bf16.msra.mxu0 %v3360
    %4999 = vmatprep.subr.bf16.mxu0 %v3363
    %5000 = vmatpush1.bf16.msra.mxu0 %v3362
    %5001 = vmatprep.subr.bf16.mxu0 %v3365
    %5002 = vmatpush1.bf16.msra.mxu0 %v3364
    %5003 = vmatprep.subr.bf16.mxu0 %v3367
    %5004 = vmatpush1.bf16.msra.mxu0 %v3366
    %5005 = vmatprep.subr.bf16.mxu0 %v3369
    %5006 = vmatpush1.bf16.msra.mxu0 %v3368
    %5007 = vmatprep.subr.bf16.mxu0 %v3371
    %5008 = vmatpush1.bf16.msra.mxu0 %v3370
    %5009 = vmatprep.subr.bf16.mxu0 %v3373
    %5010 = vmatpush1.bf16.msra.mxu0 %v3372
    %5011 = vmatprep.subr.bf16.mxu0 %v3375
    %5012 = vmatpush1.bf16.msra.mxu0 %v3374
    %5013 = vmatprep.subr.bf16.mxu0 %v3377
    %5014 = vmatpush1.bf16.msra.mxu0 %v3376
    %5015 = vmatprep.subr.bf16.mxu0 %v3379
    %5016 = vmatpush1.bf16.msra.mxu0 %v3378
    %5017 = vmatprep.subr.bf16.mxu0 %v3381
    %5018 = vmatpush1.bf16.msra.mxu0 %v3380
    %5019 = vmatprep.subr.bf16.mxu0 %v3383
    %5020 = vmatpush1.bf16.msra.mxu0 %v3382
    %5021 = vmatprep.subr.bf16.mxu0 %v3385
    %5022 = vmatpush1.bf16.msra.mxu0 %v3384
    %5023 = vmatprep.mubr.bf16.mxu0 %v2123
    %5024 = vmatmul.mubr.bf16.gmra.mrb[0].mxu0 %v2122
    %v5025 = vpop.f32.mrb[0].mxu0
    %v5026 = vadd.f32 %v4973, %v5025
    %v5027 = vpop.f32.mrb[0].mxu0
    %v5028 = vadd.f32 %v4975, %v5027
    %v5029 = vpop.f32.mrb[0].mxu0
    %v5030 = vadd.f32 %v4977, %v5029
    %v5031 = vpop.f32.mrb[0].mxu0
    %v5032 = vadd.f32 %v4979, %v5031
    %5033 = vmatprep.mubr.bf16.mxu0 %v2129
    %5034 = vmatmul.mubr.bf16.gmra.mrb[0].mxu0 %v2128
    %v5035 = vpop.f32.mrb[0].mxu0
    %v5036 = vadd.f32 %v4983, %v5035
    %v5037 = vpop.f32.mrb[0].mxu0
    %v5038 = vadd.f32 %v4985, %v5037
    %v5039 = vpop.f32.mrb[0].mxu0
    %v5040 = vadd.f32 %v4987, %v5039
    %v5041 = vpop.f32.mrb[0].mxu0
    %v5042 = vadd.f32 %v4989, %v5041
    %5043 = vdwg.mxu0
    %5044 = vmatprep.subr.bf16.mxu0 %v3387
    %5045 = vmatpush1.bf16.msra.mxu0 %v3386
    %5046 = vmatprep.subr.bf16.mxu0 %v3389
    %5047 = vmatpush1.bf16.msra.mxu0 %v3388
    %5048 = vmatprep.subr.bf16.mxu0 %v3391
    %5049 = vmatpush1.bf16.msra.mxu0 %v3390
    %5050 = vmatprep.subr.bf16.mxu0 %v3393
    %5051 = vmatpush1.bf16.msra.mxu0 %v3392
    %5052 = vmatprep.subr.bf16.mxu0 %v3395
    %5053 = vmatpush1.bf16.msra.mxu0 %v3394
    %5054 = vmatprep.subr.bf16.mxu0 %v3397
    %5055 = vmatpush1.bf16.msra.mxu0 %v3396
    %5056 = vmatprep.subr.bf16.mxu0 %v3399
    %5057 = vmatpush1.bf16.msra.mxu0 %v3398
    %5058 = vmatprep.subr.bf16.mxu0 %v3401
    %5059 = vmatpush1.bf16.msra.mxu0 %v3400
    %5060 = vmatprep.subr.bf16.mxu0 0
    %5061 = vmatpush1.bf16.msra.mxu0 0
    %5062 = vmatprep.subr.bf16.mxu0 0
    %5063 = vmatpush1.bf16.msra.mxu0 0
    %5064 = vmatprep.subr.bf16.mxu0 0
    %5065 = vmatpush1.bf16.msra.mxu0 0
    %5066 = vmatprep.subr.bf16.mxu0 0
    %5067 = vmatpush1.bf16.msra.mxu0 0
    %5068 = vmatprep.subr.bf16.mxu0 0
    %5069 = vmatpush1.bf16.msra.mxu0 0
    %5070 = vmatprep.subr.bf16.mxu0 0
    %5071 = vmatpush1.bf16.msra.mxu0 0
    %5072 = vmatprep.subr.bf16.mxu0 0
    %5073 = vmatpush1.bf16.msra.mxu0 0
    %5074 = vmatprep.subr.bf16.mxu0 0
    %5075 = vmatpush1.bf16.msra.mxu0 0
    %5076 = vmatprep.mubr.bf16.mxu0 0
    %5077 = vmatmul.mubr.bf16.gmra.mrb[0].mxu0 %v2124
    %v5078 = vpop.f32.mrb[0].mxu0
    %v5079 = vadd.f32 %v5026, %v5078
    %v5080 = vpop.f32.mrb[0].mxu0
    %v5081 = vadd.f32 %v5028, %v5080
    %v5082 = vpop.f32.mrb[0].mxu0
    %v5083 = vadd.f32 %v5030, %v5082
    %v5084 = vpop.f32.mrb[0].mxu0
    %v5085 = vadd.f32 %v5032, %v5084
    %5086 = vmatprep.mubr.bf16.mxu0 0
    %5087 = vmatmul.mubr.bf16.gmra.mrb[0].mxu0 %v2130
    %v5088 = vpop.f32.mrb[0].mxu0
    %v5089 = vadd.f32 %v5036, %v5088
    %v5090 = vpop.f32.mrb[0].mxu0
    %v5091 = vadd.f32 %v5038, %v5090
    %v5092 = vpop.f32.mrb[0].mxu0
    %v5093 = vadd.f32 %v5040, %v5092
    %v5094 = vpop.f32.mrb[0].mxu0
    %v5095 = vadd.f32 %v5042, %v5094
    %5096 = vdwg.mxu0
    %5097 = vmatprep.subr.bf16.mxu0 %v3701
    %5098 = vmatpush1.bf16.msra.mxu0 %v3700
    %5099 = vmatprep.subr.bf16.mxu0 %v3703
    %5100 = vmatpush1.bf16.msra.mxu0 %v3702
    %5101 = vmatprep.subr.bf16.mxu0 %v3705
    %5102 = vmatpush1.bf16.msra.mxu0 %v3704
    %5103 = vmatprep.subr.bf16.mxu0 %v3707
    %5104 = vmatpush1.bf16.msra.mxu0 %v3706
    %5105 = vmatprep.subr.bf16.mxu0 %v3709
    %5106 = vmatpush1.bf16.msra.mxu0 %v3708
    %5107 = vmatprep.subr.bf16.mxu0 %v3711
    %5108 = vmatpush1.bf16.msra.mxu0 %v3710
    %5109 = vmatprep.subr.bf16.mxu0 %v3713
    %5110 = vmatpush1.bf16.msra.mxu0 %v3712
    %5111 = vmatprep.subr.bf16.mxu0 %v3715
    %5112 = vmatpush1.bf16.msra.mxu0 %v3714
    %5113 = vmatprep.subr.bf16.mxu0 %v3717
    %5114 = vmatpush1.bf16.msra.mxu0 %v3716
    %5115 = vmatprep.subr.bf16.mxu0 %v3719
    %5116 = vmatpush1.bf16.msra.mxu0 %v3718
    %5117 = vmatprep.subr.bf16.mxu0 %v3721
    %5118 = vmatpush1.bf16.msra.mxu0 %v3720
    %5119 = vmatprep.subr.bf16.mxu0 %v3723
    %5120 = vmatpush1.bf16.msra.mxu0 %v3722
    %5121 = vmatprep.subr.bf16.mxu0 %v3725
    %5122 = vmatpush1.bf16.msra.mxu0 %v3724
    %5123 = vmatprep.subr.bf16.mxu0 %v3727
    %5124 = vmatpush1.bf16.msra.mxu0 %v3726
    %5125 = vmatprep.subr.bf16.mxu0 %v3729
    %5126 = vmatpush1.bf16.msra.mxu0 %v3728
    %5127 = vmatprep.subr.bf16.mxu0 %v3731
    %5128 = vmatpush1.bf16.msra.mxu0 %v3730
    %5129 = vmatprep.mubr.bf16.mxu0 %v2729
    %5130 = vmatmul.mubr.bf16.gmra.mrb[0].mxu0 %v2728
    %v5131 = vpop.f32.mrb[0].mxu0
    %v5132 = vadd.f32 0.0, %v5131
    %v5133 = vpop.f32.mrb[0].mxu0
    %v5134 = vadd.f32 0.0, %v5133
    %v5135 = vpop.f32.mrb[0].mxu0
    %v5136 = vadd.f32 0.0, %v5135
    %v5137 = vpop.f32.mrb[0].mxu0
    %v5138 = vadd.f32 0.0, %v5137
    %5139 = vmatprep.mubr.bf16.mxu0 %v2735
    %5140 = vmatmul.mubr.bf16.gmra.mrb[0].mxu0 %v2734
    %v5141 = vpop.f32.mrb[0].mxu0
    %v5142 = vadd.f32 0.0, %v5141
    %v5143 = vpop.f32.mrb[0].mxu0
    %v5144 = vadd.f32 0.0, %v5143
    %v5145 = vpop.f32.mrb[0].mxu0
    %v5146 = vadd.f32 0.0, %v5145
    %v5147 = vpop.f32.mrb[0].mxu0
    %v5148 = vadd.f32 0.0, %v5147
    %5149 = vdwg.mxu0
    %5150 = vmatprep.subr.bf16.mxu0 %v3733
    %5151 = vmatpush1.bf16.msra.mxu0 %v3732
    %5152 = vmatprep.subr.bf16.mxu0 %v3735
    %5153 = vmatpush1.bf16.msra.mxu0 %v3734
    %5154 = vmatprep.subr.bf16.mxu0 %v3737
    %5155 = vmatpush1.bf16.msra.mxu0 %v3736
    %5156 = vmatprep.subr.bf16.mxu0 %v3739
    %5157 = vmatpush1.bf16.msra.mxu0 %v3738
    %5158 = vmatprep.subr.bf16.mxu0 %v3741
    %5159 = vmatpush1.bf16.msra.mxu0 %v3740
    %5160 = vmatprep.subr.bf16.mxu0 %v3743
    %5161 = vmatpush1.bf16.msra.mxu0 %v3742
    %5162 = vmatprep.subr.bf16.mxu0 %v3745
    %5163 = vmatpush1.bf16.msra.mxu0 %v3744
    %5164 = vmatprep.subr.bf16.mxu0 %v3747
    %5165 = vmatpush1.bf16.msra.mxu0 %v3746
    %5166 = vmatprep.subr.bf16.mxu0 0
    %5167 = vmatpush1.bf16.msra.mxu0 0
    %5168 = vmatprep.subr.bf16.mxu0 0
    %5169 = vmatpush1.bf16.msra.mxu0 0
    %5170 = vmatprep.subr.bf16.mxu0 0
    %5171 = vmatpush1.bf16.msra.mxu0 0
    %5172 = vmatprep.subr.bf16.mxu0 0
    %5173 = vmatpush1.bf16.msra.mxu0 0
    %5174 = vmatprep.subr.bf16.mxu0 0
    %5175 = vmatpush1.bf16.msra.mxu0 0
    %5176 = vmatprep.subr.bf16.mxu0 0
    %5177 = vmatpush1.bf16.msra.mxu0 0
    %5178 = vmatprep.subr.bf16.mxu0 0
    %5179 = vmatpush1.bf16.msra.mxu0 0
    %5180 = vmatprep.subr.bf16.mxu0 0
    %5181 = vmatpush1.bf16.msra.mxu0 0
    %5182 = vmatprep.mubr.bf16.mxu0 0
    %5183 = vmatmul.mubr.bf16.gmra.mrb[0].mxu0 %v2730
    %v5184 = vpop.f32.mrb[0].mxu0
    %v5185 = vadd.f32 %v5132, %v5184
    %v5186 = vpop.f32.mrb[0].mxu0
    %v5187 = vadd.f32 %v5134, %v5186
    %v5188 = vpop.f32.mrb[0].mxu0
    %v5189 = vadd.f32 %v5136, %v5188
    %v5190 = vpop.f32.mrb[0].mxu0
    %v5191 = vadd.f32 %v5138, %v5190
    %5192 = vmatprep.mubr.bf16.mxu0 0
    %5193 = vmatmul.mubr.bf16.gmra.mrb[0].mxu0 %v2736
    %v5194 = vpop.f32.mrb[0].mxu0
    %v5195 = vadd.f32 %v5142, %v5194
    %v5196 = vpop.f32.mrb[0].mxu0
    %v5197 = vadd.f32 %v5144, %v5196
    %v5198 = vpop.f32.mrb[0].mxu0
    %v5199 = vadd.f32 %v5146, %v5198
    %v5200 = vpop.f32.mrb[0].mxu0
    %v5201 = vadd.f32 %v5148, %v5200
    %5202 = vdwg.mxu0
    %v5203 = vadd.f32 %v5079, %v5185
    %v5204 = vadd.f32 %v5081, %v5187
    %v5205 = vadd.f32 %v5083, %v5189
    %v5206 = vadd.f32 %v5085, %v5191
    %v5207 = vadd.f32 %v5089, %v5195
    %v5208 = vadd.f32 %v5091, %v5197
    %v5209 = vadd.f32 %v5093, %v5199
    %v5210 = vadd.f32 %v5095, %v5201
    %v5211 = vadd.f32 %v5203, %v3914
    %v5212 = vadd.f32 %v5204, %v3918
    %v5213 = vadd.f32 %v5205, %v3914
    %v5214 = vadd.f32 %v5206, %v3918
    %v5215 = vadd.f32 %v5207, %v3914
    %v5216 = vadd.f32 %v5208, %v3918
    %v5217 = vadd.f32 %v5209, %v3914
    %v5218 = vadd.f32 %v5210, %v3918
    %vm5219 = vcmp.gt.f32.partialorder %v5211, 0.0
    %vm5220 = vcmp.gt.f32.partialorder %v5212, 0.0
    %vm5221 = vcmp.gt.f32.partialorder %v5213, 0.0
    %vm5222 = vcmp.gt.f32.partialorder %v5214, 0.0
    %vm5223 = vcmp.gt.f32.partialorder %v5215, 0.0
    %vm5224 = vcmp.gt.f32.partialorder %v5216, 0.0
    %vm5225 = vcmp.gt.f32.partialorder %v5217, 0.0
    %vm5226 = vcmp.gt.f32.partialorder %v5218, 0.0
    %v5227 = vmul.f32 %v5211, 0.15
    %v5228 = vmul.f32 %v5212, 0.15
    %v5229 = vmul.f32 %v5213, 0.15
    %v5230 = vmul.f32 %v5214, 0.15
    %v5231 = vmul.f32 %v5215, 0.15
    %v5232 = vmul.f32 %v5216, 0.15
    %v5233 = vmul.f32 %v5217, 0.15
    %v5234 = vmul.f32 %v5218, 0.15
    %v5235 = vsel %vm5219, %v5211, %v5227
    %v5236 = vsel %vm5220, %v5212, %v5228
    %v5237 = vsel %vm5221, %v5213, %v5229
    %v5238 = vsel %vm5222, %v5214, %v5230
    %v5239 = vsel %vm5223, %v5215, %v5231
    %v5240 = vsel %vm5224, %v5216, %v5232
    %v5241 = vsel %vm5225, %v5217, %v5233
    %v5242 = vsel %vm5226, %v5218, %v5234
    %v5251 = vcombine.low %v5235, %v5236
    %v5252 = vcombine.high %v5235, %v5236
    %v5253 = vcombine.low %v5237, %v5238
    %v5254 = vcombine.high %v5237, %v5238
    %v5255 = vcombine.low %v5239, %v5240
    %v5256 = vcombine.high %v5239, %v5240
    %v5257 = vcombine.low %v5241, %v5242
    %v5258 = vcombine.high %v5241, %v5242
    %v5259 = vcombine.high %v5251, %v5251
    %v5260 = vcombine.high %v5252, %v5252
    %v5261 = vcombine.high %v5253, %v5253
    %v5262 = vcombine.high %v5254, %v5254
    %v5263 = vcombine.high %v5255, %v5255
    %v5264 = vcombine.high %v5256, %v5256
    %v5265 = vcombine.high %v5257, %v5257
    %v5266 = vcombine.high %v5258, %v5258
    %v5267 = vrot.slane %v5251, 7
    %v5268 = vrot.slane %v5259, 7
    %v5269 = vrot.slane %v5252, 7
    %v5270 = vrot.slane %v5260, 7
    %v5271 = vrot.slane %v5253, 7
    %v5272 = vrot.slane %v5261, 7
    %v5273 = vrot.slane %v5254, 7
    %v5274 = vrot.slane %v5262, 7
    %v5275 = vrot.slane %v5255, 7
    %v5276 = vrot.slane %v5263, 7
    %v5277 = vrot.slane %v5256, 7
    %v5278 = vrot.slane %v5264, 7
    %v5279 = vrot.slane %v5257, 7
    %v5280 = vrot.slane %v5265, 7
    %v5281 = vrot.slane %v5258, 7
    %v5282 = vrot.slane %v5266, 7
    %5299 = vst [vmem:[#allocation3 + $0x40] sm:$0x1e] %v5267
    %5300 = vst [vmem:[#allocation3 + $0x48] sm:$0x1e] %v5268
    %5301 = vst [vmem:[#allocation3 + $0xa0] sm:$0x1e] %v5269
    %5302 = vst [vmem:[#allocation3 + $0xa8] sm:$0x1e] %v5270
    %5303 = vst [vmem:[#allocation3 + $0x100] sm:$0x1e] %v5271
    %5304 = vst [vmem:[#allocation3 + $0x108] sm:$0x1e] %v5272
    %5305 = vst [vmem:[#allocation3 + $0x160] sm:$0x1e] %v5273
    %5306 = vst [vmem:[#allocation3 + $0x168] sm:$0x1e] %v5274
    %5307 = vst [vmem:[#allocation3 + $0x1c0] sm:$0x1e] %v5275
    %5308 = vst [vmem:[#allocation3 + $0x1c8] sm:$0x1e] %v5276
    %5309 = vst [vmem:[#allocation3 + $0x220] sm:$0x1e] %v5277
    %5310 = vst [vmem:[#allocation3 + $0x228] sm:$0x1e] %v5278
    %5311 = vst [vmem:[#allocation3 + $0x280] sm:$0x1e] %v5279
    %5312 = vst [vmem:[#allocation3 + $0x288] sm:$0x1e] %v5280
    %5313 = vst [vmem:[#allocation3 + $0x2e0] sm:$0x1e] %v5281
    %5314 = vst [vmem:[#allocation3 + $0x2e8] sm:$0x1e] %v5282
    %v5315 = vld [vmem:[#allocation12] sm:$0xf]
    %v5316 = vld [vmem:[#allocation12 + $0x4] sm:$0xf]
    %v5317 = vld [vmem:[#allocation12 + $0x8] sm:$0xf]
    %v5318 = vld [vmem:[#allocation12 + $0xc] sm:$0xf]
    %v5319 = vld [vmem:[#allocation12 + $0x10] sm:$0xf]
    %v5320 = vld [vmem:[#allocation12 + $0x14] sm:$0xf]
    %v5321 = vld [vmem:[#allocation12 + $0x18] sm:$0xf]
    %v5322 = vld [vmem:[#allocation12 + $0x1c] sm:$0xf]
    %v5323 = vld [vmem:[#allocation12 + $0x20] sm:$0xf]
    %v5324 = vld [vmem:[#allocation12 + $0x24] sm:$0xf]
    %v5325 = vld [vmem:[#allocation12 + $0x28] sm:$0xf]
    %v5326 = vld [vmem:[#allocation12 + $0x2c] sm:$0xf]
    %v5327 = vld [vmem:[#allocation12 + $0x30] sm:$0xf]
    %v5328 = vld [vmem:[#allocation12 + $0x34] sm:$0xf]
    %v5329 = vld [vmem:[#allocation12 + $0x38] sm:$0xf]
    %v5330 = vld [vmem:[#allocation12 + $0x3c] sm:$0xf]
    %v5331 = vld [vmem:[#allocation12 + $0x40] sm:$0xf]
    %v5332 = vld [vmem:[#allocation12 + $0x44] sm:$0xf]
    %v5333 = vld [vmem:[#allocation12 + $0x48] sm:$0xf]
    %v5334 = vld [vmem:[#allocation12 + $0x4c] sm:$0xf]
    %v5335 = vld [vmem:[#allocation12 + $0x50] sm:$0xf]
    %v5336 = vld [vmem:[#allocation12 + $0x54] sm:$0xf]
    %v5337 = vld [vmem:[#allocation12 + $0x58] sm:$0xf]
    %v5338 = vld [vmem:[#allocation12 + $0x5c] sm:$0xf]
    %v5339 = vld [vmem:[#allocation12 + $0x60] sm:$0xf]
    %v5340 = vld [vmem:[#allocation12 + $0x64] sm:$0xf]
    %v5341 = vld [vmem:[#allocation12 + $0x68] sm:$0xf]
    %v5342 = vld [vmem:[#allocation12 + $0x6c] sm:$0xf]
    %v5343 = vld [vmem:[#allocation12 + $0x70] sm:$0xf]
    %v5344 = vld [vmem:[#allocation12 + $0x74] sm:$0xf]
    %v5345 = vld [vmem:[#allocation12 + $0x78] sm:$0xf]
    %v5346 = vld [vmem:[#allocation12 + $0x7c] sm:$0xf]
    %v5347 = vld [vmem:[#allocation12 + $0x80] sm:$0xf]
    %v5348 = vld [vmem:[#allocation12 + $0x84] sm:$0xf]
    %v5349 = vld [vmem:[#allocation12 + $0x88] sm:$0xf]
    %v5350 = vld [vmem:[#allocation12 + $0x8c] sm:$0xf]
    %v5351 = vld [vmem:[#allocation12 + $0x90] sm:$0xf]
    %v5352 = vld [vmem:[#allocation12 + $0x94] sm:$0xf]
    %v5353 = vld [vmem:[#allocation12 + $0x98] sm:$0xf]
    %v5354 = vld [vmem:[#allocation12 + $0x9c] sm:$0xf]
    %v5355 = vld [vmem:[#allocation12 + $0xa0] sm:$0xf]
    %v5356 = vld [vmem:[#allocation12 + $0xa4] sm:$0xf]
    %v5357 = vld [vmem:[#allocation12 + $0xa8] sm:$0xf]
    %v5358 = vld [vmem:[#allocation12 + $0xac] sm:$0xf]
    %v5359 = vld [vmem:[#allocation12 + $0xb0] sm:$0xf]
    %v5360 = vld [vmem:[#allocation12 + $0xb4] sm:$0xf]
    %v5361 = vld [vmem:[#allocation12 + $0xb8] sm:$0xf]
    %v5362 = vld [vmem:[#allocation12 + $0xbc] sm:$0xf]
    %v5363 = vld [vmem:[#allocation12 + $0xc0] sm:$0xf]
    %v5364 = vld [vmem:[#allocation12 + $0xc4] sm:$0xf]
    %v5365 = vld [vmem:[#allocation12 + $0xc8] sm:$0xf]
    %v5366 = vld [vmem:[#allocation12 + $0xcc] sm:$0xf]
    %v5367 = vld [vmem:[#allocation12 + $0xd0] sm:$0xf]
    %v5368 = vld [vmem:[#allocation12 + $0xd4] sm:$0xf]
    %v5369 = vld [vmem:[#allocation12 + $0xd8] sm:$0xf]
    %v5370 = vld [vmem:[#allocation12 + $0xdc] sm:$0xf]
    %v5371 = vld [vmem:[#allocation12 + $0xe0] sm:$0xf]
    %v5372 = vld [vmem:[#allocation12 + $0xe4] sm:$0xf]
    %v5373 = vld [vmem:[#allocation12 + $0xe8] sm:$0xf]
    %v5374 = vld [vmem:[#allocation12 + $0xec] sm:$0xf]
    %v5375 = vld [vmem:[#allocation12 + $0xf0] sm:$0xf]
    %v5376 = vld [vmem:[#allocation12 + $0xf4] sm:$0xf]
    %v5377 = vld [vmem:[#allocation12 + $0xf8] sm:$0xf]
    %v5378 = vld [vmem:[#allocation12 + $0xfc] sm:$0xf]
    %v5379 = vld [vmem:[#allocation12 + $0x100] sm:$0xf]
    %v5380 = vld [vmem:[#allocation12 + $0x104] sm:$0xf]
    %v5381 = vld [vmem:[#allocation12 + $0x108] sm:$0xf]
    %v5382 = vld [vmem:[#allocation12 + $0x10c] sm:$0xf]
    %v5383 = vld [vmem:[#allocation12 + $0x110] sm:$0xf]
    %v5384 = vld [vmem:[#allocation12 + $0x114] sm:$0xf]
    %v5385 = vld [vmem:[#allocation12 + $0x118] sm:$0xf]
    %v5386 = vld [vmem:[#allocation12 + $0x11c] sm:$0xf]
    %v5387 = vld [vmem:[#allocation12 + $0x120] sm:$0xf]
    %v5388 = vld [vmem:[#allocation12 + $0x124] sm:$0xf]
    %v5389 = vld [vmem:[#allocation12 + $0x128] sm:$0xf]
    %v5390 = vld [vmem:[#allocation12 + $0x12c] sm:$0xf]
    %v5391 = vld [vmem:[#allocation12 + $0x130] sm:$0xf]
    %v5392 = vld [vmem:[#allocation12 + $0x134] sm:$0xf]
    %v5393 = vld [vmem:[#allocation12 + $0x138] sm:$0xf]
    %v5394 = vld [vmem:[#allocation12 + $0x13c] sm:$0xf]
    %v5395 = vld [vmem:[#allocation12 + $0x140] sm:$0xf]
    %v5396 = vld [vmem:[#allocation12 + $0x144] sm:$0xf]
    %v5397 = vld [vmem:[#allocation12 + $0x148] sm:$0xf]
    %v5398 = vld [vmem:[#allocation12 + $0x14c] sm:$0xf]
    %v5399 = vld [vmem:[#allocation12 + $0x150] sm:$0xf]
    %v5400 = vld [vmem:[#allocation12 + $0x154] sm:$0xf]
    %v5401 = vld [vmem:[#allocation12 + $0x158] sm:$0xf]
    %v5402 = vld [vmem:[#allocation12 + $0x15c] sm:$0xf]
    %v5403 = vld [vmem:[#allocation12 + $0x160] sm:$0xf]
    %v5404 = vld [vmem:[#allocation12 + $0x164] sm:$0xf]
    %v5405 = vld [vmem:[#allocation12 + $0x168] sm:$0xf]
    %v5406 = vld [vmem:[#allocation12 + $0x16c] sm:$0xf]
    %v5407 = vld [vmem:[#allocation12 + $0x170] sm:$0xf]
    %v5408 = vld [vmem:[#allocation12 + $0x174] sm:$0xf]
    %v5409 = vld [vmem:[#allocation12 + $0x178] sm:$0xf]
    %v5410 = vld [vmem:[#allocation12 + $0x17c] sm:$0xf]
    %s5411 = scalar_lea.vmem [#allocation12], 384
    %v5412 = vld [vmem:[%s5411] sm:$0xf]
    %v5413 = vld [vmem:[%s5411 + $0x4] sm:$0xf]
    %v5414 = vld [vmem:[%s5411 + $0x8] sm:$0xf]
    %v5415 = vld [vmem:[%s5411 + $0xc] sm:$0xf]
    %v5416 = vld [vmem:[%s5411 + $0x10] sm:$0xf]
    %v5417 = vld [vmem:[%s5411 + $0x14] sm:$0xf]
    %v5418 = vld [vmem:[%s5411 + $0x18] sm:$0xf]
    %v5419 = vld [vmem:[%s5411 + $0x1c] sm:$0xf]
    %v5420 = vld [vmem:[%s5411 + $0x20] sm:$0xf]
    %v5421 = vld [vmem:[%s5411 + $0x24] sm:$0xf]
    %v5422 = vld [vmem:[%s5411 + $0x28] sm:$0xf]
    %v5423 = vld [vmem:[%s5411 + $0x2c] sm:$0xf]
    %v5424 = vld [vmem:[%s5411 + $0x30] sm:$0xf]
    %v5425 = vld [vmem:[%s5411 + $0x34] sm:$0xf]
    %v5426 = vld [vmem:[%s5411 + $0x38] sm:$0xf]
    %v5427 = vld [vmem:[%s5411 + $0x3c] sm:$0xf]
    %v5428 = vld [vmem:[%s5411 + $0x40] sm:$0xf]
    %v5429 = vld [vmem:[%s5411 + $0x44] sm:$0xf]
    %v5430 = vld [vmem:[%s5411 + $0x48] sm:$0xf]
    %v5431 = vld [vmem:[%s5411 + $0x4c] sm:$0xf]
    %v5432 = vld [vmem:[%s5411 + $0x50] sm:$0xf]
    %v5433 = vld [vmem:[%s5411 + $0x54] sm:$0xf]
    %v5434 = vld [vmem:[%s5411 + $0x58] sm:$0xf]
    %v5435 = vld [vmem:[%s5411 + $0x5c] sm:$0xf]
    %v5436 = vld [vmem:[%s5411 + $0x60] sm:$0xf]
    %v5437 = vld [vmem:[%s5411 + $0x64] sm:$0xf]
    %v5438 = vld [vmem:[%s5411 + $0x68] sm:$0xf]
    %v5439 = vld [vmem:[%s5411 + $0x6c] sm:$0xf]
    %v5440 = vld [vmem:[%s5411 + $0x70] sm:$0xf]
    %v5441 = vld [vmem:[%s5411 + $0x74] sm:$0xf]
    %v5442 = vld [vmem:[%s5411 + $0x78] sm:$0xf]
    %v5443 = vld [vmem:[%s5411 + $0x7c] sm:$0xf]
    %v5444 = vld [vmem:[%s5411 + $0x80] sm:$0xf]
    %v5445 = vld [vmem:[%s5411 + $0x84] sm:$0xf]
    %v5446 = vld [vmem:[%s5411 + $0x88] sm:$0xf]
    %v5447 = vld [vmem:[%s5411 + $0x8c] sm:$0xf]
    %v5448 = vld [vmem:[%s5411 + $0x90] sm:$0xf]
    %v5449 = vld [vmem:[%s5411 + $0x94] sm:$0xf]
    %v5450 = vld [vmem:[%s5411 + $0x98] sm:$0xf]
    %v5451 = vld [vmem:[%s5411 + $0x9c] sm:$0xf]
    %v5452 = vld [vmem:[%s5411 + $0xa0] sm:$0xf]
    %v5453 = vld [vmem:[%s5411 + $0xa4] sm:$0xf]
    %v5454 = vld [vmem:[%s5411 + $0xa8] sm:$0xf]
    %v5455 = vld [vmem:[%s5411 + $0xac] sm:$0xf]
    %v5456 = vld [vmem:[%s5411 + $0xb0] sm:$0xf]
    %v5457 = vld [vmem:[%s5411 + $0xb4] sm:$0xf]
    %v5458 = vld [vmem:[%s5411 + $0xb8] sm:$0xf]
    %v5459 = vld [vmem:[%s5411 + $0xbc] sm:$0xf]
    %v5460 = vld [vmem:[%s5411 + $0xc0] sm:$0xf]
    %v5461 = vld [vmem:[%s5411 + $0xc4] sm:$0xf]
    %v5462 = vld [vmem:[%s5411 + $0xc8] sm:$0xf]
    %v5463 = vld [vmem:[%s5411 + $0xcc] sm:$0xf]
    %v5464 = vld [vmem:[%s5411 + $0xd0] sm:$0xf]
    %v5465 = vld [vmem:[%s5411 + $0xd4] sm:$0xf]
    %v5466 = vld [vmem:[%s5411 + $0xd8] sm:$0xf]
    %v5467 = vld [vmem:[%s5411 + $0xdc] sm:$0xf]
    %v5468 = vld [vmem:[%s5411 + $0xe0] sm:$0xf]
    %v5469 = vld [vmem:[%s5411 + $0xe4] sm:$0xf]
    %v5470 = vld [vmem:[%s5411 + $0xe8] sm:$0xf]
    %v5471 = vld [vmem:[%s5411 + $0xec] sm:$0xf]
    %v5472 = vld [vmem:[%s5411 + $0xf0] sm:$0xf]
    %v5473 = vld [vmem:[%s5411 + $0xf4] sm:$0xf]
    %v5474 = vld [vmem:[%s5411 + $0xf8] sm:$0xf]
    %v5475 = vld [vmem:[%s5411 + $0xfc] sm:$0xf]
    %v5476 = vld [vmem:[%s5411 + $0x100] sm:$0xf]
    %v5477 = vld [vmem:[%s5411 + $0x104] sm:$0xf]
    %v5478 = vld [vmem:[%s5411 + $0x108] sm:$0xf]
    %v5479 = vld [vmem:[%s5411 + $0x10c] sm:$0xf]
    %v5480 = vld [vmem:[%s5411 + $0x110] sm:$0xf]
    %v5481 = vld [vmem:[%s5411 + $0x114] sm:$0xf]
    %v5482 = vld [vmem:[%s5411 + $0x118] sm:$0xf]
    %v5483 = vld [vmem:[%s5411 + $0x11c] sm:$0xf]
    %v5484 = vld [vmem:[%s5411 + $0x120] sm:$0xf]
    %v5485 = vld [vmem:[%s5411 + $0x124] sm:$0xf]
    %v5486 = vld [vmem:[%s5411 + $0x128] sm:$0xf]
    %v5487 = vld [vmem:[%s5411 + $0x12c] sm:$0xf]
    %v5488 = vld [vmem:[%s5411 + $0x130] sm:$0xf]
    %v5489 = vld [vmem:[%s5411 + $0x134] sm:$0xf]
    %v5490 = vld [vmem:[%s5411 + $0x138] sm:$0xf]
    %v5491 = vld [vmem:[%s5411 + $0x13c] sm:$0xf]
    %v5492 = vld [vmem:[%s5411 + $0x140] sm:$0xf]
    %v5493 = vld [vmem:[%s5411 + $0x144] sm:$0xf]
    %v5494 = vld [vmem:[%s5411 + $0x148] sm:$0xf]
    %v5495 = vld [vmem:[%s5411 + $0x14c] sm:$0xf]
    %v5496 = vld [vmem:[%s5411 + $0x150] sm:$0xf]
    %v5497 = vld [vmem:[%s5411 + $0x154] sm:$0xf]
    %v5498 = vld [vmem:[%s5411 + $0x158] sm:$0xf]
    %v5499 = vld [vmem:[%s5411 + $0x15c] sm:$0xf]
    %v5500 = vld [vmem:[%s5411 + $0x160] sm:$0xf]
    %v5501 = vld [vmem:[%s5411 + $0x164] sm:$0xf]
    %v5502 = vld [vmem:[%s5411 + $0x168] sm:$0xf]
    %v5503 = vld [vmem:[%s5411 + $0x16c] sm:$0xf]
    %v5504 = vld [vmem:[%s5411 + $0x170] sm:$0xf]
    %v5505 = vld [vmem:[%s5411 + $0x174] sm:$0xf]
    %v5506 = vld [vmem:[%s5411 + $0x178] sm:$0xf]
    %v5507 = vld [vmem:[%s5411 + $0x17c] sm:$0xf]
    %s5508 = scalar_lea.vmem [#allocation12], 768
    %v5509 = vld [vmem:[%s5508] sm:$0xf]
    %v5510 = vld [vmem:[%s5508 + $0x4] sm:$0xf]
    %v5511 = vld [vmem:[%s5508 + $0x8] sm:$0xf]
    %v5512 = vld [vmem:[%s5508 + $0xc] sm:$0xf]
    %v5513 = vld [vmem:[%s5508 + $0x10] sm:$0xf]
    %v5514 = vld [vmem:[%s5508 + $0x14] sm:$0xf]
    %v5515 = vld [vmem:[%s5508 + $0x18] sm:$0xf]
    %v5516 = vld [vmem:[%s5508 + $0x1c] sm:$0xf]
    %v5517 = vld [vmem:[%s5508 + $0x20] sm:$0xf]
    %v5518 = vld [vmem:[%s5508 + $0x24] sm:$0xf]
    %v5519 = vld [vmem:[%s5508 + $0x28] sm:$0xf]
    %v5520 = vld [vmem:[%s5508 + $0x2c] sm:$0xf]
    %v5521 = vld [vmem:[%s5508 + $0x30] sm:$0xf]
    %v5522 = vld [vmem:[%s5508 + $0x34] sm:$0xf]
    %v5523 = vld [vmem:[%s5508 + $0x38] sm:$0xf]
    %v5524 = vld [vmem:[%s5508 + $0x3c] sm:$0xf]
    %v5525 = vld [vmem:[%s5508 + $0x40] sm:$0xf]
    %v5526 = vld [vmem:[%s5508 + $0x44] sm:$0xf]
    %v5527 = vld [vmem:[%s5508 + $0x48] sm:$0xf]
    %v5528 = vld [vmem:[%s5508 + $0x4c] sm:$0xf]
    %v5529 = vld [vmem:[%s5508 + $0x50] sm:$0xf]
    %v5530 = vld [vmem:[%s5508 + $0x54] sm:$0xf]
    %v5531 = vld [vmem:[%s5508 + $0x58] sm:$0xf]
    %v5532 = vld [vmem:[%s5508 + $0x5c] sm:$0xf]
    %v5533 = vld [vmem:[%s5508 + $0x60] sm:$0xf]
    %v5534 = vld [vmem:[%s5508 + $0x64] sm:$0xf]
    %v5535 = vld [vmem:[%s5508 + $0x68] sm:$0xf]
    %v5536 = vld [vmem:[%s5508 + $0x6c] sm:$0xf]
    %v5537 = vld [vmem:[%s5508 + $0x70] sm:$0xf]
    %v5538 = vld [vmem:[%s5508 + $0x74] sm:$0xf]
    %v5539 = vld [vmem:[%s5508 + $0x78] sm:$0xf]
    %v5540 = vld [vmem:[%s5508 + $0x7c] sm:$0xf]
    %v5541 = vld [vmem:[%s5508 + $0x80] sm:$0xf]
    %v5542 = vld [vmem:[%s5508 + $0x84] sm:$0xf]
    %v5543 = vld [vmem:[%s5508 + $0x88] sm:$0xf]
    %v5544 = vld [vmem:[%s5508 + $0x8c] sm:$0xf]
    %v5545 = vld [vmem:[%s5508 + $0x90] sm:$0xf]
    %v5546 = vld [vmem:[%s5508 + $0x94] sm:$0xf]
    %v5547 = vld [vmem:[%s5508 + $0x98] sm:$0xf]
    %v5548 = vld [vmem:[%s5508 + $0x9c] sm:$0xf]
    %v5549 = vld [vmem:[%s5508 + $0xa0] sm:$0xf]
    %v5550 = vld [vmem:[%s5508 + $0xa4] sm:$0xf]
    %v5551 = vld [vmem:[%s5508 + $0xa8] sm:$0xf]
    %v5552 = vld [vmem:[%s5508 + $0xac] sm:$0xf]
    %v5553 = vld [vmem:[%s5508 + $0xb0] sm:$0xf]
    %v5554 = vld [vmem:[%s5508 + $0xb4] sm:$0xf]
    %v5555 = vld [vmem:[%s5508 + $0xb8] sm:$0xf]
    %v5556 = vld [vmem:[%s5508 + $0xbc] sm:$0xf]
    %v5557 = vld [vmem:[%s5508 + $0xc0] sm:$0xf]
    %v5558 = vld [vmem:[%s5508 + $0xc4] sm:$0xf]
    %v5559 = vld [vmem:[%s5508 + $0xc8] sm:$0xf]
    %v5560 = vld [vmem:[%s5508 + $0xcc] sm:$0xf]
    %v5561 = vld [vmem:[%s5508 + $0xd0] sm:$0xf]
    %v5562 = vld [vmem:[%s5508 + $0xd4] sm:$0xf]
    %v5563 = vld [vmem:[%s5508 + $0xd8] sm:$0xf]
    %v5564 = vld [vmem:[%s5508 + $0xdc] sm:$0xf]
    %v5565 = vld [vmem:[%s5508 + $0xe0] sm:$0xf]
    %v5566 = vld [vmem:[%s5508 + $0xe4] sm:$0xf]
    %v5567 = vld [vmem:[%s5508 + $0xe8] sm:$0xf]
    %v5568 = vld [vmem:[%s5508 + $0xec] sm:$0xf]
    %v5569 = vld [vmem:[%s5508 + $0xf0] sm:$0xf]
    %v5570 = vld [vmem:[%s5508 + $0xf4] sm:$0xf]
    %v5571 = vld [vmem:[%s5508 + $0xf8] sm:$0xf]
    %v5572 = vld [vmem:[%s5508 + $0xfc] sm:$0xf]
    %v5573 = vld [vmem:[%s5508 + $0x100] sm:$0xf]
    %v5574 = vld [vmem:[%s5508 + $0x104] sm:$0xf]
    %v5575 = vld [vmem:[%s5508 + $0x108] sm:$0xf]
    %v5576 = vld [vmem:[%s5508 + $0x10c] sm:$0xf]
    %v5577 = vld [vmem:[%s5508 + $0x110] sm:$0xf]
    %v5578 = vld [vmem:[%s5508 + $0x114] sm:$0xf]
    %v5579 = vld [vmem:[%s5508 + $0x118] sm:$0xf]
    %v5580 = vld [vmem:[%s5508 + $0x11c] sm:$0xf]
    %v5581 = vld [vmem:[%s5508 + $0x120] sm:$0xf]
    %v5582 = vld [vmem:[%s5508 + $0x124] sm:$0xf]
    %v5583 = vld [vmem:[%s5508 + $0x128] sm:$0xf]
    %v5584 = vld [vmem:[%s5508 + $0x12c] sm:$0xf]
    %v5585 = vld [vmem:[%s5508 + $0x130] sm:$0xf]
    %v5586 = vld [vmem:[%s5508 + $0x134] sm:$0xf]
    %v5587 = vld [vmem:[%s5508 + $0x138] sm:$0xf]
    %v5588 = vld [vmem:[%s5508 + $0x13c] sm:$0xf]
    %v5589 = vld [vmem:[%s5508 + $0x140] sm:$0xf]
    %v5590 = vld [vmem:[%s5508 + $0x144] sm:$0xf]
    %v5591 = vld [vmem:[%s5508 + $0x148] sm:$0xf]
    %v5592 = vld [vmem:[%s5508 + $0x14c] sm:$0xf]
    %v5593 = vld [vmem:[%s5508 + $0x150] sm:$0xf]
    %v5594 = vld [vmem:[%s5508 + $0x154] sm:$0xf]
    %v5595 = vld [vmem:[%s5508 + $0x158] sm:$0xf]
    %v5596 = vld [vmem:[%s5508 + $0x15c] sm:$0xf]
    %v5597 = vld [vmem:[%s5508 + $0x160] sm:$0xf]
    %v5598 = vld [vmem:[%s5508 + $0x164] sm:$0xf]
    %v5599 = vld [vmem:[%s5508 + $0x168] sm:$0xf]
    %v5600 = vld [vmem:[%s5508 + $0x16c] sm:$0xf]
    %v5601 = vld [vmem:[%s5508 + $0x170] sm:$0xf]
    %v5602 = vld [vmem:[%s5508 + $0x174] sm:$0xf]
    %v5603 = vld [vmem:[%s5508 + $0x178] sm:$0xf]
    %v5604 = vld [vmem:[%s5508 + $0x17c] sm:$0xf]
    %v5605 = vld [vmem:[#allocation3] sm:$0xf]
    %v5606 = vld [vmem:[#allocation3 + $0x8] sm:$0xf]
    %v5607 = vld [vmem:[#allocation3 + $0x10] sm:$0xf]
    %v5608 = vld [vmem:[#allocation3 + $0x18] sm:$0xf]
    %v5609 = vld [vmem:[#allocation3 + $0x20] sm:$0xf]
    %v5610 = vld [vmem:[#allocation3 + $0x28] sm:$0xf]
    %v5611 = vld [vmem:[#allocation3 + $0x30] sm:$0xf]
    %v5612 = vld [vmem:[#allocation3 + $0x38] sm:$0xf]
    %v5613 = vld [vmem:[#allocation3 + $0x40] sm:$0xf]
    %v5614 = vld [vmem:[#allocation3 + $0x48] sm:$0xf]
    %v5615 = vld [vmem:[#allocation3 + $0x50] sm:$0xf]
    %v5616 = vld [vmem:[#allocation3 + $0x58] sm:$0xf]
    %v5617 = vld [vmem:[#allocation3 + $0x60] sm:$0xf]
    %v5618 = vld [vmem:[#allocation3 + $0x68] sm:$0xf]
    %v5619 = vld [vmem:[#allocation3 + $0x70] sm:$0xf]
    %v5620 = vld [vmem:[#allocation3 + $0x78] sm:$0xf]
    %v5621 = vld [vmem:[#allocation3 + $0x80] sm:$0xf]
    %v5622 = vld [vmem:[#allocation3 + $0x88] sm:$0xf]
    %v5623 = vld [vmem:[#allocation3 + $0x90] sm:$0xf]
    %v5624 = vld [vmem:[#allocation3 + $0x98] sm:$0xf]
    %v5625 = vld [vmem:[#allocation3 + $0xa0] sm:$0xf]
    %v5626 = vld [vmem:[#allocation3 + $0xa8] sm:$0xf]
    %v5627 = vld [vmem:[#allocation3 + $0xb0] sm:$0xf]
    %v5628 = vld [vmem:[#allocation3 + $0xb8] sm:$0xf]
    %v5629 = vld [vmem:[#allocation3 + $0xc0] sm:$0xf]
    %v5630 = vld [vmem:[#allocation3 + $0xc8] sm:$0xf]
    %v5631 = vld [vmem:[#allocation3 + $0xd0] sm:$0xf]
    %v5632 = vld [vmem:[#allocation3 + $0xd8] sm:$0xf]
    %v5633 = vld [vmem:[#allocation3 + $0xe0] sm:$0xf]
    %v5634 = vld [vmem:[#allocation3 + $0xe8] sm:$0xf]
    %v5635 = vld [vmem:[#allocation3 + $0xf0] sm:$0xf]
    %v5636 = vld [vmem:[#allocation3 + $0xf8] sm:$0xf]
    %v5637 = vld [vmem:[#allocation3 + $0x100] sm:$0xf]
    %v5638 = vld [vmem:[#allocation3 + $0x108] sm:$0xf]
    %v5639 = vld [vmem:[#allocation3 + $0x110] sm:$0xf]
    %v5640 = vld [vmem:[#allocation3 + $0x118] sm:$0xf]
    %v5641 = vld [vmem:[#allocation3 + $0x120] sm:$0xf]
    %v5642 = vld [vmem:[#allocation3 + $0x128] sm:$0xf]
    %v5643 = vld [vmem:[#allocation3 + $0x130] sm:$0xf]
    %v5644 = vld [vmem:[#allocation3 + $0x138] sm:$0xf]
    %v5645 = vld [vmem:[#allocation3 + $0x140] sm:$0xf]
    %v5646 = vld [vmem:[#allocation3 + $0x148] sm:$0xf]
    %v5647 = vld [vmem:[#allocation3 + $0x150] sm:$0xf]
    %v5648 = vld [vmem:[#allocation3 + $0x158] sm:$0xf]
    %v5649 = vld [vmem:[#allocation3 + $0x160] sm:$0xf]
    %v5650 = vld [vmem:[#allocation3 + $0x168] sm:$0xf]
    %v5651 = vld [vmem:[#allocation3 + $0x170] sm:$0xf]
    %v5652 = vld [vmem:[#allocation3 + $0x178] sm:$0xf]
    %v5653 = vld [vmem:[#allocation3 + $0x180] sm:$0xf]
    %v5654 = vld [vmem:[#allocation3 + $0x188] sm:$0xf]
    %v5655 = vld [vmem:[#allocation3 + $0x190] sm:$0xf]
    %v5656 = vld [vmem:[#allocation3 + $0x198] sm:$0xf]
    %v5657 = vld [vmem:[#allocation3 + $0x1a0] sm:$0xf]
    %v5658 = vld [vmem:[#allocation3 + $0x1a8] sm:$0xf]
    %v5659 = vld [vmem:[#allocation3 + $0x1b0] sm:$0xf]
    %v5660 = vld [vmem:[#allocation3 + $0x1b8] sm:$0xf]
    %v5661 = vld [vmem:[#allocation3 + $0x1c0] sm:$0xf]
    %v5662 = vld [vmem:[#allocation3 + $0x1c8] sm:$0xf]
    %v5663 = vld [vmem:[#allocation3 + $0x1d0] sm:$0xf]
    %v5664 = vld [vmem:[#allocation3 + $0x1d8] sm:$0xf]
    %v5665 = vld [vmem:[#allocation3 + $0x1e0] sm:$0xf]
    %v5666 = vld [vmem:[#allocation3 + $0x1e8] sm:$0xf]
    %v5667 = vld [vmem:[#allocation3 + $0x1f0] sm:$0xf]
    %v5668 = vld [vmem:[#allocation3 + $0x1f8] sm:$0xf]
    %v5669 = vld [vmem:[#allocation3 + $0x200] sm:$0xf]
    %v5670 = vld [vmem:[#allocation3 + $0x208] sm:$0xf]
    %v5671 = vld [vmem:[#allocation3 + $0x210] sm:$0xf]
    %v5672 = vld [vmem:[#allocation3 + $0x218] sm:$0xf]
    %v5673 = vld [vmem:[#allocation3 + $0x220] sm:$0xf]
    %v5674 = vld [vmem:[#allocation3 + $0x228] sm:$0xf]
    %v5675 = vld [vmem:[#allocation3 + $0x230] sm:$0xf]
    %v5676 = vld [vmem:[#allocation3 + $0x238] sm:$0xf]
    %v5677 = vld [vmem:[#allocation3 + $0x240] sm:$0xf]
    %v5678 = vld [vmem:[#allocation3 + $0x248] sm:$0xf]
    %v5679 = vld [vmem:[#allocation3 + $0x250] sm:$0xf]
    %v5680 = vld [vmem:[#allocation3 + $0x258] sm:$0xf]
    %v5681 = vld [vmem:[#allocation3 + $0x260] sm:$0xf]
    %v5682 = vld [vmem:[#allocation3 + $0x268] sm:$0xf]
    %v5683 = vld [vmem:[#allocation3 + $0x270] sm:$0xf]
    %v5684 = vld [vmem:[#allocation3 + $0x278] sm:$0xf]
    %v5685 = vld [vmem:[#allocation3 + $0x280] sm:$0xf]
    %v5686 = vld [vmem:[#allocation3 + $0x288] sm:$0xf]
    %v5687 = vld [vmem:[#allocation3 + $0x290] sm:$0xf]
    %v5688 = vld [vmem:[#allocation3 + $0x298] sm:$0xf]
    %v5689 = vld [vmem:[#allocation3 + $0x2a0] sm:$0xf]
    %v5690 = vld [vmem:[#allocation3 + $0x2a8] sm:$0xf]
    %v5691 = vld [vmem:[#allocation3 + $0x2b0] sm:$0xf]
    %v5692 = vld [vmem:[#allocation3 + $0x2b8] sm:$0xf]
    %v5693 = vld [vmem:[#allocation3 + $0x2c0] sm:$0xf]
    %v5694 = vld [vmem:[#allocation3 + $0x2c8] sm:$0xf]
    %v5695 = vld [vmem:[#allocation3 + $0x2d0] sm:$0xf]
    %v5696 = vld [vmem:[#allocation3 + $0x2d8] sm:$0xf]
    %v5697 = vld [vmem:[#allocation3 + $0x2e0] sm:$0xf]
    %v5698 = vld [vmem:[#allocation3 + $0x2e8] sm:$0xf]
    %v5699 = vld [vmem:[#allocation3 + $0x2f0] sm:$0xf]
    %v5700 = vld [vmem:[#allocation3 + $0x2f8] sm:$0xf]
    %v5797 = vcombine.low %v5605, %v5606
    %v5798 = vcombine.low %v5607, %v5608
    %v5799 = vcombine.low %v5609, %v5610
    %v5800 = vcombine.low %v5611, %v5612
    %v5801 = vcombine.low %v5613, %v5614
    %v5802 = vcombine.low %v5615, %v5616
    %v5803 = vcombine.low %v5617, %v5618
    %v5804 = vcombine.low %v5619, %v5620
    %v5805 = vcombine.low %v5621, %v5622
    %v5806 = vcombine.low %v5623, %v5624
    %v5807 = vcombine.low %v5625, %v5626
    %v5808 = vcombine.low %v5627, %v5628
    %v5809 = vcombine.low %v5629, %v5630
    %v5810 = vcombine.low %v5631, %v5632
    %v5811 = vcombine.low %v5633, %v5634
    %v5812 = vcombine.low %v5635, %v5636
    %v5813 = vcombine.low %v5637, %v5638
    %v5814 = vcombine.low %v5639, %v5640
    %v5815 = vcombine.low %v5641, %v5642
    %v5816 = vcombine.low %v5643, %v5644
    %v5817 = vcombine.low %v5645, %v5646
    %v5818 = vcombine.low %v5647, %v5648
    %v5819 = vcombine.low %v5649, %v5650
    %v5820 = vcombine.low %v5651, %v5652
    %v5821 = vcombine.low %v5653, %v5654
    %v5822 = vcombine.low %v5655, %v5656
    %v5823 = vcombine.low %v5657, %v5658
    %v5824 = vcombine.low %v5659, %v5660
    %v5825 = vcombine.low %v5661, %v5662
    %v5826 = vcombine.low %v5663, %v5664
    %v5827 = vcombine.low %v5665, %v5666
    %v5828 = vcombine.low %v5667, %v5668
    %v5829 = vcombine.low %v5669, %v5670
    %v5830 = vcombine.low %v5671, %v5672
    %v5831 = vcombine.low %v5673, %v5674
    %v5832 = vcombine.low %v5675, %v5676
    %v5833 = vcombine.low %v5677, %v5678
    %v5834 = vcombine.low %v5679, %v5680
    %v5835 = vcombine.low %v5681, %v5682
    %v5836 = vcombine.low %v5683, %v5684
    %v5837 = vcombine.low %v5685, %v5686
    %v5838 = vcombine.low %v5687, %v5688
    %v5839 = vcombine.low %v5689, %v5690
    %v5840 = vcombine.low %v5691, %v5692
    %v5841 = vcombine.low %v5693, %v5694
    %v5842 = vcombine.low %v5695, %v5696
    %v5843 = vcombine.low %v5697, %v5698
    %v5844 = vcombine.low %v5699, %v5700
    %v5845 = vcombine.low %v5797, %v5803
    %v5846 = vcombine.high %v5797, %v5803
    %v5847 = vcombine.low %v5798, %v5804
    %v5848 = vcombine.high %v5798, %v5804
    %v5849 = vcombine.low %v5799, %v5805
    %v5850 = vcombine.high %v5799, %v5805
    %v5851 = vcombine.low %v5800, %v5806
    %v5852 = vcombine.high %v5800, %v5806
    %v5853 = vcombine.low %v5801, %v5807
    %v5854 = vcombine.high %v5801, %v5807
    %v5855 = vcombine.low %v5802, %v5808
    %v5856 = vcombine.high %v5802, %v5808
    %v5857 = vcombine.low %v5809, %v5815
    %v5858 = vcombine.high %v5809, %v5815
    %v5859 = vcombine.low %v5810, %v5816
    %v5860 = vcombine.high %v5810, %v5816
    %v5861 = vcombine.low %v5811, %v5817
    %v5862 = vcombine.high %v5811, %v5817
    %v5863 = vcombine.low %v5812, %v5818
    %v5864 = vcombine.high %v5812, %v5818
    %v5865 = vcombine.low %v5813, %v5819
    %v5866 = vcombine.high %v5813, %v5819
    %v5867 = vcombine.low %v5814, %v5820
    %v5868 = vcombine.high %v5814, %v5820
    %v5869 = vcombine.low %v5821, %v5827
    %v5870 = vcombine.high %v5821, %v5827
    %v5871 = vcombine.low %v5822, %v5828
    %v5872 = vcombine.high %v5822, %v5828
    %v5873 = vcombine.low %v5823, %v5829
    %v5874 = vcombine.high %v5823, %v5829
    %v5875 = vcombine.low %v5824, %v5830
    %v5876 = vcombine.high %v5824, %v5830
    %v5877 = vcombine.low %v5825, %v5831
    %v5878 = vcombine.high %v5825, %v5831
    %v5879 = vcombine.low %v5826, %v5832
    %v5880 = vcombine.high %v5826, %v5832
    %v5881 = vcombine.low %v5833, %v5839
    %v5882 = vcombine.high %v5833, %v5839
    %v5883 = vcombine.low %v5834, %v5840
    %v5884 = vcombine.high %v5834, %v5840
    %v5885 = vcombine.low %v5835, %v5841
    %v5886 = vcombine.high %v5835, %v5841
    %v5887 = vcombine.low %v5836, %v5842
    %v5888 = vcombine.high %v5836, %v5842
    %v5889 = vcombine.low %v5837, %v5843
    %v5890 = vcombine.high %v5837, %v5843
    %v5891 = vcombine.low %v5838, %v5844
    %v5892 = vcombine.high %v5838, %v5844
    %v5941 = vpack.c.bf16 %v5857, %v5845
    %v5942 = vpack.c.bf16 %v5858, %v5846
    %v5943 = vpack.c.bf16 %v5859, %v5847
    %v5944 = vpack.c.bf16 %v5860, %v5848
    %v5945 = vpack.c.bf16 %v5861, %v5849
    %v5946 = vpack.c.bf16 %v5862, %v5850
    %v5947 = vpack.c.bf16 %v5863, %v5851
    %v5948 = vpack.c.bf16 %v5864, %v5852
    %v5949 = vpack.c.bf16 %v5865, %v5853
    %v5950 = vpack.c.bf16 %v5866, %v5854
    %v5951 = vpack.c.bf16 %v5867, %v5855
    %v5952 = vpack.c.bf16 %v5868, %v5856
    %v5953 = vpack.c.bf16 %v5881, %v5869
    %v5954 = vpack.c.bf16 %v5882, %v5870
    %v5955 = vpack.c.bf16 %v5883, %v5871
    %v5956 = vpack.c.bf16 %v5884, %v5872
    %v5957 = vpack.c.bf16 %v5885, %v5873
    %v5958 = vpack.c.bf16 %v5886, %v5874
    %v5959 = vpack.c.bf16 %v5887, %v5875
    %v5960 = vpack.c.bf16 %v5888, %v5876
    %v5961 = vpack.c.bf16 %v5889, %v5877
    %v5962 = vpack.c.bf16 %v5890, %v5878
    %v5963 = vpack.c.bf16 %v5891, %v5879
    %v5964 = vpack.c.bf16 %v5892, %v5880
    %v5965 = vld [vmem:[#allocation3] sm:$0x1e]
    %v5966 = vld [vmem:[#allocation3 + $0x8] sm:$0x1e]
    %v5967 = vld [vmem:[#allocation3 + $0x10] sm:$0x1e]
    %v5968 = vld [vmem:[#allocation3 + $0x18] sm:$0x1e]
    %v5969 = vld [vmem:[#allocation3 + $0x20] sm:$0x1e]
    %v5970 = vld [vmem:[#allocation3 + $0x28] sm:$0x1e]
    %v5971 = vld [vmem:[#allocation3 + $0x30] sm:$0x1e]
    %v5972 = vld [vmem:[#allocation3 + $0x38] sm:$0x1e]
    %v5973 = vld [vmem:[#allocation3 + $0x40] sm:$0x1e]
    %v5974 = vld [vmem:[#allocation3 + $0x48] sm:$0x1e]
    %v5975 = vld [vmem:[#allocation3 + $0x50] sm:$0x1e]
    %v5976 = vld [vmem:[#allocation3 + $0x58] sm:$0x1e]
    %v5977 = vld [vmem:[#allocation3 + $0x60] sm:$0x1e]
    %v5978 = vld [vmem:[#allocation3 + $0x68] sm:$0x1e]
    %v5979 = vld [vmem:[#allocation3 + $0x70] sm:$0x1e]
    %v5980 = vld [vmem:[#allocation3 + $0x78] sm:$0x1e]
    %v5981 = vld [vmem:[#allocation3 + $0x80] sm:$0x1e]
    %v5982 = vld [vmem:[#allocation3 + $0x88] sm:$0x1e]
    %v5983 = vld [vmem:[#allocation3 + $0x90] sm:$0x1e]
    %v5984 = vld [vmem:[#allocation3 + $0x98] sm:$0x1e]
    %v5985 = vld [vmem:[#allocation3 + $0xa0] sm:$0x1e]
    %v5986 = vld [vmem:[#allocation3 + $0xa8] sm:$0x1e]
    %v5987 = vld [vmem:[#allocation3 + $0xb0] sm:$0x1e]
    %v5988 = vld [vmem:[#allocation3 + $0xb8] sm:$0x1e]
    %v5989 = vld [vmem:[#allocation3 + $0xc0] sm:$0x1e]
    %v5990 = vld [vmem:[#allocation3 + $0xc8] sm:$0x1e]
    %v5991 = vld [vmem:[#allocation3 + $0xd0] sm:$0x1e]
    %v5992 = vld [vmem:[#allocation3 + $0xd8] sm:$0x1e]
    %v5993 = vld [vmem:[#allocation3 + $0xe0] sm:$0x1e]
    %v5994 = vld [vmem:[#allocation3 + $0xe8] sm:$0x1e]
    %v5995 = vld [vmem:[#allocation3 + $0xf0] sm:$0x1e]
    %v5996 = vld [vmem:[#allocation3 + $0xf8] sm:$0x1e]
    %v5997 = vld [vmem:[#allocation3 + $0x100] sm:$0x1e]
    %v5998 = vld [vmem:[#allocation3 + $0x108] sm:$0x1e]
    %v5999 = vld [vmem:[#allocation3 + $0x110] sm:$0x1e]
    %v6000 = vld [vmem:[#allocation3 + $0x118] sm:$0x1e]
    %v6001 = vld [vmem:[#allocation3 + $0x120] sm:$0x1e]
    %v6002 = vld [vmem:[#allocation3 + $0x128] sm:$0x1e]
    %v6003 = vld [vmem:[#allocation3 + $0x130] sm:$0x1e]
    %v6004 = vld [vmem:[#allocation3 + $0x138] sm:$0x1e]
    %v6005 = vld [vmem:[#allocation3 + $0x140] sm:$0x1e]
    %v6006 = vld [vmem:[#allocation3 + $0x148] sm:$0x1e]
    %v6007 = vld [vmem:[#allocation3 + $0x150] sm:$0x1e]
    %v6008 = vld [vmem:[#allocation3 + $0x158] sm:$0x1e]
    %v6009 = vld [vmem:[#allocation3 + $0x160] sm:$0x1e]
    %v6010 = vld [vmem:[#allocation3 + $0x168] sm:$0x1e]
    %v6011 = vld [vmem:[#allocation3 + $0x170] sm:$0x1e]
    %v6012 = vld [vmem:[#allocation3 + $0x178] sm:$0x1e]
    %v6013 = vld [vmem:[#allocation3 + $0x180] sm:$0x1e]
    %v6014 = vld [vmem:[#allocation3 + $0x188] sm:$0x1e]
    %v6015 = vld [vmem:[#allocation3 + $0x190] sm:$0x1e]
    %v6016 = vld [vmem:[#allocation3 + $0x198] sm:$0x1e]
    %v6017 = vld [vmem:[#allocation3 + $0x1a0] sm:$0x1e]
    %v6018 = vld [vmem:[#allocation3 + $0x1a8] sm:$0x1e]
    %v6019 = vld [vmem:[#allocation3 + $0x1b0] sm:$0x1e]
    %v6020 = vld [vmem:[#allocation3 + $0x1b8] sm:$0x1e]
    %v6021 = vld [vmem:[#allocation3 + $0x1c0] sm:$0x1e]
    %v6022 = vld [vmem:[#allocation3 + $0x1c8] sm:$0x1e]
    %v6023 = vld [vmem:[#allocation3 + $0x1d0] sm:$0x1e]
    %v6024 = vld [vmem:[#allocation3 + $0x1d8] sm:$0x1e]
    %v6025 = vld [vmem:[#allocation3 + $0x1e0] sm:$0x1e]
    %v6026 = vld [vmem:[#allocation3 + $0x1e8] sm:$0x1e]
    %v6027 = vld [vmem:[#allocation3 + $0x1f0] sm:$0x1e]
    %v6028 = vld [vmem:[#allocation3 + $0x1f8] sm:$0x1e]
    %v6029 = vld [vmem:[#allocation3 + $0x200] sm:$0x1e]
    %v6030 = vld [vmem:[#allocation3 + $0x208] sm:$0x1e]
    %v6031 = vld [vmem:[#allocation3 + $0x210] sm:$0x1e]
    %v6032 = vld [vmem:[#allocation3 + $0x218] sm:$0x1e]
    %v6033 = vld [vmem:[#allocation3 + $0x220] sm:$0x1e]
    %v6034 = vld [vmem:[#allocation3 + $0x228] sm:$0x1e]
    %v6035 = vld [vmem:[#allocation3 + $0x230] sm:$0x1e]
    %v6036 = vld [vmem:[#allocation3 + $0x238] sm:$0x1e]
    %v6037 = vld [vmem:[#allocation3 + $0x240] sm:$0x1e]
    %v6038 = vld [vmem:[#allocation3 + $0x248] sm:$0x1e]
    %v6039 = vld [vmem:[#allocation3 + $0x250] sm:$0x1e]
    %v6040 = vld [vmem:[#allocation3 + $0x258] sm:$0x1e]
    %v6041 = vld [vmem:[#allocation3 + $0x260] sm:$0x1e]
    %v6042 = vld [vmem:[#allocation3 + $0x268] sm:$0x1e]
    %v6043 = vld [vmem:[#allocation3 + $0x270] sm:$0x1e]
    %v6044 = vld [vmem:[#allocation3 + $0x278] sm:$0x1e]
    %v6045 = vld [vmem:[#allocation3 + $0x280] sm:$0x1e]
    %v6046 = vld [vmem:[#allocation3 + $0x288] sm:$0x1e]
    %v6047 = vld [vmem:[#allocation3 + $0x290] sm:$0x1e]
    %v6048 = vld [vmem:[#allocation3 + $0x298] sm:$0x1e]
    %v6049 = vld [vmem:[#allocation3 + $0x2a0] sm:$0x1e]
    %v6050 = vld [vmem:[#allocation3 + $0x2a8] sm:$0x1e]
    %v6051 = vld [vmem:[#allocation3 + $0x2b0] sm:$0x1e]
    %v6052 = vld [vmem:[#allocation3 + $0x2b8] sm:$0x1e]
    %v6053 = vld [vmem:[#allocation3 + $0x2c0] sm:$0x1e]
    %v6054 = vld [vmem:[#allocation3 + $0x2c8] sm:$0x1e]
    %v6055 = vld [vmem:[#allocation3 + $0x2d0] sm:$0x1e]
    %v6056 = vld [vmem:[#allocation3 + $0x2d8] sm:$0x1e]
    %v6057 = vld [vmem:[#allocation3 + $0x2e0] sm:$0x1e]
    %v6058 = vld [vmem:[#allocation3 + $0x2e8] sm:$0x1e]
    %v6059 = vld [vmem:[#allocation3 + $0x2f0] sm:$0x1e]
    %v6060 = vld [vmem:[#allocation3 + $0x2f8] sm:$0x1e]
    %v6157 = vcombine.low %v5965, %v5966
    %v6158 = vcombine.high %v5965, %v5966
    %v6159 = vcombine.low %v5967, %v5968
    %v6160 = vcombine.high %v5967, %v5968
    %v6161 = vcombine.low %v5969, %v5970
    %v6162 = vcombine.high %v5969, %v5970
    %v6163 = vcombine.low %v5971, %v5972
    %v6164 = vcombine.high %v5971, %v5972
    %v6165 = vcombine.low %v5973, %v5974
    %v6166 = vcombine.high %v5973, %v5974
    %v6167 = vcombine.low %v5975, %v5976
    %v6168 = vcombine.high %v5975, %v5976
    %v6169 = vcombine.low %v5977, %v5978
    %v6170 = vcombine.high %v5977, %v5978
    %v6171 = vcombine.low %v5979, %v5980
    %v6172 = vcombine.high %v5979, %v5980
    %v6173 = vcombine.low %v5981, %v5982
    %v6174 = vcombine.high %v5981, %v5982
    %v6175 = vcombine.low %v5983, %v5984
    %v6176 = vcombine.high %v5983, %v5984
    %v6177 = vcombine.low %v5985, %v5986
    %v6178 = vcombine.high %v5985, %v5986
    %v6179 = vcombine.low %v5987, %v5988
    %v6180 = vcombine.high %v5987, %v5988
    %v6181 = vcombine.low %v5989, %v5990
    %v6182 = vcombine.high %v5989, %v5990
    %v6183 = vcombine.low %v5991, %v5992
    %v6184 = vcombine.high %v5991, %v5992
    %v6185 = vcombine.low %v5993, %v5994
    %v6186 = vcombine.high %v5993, %v5994
    %v6187 = vcombine.low %v5995, %v5996
    %v6188 = vcombine.high %v5995, %v5996
    %v6189 = vcombine.low %v5997, %v5998
    %v6190 = vcombine.high %v5997, %v5998
    %v6191 = vcombine.low %v5999, %v6000
    %v6192 = vcombine.high %v5999, %v6000
    %v6193 = vcombine.low %v6001, %v6002
    %v6194 = vcombine.high %v6001, %v6002
    %v6195 = vcombine.low %v6003, %v6004
    %v6196 = vcombine.high %v6003, %v6004
    %v6197 = vcombine.low %v6005, %v6006
    %v6198 = vcombine.high %v6005, %v6006
    %v6199 = vcombine.low %v6007, %v6008
    %v6200 = vcombine.high %v6007, %v6008
    %v6201 = vcombine.low %v6009, %v6010
    %v6202 = vcombine.high %v6009, %v6010
    %v6203 = vcombine.low %v6011, %v6012
    %v6204 = vcombine.high %v6011, %v6012
    %v6205 = vcombine.low %v6013, %v6014
    %v6206 = vcombine.high %v6013, %v6014
    %v6207 = vcombine.low %v6015, %v6016
    %v6208 = vcombine.high %v6015, %v6016
    %v6209 = vcombine.low %v6017, %v6018
    %v6210 = vcombine.high %v6017, %v6018
    %v6211 = vcombine.low %v6019, %v6020
    %v6212 = vcombine.high %v6019, %v6020
    %v6213 = vcombine.low %v6021, %v6022
    %v6214 = vcombine.high %v6021, %v6022
    %v6215 = vcombine.low %v6023, %v6024
    %v6216 = vcombine.high %v6023, %v6024
    %v6217 = vcombine.low %v6025, %v6026
    %v6218 = vcombine.high %v6025, %v6026
    %v6219 = vcombine.low %v6027, %v6028
    %v6220 = vcombine.high %v6027, %v6028
    %v6221 = vcombine.low %v6029, %v6030
    %v6222 = vcombine.high %v6029, %v6030
    %v6223 = vcombine.low %v6031, %v6032
    %v6224 = vcombine.high %v6031, %v6032
    %v6225 = vcombine.low %v6033, %v6034
    %v6226 = vcombine.high %v6033, %v6034
    %v6227 = vcombine.low %v6035, %v6036
    %v6228 = vcombine.high %v6035, %v6036
    %v6229 = vcombine.low %v6037, %v6038
    %v6230 = vcombine.high %v6037, %v6038
    %v6231 = vcombine.low %v6039, %v6040
    %v6232 = vcombine.high %v6039, %v6040
    %v6233 = vcombine.low %v6041, %v6042
    %v6234 = vcombine.high %v6041, %v6042
    %v6235 = vcombine.low %v6043, %v6044
    %v6236 = vcombine.high %v6043, %v6044
    %v6237 = vcombine.low %v6045, %v6046
    %v6238 = vcombine.high %v6045, %v6046
    %v6239 = vcombine.low %v6047, %v6048
    %v6240 = vcombine.high %v6047, %v6048
    %v6241 = vcombine.low %v6049, %v6050
    %v6242 = vcombine.high %v6049, %v6050
    %v6243 = vcombine.low %v6051, %v6052
    %v6244 = vcombine.high %v6051, %v6052
    %v6245 = vcombine.low %v6053, %v6054
    %v6246 = vcombine.high %v6053, %v6054
    %v6247 = vcombine.low %v6055, %v6056
    %v6248 = vcombine.high %v6055, %v6056
    %v6249 = vcombine.low %v6057, %v6058
    %v6250 = vcombine.high %v6057, %v6058
    %v6251 = vcombine.low %v6059, %v6060
    %v6252 = vcombine.high %v6059, %v6060
    %v6253 = vrot.slane %v6157, 5
    %v6254 = vrot.slane %v6253, 4
    %v6255 = vrot.slane %v6158, 5
    %v6256 = vsel %vm2277, %v6254, %v6255
    %v6257 = vrot.slane %v6159, 5
    %v6258 = vrot.slane %v6257, 4
    %v6259 = vrot.slane %v6160, 5
    %v6260 = vsel %vm2277, %v6258, %v6259
    %v6261 = vrot.slane %v6161, 5
    %v6262 = vrot.slane %v6261, 4
    %v6263 = vrot.slane %v6162, 5
    %v6264 = vsel %vm2277, %v6262, %v6263
    %v6265 = vrot.slane %v6163, 5
    %v6266 = vrot.slane %v6265, 4
    %v6267 = vrot.slane %v6164, 5
    %v6268 = vsel %vm2277, %v6266, %v6267
    %v6269 = vrot.slane %v6165, 5
    %v6270 = vrot.slane %v6269, 4
    %v6271 = vrot.slane %v6166, 5
    %v6272 = vsel %vm2277, %v6270, %v6271
    %v6273 = vrot.slane %v6167, 5
    %v6274 = vrot.slane %v6273, 4
    %v6275 = vrot.slane %v6168, 5
    %v6276 = vsel %vm2277, %v6274, %v6275
    %v6277 = vrot.slane %v6169, 5
    %v6278 = vrot.slane %v6277, 4
    %v6279 = vrot.slane %v6170, 5
    %v6280 = vsel %vm2277, %v6278, %v6279
    %v6281 = vrot.slane %v6171, 5
    %v6282 = vrot.slane %v6281, 4
    %v6283 = vrot.slane %v6172, 5
    %v6284 = vsel %vm2277, %v6282, %v6283
    %v6285 = vrot.slane %v6173, 5
    %v6286 = vrot.slane %v6285, 4
    %v6287 = vrot.slane %v6174, 5
    %v6288 = vsel %vm2277, %v6286, %v6287
    %v6289 = vrot.slane %v6175, 5
    %v6290 = vrot.slane %v6289, 4
    %v6291 = vrot.slane %v6176, 5
    %v6292 = vsel %vm2277, %v6290, %v6291
    %v6293 = vrot.slane %v6177, 5
    %v6294 = vrot.slane %v6293, 4
    %v6295 = vrot.slane %v6178, 5
    %v6296 = vsel %vm2277, %v6294, %v6295
    %v6297 = vrot.slane %v6179, 5
    %v6298 = vrot.slane %v6297, 4
    %v6299 = vrot.slane %v6180, 5
    %v6300 = vsel %vm2277, %v6298, %v6299
    %v6301 = vrot.slane %v6181, 5
    %v6302 = vrot.slane %v6301, 4
    %v6303 = vrot.slane %v6182, 5
    %v6304 = vsel %vm2277, %v6302, %v6303
    %v6305 = vrot.slane %v6183, 5
    %v6306 = vrot.slane %v6305, 4
    %v6307 = vrot.slane %v6184, 5
    %v6308 = vsel %vm2277, %v6306, %v6307
    %v6309 = vrot.slane %v6185, 5
    %v6310 = vrot.slane %v6309, 4
    %v6311 = vrot.slane %v6186, 5
    %v6312 = vsel %vm2277, %v6310, %v6311
    %v6313 = vrot.slane %v6187, 5
    %v6314 = vrot.slane %v6313, 4
    %v6315 = vrot.slane %v6188, 5
    %v6316 = vsel %vm2277, %v6314, %v6315
    %v6317 = vrot.slane %v6189, 5
    %v6318 = vrot.slane %v6317, 4
    %v6319 = vrot.slane %v6190, 5
    %v6320 = vsel %vm2277, %v6318, %v6319
    %v6321 = vrot.slane %v6191, 5
    %v6322 = vrot.slane %v6321, 4
    %v6323 = vrot.slane %v6192, 5
    %v6324 = vsel %vm2277, %v6322, %v6323
    %v6325 = vrot.slane %v6193, 5
    %v6326 = vrot.slane %v6325, 4
    %v6327 = vrot.slane %v6194, 5
    %v6328 = vsel %vm2277, %v6326, %v6327
    %v6329 = vrot.slane %v6195, 5
    %v6330 = vrot.slane %v6329, 4
    %v6331 = vrot.slane %v6196, 5
    %v6332 = vsel %vm2277, %v6330, %v6331
    %v6333 = vrot.slane %v6197, 5
    %v6334 = vrot.slane %v6333, 4
    %v6335 = vrot.slane %v6198, 5
    %v6336 = vsel %vm2277, %v6334, %v6335
    %v6337 = vrot.slane %v6199, 5
    %v6338 = vrot.slane %v6337, 4
    %v6339 = vrot.slane %v6200, 5
    %v6340 = vsel %vm2277, %v6338, %v6339
    %v6341 = vrot.slane %v6201, 5
    %v6342 = vrot.slane %v6341, 4
    %v6343 = vrot.slane %v6202, 5
    %v6344 = vsel %vm2277, %v6342, %v6343
    %v6345 = vrot.slane %v6203, 5
    %v6346 = vrot.slane %v6345, 4
    %v6347 = vrot.slane %v6204, 5
    %v6348 = vsel %vm2277, %v6346, %v6347
    %v6349 = vrot.slane %v6205, 5
    %v6350 = vrot.slane %v6349, 4
    %v6351 = vrot.slane %v6206, 5
    %v6352 = vsel %vm2277, %v6350, %v6351
    %v6353 = vrot.slane %v6207, 5
    %v6354 = vrot.slane %v6353, 4
    %v6355 = vrot.slane %v6208, 5
    %v6356 = vsel %vm2277, %v6354, %v6355
    %v6357 = vrot.slane %v6209, 5
    %v6358 = vrot.slane %v6357, 4
    %v6359 = vrot.slane %v6210, 5
    %v6360 = vsel %vm2277, %v6358, %v6359
    %v6361 = vrot.slane %v6211, 5
    %v6362 = vrot.slane %v6361, 4
    %v6363 = vrot.slane %v6212, 5
    %v6364 = vsel %vm2277, %v6362, %v6363
    %v6365 = vrot.slane %v6213, 5
    %v6366 = vrot.slane %v6365, 4
    %v6367 = vrot.slane %v6214, 5
    %v6368 = vsel %vm2277, %v6366, %v6367
    %v6369 = vrot.slane %v6215, 5
    %v6370 = vrot.slane %v6369, 4
    %v6371 = vrot.slane %v6216, 5
    %v6372 = vsel %vm2277, %v6370, %v6371
    %v6373 = vrot.slane %v6217, 5
    %v6374 = vrot.slane %v6373, 4
    %v6375 = vrot.slane %v6218, 5
    %v6376 = vsel %vm2277, %v6374, %v6375
    %v6377 = vrot.slane %v6219, 5
    %v6378 = vrot.slane %v6377, 4
    %v6379 = vrot.slane %v6220, 5
    %v6380 = vsel %vm2277, %v6378, %v6379
    %v6381 = vrot.slane %v6221, 5
    %v6382 = vrot.slane %v6381, 4
    %v6383 = vrot.slane %v6222, 5
    %v6384 = vsel %vm2277, %v6382, %v6383
    %v6385 = vrot.slane %v6223, 5
    %v6386 = vrot.slane %v6385, 4
    %v6387 = vrot.slane %v6224, 5
    %v6388 = vsel %vm2277, %v6386, %v6387
    %v6389 = vrot.slane %v6225, 5
    %v6390 = vrot.slane %v6389, 4
    %v6391 = vrot.slane %v6226, 5
    %v6392 = vsel %vm2277, %v6390, %v6391
    %v6393 = vrot.slane %v6227, 5
    %v6394 = vrot.slane %v6393, 4
    %v6395 = vrot.slane %v6228, 5
    %v6396 = vsel %vm2277, %v6394, %v6395
    %v6397 = vrot.slane %v6229, 5
    %v6398 = vrot.slane %v6397, 4
    %v6399 = vrot.slane %v6230, 5
    %v6400 = vsel %vm2277, %v6398, %v6399
    %v6401 = vrot.slane %v6231, 5
    %v6402 = vrot.slane %v6401, 4
    %v6403 = vrot.slane %v6232, 5
    %v6404 = vsel %vm2277, %v6402, %v6403
    %v6405 = vrot.slane %v6233, 5
    %v6406 = vrot.slane %v6405, 4
    %v6407 = vrot.slane %v6234, 5
    %v6408 = vsel %vm2277, %v6406, %v6407
    %v6409 = vrot.slane %v6235, 5
    %v6410 = vrot.slane %v6409, 4
    %v6411 = vrot.slane %v6236, 5
    %v6412 = vsel %vm2277, %v6410, %v6411
    %v6413 = vrot.slane %v6237, 5
    %v6414 = vrot.slane %v6413, 4
    %v6415 = vrot.slane %v6238, 5
    %v6416 = vsel %vm2277, %v6414, %v6415
    %v6417 = vrot.slane %v6239, 5
    %v6418 = vrot.slane %v6417, 4
    %v6419 = vrot.slane %v6240, 5
    %v6420 = vsel %vm2277, %v6418, %v6419
    %v6421 = vrot.slane %v6241, 5
    %v6422 = vrot.slane %v6421, 4
    %v6423 = vrot.slane %v6242, 5
    %v6424 = vsel %vm2277, %v6422, %v6423
    %v6425 = vrot.slane %v6243, 5
    %v6426 = vrot.slane %v6425, 4
    %v6427 = vrot.slane %v6244, 5
    %v6428 = vsel %vm2277, %v6426, %v6427
    %v6429 = vrot.slane %v6245, 5
    %v6430 = vrot.slane %v6429, 4
    %v6431 = vrot.slane %v6246, 5
    %v6432 = vsel %vm2277, %v6430, %v6431
    %v6433 = vrot.slane %v6247, 5
    %v6434 = vrot.slane %v6433, 4
    %v6435 = vrot.slane %v6248, 5
    %v6436 = vsel %vm2277, %v6434, %v6435
    %v6437 = vrot.slane %v6249, 5
    %v6438 = vrot.slane %v6437, 4
    %v6439 = vrot.slane %v6250, 5
    %v6440 = vsel %vm2277, %v6438, %v6439
    %v6441 = vrot.slane %v6251, 5
    %v6442 = vrot.slane %v6441, 4
    %v6443 = vrot.slane %v6252, 5
    %v6444 = vsel %vm2277, %v6442, %v6443
    %v6445 = vcombine.low %v6256, %v6280
    %v6446 = vcombine.high %v6256, %v6280
    %v6447 = vcombine.low %v6260, %v6284
    %v6448 = vcombine.high %v6260, %v6284
    %v6449 = vcombine.low %v6264, %v6288
    %v6450 = vcombine.high %v6264, %v6288
    %v6451 = vcombine.low %v6268, %v6292
    %v6452 = vcombine.high %v6268, %v6292
    %v6453 = vcombine.low %v6272, %v6296
    %v6454 = vcombine.high %v6272, %v6296
    %v6455 = vcombine.low %v6276, %v6300
    %v6456 = vcombine.high %v6276, %v6300
    %v6457 = vcombine.low %v6304, %v6328
    %v6458 = vcombine.high %v6304, %v6328
    %v6459 = vcombine.low %v6308, %v6332
    %v6460 = vcombine.high %v6308, %v6332
    %v6461 = vcombine.low %v6312, %v6336
    %v6462 = vcombine.high %v6312, %v6336
    %v6463 = vcombine.low %v6316, %v6340
    %v6464 = vcombine.high %v6316, %v6340
    %v6465 = vcombine.low %v6320, %v6344
    %v6466 = vcombine.high %v6320, %v6344
    %v6467 = vcombine.low %v6324, %v6348
    %v6468 = vcombine.high %v6324, %v6348
    %v6469 = vcombine.low %v6352, %v6376
    %v6470 = vcombine.high %v6352, %v6376
    %v6471 = vcombine.low %v6356, %v6380
    %v6472 = vcombine.high %v6356, %v6380
    %v6473 = vcombine.low %v6360, %v6384
    %v6474 = vcombine.high %v6360, %v6384
    %v6475 = vcombine.low %v6364, %v6388
    %v6476 = vcombine.high %v6364, %v6388
    %v6477 = vcombine.low %v6368, %v6392
    %v6478 = vcombine.high %v6368, %v6392
    %v6479 = vcombine.low %v6372, %v6396
    %v6480 = vcombine.high %v6372, %v6396
    %v6481 = vcombine.low %v6400, %v6424
    %v6482 = vcombine.high %v6400, %v6424
    %v6483 = vcombine.low %v6404, %v6428
    %v6484 = vcombine.high %v6404, %v6428
    %v6485 = vcombine.low %v6408, %v6432
    %v6486 = vcombine.high %v6408, %v6432
    %v6487 = vcombine.low %v6412, %v6436
    %v6488 = vcombine.high %v6412, %v6436
    %v6489 = vcombine.low %v6416, %v6440
    %v6490 = vcombine.high %v6416, %v6440
    %v6491 = vcombine.low %v6420, %v6444
    %v6492 = vcombine.high %v6420, %v6444
    %v6541 = vpack.c.bf16 %v6457, %v6445
    %v6542 = vpack.c.bf16 %v6458, %v6446
    %v6543 = vpack.c.bf16 %v6459, %v6447
    %v6544 = vpack.c.bf16 %v6460, %v6448
    %v6545 = vpack.c.bf16 %v6461, %v6449
    %v6546 = vpack.c.bf16 %v6462, %v6450
    %v6547 = vpack.c.bf16 %v6463, %v6451
    %v6548 = vpack.c.bf16 %v6464, %v6452
    %v6549 = vpack.c.bf16 %v6465, %v6453
    %v6550 = vpack.c.bf16 %v6466, %v6454
    %v6551 = vpack.c.bf16 %v6467, %v6455
    %v6552 = vpack.c.bf16 %v6468, %v6456
    %v6553 = vpack.c.bf16 %v6481, %v6469
    %v6554 = vpack.c.bf16 %v6482, %v6470
    %v6555 = vpack.c.bf16 %v6483, %v6471
    %v6556 = vpack.c.bf16 %v6484, %v6472
    %v6557 = vpack.c.bf16 %v6485, %v6473
    %v6558 = vpack.c.bf16 %v6486, %v6474
    %v6559 = vpack.c.bf16 %v6487, %v6475
    %v6560 = vpack.c.bf16 %v6488, %v6476
    %v6561 = vpack.c.bf16 %v6489, %v6477
    %v6562 = vpack.c.bf16 %v6490, %v6478
    %v6563 = vpack.c.bf16 %v6491, %v6479
    %v6564 = vpack.c.bf16 %v6492, %v6480
    %v6565 = vld [vmem:[#allocation3] sm:$0x3c]
    %v6566 = vld [vmem:[#allocation3 + $0x8] sm:$0x3c]
    %v6567 = vld [vmem:[#allocation3 + $0x10] sm:$0x3c]
    %v6568 = vld [vmem:[#allocation3 + $0x18] sm:$0x3c]
    %v6569 = vld [vmem:[#allocation3 + $0x20] sm:$0x3c]
    %v6570 = vld [vmem:[#allocation3 + $0x28] sm:$0x3c]
    %v6571 = vld [vmem:[#allocation3 + $0x30] sm:$0x3c]
    %v6572 = vld [vmem:[#allocation3 + $0x38] sm:$0x3c]
    %v6573 = vld [vmem:[#allocation3 + $0x40] sm:$0x3c]
    %v6574 = vld [vmem:[#allocation3 + $0x48] sm:$0x3c]
    %v6575 = vld [vmem:[#allocation3 + $0x50] sm:$0x3c]
    %v6576 = vld [vmem:[#allocation3 + $0x58] sm:$0x3c]
    %v6577 = vld [vmem:[#allocation3 + $0x60] sm:$0x3c]
    %v6578 = vld [vmem:[#allocation3 + $0x68] sm:$0x3c]
    %v6579 = vld [vmem:[#allocation3 + $0x70] sm:$0x3c]
    %v6580 = vld [vmem:[#allocation3 + $0x78] sm:$0x3c]
    %v6581 = vld [vmem:[#allocation3 + $0x80] sm:$0x3c]
    %v6582 = vld [vmem:[#allocation3 + $0x88] sm:$0x3c]
    %v6583 = vld [vmem:[#allocation3 + $0x90] sm:$0x3c]
    %v6584 = vld [vmem:[#allocation3 + $0x98] sm:$0x3c]
    %v6585 = vld [vmem:[#allocation3 + $0xa0] sm:$0x3c]
    %v6586 = vld [vmem:[#allocation3 + $0xa8] sm:$0x3c]
    %v6587 = vld [vmem:[#allocation3 + $0xb0] sm:$0x3c]
    %v6588 = vld [vmem:[#allocation3 + $0xb8] sm:$0x3c]
    %v6589 = vld [vmem:[#allocation3 + $0xc0] sm:$0x3c]
    %v6590 = vld [vmem:[#allocation3 + $0xc8] sm:$0x3c]
    %v6591 = vld [vmem:[#allocation3 + $0xd0] sm:$0x3c]
    %v6592 = vld [vmem:[#allocation3 + $0xd8] sm:$0x3c]
    %v6593 = vld [vmem:[#allocation3 + $0xe0] sm:$0x3c]
    %v6594 = vld [vmem:[#allocation3 + $0xe8] sm:$0x3c]
    %v6595 = vld [vmem:[#allocation3 + $0xf0] sm:$0x3c]
    %v6596 = vld [vmem:[#allocation3 + $0xf8] sm:$0x3c]
    %v6597 = vld [vmem:[#allocation3 + $0x100] sm:$0x3c]
    %v6598 = vld [vmem:[#allocation3 + $0x108] sm:$0x3c]
    %v6599 = vld [vmem:[#allocation3 + $0x110] sm:$0x3c]
    %v6600 = vld [vmem:[#allocation3 + $0x118] sm:$0x3c]
    %v6601 = vld [vmem:[#allocation3 + $0x120] sm:$0x3c]
    %v6602 = vld [vmem:[#allocation3 + $0x128] sm:$0x3c]
    %v6603 = vld [vmem:[#allocation3 + $0x130] sm:$0x3c]
    %v6604 = vld [vmem:[#allocation3 + $0x138] sm:$0x3c]
    %v6605 = vld [vmem:[#allocation3 + $0x140] sm:$0x3c]
    %v6606 = vld [vmem:[#allocation3 + $0x148] sm:$0x3c]
    %v6607 = vld [vmem:[#allocation3 + $0x150] sm:$0x3c]
    %v6608 = vld [vmem:[#allocation3 + $0x158] sm:$0x3c]
    %v6609 = vld [vmem:[#allocation3 + $0x160] sm:$0x3c]
    %v6610 = vld [vmem:[#allocation3 + $0x168] sm:$0x3c]
    %v6611 = vld [vmem:[#allocation3 + $0x170] sm:$0x3c]
    %v6612 = vld [vmem:[#allocation3 + $0x178] sm:$0x3c]
    %v6613 = vld [vmem:[#allocation3 + $0x180] sm:$0x3c]
    %v6614 = vld [vmem:[#allocation3 + $0x188] sm:$0x3c]
    %v6615 = vld [vmem:[#allocation3 + $0x190] sm:$0x3c]
    %v6616 = vld [vmem:[#allocation3 + $0x198] sm:$0x3c]
    %v6617 = vld [vmem:[#allocation3 + $0x1a0] sm:$0x3c]
    %v6618 = vld [vmem:[#allocation3 + $0x1a8] sm:$0x3c]
    %v6619 = vld [vmem:[#allocation3 + $0x1b0] sm:$0x3c]
    %v6620 = vld [vmem:[#allocation3 + $0x1b8] sm:$0x3c]
    %v6621 = vld [vmem:[#allocation3 + $0x1c0] sm:$0x3c]
    %v6622 = vld [vmem:[#allocation3 + $0x1c8] sm:$0x3c]
    %v6623 = vld [vmem:[#allocation3 + $0x1d0] sm:$0x3c]
    %v6624 = vld [vmem:[#allocation3 + $0x1d8] sm:$0x3c]
    %v6625 = vld [vmem:[#allocation3 + $0x1e0] sm:$0x3c]
    %v6626 = vld [vmem:[#allocation3 + $0x1e8] sm:$0x3c]
    %v6627 = vld [vmem:[#allocation3 + $0x1f0] sm:$0x3c]
    %v6628 = vld [vmem:[#allocation3 + $0x1f8] sm:$0x3c]
    %v6629 = vld [vmem:[#allocation3 + $0x200] sm:$0x3c]
    %v6630 = vld [vmem:[#allocation3 + $0x208] sm:$0x3c]
    %v6631 = vld [vmem:[#allocation3 + $0x210] sm:$0x3c]
    %v6632 = vld [vmem:[#allocation3 + $0x218] sm:$0x3c]
    %v6633 = vld [vmem:[#allocation3 + $0x220] sm:$0x3c]
    %v6634 = vld [vmem:[#allocation3 + $0x228] sm:$0x3c]
    %v6635 = vld [vmem:[#allocation3 + $0x230] sm:$0x3c]
    %v6636 = vld [vmem:[#allocation3 + $0x238] sm:$0x3c]
    %v6637 = vld [vmem:[#allocation3 + $0x240] sm:$0x3c]
    %v6638 = vld [vmem:[#allocation3 + $0x248] sm:$0x3c]
    %v6639 = vld [vmem:[#allocation3 + $0x250] sm:$0x3c]
    %v6640 = vld [vmem:[#allocation3 + $0x258] sm:$0x3c]
    %v6641 = vld [vmem:[#allocation3 + $0x260] sm:$0x3c]
    %v6642 = vld [vmem:[#allocation3 + $0x268] sm:$0x3c]
    %v6643 = vld [vmem:[#allocation3 + $0x270] sm:$0x3c]
    %v6644 = vld [vmem:[#allocation3 + $0x278] sm:$0x3c]
    %v6645 = vld [vmem:[#allocation3 + $0x280] sm:$0x3c]
    %v6646 = vld [vmem:[#allocation3 + $0x288] sm:$0x3c]
    %v6647 = vld [vmem:[#allocation3 + $0x290] sm:$0x3c]
    %v6648 = vld [vmem:[#allocation3 + $0x298] sm:$0x3c]
    %v6649 = vld [vmem:[#allocation3 + $0x2a0] sm:$0x3c]
    %v6650 = vld [vmem:[#allocation3 + $0x2a8] sm:$0x3c]
    %v6651 = vld [vmem:[#allocation3 + $0x2b0] sm:$0x3c]
    %v6652 = vld [vmem:[#allocation3 + $0x2b8] sm:$0x3c]
    %v6653 = vld [vmem:[#allocation3 + $0x2c0] sm:$0x3c]
    %v6654 = vld [vmem:[#allocation3 + $0x2c8] sm:$0x3c]
    %v6655 = vld [vmem:[#allocation3 + $0x2d0] sm:$0x3c]
    %v6656 = vld [vmem:[#allocation3 + $0x2d8] sm:$0x3c]
    %v6657 = vld [vmem:[#allocation3 + $0x2e0] sm:$0x3c]
    %v6658 = vld [vmem:[#allocation3 + $0x2e8] sm:$0x3c]
    %v6659 = vld [vmem:[#allocation3 + $0x2f0] sm:$0x3c]
    %v6660 = vld [vmem:[#allocation3 + $0x2f8] sm:$0x3c]
    %v6757 = vcombine.low %v6565, %v6566
    %v6758 = vcombine.high %v6565, %v6566
    %v6759 = vcombine.low %v6567, %v6568
    %v6760 = vcombine.high %v6567, %v6568
    %v6761 = vcombine.low %v6569, %v6570
    %v6762 = vcombine.high %v6569, %v6570
    %v6763 = vcombine.low %v6571, %v6572
    %v6764 = vcombine.high %v6571, %v6572
    %v6765 = vcombine.low %v6573, %v6574
    %v6766 = vcombine.high %v6573, %v6574
    %v6767 = vcombine.low %v6575, %v6576
    %v6768 = vcombine.high %v6575, %v6576
    %v6769 = vcombine.low %v6577, %v6578
    %v6770 = vcombine.high %v6577, %v6578
    %v6771 = vcombine.low %v6579, %v6580
    %v6772 = vcombine.high %v6579, %v6580
    %v6773 = vcombine.low %v6581, %v6582
    %v6774 = vcombine.high %v6581, %v6582
    %v6775 = vcombine.low %v6583, %v6584
    %v6776 = vcombine.high %v6583, %v6584
    %v6777 = vcombine.low %v6585, %v6586
    %v6778 = vcombine.high %v6585, %v6586
    %v6779 = vcombine.low %v6587, %v6588
    %v6780 = vcombine.high %v6587, %v6588
    %v6781 = vcombine.low %v6589, %v6590
    %v6782 = vcombine.high %v6589, %v6590
    %v6783 = vcombine.low %v6591, %v6592
    %v6784 = vcombine.high %v6591, %v6592
    %v6785 = vcombine.low %v6593, %v6594
    %v6786 = vcombine.high %v6593, %v6594
    %v6787 = vcombine.low %v6595, %v6596
    %v6788 = vcombine.high %v6595, %v6596
    %v6789 = vcombine.low %v6597, %v6598
    %v6790 = vcombine.high %v6597, %v6598
    %v6791 = vcombine.low %v6599, %v6600
    %v6792 = vcombine.high %v6599, %v6600
    %v6793 = vcombine.low %v6601, %v6602
    %v6794 = vcombine.high %v6601, %v6602
    %v6795 = vcombine.low %v6603, %v6604
    %v6796 = vcombine.high %v6603, %v6604
    %v6797 = vcombine.low %v6605, %v6606
    %v6798 = vcombine.high %v6605, %v6606
    %v6799 = vcombine.low %v6607, %v6608
    %v6800 = vcombine.high %v6607, %v6608
    %v6801 = vcombine.low %v6609, %v6610
    %v6802 = vcombine.high %v6609, %v6610
    %v6803 = vcombine.low %v6611, %v6612
    %v6804 = vcombine.high %v6611, %v6612
    %v6805 = vcombine.low %v6613, %v6614
    %v6806 = vcombine.high %v6613, %v6614
    %v6807 = vcombine.low %v6615, %v6616
    %v6808 = vcombine.high %v6615, %v6616
    %v6809 = vcombine.low %v6617, %v6618
    %v6810 = vcombine.high %v6617, %v6618
    %v6811 = vcombine.low %v6619, %v6620
    %v6812 = vcombine.high %v6619, %v6620
    %v6813 = vcombine.low %v6621, %v6622
    %v6814 = vcombine.high %v6621, %v6622
    %v6815 = vcombine.low %v6623, %v6624
    %v6816 = vcombine.high %v6623, %v6624
    %v6817 = vcombine.low %v6625, %v6626
    %v6818 = vcombine.high %v6625, %v6626
    %v6819 = vcombine.low %v6627, %v6628
    %v6820 = vcombine.high %v6627, %v6628
    %v6821 = vcombine.low %v6629, %v6630
    %v6822 = vcombine.high %v6629, %v6630
    %v6823 = vcombine.low %v6631, %v6632
    %v6824 = vcombine.high %v6631, %v6632
    %v6825 = vcombine.low %v6633, %v6634
    %v6826 = vcombine.high %v6633, %v6634
    %v6827 = vcombine.low %v6635, %v6636
    %v6828 = vcombine.high %v6635, %v6636
    %v6829 = vcombine.low %v6637, %v6638
    %v6830 = vcombine.high %v6637, %v6638
    %v6831 = vcombine.low %v6639, %v6640
    %v6832 = vcombine.high %v6639, %v6640
    %v6833 = vcombine.low %v6641, %v6642
    %v6834 = vcombine.high %v6641, %v6642
    %v6835 = vcombine.low %v6643, %v6644
    %v6836 = vcombine.high %v6643, %v6644
    %v6837 = vcombine.low %v6645, %v6646
    %v6838 = vcombine.high %v6645, %v6646
    %v6839 = vcombine.low %v6647, %v6648
    %v6840 = vcombine.high %v6647, %v6648
    %v6841 = vcombine.low %v6649, %v6650
    %v6842 = vcombine.high %v6649, %v6650
    %v6843 = vcombine.low %v6651, %v6652
    %v6844 = vcombine.high %v6651, %v6652
    %v6845 = vcombine.low %v6653, %v6654
    %v6846 = vcombine.high %v6653, %v6654
    %v6847 = vcombine.low %v6655, %v6656
    %v6848 = vcombine.high %v6655, %v6656
    %v6849 = vcombine.low %v6657, %v6658
    %v6850 = vcombine.high %v6657, %v6658
    %v6851 = vcombine.low %v6659, %v6660
    %v6852 = vcombine.high %v6659, %v6660
    %v6853 = vrot.slane %v6757, 6
    %v6854 = vrot.slane %v6853, 4
    %v6855 = vrot.slane %v6758, 6
    %v6856 = vsel %vm2580, %v6854, %v6855
    %v6857 = vrot.slane %v6759, 6
    %v6858 = vrot.slane %v6857, 4
    %v6859 = vrot.slane %v6760, 6
    %v6860 = vsel %vm2580, %v6858, %v6859
    %v6861 = vrot.slane %v6761, 6
    %v6862 = vrot.slane %v6861, 4
    %v6863 = vrot.slane %v6762, 6
    %v6864 = vsel %vm2580, %v6862, %v6863
    %v6865 = vrot.slane %v6763, 6
    %v6866 = vrot.slane %v6865, 4
    %v6867 = vrot.slane %v6764, 6
    %v6868 = vsel %vm2580, %v6866, %v6867
    %v6869 = vrot.slane %v6765, 6
    %v6870 = vrot.slane %v6869, 4
    %v6871 = vrot.slane %v6766, 6
    %v6872 = vsel %vm2580, %v6870, %v6871
    %v6873 = vrot.slane %v6767, 6
    %v6874 = vrot.slane %v6873, 4
    %v6875 = vrot.slane %v6768, 6
    %v6876 = vsel %vm2580, %v6874, %v6875
    %v6877 = vrot.slane %v6769, 6
    %v6878 = vrot.slane %v6877, 4
    %v6879 = vrot.slane %v6770, 6
    %v6880 = vsel %vm2580, %v6878, %v6879
    %v6881 = vrot.slane %v6771, 6
    %v6882 = vrot.slane %v6881, 4
    %v6883 = vrot.slane %v6772, 6
    %v6884 = vsel %vm2580, %v6882, %v6883
    %v6885 = vrot.slane %v6773, 6
    %v6886 = vrot.slane %v6885, 4
    %v6887 = vrot.slane %v6774, 6
    %v6888 = vsel %vm2580, %v6886, %v6887
    %v6889 = vrot.slane %v6775, 6
    %v6890 = vrot.slane %v6889, 4
    %v6891 = vrot.slane %v6776, 6
    %v6892 = vsel %vm2580, %v6890, %v6891
    %v6893 = vrot.slane %v6777, 6
    %v6894 = vrot.slane %v6893, 4
    %v6895 = vrot.slane %v6778, 6
    %v6896 = vsel %vm2580, %v6894, %v6895
    %v6897 = vrot.slane %v6779, 6
    %v6898 = vrot.slane %v6897, 4
    %v6899 = vrot.slane %v6780, 6
    %v6900 = vsel %vm2580, %v6898, %v6899
    %v6901 = vrot.slane %v6781, 6
    %v6902 = vrot.slane %v6901, 4
    %v6903 = vrot.slane %v6782, 6
    %v6904 = vsel %vm2580, %v6902, %v6903
    %v6905 = vrot.slane %v6783, 6
    %v6906 = vrot.slane %v6905, 4
    %v6907 = vrot.slane %v6784, 6
    %v6908 = vsel %vm2580, %v6906, %v6907
    %v6909 = vrot.slane %v6785, 6
    %v6910 = vrot.slane %v6909, 4
    %v6911 = vrot.slane %v6786, 6
    %v6912 = vsel %vm2580, %v6910, %v6911
    %v6913 = vrot.slane %v6787, 6
    %v6914 = vrot.slane %v6913, 4
    %v6915 = vrot.slane %v6788, 6
    %v6916 = vsel %vm2580, %v6914, %v6915
    %v6917 = vrot.slane %v6789, 6
    %v6918 = vrot.slane %v6917, 4
    %v6919 = vrot.slane %v6790, 6
    %v6920 = vsel %vm2580, %v6918, %v6919
    %v6921 = vrot.slane %v6791, 6
    %v6922 = vrot.slane %v6921, 4
    %v6923 = vrot.slane %v6792, 6
    %v6924 = vsel %vm2580, %v6922, %v6923
    %v6925 = vrot.slane %v6793, 6
    %v6926 = vrot.slane %v6925, 4
    %v6927 = vrot.slane %v6794, 6
    %v6928 = vsel %vm2580, %v6926, %v6927
    %v6929 = vrot.slane %v6795, 6
    %v6930 = vrot.slane %v6929, 4
    %v6931 = vrot.slane %v6796, 6
    %v6932 = vsel %vm2580, %v6930, %v6931
    %v6933 = vrot.slane %v6797, 6
    %v6934 = vrot.slane %v6933, 4
    %v6935 = vrot.slane %v6798, 6
    %v6936 = vsel %vm2580, %v6934, %v6935
    %v6937 = vrot.slane %v6799, 6
    %v6938 = vrot.slane %v6937, 4
    %v6939 = vrot.slane %v6800, 6
    %v6940 = vsel %vm2580, %v6938, %v6939
    %v6941 = vrot.slane %v6801, 6
    %v6942 = vrot.slane %v6941, 4
    %v6943 = vrot.slane %v6802, 6
    %v6944 = vsel %vm2580, %v6942, %v6943
    %v6945 = vrot.slane %v6803, 6
    %v6946 = vrot.slane %v6945, 4
    %v6947 = vrot.slane %v6804, 6
    %v6948 = vsel %vm2580, %v6946, %v6947
    %v6949 = vrot.slane %v6805, 6
    %v6950 = vrot.slane %v6949, 4
    %v6951 = vrot.slane %v6806, 6
    %v6952 = vsel %vm2580, %v6950, %v6951
    %v6953 = vrot.slane %v6807, 6
    %v6954 = vrot.slane %v6953, 4
    %v6955 = vrot.slane %v6808, 6
    %v6956 = vsel %vm2580, %v6954, %v6955
    %v6957 = vrot.slane %v6809, 6
    %v6958 = vrot.slane %v6957, 4
    %v6959 = vrot.slane %v6810, 6
    %v6960 = vsel %vm2580, %v6958, %v6959
    %v6961 = vrot.slane %v6811, 6
    %v6962 = vrot.slane %v6961, 4
    %v6963 = vrot.slane %v6812, 6
    %v6964 = vsel %vm2580, %v6962, %v6963
    %v6965 = vrot.slane %v6813, 6
    %v6966 = vrot.slane %v6965, 4
    %v6967 = vrot.slane %v6814, 6
    %v6968 = vsel %vm2580, %v6966, %v6967
    %v6969 = vrot.slane %v6815, 6
    %v6970 = vrot.slane %v6969, 4
    %v6971 = vrot.slane %v6816, 6
    %v6972 = vsel %vm2580, %v6970, %v6971
    %v6973 = vrot.slane %v6817, 6
    %v6974 = vrot.slane %v6973, 4
    %v6975 = vrot.slane %v6818, 6
    %v6976 = vsel %vm2580, %v6974, %v6975
    %v6977 = vrot.slane %v6819, 6
    %v6978 = vrot.slane %v6977, 4
    %v6979 = vrot.slane %v6820, 6
    %v6980 = vsel %vm2580, %v6978, %v6979
    %v6981 = vrot.slane %v6821, 6
    %v6982 = vrot.slane %v6981, 4
    %v6983 = vrot.slane %v6822, 6
    %v6984 = vsel %vm2580, %v6982, %v6983
    %v6985 = vrot.slane %v6823, 6
    %v6986 = vrot.slane %v6985, 4
    %v6987 = vrot.slane %v6824, 6
    %v6988 = vsel %vm2580, %v6986, %v6987
    %v6989 = vrot.slane %v6825, 6
    %v6990 = vrot.slane %v6989, 4
    %v6991 = vrot.slane %v6826, 6
    %v6992 = vsel %vm2580, %v6990, %v6991
    %v6993 = vrot.slane %v6827, 6
    %v6994 = vrot.slane %v6993, 4
    %v6995 = vrot.slane %v6828, 6
    %v6996 = vsel %vm2580, %v6994, %v6995
    %v6997 = vrot.slane %v6829, 6
    %v6998 = vrot.slane %v6997, 4
    %v6999 = vrot.slane %v6830, 6
    %v7000 = vsel %vm2580, %v6998, %v6999
    %v7001 = vrot.slane %v6831, 6
    %v7002 = vrot.slane %v7001, 4
    %v7003 = vrot.slane %v6832, 6
    %v7004 = vsel %vm2580, %v7002, %v7003
    %v7005 = vrot.slane %v6833, 6
    %v7006 = vrot.slane %v7005, 4
    %v7007 = vrot.slane %v6834, 6
    %v7008 = vsel %vm2580, %v7006, %v7007
    %v7009 = vrot.slane %v6835, 6
    %v7010 = vrot.slane %v7009, 4
    %v7011 = vrot.slane %v6836, 6
    %v7012 = vsel %vm2580, %v7010, %v7011
    %v7013 = vrot.slane %v6837, 6
    %v7014 = vrot.slane %v7013, 4
    %v7015 = vrot.slane %v6838, 6
    %v7016 = vsel %vm2580, %v7014, %v7015
    %v7017 = vrot.slane %v6839, 6
    %v7018 = vrot.slane %v7017, 4
    %v7019 = vrot.slane %v6840, 6
    %v7020 = vsel %vm2580, %v7018, %v7019
    %v7021 = vrot.slane %v6841, 6
    %v7022 = vrot.slane %v7021, 4
    %v7023 = vrot.slane %v6842, 6
    %v7024 = vsel %vm2580, %v7022, %v7023
    %v7025 = vrot.slane %v6843, 6
    %v7026 = vrot.slane %v7025, 4
    %v7027 = vrot.slane %v6844, 6
    %v7028 = vsel %vm2580, %v7026, %v7027
    %v7029 = vrot.slane %v6845, 6
    %v7030 = vrot.slane %v7029, 4
    %v7031 = vrot.slane %v6846, 6
    %v7032 = vsel %vm2580, %v7030, %v7031
    %v7033 = vrot.slane %v6847, 6
    %v7034 = vrot.slane %v7033, 4
    %v7035 = vrot.slane %v6848, 6
    %v7036 = vsel %vm2580, %v7034, %v7035
    %v7037 = vrot.slane %v6849, 6
    %v7038 = vrot.slane %v7037, 4
    %v7039 = vrot.slane %v6850, 6
    %v7040 = vsel %vm2580, %v7038, %v7039
    %v7041 = vrot.slane %v6851, 6
    %v7042 = vrot.slane %v7041, 4
    %v7043 = vrot.slane %v6852, 6
    %v7044 = vsel %vm2580, %v7042, %v7043
    %v7045 = vcombine.low %v6856, %v6880
    %v7046 = vcombine.high %v6856, %v6880
    %v7047 = vcombine.low %v6860, %v6884
    %v7048 = vcombine.high %v6860, %v6884
    %v7049 = vcombine.low %v6864, %v6888
    %v7050 = vcombine.high %v6864, %v6888
    %v7051 = vcombine.low %v6868, %v6892
    %v7052 = vcombine.high %v6868, %v6892
    %v7053 = vcombine.low %v6872, %v6896
    %v7054 = vcombine.high %v6872, %v6896
    %v7055 = vcombine.low %v6876, %v6900
    %v7056 = vcombine.high %v6876, %v6900
    %v7057 = vcombine.low %v6904, %v6928
    %v7058 = vcombine.high %v6904, %v6928
    %v7059 = vcombine.low %v6908, %v6932
    %v7060 = vcombine.high %v6908, %v6932
    %v7061 = vcombine.low %v6912, %v6936
    %v7062 = vcombine.high %v6912, %v6936
    %v7063 = vcombine.low %v6916, %v6940
    %v7064 = vcombine.high %v6916, %v6940
    %v7065 = vcombine.low %v6920, %v6944
    %v7066 = vcombine.high %v6920, %v6944
    %v7067 = vcombine.low %v6924, %v6948
    %v7068 = vcombine.high %v6924, %v6948
    %v7069 = vcombine.low %v6952, %v6976
    %v7070 = vcombine.high %v6952, %v6976
    %v7071 = vcombine.low %v6956, %v6980
    %v7072 = vcombine.high %v6956, %v6980
    %v7073 = vcombine.low %v6960, %v6984
    %v7074 = vcombine.high %v6960, %v6984
    %v7075 = vcombine.low %v6964, %v6988
    %v7076 = vcombine.high %v6964, %v6988
    %v7077 = vcombine.low %v6968, %v6992
    %v7078 = vcombine.high %v6968, %v6992
    %v7079 = vcombine.low %v6972, %v6996
    %v7080 = vcombine.high %v6972, %v6996
    %v7081 = vcombine.low %v7000, %v7024
    %v7082 = vcombine.high %v7000, %v7024
    %v7083 = vcombine.low %v7004, %v7028
    %v7084 = vcombine.high %v7004, %v7028
    %v7085 = vcombine.low %v7008, %v7032
    %v7086 = vcombine.high %v7008, %v7032
    %v7087 = vcombine.low %v7012, %v7036
    %v7088 = vcombine.high %v7012, %v7036
    %v7089 = vcombine.low %v7016, %v7040
    %v7090 = vcombine.high %v7016, %v7040
    %v7091 = vcombine.low %v7020, %v7044
    %v7092 = vcombine.high %v7020, %v7044
    %v7141 = vpack.c.bf16 %v7057, %v7045
    %v7142 = vpack.c.bf16 %v7058, %v7046
    %v7143 = vpack.c.bf16 %v7059, %v7047
    %v7144 = vpack.c.bf16 %v7060, %v7048
    %v7145 = vpack.c.bf16 %v7061, %v7049
    %v7146 = vpack.c.bf16 %v7062, %v7050
    %v7147 = vpack.c.bf16 %v7063, %v7051
    %v7148 = vpack.c.bf16 %v7064, %v7052
    %v7149 = vpack.c.bf16 %v7065, %v7053
    %v7150 = vpack.c.bf16 %v7066, %v7054
    %v7151 = vpack.c.bf16 %v7067, %v7055
    %v7152 = vpack.c.bf16 %v7068, %v7056
    %v7153 = vpack.c.bf16 %v7081, %v7069
    %v7154 = vpack.c.bf16 %v7082, %v7070
    %v7155 = vpack.c.bf16 %v7083, %v7071
    %v7156 = vpack.c.bf16 %v7084, %v7072
    %v7157 = vpack.c.bf16 %v7085, %v7073
    %v7158 = vpack.c.bf16 %v7086, %v7074
    %v7159 = vpack.c.bf16 %v7087, %v7075
    %v7160 = vpack.c.bf16 %v7088, %v7076
    %v7161 = vpack.c.bf16 %v7089, %v7077
    %v7162 = vpack.c.bf16 %v7090, %v7078
    %v7163 = vpack.c.bf16 %v7091, %v7079
    %v7164 = vpack.c.bf16 %v7092, %v7080
    %v7261 = vunpack.c.l.b16 %v5412
    %v7262 = vunpack.c.l.b16 %v5413
    %v7263 = vunpack.c.l.b16 %v5414
    %v7264 = vunpack.c.l.b16 %v5415
    %v7265 = vunpack.c.l.b16 %v5416
    %v7266 = vunpack.c.l.b16 %v5417
    %v7267 = vunpack.c.l.b16 %v5418
    %v7268 = vunpack.c.l.b16 %v5419
    %v7269 = vunpack.c.l.b16 %v5420
    %v7270 = vunpack.c.l.b16 %v5421
    %v7271 = vunpack.c.l.b16 %v5422
    %v7272 = vunpack.c.l.b16 %v5423
    %v7273 = vunpack.c.l.b16 %v5424
    %v7274 = vunpack.c.l.b16 %v5425
    %v7275 = vunpack.c.l.b16 %v5426
    %v7276 = vunpack.c.l.b16 %v5427
    %v7277 = vunpack.c.l.b16 %v5428
    %v7278 = vunpack.c.l.b16 %v5429
    %v7279 = vunpack.c.l.b16 %v5430
    %v7280 = vunpack.c.l.b16 %v5431
    %v7281 = vunpack.c.l.b16 %v5432
    %v7282 = vunpack.c.l.b16 %v5433
    %v7283 = vunpack.c.l.b16 %v5434
    %v7284 = vunpack.c.l.b16 %v5435
    %v7285 = vunpack.c.l.b16 %v5436
    %v7286 = vunpack.c.l.b16 %v5437
    %v7287 = vunpack.c.l.b16 %v5438
    %v7288 = vunpack.c.l.b16 %v5439
    %v7289 = vunpack.c.l.b16 %v5440
    %v7290 = vunpack.c.l.b16 %v5441
    %v7291 = vunpack.c.l.b16 %v5442
    %v7292 = vunpack.c.l.b16 %v5443
    %v7293 = vunpack.c.l.b16 %v5444
    %v7294 = vunpack.c.l.b16 %v5445
    %v7295 = vunpack.c.l.b16 %v5446
    %v7296 = vunpack.c.l.b16 %v5447
    %v7297 = vunpack.c.l.b16 %v5448
    %v7298 = vunpack.c.l.b16 %v5449
    %v7299 = vunpack.c.l.b16 %v5450
    %v7300 = vunpack.c.l.b16 %v5451
    %v7301 = vunpack.c.l.b16 %v5452
    %v7302 = vunpack.c.l.b16 %v5453
    %v7303 = vunpack.c.l.b16 %v5454
    %v7304 = vunpack.c.l.b16 %v5455
    %v7305 = vunpack.c.l.b16 %v5456
    %v7306 = vunpack.c.l.b16 %v5457
    %v7307 = vunpack.c.l.b16 %v5458
    %v7308 = vunpack.c.l.b16 %v5459
    %v7309 = vunpack.c.l.b16 %v5460
    %v7310 = vunpack.c.l.b16 %v5461
    %v7311 = vunpack.c.l.b16 %v5462
    %v7312 = vunpack.c.l.b16 %v5463
    %v7313 = vunpack.c.l.b16 %v5464
    %v7314 = vunpack.c.l.b16 %v5465
    %v7315 = vunpack.c.l.b16 %v5466
    %v7316 = vunpack.c.l.b16 %v5467
    %v7317 = vunpack.c.l.b16 %v5468
    %v7318 = vunpack.c.l.b16 %v5469
    %v7319 = vunpack.c.l.b16 %v5470
    %v7320 = vunpack.c.l.b16 %v5471
    %v7321 = vunpack.c.l.b16 %v5472
    %v7322 = vunpack.c.l.b16 %v5473
    %v7323 = vunpack.c.l.b16 %v5474
    %v7324 = vunpack.c.l.b16 %v5475
    %v7325 = vunpack.c.l.b16 %v5476
    %v7326 = vunpack.c.l.b16 %v5477
    %v7327 = vunpack.c.l.b16 %v5478
    %v7328 = vunpack.c.l.b16 %v5479
    %v7329 = vunpack.c.l.b16 %v5480
    %v7330 = vunpack.c.l.b16 %v5481
    %v7331 = vunpack.c.l.b16 %v5482
    %v7332 = vunpack.c.l.b16 %v5483
    %v7333 = vunpack.c.l.b16 %v5484
    %v7334 = vunpack.c.l.b16 %v5485
    %v7335 = vunpack.c.l.b16 %v5486
    %v7336 = vunpack.c.l.b16 %v5487
    %v7337 = vunpack.c.l.b16 %v5488
    %v7338 = vunpack.c.l.b16 %v5489
    %v7339 = vunpack.c.l.b16 %v5490
    %v7340 = vunpack.c.l.b16 %v5491
    %v7341 = vunpack.c.l.b16 %v5492
    %v7342 = vunpack.c.l.b16 %v5493
    %v7343 = vunpack.c.l.b16 %v5494
    %v7344 = vunpack.c.l.b16 %v5495
    %v7345 = vunpack.c.l.b16 %v5496
    %v7346 = vunpack.c.l.b16 %v5497
    %v7347 = vunpack.c.l.b16 %v5498
    %v7348 = vunpack.c.l.b16 %v5499
    %v7349 = vunpack.c.l.b16 %v5500
    %v7350 = vunpack.c.l.b16 %v5501
    %v7351 = vunpack.c.l.b16 %v5502
    %v7352 = vunpack.c.l.b16 %v5503
    %v7353 = vunpack.c.l.b16 %v5504
    %v7354 = vunpack.c.l.b16 %v5505
    %v7355 = vunpack.c.l.b16 %v5506
    %v7356 = vunpack.c.l.b16 %v5507
    %v7357 = vpack.c.b16 %v7262, %v7261
    %v7358 = vpack.c.b16 %v7264, %v7263
    %v7359 = vpack.c.b16 %v7266, %v7265
    %v7360 = vpack.c.b16 %v7268, %v7267
    %v7361 = vpack.c.b16 %v7270, %v7269
    %v7362 = vpack.c.b16 %v7272, %v7271
    %v7363 = vpack.c.b16 %v7274, %v7273
    %v7364 = vpack.c.b16 %v7276, %v7275
    %v7365 = vpack.c.b16 %v7278, %v7277
    %v7366 = vpack.c.b16 %v7280, %v7279
    %v7367 = vpack.c.b16 %v7282, %v7281
    %v7368 = vpack.c.b16 %v7284, %v7283
    %v7369 = vpack.c.b16 %v7286, %v7285
    %v7370 = vpack.c.b16 %v7288, %v7287
    %v7371 = vpack.c.b16 %v7290, %v7289
    %v7372 = vpack.c.b16 %v7292, %v7291
    %v7373 = vpack.c.b16 %v7294, %v7293
    %v7374 = vpack.c.b16 %v7296, %v7295
    %v7375 = vpack.c.b16 %v7298, %v7297
    %v7376 = vpack.c.b16 %v7300, %v7299
    %v7377 = vpack.c.b16 %v7302, %v7301
    %v7378 = vpack.c.b16 %v7304, %v7303
    %v7379 = vpack.c.b16 %v7306, %v7305
    %v7380 = vpack.c.b16 %v7308, %v7307
    %v7381 = vpack.c.b16 %v7310, %v7309
    %v7382 = vpack.c.b16 %v7312, %v7311
    %v7383 = vpack.c.b16 %v7314, %v7313
    %v7384 = vpack.c.b16 %v7316, %v7315
    %v7385 = vpack.c.b16 %v7318, %v7317
    %v7386 = vpack.c.b16 %v7320, %v7319
    %v7387 = vpack.c.b16 %v7322, %v7321
    %v7388 = vpack.c.b16 %v7324, %v7323
    %v7389 = vpack.c.b16 %v7326, %v7325
    %v7390 = vpack.c.b16 %v7328, %v7327
    %v7391 = vpack.c.b16 %v7330, %v7329
    %v7392 = vpack.c.b16 %v7332, %v7331
    %v7393 = vpack.c.b16 %v7334, %v7333
    %v7394 = vpack.c.b16 %v7336, %v7335
    %v7395 = vpack.c.b16 %v7338, %v7337
    %v7396 = vpack.c.b16 %v7340, %v7339
    %v7397 = vpack.c.b16 %v7342, %v7341
    %v7398 = vpack.c.b16 %v7344, %v7343
    %v7399 = vpack.c.b16 %v7346, %v7345
    %v7400 = vpack.c.b16 %v7348, %v7347
    %v7401 = vpack.c.b16 %v7350, %v7349
    %v7402 = vpack.c.b16 %v7352, %v7351
    %v7403 = vpack.c.b16 %v7354, %v7353
    %v7404 = vpack.c.b16 %v7356, %v7355
    %7453 = vmatprep.subr.bf16.mxu0 0
    %7454 = vmatpush1.bf16.msra.mxu0 %v7357
    %7455 = vmatprep.subr.bf16.mxu0 0
    %7456 = vmatpush1.bf16.msra.mxu0 %v7358
    %7457 = vmatprep.subr.bf16.mxu0 0
    %7458 = vmatpush1.bf16.msra.mxu0 %v7359
    %7459 = vmatprep.subr.bf16.mxu0 0
    %7460 = vmatpush1.bf16.msra.mxu0 %v7360
    %7461 = vmatprep.subr.bf16.mxu0 0
    %7462 = vmatpush1.bf16.msra.mxu0 %v7361
    %7463 = vmatprep.subr.bf16.mxu0 0
    %7464 = vmatpush1.bf16.msra.mxu0 %v7362
    %7465 = vmatprep.subr.bf16.mxu0 0
    %7466 = vmatpush1.bf16.msra.mxu0 %v7363
    %7467 = vmatprep.subr.bf16.mxu0 0
    %7468 = vmatpush1.bf16.msra.mxu0 %v7364
    %7469 = vmatprep.subr.bf16.mxu0 0
    %7470 = vmatpush1.bf16.msra.mxu0 %v7365
    %7471 = vmatprep.subr.bf16.mxu0 0
    %7472 = vmatpush1.bf16.msra.mxu0 %v7366
    %7473 = vmatprep.subr.bf16.mxu0 0
    %7474 = vmatpush1.bf16.msra.mxu0 %v7367
    %7475 = vmatprep.subr.bf16.mxu0 0
    %7476 = vmatpush1.bf16.msra.mxu0 %v7368
    %7477 = vmatprep.subr.bf16.mxu0 0
    %7478 = vmatpush1.bf16.msra.mxu0 %v7369
    %7479 = vmatprep.subr.bf16.mxu0 0
    %7480 = vmatpush1.bf16.msra.mxu0 %v7370
    %7481 = vmatprep.subr.bf16.mxu0 0
    %7482 = vmatpush1.bf16.msra.mxu0 %v7371
    %7483 = vmatprep.subr.bf16.mxu0 0
    %7484 = vmatpush1.bf16.msra.mxu0 %v7372
    %7485 = vmatprep.mubr.bf16.mxu0 %v6542
    %7486 = vmatmul.mubr.bf16.gmra.mrb[0].mxu0 %v6541
    %v7487 = vpop.f32.mrb[0].mxu0
    %v7488 = vadd.f32 0.0, %v7487
    %v7489 = vpop.f32.mrb[0].mxu0
    %v7490 = vpop.f32.mrb[0].mxu0
    %v7491 = vadd.f32 0.0, %v7490
    %v7492 = vpop.f32.mrb[0].mxu0
    %7493 = vmatprep.mubr.bf16.mxu0 %v6554
    %7494 = vmatmul.mubr.bf16.gmra.mrb[0].mxu0 %v6553
    %v7495 = vpop.f32.mrb[0].mxu0
    %v7496 = vadd.f32 0.0, %v7495
    %v7497 = vpop.f32.mrb[0].mxu0
    %v7498 = vpop.f32.mrb[0].mxu0
    %v7499 = vadd.f32 0.0, %v7498
    %v7500 = vpop.f32.mrb[0].mxu0
    %7501 = vdwg.mxu0
    %7502 = vmatprep.subr.bf16.mxu0 0
    %7503 = vmatpush1.bf16.msra.mxu0 %v7373
    %7504 = vmatprep.subr.bf16.mxu0 0
    %7505 = vmatpush1.bf16.msra.mxu0 %v7374
    %7506 = vmatprep.subr.bf16.mxu0 0
    %7507 = vmatpush1.bf16.msra.mxu0 %v7375
    %7508 = vmatprep.subr.bf16.mxu0 0
    %7509 = vmatpush1.bf16.msra.mxu0 %v7376
    %7510 = vmatprep.subr.bf16.mxu0 0
    %7511 = vmatpush1.bf16.msra.mxu0 %v7377
    %7512 = vmatprep.subr.bf16.mxu0 0
    %7513 = vmatpush1.bf16.msra.mxu0 %v7378
    %7514 = vmatprep.subr.bf16.mxu0 0
    %7515 = vmatpush1.bf16.msra.mxu0 %v7379
    %7516 = vmatprep.subr.bf16.mxu0 0
    %7517 = vmatpush1.bf16.msra.mxu0 %v7380
    %7518 = vmatprep.subr.bf16.mxu0 0
    %7519 = vmatpush1.bf16.msra.mxu0 %v7381
    %7520 = vmatprep.subr.bf16.mxu0 0
    %7521 = vmatpush1.bf16.msra.mxu0 %v7382
    %7522 = vmatprep.subr.bf16.mxu0 0
    %7523 = vmatpush1.bf16.msra.mxu0 %v7383
    %7524 = vmatprep.subr.bf16.mxu0 0
    %7525 = vmatpush1.bf16.msra.mxu0 %v7384
    %7526 = vmatprep.subr.bf16.mxu0 0
    %7527 = vmatpush1.bf16.msra.mxu0 %v7385
    %7528 = vmatprep.subr.bf16.mxu0 0
    %7529 = vmatpush1.bf16.msra.mxu0 %v7386
    %7530 = vmatprep.subr.bf16.mxu0 0
    %7531 = vmatpush1.bf16.msra.mxu0 %v7387
    %7532 = vmatprep.subr.bf16.mxu0 0
    %7533 = vmatpush1.bf16.msra.mxu0 %v7388
    %7534 = vmatprep.mubr.bf16.mxu0 %v6544
    %7535 = vmatmul.mubr.bf16.gmra.mrb[0].mxu0 %v6543
    %v7536 = vpop.f32.mrb[0].mxu0
    %v7537 = vadd.f32 %v7488, %v7536
    %v7538 = vpop.f32.mrb[0].mxu0
    %v7539 = vpop.f32.mrb[0].mxu0
    %v7540 = vadd.f32 %v7491, %v7539
    %v7541 = vpop.f32.mrb[0].mxu0
    %7542 = vmatprep.mubr.bf16.mxu0 %v6556
    %7543 = vmatmul.mubr.bf16.gmra.mrb[0].mxu0 %v6555
    %v7544 = vpop.f32.mrb[0].mxu0
    %v7545 = vadd.f32 %v7496, %v7544
    %v7546 = vpop.f32.mrb[0].mxu0
    %v7547 = vpop.f32.mrb[0].mxu0
    %v7548 = vadd.f32 %v7499, %v7547
    %v7549 = vpop.f32.mrb[0].mxu0
    %7550 = vdwg.mxu0
    %7551 = vmatprep.subr.bf16.mxu0 0
    %7552 = vmatpush1.bf16.msra.mxu0 %v7389
    %7553 = vmatprep.subr.bf16.mxu0 0
    %7554 = vmatpush1.bf16.msra.mxu0 %v7390
    %7555 = vmatprep.subr.bf16.mxu0 0
    %7556 = vmatpush1.bf16.msra.mxu0 %v7391
    %7557 = vmatprep.subr.bf16.mxu0 0
    %7558 = vmatpush1.bf16.msra.mxu0 %v7392
    %7559 = vmatprep.subr.bf16.mxu0 0
    %7560 = vmatpush1.bf16.msra.mxu0 %v7393
    %7561 = vmatprep.subr.bf16.mxu0 0
    %7562 = vmatpush1.bf16.msra.mxu0 %v7394
    %7563 = vmatprep.subr.bf16.mxu0 0
    %7564 = vmatpush1.bf16.msra.mxu0 %v7395
    %7565 = vmatprep.subr.bf16.mxu0 0
    %7566 = vmatpush1.bf16.msra.mxu0 %v7396
    %7567 = vmatprep.subr.bf16.mxu0 0
    %7568 = vmatpush1.bf16.msra.mxu0 %v7397
    %7569 = vmatprep.subr.bf16.mxu0 0
    %7570 = vmatpush1.bf16.msra.mxu0 %v7398
    %7571 = vmatprep.subr.bf16.mxu0 0
    %7572 = vmatpush1.bf16.msra.mxu0 %v7399
    %7573 = vmatprep.subr.bf16.mxu0 0
    %7574 = vmatpush1.bf16.msra.mxu0 %v7400
    %7575 = vmatprep.subr.bf16.mxu0 0
    %7576 = vmatpush1.bf16.msra.mxu0 %v7401
    %7577 = vmatprep.subr.bf16.mxu0 0
    %7578 = vmatpush1.bf16.msra.mxu0 %v7402
    %7579 = vmatprep.subr.bf16.mxu0 0
    %7580 = vmatpush1.bf16.msra.mxu0 %v7403
    %7581 = vmatprep.subr.bf16.mxu0 0
    %7582 = vmatpush1.bf16.msra.mxu0 %v7404
    %7583 = vmatprep.mubr.bf16.mxu0 %v6546
    %7584 = vmatmul.mubr.bf16.gmra.mrb[0].mxu0 %v6545
    %v7585 = vpop.f32.mrb[0].mxu0
    %v7586 = vadd.f32 %v7537, %v7585
    %v7587 = vpop.f32.mrb[0].mxu0
    %v7588 = vpop.f32.mrb[0].mxu0
    %v7589 = vadd.f32 %v7540, %v7588
    %v7590 = vpop.f32.mrb[0].mxu0
    %7591 = vmatprep.mubr.bf16.mxu0 %v6558
    %7592 = vmatmul.mubr.bf16.gmra.mrb[0].mxu0 %v6557
    %v7593 = vpop.f32.mrb[0].mxu0
    %v7594 = vadd.f32 %v7545, %v7593
    %v7595 = vpop.f32.mrb[0].mxu0
    %v7596 = vpop.f32.mrb[0].mxu0
    %v7597 = vadd.f32 %v7548, %v7596
    %v7598 = vpop.f32.mrb[0].mxu0
    %7599 = vdwg.mxu0
    %v7696 = vunpack.c.l.b16 %v5315
    %v7697 = vunpack.c.l.b16 %v5316
    %v7698 = vunpack.c.l.b16 %v5317
    %v7699 = vunpack.c.l.b16 %v5318
    %v7700 = vunpack.c.l.b16 %v5319
    %v7701 = vunpack.c.l.b16 %v5320
    %v7702 = vunpack.c.l.b16 %v5321
    %v7703 = vunpack.c.l.b16 %v5322
    %v7704 = vunpack.c.l.b16 %v5323
    %v7705 = vunpack.c.l.b16 %v5324
    %v7706 = vunpack.c.l.b16 %v5325
    %v7707 = vunpack.c.l.b16 %v5326
    %v7708 = vunpack.c.l.b16 %v5327
    %v7709 = vunpack.c.l.b16 %v5328
    %v7710 = vunpack.c.l.b16 %v5329
    %v7711 = vunpack.c.l.b16 %v5330
    %v7712 = vunpack.c.l.b16 %v5331
    %v7713 = vunpack.c.l.b16 %v5332
    %v7714 = vunpack.c.l.b16 %v5333
    %v7715 = vunpack.c.l.b16 %v5334
    %v7716 = vunpack.c.l.b16 %v5335
    %v7717 = vunpack.c.l.b16 %v5336
    %v7718 = vunpack.c.l.b16 %v5337
    %v7719 = vunpack.c.l.b16 %v5338
    %v7720 = vunpack.c.l.b16 %v5339
    %v7721 = vunpack.c.l.b16 %v5340
    %v7722 = vunpack.c.l.b16 %v5341
    %v7723 = vunpack.c.l.b16 %v5342
    %v7724 = vunpack.c.l.b16 %v5343
    %v7725 = vunpack.c.l.b16 %v5344
    %v7726 = vunpack.c.l.b16 %v5345
    %v7727 = vunpack.c.l.b16 %v5346
    %v7728 = vunpack.c.l.b16 %v5347
    %v7729 = vunpack.c.l.b16 %v5348
    %v7730 = vunpack.c.l.b16 %v5349
    %v7731 = vunpack.c.l.b16 %v5350
    %v7732 = vunpack.c.l.b16 %v5351
    %v7733 = vunpack.c.l.b16 %v5352
    %v7734 = vunpack.c.l.b16 %v5353
    %v7735 = vunpack.c.l.b16 %v5354
    %v7736 = vunpack.c.l.b16 %v5355
    %v7737 = vunpack.c.l.b16 %v5356
    %v7738 = vunpack.c.l.b16 %v5357
    %v7739 = vunpack.c.l.b16 %v5358
    %v7740 = vunpack.c.l.b16 %v5359
    %v7741 = vunpack.c.l.b16 %v5360
    %v7742 = vunpack.c.l.b16 %v5361
    %v7743 = vunpack.c.l.b16 %v5362
    %v7744 = vunpack.c.l.b16 %v5363
    %v7745 = vunpack.c.l.b16 %v5364
    %v7746 = vunpack.c.l.b16 %v5365
    %v7747 = vunpack.c.l.b16 %v5366
    %v7748 = vunpack.c.l.b16 %v5367
    %v7749 = vunpack.c.l.b16 %v5368
    %v7750 = vunpack.c.l.b16 %v5369
    %v7751 = vunpack.c.l.b16 %v5370
    %v7752 = vunpack.c.l.b16 %v5371
    %v7753 = vunpack.c.l.b16 %v5372
    %v7754 = vunpack.c.l.b16 %v5373
    %v7755 = vunpack.c.l.b16 %v5374
    %v7756 = vunpack.c.l.b16 %v5375
    %v7757 = vunpack.c.l.b16 %v5376
    %v7758 = vunpack.c.l.b16 %v5377
    %v7759 = vunpack.c.l.b16 %v5378
    %v7760 = vunpack.c.l.b16 %v5379
    %v7761 = vunpack.c.l.b16 %v5380
    %v7762 = vunpack.c.l.b16 %v5381
    %v7763 = vunpack.c.l.b16 %v5382
    %v7764 = vunpack.c.l.b16 %v5383
    %v7765 = vunpack.c.l.b16 %v5384
    %v7766 = vunpack.c.l.b16 %v5385
    %v7767 = vunpack.c.l.b16 %v5386
    %v7768 = vunpack.c.l.b16 %v5387
    %v7769 = vunpack.c.l.b16 %v5388
    %v7770 = vunpack.c.l.b16 %v5389
    %v7771 = vunpack.c.l.b16 %v5390
    %v7772 = vunpack.c.l.b16 %v5391
    %v7773 = vunpack.c.l.b16 %v5392
    %v7774 = vunpack.c.l.b16 %v5393
    %v7775 = vunpack.c.l.b16 %v5394
    %v7776 = vunpack.c.l.b16 %v5395
    %v7777 = vunpack.c.l.b16 %v5396
    %v7778 = vunpack.c.l.b16 %v5397
    %v7779 = vunpack.c.l.b16 %v5398
    %v7780 = vunpack.c.l.b16 %v5399
    %v7781 = vunpack.c.l.b16 %v5400
    %v7782 = vunpack.c.l.b16 %v5401
    %v7783 = vunpack.c.l.b16 %v5402
    %v7784 = vunpack.c.l.b16 %v5403
    %v7785 = vunpack.c.l.b16 %v5404
    %v7786 = vunpack.c.l.b16 %v5405
    %v7787 = vunpack.c.l.b16 %v5406
    %v7788 = vunpack.c.l.b16 %v5407
    %v7789 = vunpack.c.l.b16 %v5408
    %v7790 = vunpack.c.l.b16 %v5409
    %v7791 = vunpack.c.l.b16 %v5410
    %v7792 = vpack.c.b16 %v7697, %v7696
    %v7793 = vpack.c.b16 %v7699, %v7698
    %v7794 = vpack.c.b16 %v7701, %v7700
    %v7795 = vpack.c.b16 %v7703, %v7702
    %v7796 = vpack.c.b16 %v7705, %v7704
    %v7797 = vpack.c.b16 %v7707, %v7706
    %v7798 = vpack.c.b16 %v7709, %v7708
    %v7799 = vpack.c.b16 %v7711, %v7710
    %v7800 = vpack.c.b16 %v7713, %v7712
    %v7801 = vpack.c.b16 %v7715, %v7714
    %v7802 = vpack.c.b16 %v7717, %v7716
    %v7803 = vpack.c.b16 %v7719, %v7718
    %v7804 = vpack.c.b16 %v7721, %v7720
    %v7805 = vpack.c.b16 %v7723, %v7722
    %v7806 = vpack.c.b16 %v7725, %v7724
    %v7807 = vpack.c.b16 %v7727, %v7726
    %v7808 = vpack.c.b16 %v7729, %v7728
    %v7809 = vpack.c.b16 %v7731, %v7730
    %v7810 = vpack.c.b16 %v7733, %v7732
    %v7811 = vpack.c.b16 %v7735, %v7734
    %v7812 = vpack.c.b16 %v7737, %v7736
    %v7813 = vpack.c.b16 %v7739, %v7738
    %v7814 = vpack.c.b16 %v7741, %v7740
    %v7815 = vpack.c.b16 %v7743, %v7742
    %v7816 = vpack.c.b16 %v7745, %v7744
    %v7817 = vpack.c.b16 %v7747, %v7746
    %v7818 = vpack.c.b16 %v7749, %v7748
    %v7819 = vpack.c.b16 %v7751, %v7750
    %v7820 = vpack.c.b16 %v7753, %v7752
    %v7821 = vpack.c.b16 %v7755, %v7754
    %v7822 = vpack.c.b16 %v7757, %v7756
    %v7823 = vpack.c.b16 %v7759, %v7758
    %v7824 = vpack.c.b16 %v7761, %v7760
    %v7825 = vpack.c.b16 %v7763, %v7762
    %v7826 = vpack.c.b16 %v7765, %v7764
    %v7827 = vpack.c.b16 %v7767, %v7766
    %v7828 = vpack.c.b16 %v7769, %v7768
    %v7829 = vpack.c.b16 %v7771, %v7770
    %v7830 = vpack.c.b16 %v7773, %v7772
    %v7831 = vpack.c.b16 %v7775, %v7774
    %v7832 = vpack.c.b16 %v7777, %v7776
    %v7833 = vpack.c.b16 %v7779, %v7778
    %v7834 = vpack.c.b16 %v7781, %v7780
    %v7835 = vpack.c.b16 %v7783, %v7782
    %v7836 = vpack.c.b16 %v7785, %v7784
    %v7837 = vpack.c.b16 %v7787, %v7786
    %v7838 = vpack.c.b16 %v7789, %v7788
    %v7839 = vpack.c.b16 %v7791, %v7790
    %7888 = vmatprep.subr.bf16.mxu0 0
    %7889 = vmatpush1.bf16.msra.mxu0 %v7792
    %7890 = vmatprep.subr.bf16.mxu0 0
    %7891 = vmatpush1.bf16.msra.mxu0 %v7793
    %7892 = vmatprep.subr.bf16.mxu0 0
    %7893 = vmatpush1.bf16.msra.mxu0 %v7794
    %7894 = vmatprep.subr.bf16.mxu0 0
    %7895 = vmatpush1.bf16.msra.mxu0 %v7795
    %7896 = vmatprep.subr.bf16.mxu0 0
    %7897 = vmatpush1.bf16.msra.mxu0 %v7796
    %7898 = vmatprep.subr.bf16.mxu0 0
    %7899 = vmatpush1.bf16.msra.mxu0 %v7797
    %7900 = vmatprep.subr.bf16.mxu0 0
    %7901 = vmatpush1.bf16.msra.mxu0 %v7798
    %7902 = vmatprep.subr.bf16.mxu0 0
    %7903 = vmatpush1.bf16.msra.mxu0 %v7799
    %7904 = vmatprep.subr.bf16.mxu0 0
    %7905 = vmatpush1.bf16.msra.mxu0 %v7800
    %7906 = vmatprep.subr.bf16.mxu0 0
    %7907 = vmatpush1.bf16.msra.mxu0 %v7801
    %7908 = vmatprep.subr.bf16.mxu0 0
    %7909 = vmatpush1.bf16.msra.mxu0 %v7802
    %7910 = vmatprep.subr.bf16.mxu0 0
    %7911 = vmatpush1.bf16.msra.mxu0 %v7803
    %7912 = vmatprep.subr.bf16.mxu0 0
    %7913 = vmatpush1.bf16.msra.mxu0 %v7804
    %7914 = vmatprep.subr.bf16.mxu0 0
    %7915 = vmatpush1.bf16.msra.mxu0 %v7805
    %7916 = vmatprep.subr.bf16.mxu0 0
    %7917 = vmatpush1.bf16.msra.mxu0 %v7806
    %7918 = vmatprep.subr.bf16.mxu0 0
    %7919 = vmatpush1.bf16.msra.mxu0 %v7807
    %7920 = vmatprep.mubr.bf16.mxu0 %v5942
    %7921 = vmatmul.mubr.bf16.gmra.mrb[0].mxu0 %v5941
    %v7922 = vpop.f32.mrb[0].mxu0
    %v7923 = vadd.f32 %v7586, %v7922
    %v7924 = vpop.f32.mrb[0].mxu0
    %v7925 = vpop.f32.mrb[0].mxu0
    %v7926 = vadd.f32 %v7589, %v7925
    %v7927 = vpop.f32.mrb[0].mxu0
    %7928 = vmatprep.mubr.bf16.mxu0 %v5954
    %7929 = vmatmul.mubr.bf16.gmra.mrb[0].mxu0 %v5953
    %v7930 = vpop.f32.mrb[0].mxu0
    %v7931 = vadd.f32 %v7594, %v7930
    %v7932 = vpop.f32.mrb[0].mxu0
    %v7933 = vpop.f32.mrb[0].mxu0
    %v7934 = vadd.f32 %v7597, %v7933
    %v7935 = vpop.f32.mrb[0].mxu0
    %7936 = vdwg.mxu0
    %7937 = vmatprep.subr.bf16.mxu0 0
    %7938 = vmatpush1.bf16.msra.mxu0 %v7808
    %7939 = vmatprep.subr.bf16.mxu0 0
    %7940 = vmatpush1.bf16.msra.mxu0 %v7809
    %7941 = vmatprep.subr.bf16.mxu0 0
    %7942 = vmatpush1.bf16.msra.mxu0 %v7810
    %7943 = vmatprep.subr.bf16.mxu0 0
    %7944 = vmatpush1.bf16.msra.mxu0 %v7811
    %7945 = vmatprep.subr.bf16.mxu0 0
    %7946 = vmatpush1.bf16.msra.mxu0 %v7812
    %7947 = vmatprep.subr.bf16.mxu0 0
    %7948 = vmatpush1.bf16.msra.mxu0 %v7813
    %7949 = vmatprep.subr.bf16.mxu0 0
    %7950 = vmatpush1.bf16.msra.mxu0 %v7814
    %7951 = vmatprep.subr.bf16.mxu0 0
    %7952 = vmatpush1.bf16.msra.mxu0 %v7815
    %7953 = vmatprep.subr.bf16.mxu0 0
    %7954 = vmatpush1.bf16.msra.mxu0 %v7816
    %7955 = vmatprep.subr.bf16.mxu0 0
    %7956 = vmatpush1.bf16.msra.mxu0 %v7817
    %7957 = vmatprep.subr.bf16.mxu0 0
    %7958 = vmatpush1.bf16.msra.mxu0 %v7818
    %7959 = vmatprep.subr.bf16.mxu0 0
    %7960 = vmatpush1.bf16.msra.mxu0 %v7819
    %7961 = vmatprep.subr.bf16.mxu0 0
    %7962 = vmatpush1.bf16.msra.mxu0 %v7820
    %7963 = vmatprep.subr.bf16.mxu0 0
    %7964 = vmatpush1.bf16.msra.mxu0 %v7821
    %7965 = vmatprep.subr.bf16.mxu0 0
    %7966 = vmatpush1.bf16.msra.mxu0 %v7822
    %7967 = vmatprep.subr.bf16.mxu0 0
    %7968 = vmatpush1.bf16.msra.mxu0 %v7823
    %7969 = vmatprep.mubr.bf16.mxu0 %v5944
    %7970 = vmatmul.mubr.bf16.gmra.mrb[0].mxu0 %v5943
    %v7971 = vpop.f32.mrb[0].mxu0
    %v7972 = vadd.f32 %v7923, %v7971
    %v7973 = vpop.f32.mrb[0].mxu0
    %v7974 = vpop.f32.mrb[0].mxu0
    %v7975 = vadd.f32 %v7926, %v7974
    %v7976 = vpop.f32.mrb[0].mxu0
    %7977 = vmatprep.mubr.bf16.mxu0 %v5956
    %7978 = vmatmul.mubr.bf16.gmra.mrb[0].mxu0 %v5955
    %v7979 = vpop.f32.mrb[0].mxu0
    %v7980 = vadd.f32 %v7931, %v7979
    %v7981 = vpop.f32.mrb[0].mxu0
    %v7982 = vpop.f32.mrb[0].mxu0
    %v7983 = vadd.f32 %v7934, %v7982
    %v7984 = vpop.f32.mrb[0].mxu0
    %7985 = vdwg.mxu0
    %7986 = vmatprep.subr.bf16.mxu0 0
    %7987 = vmatpush1.bf16.msra.mxu0 %v7824
    %7988 = vmatprep.subr.bf16.mxu0 0
    %7989 = vmatpush1.bf16.msra.mxu0 %v7825
    %7990 = vmatprep.subr.bf16.mxu0 0
    %7991 = vmatpush1.bf16.msra.mxu0 %v7826
    %7992 = vmatprep.subr.bf16.mxu0 0
    %7993 = vmatpush1.bf16.msra.mxu0 %v7827
    %7994 = vmatprep.subr.bf16.mxu0 0
    %7995 = vmatpush1.bf16.msra.mxu0 %v7828
    %7996 = vmatprep.subr.bf16.mxu0 0
    %7997 = vmatpush1.bf16.msra.mxu0 %v7829
    %7998 = vmatprep.subr.bf16.mxu0 0
    %7999 = vmatpush1.bf16.msra.mxu0 %v7830
    %8000 = vmatprep.subr.bf16.mxu0 0
    %8001 = vmatpush1.bf16.msra.mxu0 %v7831
    %8002 = vmatprep.subr.bf16.mxu0 0
    %8003 = vmatpush1.bf16.msra.mxu0 %v7832
    %8004 = vmatprep.subr.bf16.mxu0 0
    %8005 = vmatpush1.bf16.msra.mxu0 %v7833
    %8006 = vmatprep.subr.bf16.mxu0 0
    %8007 = vmatpush1.bf16.msra.mxu0 %v7834
    %8008 = vmatprep.subr.bf16.mxu0 0
    %8009 = vmatpush1.bf16.msra.mxu0 %v7835
    %8010 = vmatprep.subr.bf16.mxu0 0
    %8011 = vmatpush1.bf16.msra.mxu0 %v7836
    %8012 = vmatprep.subr.bf16.mxu0 0
    %8013 = vmatpush1.bf16.msra.mxu0 %v7837
    %8014 = vmatprep.subr.bf16.mxu0 0
    %8015 = vmatpush1.bf16.msra.mxu0 %v7838
    %8016 = vmatprep.subr.bf16.mxu0 0
    %8017 = vmatpush1.bf16.msra.mxu0 %v7839
    %8018 = vmatprep.mubr.bf16.mxu0 %v5946
    %8019 = vmatmul.mubr.bf16.gmra.mrb[0].mxu0 %v5945
    %v8020 = vpop.f32.mrb[0].mxu0
    %v8021 = vadd.f32 %v7972, %v8020
    %v8022 = vpop.f32.mrb[0].mxu0
    %v8023 = vpop.f32.mrb[0].mxu0
    %v8024 = vadd.f32 %v7975, %v8023
    %v8025 = vpop.f32.mrb[0].mxu0
    %8026 = vmatprep.mubr.bf16.mxu0 %v5958
    %8027 = vmatmul.mubr.bf16.gmra.mrb[0].mxu0 %v5957
    %v8028 = vpop.f32.mrb[0].mxu0
    %v8029 = vadd.f32 %v7980, %v8028
    %v8030 = vpop.f32.mrb[0].mxu0
    %v8031 = vpop.f32.mrb[0].mxu0
    %v8032 = vadd.f32 %v7983, %v8031
    %v8033 = vpop.f32.mrb[0].mxu0
    %8034 = vdwg.mxu0
    %v8131 = vunpack.c.l.b16 %v5509
    %v8132 = vunpack.c.l.b16 %v5510
    %v8133 = vunpack.c.l.b16 %v5511
    %v8134 = vunpack.c.l.b16 %v5512
    %v8135 = vunpack.c.l.b16 %v5513
    %v8136 = vunpack.c.l.b16 %v5514
    %v8137 = vunpack.c.l.b16 %v5515
    %v8138 = vunpack.c.l.b16 %v5516
    %v8139 = vunpack.c.l.b16 %v5517
    %v8140 = vunpack.c.l.b16 %v5518
    %v8141 = vunpack.c.l.b16 %v5519
    %v8142 = vunpack.c.l.b16 %v5520
    %v8143 = vunpack.c.l.b16 %v5521
    %v8144 = vunpack.c.l.b16 %v5522
    %v8145 = vunpack.c.l.b16 %v5523
    %v8146 = vunpack.c.l.b16 %v5524
    %v8147 = vunpack.c.l.b16 %v5525
    %v8148 = vunpack.c.l.b16 %v5526
    %v8149 = vunpack.c.l.b16 %v5527
    %v8150 = vunpack.c.l.b16 %v5528
    %v8151 = vunpack.c.l.b16 %v5529
    %v8152 = vunpack.c.l.b16 %v5530
    %v8153 = vunpack.c.l.b16 %v5531
    %v8154 = vunpack.c.l.b16 %v5532
    %v8155 = vunpack.c.l.b16 %v5533
    %v8156 = vunpack.c.l.b16 %v5534
    %v8157 = vunpack.c.l.b16 %v5535
    %v8158 = vunpack.c.l.b16 %v5536
    %v8159 = vunpack.c.l.b16 %v5537
    %v8160 = vunpack.c.l.b16 %v5538
    %v8161 = vunpack.c.l.b16 %v5539
    %v8162 = vunpack.c.l.b16 %v5540
    %v8163 = vunpack.c.l.b16 %v5541
    %v8164 = vunpack.c.l.b16 %v5542
    %v8165 = vunpack.c.l.b16 %v5543
    %v8166 = vunpack.c.l.b16 %v5544
    %v8167 = vunpack.c.l.b16 %v5545
    %v8168 = vunpack.c.l.b16 %v5546
    %v8169 = vunpack.c.l.b16 %v5547
    %v8170 = vunpack.c.l.b16 %v5548
    %v8171 = vunpack.c.l.b16 %v5549
    %v8172 = vunpack.c.l.b16 %v5550
    %v8173 = vunpack.c.l.b16 %v5551
    %v8174 = vunpack.c.l.b16 %v5552
    %v8175 = vunpack.c.l.b16 %v5553
    %v8176 = vunpack.c.l.b16 %v5554
    %v8177 = vunpack.c.l.b16 %v5555
    %v8178 = vunpack.c.l.b16 %v5556
    %v8179 = vunpack.c.l.b16 %v5557
    %v8180 = vunpack.c.l.b16 %v5558
    %v8181 = vunpack.c.l.b16 %v5559
    %v8182 = vunpack.c.l.b16 %v5560
    %v8183 = vunpack.c.l.b16 %v5561
    %v8184 = vunpack.c.l.b16 %v5562
    %v8185 = vunpack.c.l.b16 %v5563
    %v8186 = vunpack.c.l.b16 %v5564
    %v8187 = vunpack.c.l.b16 %v5565
    %v8188 = vunpack.c.l.b16 %v5566
    %v8189 = vunpack.c.l.b16 %v5567
    %v8190 = vunpack.c.l.b16 %v5568
    %v8191 = vunpack.c.l.b16 %v5569
    %v8192 = vunpack.c.l.b16 %v5570
    %v8193 = vunpack.c.l.b16 %v5571
    %v8194 = vunpack.c.l.b16 %v5572
    %v8195 = vunpack.c.l.b16 %v5573
    %v8196 = vunpack.c.l.b16 %v5574
    %v8197 = vunpack.c.l.b16 %v5575
    %v8198 = vunpack.c.l.b16 %v5576
    %v8199 = vunpack.c.l.b16 %v5577
    %v8200 = vunpack.c.l.b16 %v5578
    %v8201 = vunpack.c.l.b16 %v5579
    %v8202 = vunpack.c.l.b16 %v5580
    %v8203 = vunpack.c.l.b16 %v5581
    %v8204 = vunpack.c.l.b16 %v5582
    %v8205 = vunpack.c.l.b16 %v5583
    %v8206 = vunpack.c.l.b16 %v5584
    %v8207 = vunpack.c.l.b16 %v5585
    %v8208 = vunpack.c.l.b16 %v5586
    %v8209 = vunpack.c.l.b16 %v5587
    %v8210 = vunpack.c.l.b16 %v5588
    %v8211 = vunpack.c.l.b16 %v5589
    %v8212 = vunpack.c.l.b16 %v5590
    %v8213 = vunpack.c.l.b16 %v5591
    %v8214 = vunpack.c.l.b16 %v5592
    %v8215 = vunpack.c.l.b16 %v5593
    %v8216 = vunpack.c.l.b16 %v5594
    %v8217 = vunpack.c.l.b16 %v5595
    %v8218 = vunpack.c.l.b16 %v5596
    %v8219 = vunpack.c.l.b16 %v5597
    %v8220 = vunpack.c.l.b16 %v5598
    %v8221 = vunpack.c.l.b16 %v5599
    %v8222 = vunpack.c.l.b16 %v5600
    %v8223 = vunpack.c.l.b16 %v5601
    %v8224 = vunpack.c.l.b16 %v5602
    %v8225 = vunpack.c.l.b16 %v5603
    %v8226 = vunpack.c.l.b16 %v5604
    %v8227 = vpack.c.b16 %v8132, %v8131
    %v8228 = vpack.c.b16 %v8134, %v8133
    %v8229 = vpack.c.b16 %v8136, %v8135
    %v8230 = vpack.c.b16 %v8138, %v8137
    %v8231 = vpack.c.b16 %v8140, %v8139
    %v8232 = vpack.c.b16 %v8142, %v8141
    %v8233 = vpack.c.b16 %v8144, %v8143
    %v8234 = vpack.c.b16 %v8146, %v8145
    %v8235 = vpack.c.b16 %v8148, %v8147
    %v8236 = vpack.c.b16 %v8150, %v8149
    %v8237 = vpack.c.b16 %v8152, %v8151
    %v8238 = vpack.c.b16 %v8154, %v8153
    %v8239 = vpack.c.b16 %v8156, %v8155
    %v8240 = vpack.c.b16 %v8158, %v8157
    %v8241 = vpack.c.b16 %v8160, %v8159
    %v8242 = vpack.c.b16 %v8162, %v8161
    %v8243 = vpack.c.b16 %v8164, %v8163
    %v8244 = vpack.c.b16 %v8166, %v8165
    %v8245 = vpack.c.b16 %v8168, %v8167
    %v8246 = vpack.c.b16 %v8170, %v8169
    %v8247 = vpack.c.b16 %v8172, %v8171
    %v8248 = vpack.c.b16 %v8174, %v8173
    %v8249 = vpack.c.b16 %v8176, %v8175
    %v8250 = vpack.c.b16 %v8178, %v8177
    %v8251 = vpack.c.b16 %v8180, %v8179
    %v8252 = vpack.c.b16 %v8182, %v8181
    %v8253 = vpack.c.b16 %v8184, %v8183
    %v8254 = vpack.c.b16 %v8186, %v8185
    %v8255 = vpack.c.b16 %v8188, %v8187
    %v8256 = vpack.c.b16 %v8190, %v8189
    %v8257 = vpack.c.b16 %v8192, %v8191
    %v8258 = vpack.c.b16 %v8194, %v8193
    %v8259 = vpack.c.b16 %v8196, %v8195
    %v8260 = vpack.c.b16 %v8198, %v8197
    %v8261 = vpack.c.b16 %v8200, %v8199
    %v8262 = vpack.c.b16 %v8202, %v8201
    %v8263 = vpack.c.b16 %v8204, %v8203
    %v8264 = vpack.c.b16 %v8206, %v8205
    %v8265 = vpack.c.b16 %v8208, %v8207
    %v8266 = vpack.c.b16 %v8210, %v8209
    %v8267 = vpack.c.b16 %v8212, %v8211
    %v8268 = vpack.c.b16 %v8214, %v8213
    %v8269 = vpack.c.b16 %v8216, %v8215
    %v8270 = vpack.c.b16 %v8218, %v8217
    %v8271 = vpack.c.b16 %v8220, %v8219
    %v8272 = vpack.c.b16 %v8222, %v8221
    %v8273 = vpack.c.b16 %v8224, %v8223
    %v8274 = vpack.c.b16 %v8226, %v8225
    %8323 = vmatprep.subr.bf16.mxu0 0
    %8324 = vmatpush1.bf16.msra.mxu0 %v8227
    %8325 = vmatprep.subr.bf16.mxu0 0
    %8326 = vmatpush1.bf16.msra.mxu0 %v8228
    %8327 = vmatprep.subr.bf16.mxu0 0
    %8328 = vmatpush1.bf16.msra.mxu0 %v8229
    %8329 = vmatprep.subr.bf16.mxu0 0
    %8330 = vmatpush1.bf16.msra.mxu0 %v8230
    %8331 = vmatprep.subr.bf16.mxu0 0
    %8332 = vmatpush1.bf16.msra.mxu0 %v8231
    %8333 = vmatprep.subr.bf16.mxu0 0
    %8334 = vmatpush1.bf16.msra.mxu0 %v8232
    %8335 = vmatprep.subr.bf16.mxu0 0
    %8336 = vmatpush1.bf16.msra.mxu0 %v8233
    %8337 = vmatprep.subr.bf16.mxu0 0
    %8338 = vmatpush1.bf16.msra.mxu0 %v8234
    %8339 = vmatprep.subr.bf16.mxu0 0
    %8340 = vmatpush1.bf16.msra.mxu0 %v8235
    %8341 = vmatprep.subr.bf16.mxu0 0
    %8342 = vmatpush1.bf16.msra.mxu0 %v8236
    %8343 = vmatprep.subr.bf16.mxu0 0
    %8344 = vmatpush1.bf16.msra.mxu0 %v8237
    %8345 = vmatprep.subr.bf16.mxu0 0
    %8346 = vmatpush1.bf16.msra.mxu0 %v8238
    %8347 = vmatprep.subr.bf16.mxu0 0
    %8348 = vmatpush1.bf16.msra.mxu0 %v8239
    %8349 = vmatprep.subr.bf16.mxu0 0
    %8350 = vmatpush1.bf16.msra.mxu0 %v8240
    %8351 = vmatprep.subr.bf16.mxu0 0
    %8352 = vmatpush1.bf16.msra.mxu0 %v8241
    %8353 = vmatprep.subr.bf16.mxu0 0
    %8354 = vmatpush1.bf16.msra.mxu0 %v8242
    %8355 = vmatprep.mubr.bf16.mxu0 %v7142
    %8356 = vmatmul.mubr.bf16.gmra.mrb[0].mxu0 %v7141
    %v8357 = vpop.f32.mrb[0].mxu0
    %v8358 = vadd.f32 0.0, %v8357
    %v8359 = vpop.f32.mrb[0].mxu0
    %v8360 = vpop.f32.mrb[0].mxu0
    %v8361 = vadd.f32 0.0, %v8360
    %v8362 = vpop.f32.mrb[0].mxu0
    %8363 = vmatprep.mubr.bf16.mxu0 %v7154
    %8364 = vmatmul.mubr.bf16.gmra.mrb[0].mxu0 %v7153
    %v8365 = vpop.f32.mrb[0].mxu0
    %v8366 = vadd.f32 0.0, %v8365
    %v8367 = vpop.f32.mrb[0].mxu0
    %v8368 = vpop.f32.mrb[0].mxu0
    %v8369 = vadd.f32 0.0, %v8368
    %v8370 = vpop.f32.mrb[0].mxu0
    %8371 = vdwg.mxu0
    %8372 = vmatprep.subr.bf16.mxu0 0
    %8373 = vmatpush1.bf16.msra.mxu0 %v8243
    %8374 = vmatprep.subr.bf16.mxu0 0
    %8375 = vmatpush1.bf16.msra.mxu0 %v8244
    %8376 = vmatprep.subr.bf16.mxu0 0
    %8377 = vmatpush1.bf16.msra.mxu0 %v8245
    %8378 = vmatprep.subr.bf16.mxu0 0
    %8379 = vmatpush1.bf16.msra.mxu0 %v8246
    %8380 = vmatprep.subr.bf16.mxu0 0
    %8381 = vmatpush1.bf16.msra.mxu0 %v8247
    %8382 = vmatprep.subr.bf16.mxu0 0
    %8383 = vmatpush1.bf16.msra.mxu0 %v8248
    %8384 = vmatprep.subr.bf16.mxu0 0
    %8385 = vmatpush1.bf16.msra.mxu0 %v8249
    %8386 = vmatprep.subr.bf16.mxu0 0
    %8387 = vmatpush1.bf16.msra.mxu0 %v8250
    %8388 = vmatprep.subr.bf16.mxu0 0
    %8389 = vmatpush1.bf16.msra.mxu0 %v8251
    %8390 = vmatprep.subr.bf16.mxu0 0
    %8391 = vmatpush1.bf16.msra.mxu0 %v8252
    %8392 = vmatprep.subr.bf16.mxu0 0
    %8393 = vmatpush1.bf16.msra.mxu0 %v8253
    %8394 = vmatprep.subr.bf16.mxu0 0
    %8395 = vmatpush1.bf16.msra.mxu0 %v8254
    %8396 = vmatprep.subr.bf16.mxu0 0
    %8397 = vmatpush1.bf16.msra.mxu0 %v8255
    %8398 = vmatprep.subr.bf16.mxu0 0
    %8399 = vmatpush1.bf16.msra.mxu0 %v8256
    %8400 = vmatprep.subr.bf16.mxu0 0
    %8401 = vmatpush1.bf16.msra.mxu0 %v8257
    %8402 = vmatprep.subr.bf16.mxu0 0
    %8403 = vmatpush1.bf16.msra.mxu0 %v8258
    %8404 = vmatprep.mubr.bf16.mxu0 %v7144
    %8405 = vmatmul.mubr.bf16.gmra.mrb[0].mxu0 %v7143
    %v8406 = vpop.f32.mrb[0].mxu0
    %v8407 = vadd.f32 %v8358, %v8406
    %v8408 = vpop.f32.mrb[0].mxu0
    %v8409 = vpop.f32.mrb[0].mxu0
    %v8410 = vadd.f32 %v8361, %v8409
    %v8411 = vpop.f32.mrb[0].mxu0
    %8412 = vmatprep.mubr.bf16.mxu0 %v7156
    %8413 = vmatmul.mubr.bf16.gmra.mrb[0].mxu0 %v7155
    %v8414 = vpop.f32.mrb[0].mxu0
    %v8415 = vadd.f32 %v8366, %v8414
    %v8416 = vpop.f32.mrb[0].mxu0
    %v8417 = vpop.f32.mrb[0].mxu0
    %v8418 = vadd.f32 %v8369, %v8417
    %v8419 = vpop.f32.mrb[0].mxu0
    %8420 = vdwg.mxu0
    %8421 = vmatprep.subr.bf16.mxu0 0
    %8422 = vmatpush1.bf16.msra.mxu0 %v8259
    %8423 = vmatprep.subr.bf16.mxu0 0
    %8424 = vmatpush1.bf16.msra.mxu0 %v8260
    %8425 = vmatprep.subr.bf16.mxu0 0
    %8426 = vmatpush1.bf16.msra.mxu0 %v8261
    %8427 = vmatprep.subr.bf16.mxu0 0
    %8428 = vmatpush1.bf16.msra.mxu0 %v8262
    %8429 = vmatprep.subr.bf16.mxu0 0
    %8430 = vmatpush1.bf16.msra.mxu0 %v8263
    %8431 = vmatprep.subr.bf16.mxu0 0
    %8432 = vmatpush1.bf16.msra.mxu0 %v8264
    %8433 = vmatprep.subr.bf16.mxu0 0
    %8434 = vmatpush1.bf16.msra.mxu0 %v8265
    %8435 = vmatprep.subr.bf16.mxu0 0
    %8436 = vmatpush1.bf16.msra.mxu0 %v8266
    %8437 = vmatprep.subr.bf16.mxu0 0
    %8438 = vmatpush1.bf16.msra.mxu0 %v8267
    %8439 = vmatprep.subr.bf16.mxu0 0
    %8440 = vmatpush1.bf16.msra.mxu0 %v8268
    %8441 = vmatprep.subr.bf16.mxu0 0
    %8442 = vmatpush1.bf16.msra.mxu0 %v8269
    %8443 = vmatprep.subr.bf16.mxu0 0
    %8444 = vmatpush1.bf16.msra.mxu0 %v8270
    %8445 = vmatprep.subr.bf16.mxu0 0
    %8446 = vmatpush1.bf16.msra.mxu0 %v8271
    %8447 = vmatprep.subr.bf16.mxu0 0
    %8448 = vmatpush1.bf16.msra.mxu0 %v8272
    %8449 = vmatprep.subr.bf16.mxu0 0
    %8450 = vmatpush1.bf16.msra.mxu0 %v8273
    %8451 = vmatprep.subr.bf16.mxu0 0
    %8452 = vmatpush1.bf16.msra.mxu0 %v8274
    %8453 = vmatprep.mubr.bf16.mxu0 %v7146
    %8454 = vmatmul.mubr.bf16.gmra.mrb[0].mxu0 %v7145
    %v8455 = vpop.f32.mrb[0].mxu0
    %v8456 = vadd.f32 %v8407, %v8455
    %v8457 = vpop.f32.mrb[0].mxu0
    %v8458 = vpop.f32.mrb[0].mxu0
    %v8459 = vadd.f32 %v8410, %v8458
    %v8460 = vpop.f32.mrb[0].mxu0
    %8461 = vmatprep.mubr.bf16.mxu0 %v7158
    %8462 = vmatmul.mubr.bf16.gmra.mrb[0].mxu0 %v7157
    %v8463 = vpop.f32.mrb[0].mxu0
    %v8464 = vadd.f32 %v8415, %v8463
    %v8465 = vpop.f32.mrb[0].mxu0
    %v8466 = vpop.f32.mrb[0].mxu0
    %v8467 = vadd.f32 %v8418, %v8466
    %v8468 = vpop.f32.mrb[0].mxu0
    %8469 = vdwg.mxu0
    %v8470 = vadd.f32 %v8021, %v8456
    %v8471 = vadd.f32 %v8024, %v8459
    %v8472 = vadd.f32 %v8029, %v8464
    %v8473 = vadd.f32 %v8032, %v8467
    %v8474 = vtanh.pop %v8470
    %v8475 = vtanh.pop %v8471
    %v8476 = vtanh.pop %v8472
    %v8477 = vtanh.pop %v8473
    %8478 = vst [vmem:[#allocation13] sm:$0xff] %v8474
    %8479 = vst [vmem:[#allocation13 + $0x20] sm:$0xff] %v8475
    %8480 = vst [vmem:[#allocation13 + $0x40] sm:$0xff] %v8476
    %8481 = vst [vmem:[#allocation13 + $0x60] sm:$0xff] %v8477
    %8482 = vmatprep.subr.bf16.mxu0 0
    %8483 = vmatpush1.bf16.msra.mxu0 %v7357
    %8484 = vmatprep.subr.bf16.mxu0 0
    %8485 = vmatpush1.bf16.msra.mxu0 %v7358
    %8486 = vmatprep.subr.bf16.mxu0 0
    %8487 = vmatpush1.bf16.msra.mxu0 %v7359
    %8488 = vmatprep.subr.bf16.mxu0 0
    %8489 = vmatpush1.bf16.msra.mxu0 %v7360
    %8490 = vmatprep.subr.bf16.mxu0 0
    %8491 = vmatpush1.bf16.msra.mxu0 %v7361
    %8492 = vmatprep.subr.bf16.mxu0 0
    %8493 = vmatpush1.bf16.msra.mxu0 %v7362
    %8494 = vmatprep.subr.bf16.mxu0 0
    %8495 = vmatpush1.bf16.msra.mxu0 %v7363
    %8496 = vmatprep.subr.bf16.mxu0 0
    %8497 = vmatpush1.bf16.msra.mxu0 %v7364
    %8498 = vmatprep.subr.bf16.mxu0 0
    %8499 = vmatpush1.bf16.msra.mxu0 %v7365
    %8500 = vmatprep.subr.bf16.mxu0 0
    %8501 = vmatpush1.bf16.msra.mxu0 %v7366
    %8502 = vmatprep.subr.bf16.mxu0 0
    %8503 = vmatpush1.bf16.msra.mxu0 %v7367
    %8504 = vmatprep.subr.bf16.mxu0 0
    %8505 = vmatpush1.bf16.msra.mxu0 %v7368
    %8506 = vmatprep.subr.bf16.mxu0 0
    %8507 = vmatpush1.bf16.msra.mxu0 %v7369
    %8508 = vmatprep.subr.bf16.mxu0 0
    %8509 = vmatpush1.bf16.msra.mxu0 %v7370
    %8510 = vmatprep.subr.bf16.mxu0 0
    %8511 = vmatpush1.bf16.msra.mxu0 %v7371
    %8512 = vmatprep.subr.bf16.mxu0 0
    %8513 = vmatpush1.bf16.msra.mxu0 %v7372
    %8514 = vmatprep.mubr.bf16.mxu0 %v6544
    %8515 = vmatmul.mubr.bf16.gmra.mrb[0].mxu0 %v6543
    %v8516 = vpop.f32.mrb[0].mxu0
    %v8517 = vadd.f32 0.0, %v8516
    %v8518 = vpop.f32.mrb[0].mxu0
    %v8519 = vpop.f32.mrb[0].mxu0
    %v8520 = vadd.f32 0.0, %v8519
    %v8521 = vpop.f32.mrb[0].mxu0
    %8522 = vmatprep.mubr.bf16.mxu0 %v6556
    %8523 = vmatmul.mubr.bf16.gmra.mrb[0].mxu0 %v6555
    %v8524 = vpop.f32.mrb[0].mxu0
    %v8525 = vadd.f32 0.0, %v8524
    %v8526 = vpop.f32.mrb[0].mxu0
    %v8527 = vpop.f32.mrb[0].mxu0
    %v8528 = vadd.f32 0.0, %v8527
    %v8529 = vpop.f32.mrb[0].mxu0
    %8530 = vdwg.mxu0
    %8531 = vmatprep.subr.bf16.mxu0 0
    %8532 = vmatpush1.bf16.msra.mxu0 %v7373
    %8533 = vmatprep.subr.bf16.mxu0 0
    %8534 = vmatpush1.bf16.msra.mxu0 %v7374
    %8535 = vmatprep.subr.bf16.mxu0 0
    %8536 = vmatpush1.bf16.msra.mxu0 %v7375
    %8537 = vmatprep.subr.bf16.mxu0 0
    %8538 = vmatpush1.bf16.msra.mxu0 %v7376
    %8539 = vmatprep.subr.bf16.mxu0 0
    %8540 = vmatpush1.bf16.msra.mxu0 %v7377
    %8541 = vmatprep.subr.bf16.mxu0 0
    %8542 = vmatpush1.bf16.msra.mxu0 %v7378
    %8543 = vmatprep.subr.bf16.mxu0 0
    %8544 = vmatpush1.bf16.msra.mxu0 %v7379
    %8545 = vmatprep.subr.bf16.mxu0 0
    %8546 = vmatpush1.bf16.msra.mxu0 %v7380
    %8547 = vmatprep.subr.bf16.mxu0 0
    %8548 = vmatpush1.bf16.msra.mxu0 %v7381
    %8549 = vmatprep.subr.bf16.mxu0 0
    %8550 = vmatpush1.bf16.msra.mxu0 %v7382
    %8551 = vmatprep.subr.bf16.mxu0 0
    %8552 = vmatpush1.bf16.msra.mxu0 %v7383
    %8553 = vmatprep.subr.bf16.mxu0 0
    %8554 = vmatpush1.bf16.msra.mxu0 %v7384
    %8555 = vmatprep.subr.bf16.mxu0 0
    %8556 = vmatpush1.bf16.msra.mxu0 %v7385
    %8557 = vmatprep.subr.bf16.mxu0 0
    %8558 = vmatpush1.bf16.msra.mxu0 %v7386
    %8559 = vmatprep.subr.bf16.mxu0 0
    %8560 = vmatpush1.bf16.msra.mxu0 %v7387
    %8561 = vmatprep.subr.bf16.mxu0 0
    %8562 = vmatpush1.bf16.msra.mxu0 %v7388
    %8563 = vmatprep.mubr.bf16.mxu0 %v6546
    %8564 = vmatmul.mubr.bf16.gmra.mrb[0].mxu0 %v6545
    %v8565 = vpop.f32.mrb[0].mxu0
    %v8566 = vadd.f32 %v8517, %v8565
    %v8567 = vpop.f32.mrb[0].mxu0
    %v8568 = vpop.f32.mrb[0].mxu0
    %v8569 = vadd.f32 %v8520, %v8568
    %v8570 = vpop.f32.mrb[0].mxu0
    %8571 = vmatprep.mubr.bf16.mxu0 %v6558
    %8572 = vmatmul.mubr.bf16.gmra.mrb[0].mxu0 %v6557
    %v8573 = vpop.f32.mrb[0].mxu0
    %v8574 = vadd.f32 %v8525, %v8573
    %v8575 = vpop.f32.mrb[0].mxu0
    %v8576 = vpop.f32.mrb[0].mxu0
    %v8577 = vadd.f32 %v8528, %v8576
    %v8578 = vpop.f32.mrb[0].mxu0
    %8579 = vdwg.mxu0
    %8580 = vmatprep.subr.bf16.mxu0 0
    %8581 = vmatpush1.bf16.msra.mxu0 %v7389
    %8582 = vmatprep.subr.bf16.mxu0 0
    %8583 = vmatpush1.bf16.msra.mxu0 %v7390
    %8584 = vmatprep.subr.bf16.mxu0 0
    %8585 = vmatpush1.bf16.msra.mxu0 %v7391
    %8586 = vmatprep.subr.bf16.mxu0 0
    %8587 = vmatpush1.bf16.msra.mxu0 %v7392
    %8588 = vmatprep.subr.bf16.mxu0 0
    %8589 = vmatpush1.bf16.msra.mxu0 %v7393
    %8590 = vmatprep.subr.bf16.mxu0 0
    %8591 = vmatpush1.bf16.msra.mxu0 %v7394
    %8592 = vmatprep.subr.bf16.mxu0 0
    %8593 = vmatpush1.bf16.msra.mxu0 %v7395
    %8594 = vmatprep.subr.bf16.mxu0 0
    %8595 = vmatpush1.bf16.msra.mxu0 %v7396
    %8596 = vmatprep.subr.bf16.mxu0 0
    %8597 = vmatpush1.bf16.msra.mxu0 %v7397
    %8598 = vmatprep.subr.bf16.mxu0 0
    %8599 = vmatpush1.bf16.msra.mxu0 %v7398
    %8600 = vmatprep.subr.bf16.mxu0 0
    %8601 = vmatpush1.bf16.msra.mxu0 %v7399
    %8602 = vmatprep.subr.bf16.mxu0 0
    %8603 = vmatpush1.bf16.msra.mxu0 %v7400
    %8604 = vmatprep.subr.bf16.mxu0 0
    %8605 = vmatpush1.bf16.msra.mxu0 %v7401
    %8606 = vmatprep.subr.bf16.mxu0 0
    %8607 = vmatpush1.bf16.msra.mxu0 %v7402
    %8608 = vmatprep.subr.bf16.mxu0 0
    %8609 = vmatpush1.bf16.msra.mxu0 %v7403
    %8610 = vmatprep.subr.bf16.mxu0 0
    %8611 = vmatpush1.bf16.msra.mxu0 %v7404
    %8612 = vmatprep.mubr.bf16.mxu0 %v6548
    %8613 = vmatmul.mubr.bf16.gmra.mrb[0].mxu0 %v6547
    %v8614 = vpop.f32.mrb[0].mxu0
    %v8615 = vadd.f32 %v8566, %v8614
    %v8616 = vpop.f32.mrb[0].mxu0
    %v8617 = vpop.f32.mrb[0].mxu0
    %v8618 = vadd.f32 %v8569, %v8617
    %v8619 = vpop.f32.mrb[0].mxu0
    %8620 = vmatprep.mubr.bf16.mxu0 %v6560
    %8621 = vmatmul.mubr.bf16.gmra.mrb[0].mxu0 %v6559
    %v8622 = vpop.f32.mrb[0].mxu0
    %v8623 = vadd.f32 %v8574, %v8622
    %v8624 = vpop.f32.mrb[0].mxu0
    %v8625 = vpop.f32.mrb[0].mxu0
    %v8626 = vadd.f32 %v8577, %v8625
    %v8627 = vpop.f32.mrb[0].mxu0
    %8628 = vdwg.mxu0
    %8629 = vmatprep.subr.bf16.mxu0 0
    %8630 = vmatpush1.bf16.msra.mxu0 %v7792
    %8631 = vmatprep.subr.bf16.mxu0 0
    %8632 = vmatpush1.bf16.msra.mxu0 %v7793
    %8633 = vmatprep.subr.bf16.mxu0 0
    %8634 = vmatpush1.bf16.msra.mxu0 %v7794
    %8635 = vmatprep.subr.bf16.mxu0 0
    %8636 = vmatpush1.bf16.msra.mxu0 %v7795
    %8637 = vmatprep.subr.bf16.mxu0 0
    %8638 = vmatpush1.bf16.msra.mxu0 %v7796
    %8639 = vmatprep.subr.bf16.mxu0 0
    %8640 = vmatpush1.bf16.msra.mxu0 %v7797
    %8641 = vmatprep.subr.bf16.mxu0 0
    %8642 = vmatpush1.bf16.msra.mxu0 %v7798
    %8643 = vmatprep.subr.bf16.mxu0 0
    %8644 = vmatpush1.bf16.msra.mxu0 %v7799
    %8645 = vmatprep.subr.bf16.mxu0 0
    %8646 = vmatpush1.bf16.msra.mxu0 %v7800
    %8647 = vmatprep.subr.bf16.mxu0 0
    %8648 = vmatpush1.bf16.msra.mxu0 %v7801
    %8649 = vmatprep.subr.bf16.mxu0 0
    %8650 = vmatpush1.bf16.msra.mxu0 %v7802
    %8651 = vmatprep.subr.bf16.mxu0 0
    %8652 = vmatpush1.bf16.msra.mxu0 %v7803
    %8653 = vmatprep.subr.bf16.mxu0 0
    %8654 = vmatpush1.bf16.msra.mxu0 %v7804
    %8655 = vmatprep.subr.bf16.mxu0 0
    %8656 = vmatpush1.bf16.msra.mxu0 %v7805
    %8657 = vmatprep.subr.bf16.mxu0 0
    %8658 = vmatpush1.bf16.msra.mxu0 %v7806
    %8659 = vmatprep.subr.bf16.mxu0 0
    %8660 = vmatpush1.bf16.msra.mxu0 %v7807
    %8661 = vmatprep.mubr.bf16.mxu0 %v5944
    %8662 = vmatmul.mubr.bf16.gmra.mrb[0].mxu0 %v5943
    %v8663 = vpop.f32.mrb[0].mxu0
    %v8664 = vadd.f32 %v8615, %v8663
    %v8665 = vpop.f32.mrb[0].mxu0
    %v8666 = vpop.f32.mrb[0].mxu0
    %v8667 = vadd.f32 %v8618, %v8666
    %v8668 = vpop.f32.mrb[0].mxu0
    %8669 = vmatprep.mubr.bf16.mxu0 %v5956
    %8670 = vmatmul.mubr.bf16.gmra.mrb[0].mxu0 %v5955
    %v8671 = vpop.f32.mrb[0].mxu0
    %v8672 = vadd.f32 %v8623, %v8671
    %v8673 = vpop.f32.mrb[0].mxu0
    %v8674 = vpop.f32.mrb[0].mxu0
    %v8675 = vadd.f32 %v8626, %v8674
    %v8676 = vpop.f32.mrb[0].mxu0
    %8677 = vdwg.mxu0
    %8678 = vmatprep.subr.bf16.mxu0 0
    %8679 = vmatpush1.bf16.msra.mxu0 %v7808
    %8680 = vmatprep.subr.bf16.mxu0 0
    %8681 = vmatpush1.bf16.msra.mxu0 %v7809
    %8682 = vmatprep.subr.bf16.mxu0 0
    %8683 = vmatpush1.bf16.msra.mxu0 %v7810
    %8684 = vmatprep.subr.bf16.mxu0 0
    %8685 = vmatpush1.bf16.msra.mxu0 %v7811
    %8686 = vmatprep.subr.bf16.mxu0 0
    %8687 = vmatpush1.bf16.msra.mxu0 %v7812
    %8688 = vmatprep.subr.bf16.mxu0 0
    %8689 = vmatpush1.bf16.msra.mxu0 %v7813
    %8690 = vmatprep.subr.bf16.mxu0 0
    %8691 = vmatpush1.bf16.msra.mxu0 %v7814
    %8692 = vmatprep.subr.bf16.mxu0 0
    %8693 = vmatpush1.bf16.msra.mxu0 %v7815
    %8694 = vmatprep.subr.bf16.mxu0 0
    %8695 = vmatpush1.bf16.msra.mxu0 %v7816
    %8696 = vmatprep.subr.bf16.mxu0 0
    %8697 = vmatpush1.bf16.msra.mxu0 %v7817
    %8698 = vmatprep.subr.bf16.mxu0 0
    %8699 = vmatpush1.bf16.msra.mxu0 %v7818
    %8700 = vmatprep.subr.bf16.mxu0 0
    %8701 = vmatpush1.bf16.msra.mxu0 %v7819
    %8702 = vmatprep.subr.bf16.mxu0 0
    %8703 = vmatpush1.bf16.msra.mxu0 %v7820
    %8704 = vmatprep.subr.bf16.mxu0 0
    %8705 = vmatpush1.bf16.msra.mxu0 %v7821
    %8706 = vmatprep.subr.bf16.mxu0 0
    %8707 = vmatpush1.bf16.msra.mxu0 %v7822
    %8708 = vmatprep.subr.bf16.mxu0 0
    %8709 = vmatpush1.bf16.msra.mxu0 %v7823
    %8710 = vmatprep.mubr.bf16.mxu0 %v5946
    %8711 = vmatmul.mubr.bf16.gmra.mrb[0].mxu0 %v5945
    %v8712 = vpop.f32.mrb[0].mxu0
    %v8713 = vadd.f32 %v8664, %v8712
    %v8714 = vpop.f32.mrb[0].mxu0
    %v8715 = vpop.f32.mrb[0].mxu0
    %v8716 = vadd.f32 %v8667, %v8715
    %v8717 = vpop.f32.mrb[0].mxu0
    %8718 = vmatprep.mubr.bf16.mxu0 %v5958
    %8719 = vmatmul.mubr.bf16.gmra.mrb[0].mxu0 %v5957
    %v8720 = vpop.f32.mrb[0].mxu0
    %v8721 = vadd.f32 %v8672, %v8720
    %v8722 = vpop.f32.mrb[0].mxu0
    %v8723 = vpop.f32.mrb[0].mxu0
    %v8724 = vadd.f32 %v8675, %v8723
    %v8725 = vpop.f32.mrb[0].mxu0
    %8726 = vdwg.mxu0
    %8727 = vmatprep.subr.bf16.mxu0 0
    %8728 = vmatpush1.bf16.msra.mxu0 %v7824
    %8729 = vmatprep.subr.bf16.mxu0 0
    %8730 = vmatpush1.bf16.msra.mxu0 %v7825
    %8731 = vmatprep.subr.bf16.mxu0 0
    %8732 = vmatpush1.bf16.msra.mxu0 %v7826
    %8733 = vmatprep.subr.bf16.mxu0 0
    %8734 = vmatpush1.bf16.msra.mxu0 %v7827
    %8735 = vmatprep.subr.bf16.mxu0 0
    %8736 = vmatpush1.bf16.msra.mxu0 %v7828
    %8737 = vmatprep.subr.bf16.mxu0 0
    %8738 = vmatpush1.bf16.msra.mxu0 %v7829
    %8739 = vmatprep.subr.bf16.mxu0 0
    %8740 = vmatpush1.bf16.msra.mxu0 %v7830
    %8741 = vmatprep.subr.bf16.mxu0 0
    %8742 = vmatpush1.bf16.msra.mxu0 %v7831
    %8743 = vmatprep.subr.bf16.mxu0 0
    %8744 = vmatpush1.bf16.msra.mxu0 %v7832
    %8745 = vmatprep.subr.bf16.mxu0 0
    %8746 = vmatpush1.bf16.msra.mxu0 %v7833
    %8747 = vmatprep.subr.bf16.mxu0 0
    %8748 = vmatpush1.bf16.msra.mxu0 %v7834
    %8749 = vmatprep.subr.bf16.mxu0 0
    %8750 = vmatpush1.bf16.msra.mxu0 %v7835
    %8751 = vmatprep.subr.bf16.mxu0 0
    %8752 = vmatpush1.bf16.msra.mxu0 %v7836
    %8753 = vmatprep.subr.bf16.mxu0 0
    %8754 = vmatpush1.bf16.msra.mxu0 %v7837
    %8755 = vmatprep.subr.bf16.mxu0 0
    %8756 = vmatpush1.bf16.msra.mxu0 %v7838
    %8757 = vmatprep.subr.bf16.mxu0 0
    %8758 = vmatpush1.bf16.msra.mxu0 %v7839
    %8759 = vmatprep.mubr.bf16.mxu0 %v5948
    %8760 = vmatmul.mubr.bf16.gmra.mrb[0].mxu0 %v5947
    %v8761 = vpop.f32.mrb[0].mxu0
    %v8762 = vadd.f32 %v8713, %v8761
    %v8763 = vpop.f32.mrb[0].mxu0
    %v8764 = vpop.f32.mrb[0].mxu0
    %v8765 = vadd.f32 %v8716, %v8764
    %v8766 = vpop.f32.mrb[0].mxu0
    %8767 = vmatprep.mubr.bf16.mxu0 %v5960
    %8768 = vmatmul.mubr.bf16.gmra.mrb[0].mxu0 %v5959
    %v8769 = vpop.f32.mrb[0].mxu0
    %v8770 = vadd.f32 %v8721, %v8769
    %v8771 = vpop.f32.mrb[0].mxu0
    %v8772 = vpop.f32.mrb[0].mxu0
    %v8773 = vadd.f32 %v8724, %v8772
    %v8774 = vpop.f32.mrb[0].mxu0
    %8775 = vdwg.mxu0
    %8776 = vmatprep.subr.bf16.mxu0 0
    %8777 = vmatpush1.bf16.msra.mxu0 %v8227
    %8778 = vmatprep.subr.bf16.mxu0 0
    %8779 = vmatpush1.bf16.msra.mxu0 %v8228
    %8780 = vmatprep.subr.bf16.mxu0 0
    %8781 = vmatpush1.bf16.msra.mxu0 %v8229
    %8782 = vmatprep.subr.bf16.mxu0 0
    %8783 = vmatpush1.bf16.msra.mxu0 %v8230
    %8784 = vmatprep.subr.bf16.mxu0 0
    %8785 = vmatpush1.bf16.msra.mxu0 %v8231
    %8786 = vmatprep.subr.bf16.mxu0 0
    %8787 = vmatpush1.bf16.msra.mxu0 %v8232
    %8788 = vmatprep.subr.bf16.mxu0 0
    %8789 = vmatpush1.bf16.msra.mxu0 %v8233
    %8790 = vmatprep.subr.bf16.mxu0 0
    %8791 = vmatpush1.bf16.msra.mxu0 %v8234
    %8792 = vmatprep.subr.bf16.mxu0 0
    %8793 = vmatpush1.bf16.msra.mxu0 %v8235
    %8794 = vmatprep.subr.bf16.mxu0 0
    %8795 = vmatpush1.bf16.msra.mxu0 %v8236
    %8796 = vmatprep.subr.bf16.mxu0 0
    %8797 = vmatpush1.bf16.msra.mxu0 %v8237
    %8798 = vmatprep.subr.bf16.mxu0 0
    %8799 = vmatpush1.bf16.msra.mxu0 %v8238
    %8800 = vmatprep.subr.bf16.mxu0 0
    %8801 = vmatpush1.bf16.msra.mxu0 %v8239
    %8802 = vmatprep.subr.bf16.mxu0 0
    %8803 = vmatpush1.bf16.msra.mxu0 %v8240
    %8804 = vmatprep.subr.bf16.mxu0 0
    %8805 = vmatpush1.bf16.msra.mxu0 %v8241
    %8806 = vmatprep.subr.bf16.mxu0 0
    %8807 = vmatpush1.bf16.msra.mxu0 %v8242
    %8808 = vmatprep.mubr.bf16.mxu0 %v7144
    %8809 = vmatmul.mubr.bf16.gmra.mrb[0].mxu0 %v7143
    %v8810 = vpop.f32.mrb[0].mxu0
    %v8811 = vadd.f32 0.0, %v8810
    %v8812 = vpop.f32.mrb[0].mxu0
    %v8813 = vpop.f32.mrb[0].mxu0
    %v8814 = vadd.f32 0.0, %v8813
    %v8815 = vpop.f32.mrb[0].mxu0
    %8816 = vmatprep.mubr.bf16.mxu0 %v7156
    %8817 = vmatmul.mubr.bf16.gmra.mrb[0].mxu0 %v7155
    %v8818 = vpop.f32.mrb[0].mxu0
    %v8819 = vadd.f32 0.0, %v8818
    %v8820 = vpop.f32.mrb[0].mxu0
    %v8821 = vpop.f32.mrb[0].mxu0
    %v8822 = vadd.f32 0.0, %v8821
    %v8823 = vpop.f32.mrb[0].mxu0
    %8824 = vdwg.mxu0
    %8825 = vmatprep.subr.bf16.mxu0 0
    %8826 = vmatpush1.bf16.msra.mxu0 %v8243
    %8827 = vmatprep.subr.bf16.mxu0 0
    %8828 = vmatpush1.bf16.msra.mxu0 %v8244
    %8829 = vmatprep.subr.bf16.mxu0 0
    %8830 = vmatpush1.bf16.msra.mxu0 %v8245
    %8831 = vmatprep.subr.bf16.mxu0 0
    %8832 = vmatpush1.bf16.msra.mxu0 %v8246
    %8833 = vmatprep.subr.bf16.mxu0 0
    %8834 = vmatpush1.bf16.msra.mxu0 %v8247
    %8835 = vmatprep.subr.bf16.mxu0 0
    %8836 = vmatpush1.bf16.msra.mxu0 %v8248
    %8837 = vmatprep.subr.bf16.mxu0 0
    %8838 = vmatpush1.bf16.msra.mxu0 %v8249
    %8839 = vmatprep.subr.bf16.mxu0 0
    %8840 = vmatpush1.bf16.msra.mxu0 %v8250
    %8841 = vmatprep.subr.bf16.mxu0 0
    %8842 = vmatpush1.bf16.msra.mxu0 %v8251
    %8843 = vmatprep.subr.bf16.mxu0 0
    %8844 = vmatpush1.bf16.msra.mxu0 %v8252
    %8845 = vmatprep.subr.bf16.mxu0 0
    %8846 = vmatpush1.bf16.msra.mxu0 %v8253
    %8847 = vmatprep.subr.bf16.mxu0 0
    %8848 = vmatpush1.bf16.msra.mxu0 %v8254
    %8849 = vmatprep.subr.bf16.mxu0 0
    %8850 = vmatpush1.bf16.msra.mxu0 %v8255
    %8851 = vmatprep.subr.bf16.mxu0 0
    %8852 = vmatpush1.bf16.msra.mxu0 %v8256
    %8853 = vmatprep.subr.bf16.mxu0 0
    %8854 = vmatpush1.bf16.msra.mxu0 %v8257
    %8855 = vmatprep.subr.bf16.mxu0 0
    %8856 = vmatpush1.bf16.msra.mxu0 %v8258
    %8857 = vmatprep.mubr.bf16.mxu0 %v7146
    %8858 = vmatmul.mubr.bf16.gmra.mrb[0].mxu0 %v7145
    %v8859 = vpop.f32.mrb[0].mxu0
    %v8860 = vadd.f32 %v8811, %v8859
    %v8861 = vpop.f32.mrb[0].mxu0
    %v8862 = vpop.f32.mrb[0].mxu0
    %v8863 = vadd.f32 %v8814, %v8862
    %v8864 = vpop.f32.mrb[0].mxu0
    %8865 = vmatprep.mubr.bf16.mxu0 %v7158
    %8866 = vmatmul.mubr.bf16.gmra.mrb[0].mxu0 %v7157
    %v8867 = vpop.f32.mrb[0].mxu0
    %v8868 = vadd.f32 %v8819, %v8867
    %v8869 = vpop.f32.mrb[0].mxu0
    %v8870 = vpop.f32.mrb[0].mxu0
    %v8871 = vadd.f32 %v8822, %v8870
    %v8872 = vpop.f32.mrb[0].mxu0
    %8873 = vdwg.mxu0
    %8874 = vmatprep.subr.bf16.mxu0 0
    %8875 = vmatpush1.bf16.msra.mxu0 %v8259
    %8876 = vmatprep.subr.bf16.mxu0 0
    %8877 = vmatpush1.bf16.msra.mxu0 %v8260
    %8878 = vmatprep.subr.bf16.mxu0 0
    %8879 = vmatpush1.bf16.msra.mxu0 %v8261
    %8880 = vmatprep.subr.bf16.mxu0 0
    %8881 = vmatpush1.bf16.msra.mxu0 %v8262
    %8882 = vmatprep.subr.bf16.mxu0 0
    %8883 = vmatpush1.bf16.msra.mxu0 %v8263
    %8884 = vmatprep.subr.bf16.mxu0 0
    %8885 = vmatpush1.bf16.msra.mxu0 %v8264
    %8886 = vmatprep.subr.bf16.mxu0 0
    %8887 = vmatpush1.bf16.msra.mxu0 %v8265
    %8888 = vmatprep.subr.bf16.mxu0 0
    %8889 = vmatpush1.bf16.msra.mxu0 %v8266
    %8890 = vmatprep.subr.bf16.mxu0 0
    %8891 = vmatpush1.bf16.msra.mxu0 %v8267
    %8892 = vmatprep.subr.bf16.mxu0 0
    %8893 = vmatpush1.bf16.msra.mxu0 %v8268
    %8894 = vmatprep.subr.bf16.mxu0 0
    %8895 = vmatpush1.bf16.msra.mxu0 %v8269
    %8896 = vmatprep.subr.bf16.mxu0 0
    %8897 = vmatpush1.bf16.msra.mxu0 %v8270
    %8898 = vmatprep.subr.bf16.mxu0 0
    %8899 = vmatpush1.bf16.msra.mxu0 %v8271
    %8900 = vmatprep.subr.bf16.mxu0 0
    %8901 = vmatpush1.bf16.msra.mxu0 %v8272
    %8902 = vmatprep.subr.bf16.mxu0 0
    %8903 = vmatpush1.bf16.msra.mxu0 %v8273
    %8904 = vmatprep.subr.bf16.mxu0 0
    %8905 = vmatpush1.bf16.msra.mxu0 %v8274
    %8906 = vmatprep.mubr.bf16.mxu0 %v7148
    %8907 = vmatmul.mubr.bf16.gmra.mrb[0].mxu0 %v7147
    %v8908 = vpop.f32.mrb[0].mxu0
    %v8909 = vadd.f32 %v8860, %v8908
    %v8910 = vpop.f32.mrb[0].mxu0
    %v8911 = vpop.f32.mrb[0].mxu0
    %v8912 = vadd.f32 %v8863, %v8911
    %v8913 = vpop.f32.mrb[0].mxu0
    %8914 = vmatprep.mubr.bf16.mxu0 %v7160
    %8915 = vmatmul.mubr.bf16.gmra.mrb[0].mxu0 %v7159
    %v8916 = vpop.f32.mrb[0].mxu0
    %v8917 = vadd.f32 %v8868, %v8916
    %v8918 = vpop.f32.mrb[0].mxu0
    %v8919 = vpop.f32.mrb[0].mxu0
    %v8920 = vadd.f32 %v8871, %v8919
    %v8921 = vpop.f32.mrb[0].mxu0
    %8922 = vdwg.mxu0
    %v8923 = vadd.f32 %v8762, %v8909
    %v8924 = vadd.f32 %v8765, %v8912
    %v8925 = vadd.f32 %v8770, %v8917
    %v8926 = vadd.f32 %v8773, %v8920
    %v8927 = vtanh.pop %v8923
    %v8928 = vtanh.pop %v8924
    %v8929 = vtanh.pop %v8925
    %v8930 = vtanh.pop %v8926
    %8931 = vst [vmem:[#allocation13 + $0x8] sm:$0xff] %v8927
    %8932 = vst [vmem:[#allocation13 + $0x28] sm:$0xff] %v8928
    %8933 = vst [vmem:[#allocation13 + $0x48] sm:$0xff] %v8929
    %8934 = vst [vmem:[#allocation13 + $0x68] sm:$0xff] %v8930
    %8935 = vmatprep.subr.bf16.mxu0 0
    %8936 = vmatpush1.bf16.msra.mxu0 %v7357
    %8937 = vmatprep.subr.bf16.mxu0 0
    %8938 = vmatpush1.bf16.msra.mxu0 %v7358
    %8939 = vmatprep.subr.bf16.mxu0 0
    %8940 = vmatpush1.bf16.msra.mxu0 %v7359
    %8941 = vmatprep.subr.bf16.mxu0 0
    %8942 = vmatpush1.bf16.msra.mxu0 %v7360
    %8943 = vmatprep.subr.bf16.mxu0 0
    %8944 = vmatpush1.bf16.msra.mxu0 %v7361
    %8945 = vmatprep.subr.bf16.mxu0 0
    %8946 = vmatpush1.bf16.msra.mxu0 %v7362
    %8947 = vmatprep.subr.bf16.mxu0 0
    %8948 = vmatpush1.bf16.msra.mxu0 %v7363
    %8949 = vmatprep.subr.bf16.mxu0 0
    %8950 = vmatpush1.bf16.msra.mxu0 %v7364
    %8951 = vmatprep.subr.bf16.mxu0 0
    %8952 = vmatpush1.bf16.msra.mxu0 %v7365
    %8953 = vmatprep.subr.bf16.mxu0 0
    %8954 = vmatpush1.bf16.msra.mxu0 %v7366
    %8955 = vmatprep.subr.bf16.mxu0 0
    %8956 = vmatpush1.bf16.msra.mxu0 %v7367
    %8957 = vmatprep.subr.bf16.mxu0 0
    %8958 = vmatpush1.bf16.msra.mxu0 %v7368
    %8959 = vmatprep.subr.bf16.mxu0 0
    %8960 = vmatpush1.bf16.msra.mxu0 %v7369
    %8961 = vmatprep.subr.bf16.mxu0 0
    %8962 = vmatpush1.bf16.msra.mxu0 %v7370
    %8963 = vmatprep.subr.bf16.mxu0 0
    %8964 = vmatpush1.bf16.msra.mxu0 %v7371
    %8965 = vmatprep.subr.bf16.mxu0 0
    %8966 = vmatpush1.bf16.msra.mxu0 %v7372
    %8967 = vmatprep.mubr.bf16.mxu0 %v6546
    %8968 = vmatmul.mubr.bf16.gmra.mrb[0].mxu0 %v6545
    %v8969 = vpop.f32.mrb[0].mxu0
    %v8970 = vadd.f32 0.0, %v8969
    %v8971 = vpop.f32.mrb[0].mxu0
    %v8972 = vpop.f32.mrb[0].mxu0
    %v8973 = vadd.f32 0.0, %v8972
    %v8974 = vpop.f32.mrb[0].mxu0
    %8975 = vmatprep.mubr.bf16.mxu0 %v6558
    %8976 = vmatmul.mubr.bf16.gmra.mrb[0].mxu0 %v6557
    %v8977 = vpop.f32.mrb[0].mxu0
    %v8978 = vadd.f32 0.0, %v8977
    %v8979 = vpop.f32.mrb[0].mxu0
    %v8980 = vpop.f32.mrb[0].mxu0
    %v8981 = vadd.f32 0.0, %v8980
    %v8982 = vpop.f32.mrb[0].mxu0
    %8983 = vdwg.mxu0
    %8984 = vmatprep.subr.bf16.mxu0 0
    %8985 = vmatpush1.bf16.msra.mxu0 %v7373
    %8986 = vmatprep.subr.bf16.mxu0 0
    %8987 = vmatpush1.bf16.msra.mxu0 %v7374
    %8988 = vmatprep.subr.bf16.mxu0 0
    %8989 = vmatpush1.bf16.msra.mxu0 %v7375
    %8990 = vmatprep.subr.bf16.mxu0 0
    %8991 = vmatpush1.bf16.msra.mxu0 %v7376
    %8992 = vmatprep.subr.bf16.mxu0 0
    %8993 = vmatpush1.bf16.msra.mxu0 %v7377
    %8994 = vmatprep.subr.bf16.mxu0 0
    %8995 = vmatpush1.bf16.msra.mxu0 %v7378
    %8996 = vmatprep.subr.bf16.mxu0 0
    %8997 = vmatpush1.bf16.msra.mxu0 %v7379
    %8998 = vmatprep.subr.bf16.mxu0 0
    %8999 = vmatpush1.bf16.msra.mxu0 %v7380
    %9000 = vmatprep.subr.bf16.mxu0 0
    %9001 = vmatpush1.bf16.msra.mxu0 %v7381
    %9002 = vmatprep.subr.bf16.mxu0 0
    %9003 = vmatpush1.bf16.msra.mxu0 %v7382
    %9004 = vmatprep.subr.bf16.mxu0 0
    %9005 = vmatpush1.bf16.msra.mxu0 %v7383
    %9006 = vmatprep.subr.bf16.mxu0 0
    %9007 = vmatpush1.bf16.msra.mxu0 %v7384
    %9008 = vmatprep.subr.bf16.mxu0 0
    %9009 = vmatpush1.bf16.msra.mxu0 %v7385
    %9010 = vmatprep.subr.bf16.mxu0 0
    %9011 = vmatpush1.bf16.msra.mxu0 %v7386
    %9012 = vmatprep.subr.bf16.mxu0 0
    %9013 = vmatpush1.bf16.msra.mxu0 %v7387
    %9014 = vmatprep.subr.bf16.mxu0 0
    %9015 = vmatpush1.bf16.msra.mxu0 %v7388
    %9016 = vmatprep.mubr.bf16.mxu0 %v6548
    %9017 = vmatmul.mubr.bf16.gmra.mrb[0].mxu0 %v6547
    %v9018 = vpop.f32.mrb[0].mxu0
    %v9019 = vadd.f32 %v8970, %v9018
    %v9020 = vpop.f32.mrb[0].mxu0
    %v9021 = vpop.f32.mrb[0].mxu0
    %v9022 = vadd.f32 %v8973, %v9021
    %v9023 = vpop.f32.mrb[0].mxu0
    %9024 = vmatprep.mubr.bf16.mxu0 %v6560
    %9025 = vmatmul.mubr.bf16.gmra.mrb[0].mxu0 %v6559
    %v9026 = vpop.f32.mrb[0].mxu0
    %v9027 = vadd.f32 %v8978, %v9026
    %v9028 = vpop.f32.mrb[0].mxu0
    %v9029 = vpop.f32.mrb[0].mxu0
    %v9030 = vadd.f32 %v8981, %v9029
    %v9031 = vpop.f32.mrb[0].mxu0
    %9032 = vdwg.mxu0
    %9033 = vmatprep.subr.bf16.mxu0 0
    %9034 = vmatpush1.bf16.msra.mxu0 %v7389
    %9035 = vmatprep.subr.bf16.mxu0 0
    %9036 = vmatpush1.bf16.msra.mxu0 %v7390
    %9037 = vmatprep.subr.bf16.mxu0 0
    %9038 = vmatpush1.bf16.msra.mxu0 %v7391
    %9039 = vmatprep.subr.bf16.mxu0 0
    %9040 = vmatpush1.bf16.msra.mxu0 %v7392
    %9041 = vmatprep.subr.bf16.mxu0 0
    %9042 = vmatpush1.bf16.msra.mxu0 %v7393
    %9043 = vmatprep.subr.bf16.mxu0 0
    %9044 = vmatpush1.bf16.msra.mxu0 %v7394
    %9045 = vmatprep.subr.bf16.mxu0 0
    %9046 = vmatpush1.bf16.msra.mxu0 %v7395
    %9047 = vmatprep.subr.bf16.mxu0 0
    %9048 = vmatpush1.bf16.msra.mxu0 %v7396
    %9049 = vmatprep.subr.bf16.mxu0 0
    %9050 = vmatpush1.bf16.msra.mxu0 %v7397
    %9051 = vmatprep.subr.bf16.mxu0 0
    %9052 = vmatpush1.bf16.msra.mxu0 %v7398
    %9053 = vmatprep.subr.bf16.mxu0 0
    %9054 = vmatpush1.bf16.msra.mxu0 %v7399
    %9055 = vmatprep.subr.bf16.mxu0 0
    %9056 = vmatpush1.bf16.msra.mxu0 %v7400
    %9057 = vmatprep.subr.bf16.mxu0 0
    %9058 = vmatpush1.bf16.msra.mxu0 %v7401
    %9059 = vmatprep.subr.bf16.mxu0 0
    %9060 = vmatpush1.bf16.msra.mxu0 %v7402
    %9061 = vmatprep.subr.bf16.mxu0 0
    %9062 = vmatpush1.bf16.msra.mxu0 %v7403
    %9063 = vmatprep.subr.bf16.mxu0 0
    %9064 = vmatpush1.bf16.msra.mxu0 %v7404
    %9065 = vmatprep.mubr.bf16.mxu0 %v6550
    %9066 = vmatmul.mubr.bf16.gmra.mrb[0].mxu0 %v6549
    %v9067 = vpop.f32.mrb[0].mxu0
    %v9068 = vadd.f32 %v9019, %v9067
    %v9069 = vpop.f32.mrb[0].mxu0
    %v9070 = vpop.f32.mrb[0].mxu0
    %v9071 = vadd.f32 %v9022, %v9070
    %v9072 = vpop.f32.mrb[0].mxu0
    %9073 = vmatprep.mubr.bf16.mxu0 %v6562
    %9074 = vmatmul.mubr.bf16.gmra.mrb[0].mxu0 %v6561
    %v9075 = vpop.f32.mrb[0].mxu0
    %v9076 = vadd.f32 %v9027, %v9075
    %v9077 = vpop.f32.mrb[0].mxu0
    %v9078 = vpop.f32.mrb[0].mxu0
    %v9079 = vadd.f32 %v9030, %v9078
    %v9080 = vpop.f32.mrb[0].mxu0
    %9081 = vdwg.mxu0
    %9082 = vmatprep.subr.bf16.mxu0 0
    %9083 = vmatpush1.bf16.msra.mxu0 %v7792
    %9084 = vmatprep.subr.bf16.mxu0 0
    %9085 = vmatpush1.bf16.msra.mxu0 %v7793
    %9086 = vmatprep.subr.bf16.mxu0 0
    %9087 = vmatpush1.bf16.msra.mxu0 %v7794
    %9088 = vmatprep.subr.bf16.mxu0 0
    %9089 = vmatpush1.bf16.msra.mxu0 %v7795
    %9090 = vmatprep.subr.bf16.mxu0 0
    %9091 = vmatpush1.bf16.msra.mxu0 %v7796
    %9092 = vmatprep.subr.bf16.mxu0 0
    %9093 = vmatpush1.bf16.msra.mxu0 %v7797
    %9094 = vmatprep.subr.bf16.mxu0 0
    %9095 = vmatpush1.bf16.msra.mxu0 %v7798
    %9096 = vmatprep.subr.bf16.mxu0 0
    %9097 = vmatpush1.bf16.msra.mxu0 %v7799
    %9098 = vmatprep.subr.bf16.mxu0 0
    %9099 = vmatpush1.bf16.msra.mxu0 %v7800
    %9100 = vmatprep.subr.bf16.mxu0 0
    %9101 = vmatpush1.bf16.msra.mxu0 %v7801
    %9102 = vmatprep.subr.bf16.mxu0 0
    %9103 = vmatpush1.bf16.msra.mxu0 %v7802
    %9104 = vmatprep.subr.bf16.mxu0 0
    %9105 = vmatpush1.bf16.msra.mxu0 %v7803
    %9106 = vmatprep.subr.bf16.mxu0 0
    %9107 = vmatpush1.bf16.msra.mxu0 %v7804
    %9108 = vmatprep.subr.bf16.mxu0 0
    %9109 = vmatpush1.bf16.msra.mxu0 %v7805
    %9110 = vmatprep.subr.bf16.mxu0 0
    %9111 = vmatpush1.bf16.msra.mxu0 %v7806
    %9112 = vmatprep.subr.bf16.mxu0 0
    %9113 = vmatpush1.bf16.msra.mxu0 %v7807
    %9114 = vmatprep.mubr.bf16.mxu0 %v5946
    %9115 = vmatmul.mubr.bf16.gmra.mrb[0].mxu0 %v5945
    %v9116 = vpop.f32.mrb[0].mxu0
    %v9117 = vadd.f32 %v9068, %v9116
    %v9118 = vpop.f32.mrb[0].mxu0
    %v9119 = vpop.f32.mrb[0].mxu0
    %v9120 = vadd.f32 %v9071, %v9119
    %v9121 = vpop.f32.mrb[0].mxu0
    %9122 = vmatprep.mubr.bf16.mxu0 %v5958
    %9123 = vmatmul.mubr.bf16.gmra.mrb[0].mxu0 %v5957
    %v9124 = vpop.f32.mrb[0].mxu0
    %v9125 = vadd.f32 %v9076, %v9124
    %v9126 = vpop.f32.mrb[0].mxu0
    %v9127 = vpop.f32.mrb[0].mxu0
    %v9128 = vadd.f32 %v9079, %v9127
    %v9129 = vpop.f32.mrb[0].mxu0
    %9130 = vdwg.mxu0
    %9131 = vmatprep.subr.bf16.mxu0 0
    %9132 = vmatpush1.bf16.msra.mxu0 %v7808
    %9133 = vmatprep.subr.bf16.mxu0 0
    %9134 = vmatpush1.bf16.msra.mxu0 %v7809
    %9135 = vmatprep.subr.bf16.mxu0 0
    %9136 = vmatpush1.bf16.msra.mxu0 %v7810
    %9137 = vmatprep.subr.bf16.mxu0 0
    %9138 = vmatpush1.bf16.msra.mxu0 %v7811
    %9139 = vmatprep.subr.bf16.mxu0 0
    %9140 = vmatpush1.bf16.msra.mxu0 %v7812
    %9141 = vmatprep.subr.bf16.mxu0 0
    %9142 = vmatpush1.bf16.msra.mxu0 %v7813
    %9143 = vmatprep.subr.bf16.mxu0 0
    %9144 = vmatpush1.bf16.msra.mxu0 %v7814
    %9145 = vmatprep.subr.bf16.mxu0 0
    %9146 = vmatpush1.bf16.msra.mxu0 %v7815
    %9147 = vmatprep.subr.bf16.mxu0 0
    %9148 = vmatpush1.bf16.msra.mxu0 %v7816
    %9149 = vmatprep.subr.bf16.mxu0 0
    %9150 = vmatpush1.bf16.msra.mxu0 %v7817
    %9151 = vmatprep.subr.bf16.mxu0 0
    %9152 = vmatpush1.bf16.msra.mxu0 %v7818
    %9153 = vmatprep.subr.bf16.mxu0 0
    %9154 = vmatpush1.bf16.msra.mxu0 %v7819
    %9155 = vmatprep.subr.bf16.mxu0 0
    %9156 = vmatpush1.bf16.msra.mxu0 %v7820
    %9157 = vmatprep.subr.bf16.mxu0 0
    %9158 = vmatpush1.bf16.msra.mxu0 %v7821
    %9159 = vmatprep.subr.bf16.mxu0 0
    %9160 = vmatpush1.bf16.msra.mxu0 %v7822
    %9161 = vmatprep.subr.bf16.mxu0 0
    %9162 = vmatpush1.bf16.msra.mxu0 %v7823
    %9163 = vmatprep.mubr.bf16.mxu0 %v5948
    %9164 = vmatmul.mubr.bf16.gmra.mrb[0].mxu0 %v5947
    %v9165 = vpop.f32.mrb[0].mxu0
    %v9166 = vadd.f32 %v9117, %v9165
    %v9167 = vpop.f32.mrb[0].mxu0
    %v9168 = vpop.f32.mrb[0].mxu0
    %v9169 = vadd.f32 %v9120, %v9168
    %v9170 = vpop.f32.mrb[0].mxu0
    %9171 = vmatprep.mubr.bf16.mxu0 %v5960
    %9172 = vmatmul.mubr.bf16.gmra.mrb[0].mxu0 %v5959
    %v9173 = vpop.f32.mrb[0].mxu0
    %v9174 = vadd.f32 %v9125, %v9173
    %v9175 = vpop.f32.mrb[0].mxu0
    %v9176 = vpop.f32.mrb[0].mxu0
    %v9177 = vadd.f32 %v9128, %v9176
    %v9178 = vpop.f32.mrb[0].mxu0
    %9179 = vdwg.mxu0
    %9180 = vmatprep.subr.bf16.mxu0 0
    %9181 = vmatpush1.bf16.msra.mxu0 %v7824
    %9182 = vmatprep.subr.bf16.mxu0 0
    %9183 = vmatpush1.bf16.msra.mxu0 %v7825
    %9184 = vmatprep.subr.bf16.mxu0 0
    %9185 = vmatpush1.bf16.msra.mxu0 %v7826
    %9186 = vmatprep.subr.bf16.mxu0 0
    %9187 = vmatpush1.bf16.msra.mxu0 %v7827
    %9188 = vmatprep.subr.bf16.mxu0 0
    %9189 = vmatpush1.bf16.msra.mxu0 %v7828
    %9190 = vmatprep.subr.bf16.mxu0 0
    %9191 = vmatpush1.bf16.msra.mxu0 %v7829
    %9192 = vmatprep.subr.bf16.mxu0 0
    %9193 = vmatpush1.bf16.msra.mxu0 %v7830
    %9194 = vmatprep.subr.bf16.mxu0 0
    %9195 = vmatpush1.bf16.msra.mxu0 %v7831
    %9196 = vmatprep.subr.bf16.mxu0 0
    %9197 = vmatpush1.bf16.msra.mxu0 %v7832
    %9198 = vmatprep.subr.bf16.mxu0 0
    %9199 = vmatpush1.bf16.msra.mxu0 %v7833
    %9200 = vmatprep.subr.bf16.mxu0 0
    %9201 = vmatpush1.bf16.msra.mxu0 %v7834
    %9202 = vmatprep.subr.bf16.mxu0 0
    %9203 = vmatpush1.bf16.msra.mxu0 %v7835
    %9204 = vmatprep.subr.bf16.mxu0 0
    %9205 = vmatpush1.bf16.msra.mxu0 %v7836
    %9206 = vmatprep.subr.bf16.mxu0 0
    %9207 = vmatpush1.bf16.msra.mxu0 %v7837
    %9208 = vmatprep.subr.bf16.mxu0 0
    %9209 = vmatpush1.bf16.msra.mxu0 %v7838
    %9210 = vmatprep.subr.bf16.mxu0 0
    %9211 = vmatpush1.bf16.msra.mxu0 %v7839
    %9212 = vmatprep.mubr.bf16.mxu0 %v5950
    %9213 = vmatmul.mubr.bf16.gmra.mrb[0].mxu0 %v5949
    %v9214 = vpop.f32.mrb[0].mxu0
    %v9215 = vadd.f32 %v9166, %v9214
    %v9216 = vpop.f32.mrb[0].mxu0
    %v9217 = vpop.f32.mrb[0].mxu0
    %v9218 = vadd.f32 %v9169, %v9217
    %v9219 = vpop.f32.mrb[0].mxu0
    %9220 = vmatprep.mubr.bf16.mxu0 %v5962
    %9221 = vmatmul.mubr.bf16.gmra.mrb[0].mxu0 %v5961
    %v9222 = vpop.f32.mrb[0].mxu0
    %v9223 = vadd.f32 %v9174, %v9222
    %v9224 = vpop.f32.mrb[0].mxu0
    %v9225 = vpop.f32.mrb[0].mxu0
    %v9226 = vadd.f32 %v9177, %v9225
    %v9227 = vpop.f32.mrb[0].mxu0
    %9228 = vdwg.mxu0
    %9229 = vmatprep.subr.bf16.mxu0 0
    %9230 = vmatpush1.bf16.msra.mxu0 %v8227
    %9231 = vmatprep.subr.bf16.mxu0 0
    %9232 = vmatpush1.bf16.msra.mxu0 %v8228
    %9233 = vmatprep.subr.bf16.mxu0 0
    %9234 = vmatpush1.bf16.msra.mxu0 %v8229
    %9235 = vmatprep.subr.bf16.mxu0 0
    %9236 = vmatpush1.bf16.msra.mxu0 %v8230
    %9237 = vmatprep.subr.bf16.mxu0 0
    %9238 = vmatpush1.bf16.msra.mxu0 %v8231
    %9239 = vmatprep.subr.bf16.mxu0 0
    %9240 = vmatpush1.bf16.msra.mxu0 %v8232
    %9241 = vmatprep.subr.bf16.mxu0 0
    %9242 = vmatpush1.bf16.msra.mxu0 %v8233
    %9243 = vmatprep.subr.bf16.mxu0 0
    %9244 = vmatpush1.bf16.msra.mxu0 %v8234
    %9245 = vmatprep.subr.bf16.mxu0 0
    %9246 = vmatpush1.bf16.msra.mxu0 %v8235
    %9247 = vmatprep.subr.bf16.mxu0 0
    %9248 = vmatpush1.bf16.msra.mxu0 %v8236
    %9249 = vmatprep.subr.bf16.mxu0 0
    %9250 = vmatpush1.bf16.msra.mxu0 %v8237
    %9251 = vmatprep.subr.bf16.mxu0 0
    %9252 = vmatpush1.bf16.msra.mxu0 %v8238
    %9253 = vmatprep.subr.bf16.mxu0 0
    %9254 = vmatpush1.bf16.msra.mxu0 %v8239
    %9255 = vmatprep.subr.bf16.mxu0 0
    %9256 = vmatpush1.bf16.msra.mxu0 %v8240
    %9257 = vmatprep.subr.bf16.mxu0 0
    %9258 = vmatpush1.bf16.msra.mxu0 %v8241
    %9259 = vmatprep.subr.bf16.mxu0 0
    %9260 = vmatpush1.bf16.msra.mxu0 %v8242
    %9261 = vmatprep.mubr.bf16.mxu0 %v7146
    %9262 = vmatmul.mubr.bf16.gmra.mrb[0].mxu0 %v7145
    %v9263 = vpop.f32.mrb[0].mxu0
    %v9264 = vadd.f32 0.0, %v9263
    %v9265 = vpop.f32.mrb[0].mxu0
    %v9266 = vpop.f32.mrb[0].mxu0
    %v9267 = vadd.f32 0.0, %v9266
    %v9268 = vpop.f32.mrb[0].mxu0
    %9269 = vmatprep.mubr.bf16.mxu0 %v7158
    %9270 = vmatmul.mubr.bf16.gmra.mrb[0].mxu0 %v7157
    %v9271 = vpop.f32.mrb[0].mxu0
    %v9272 = vadd.f32 0.0, %v9271
    %v9273 = vpop.f32.mrb[0].mxu0
    %v9274 = vpop.f32.mrb[0].mxu0
    %v9275 = vadd.f32 0.0, %v9274
    %v9276 = vpop.f32.mrb[0].mxu0
    %9277 = vdwg.mxu0
    %9278 = vmatprep.subr.bf16.mxu0 0
    %9279 = vmatpush1.bf16.msra.mxu0 %v8243
    %9280 = vmatprep.subr.bf16.mxu0 0
    %9281 = vmatpush1.bf16.msra.mxu0 %v8244
    %9282 = vmatprep.subr.bf16.mxu0 0
    %9283 = vmatpush1.bf16.msra.mxu0 %v8245
    %9284 = vmatprep.subr.bf16.mxu0 0
    %9285 = vmatpush1.bf16.msra.mxu0 %v8246
    %9286 = vmatprep.subr.bf16.mxu0 0
    %9287 = vmatpush1.bf16.msra.mxu0 %v8247
    %9288 = vmatprep.subr.bf16.mxu0 0
    %9289 = vmatpush1.bf16.msra.mxu0 %v8248
    %9290 = vmatprep.subr.bf16.mxu0 0
    %9291 = vmatpush1.bf16.msra.mxu0 %v8249
    %9292 = vmatprep.subr.bf16.mxu0 0
    %9293 = vmatpush1.bf16.msra.mxu0 %v8250
    %9294 = vmatprep.subr.bf16.mxu0 0
    %9295 = vmatpush1.bf16.msra.mxu0 %v8251
    %9296 = vmatprep.subr.bf16.mxu0 0
    %9297 = vmatpush1.bf16.msra.mxu0 %v8252
    %9298 = vmatprep.subr.bf16.mxu0 0
    %9299 = vmatpush1.bf16.msra.mxu0 %v8253
    %9300 = vmatprep.subr.bf16.mxu0 0
    %9301 = vmatpush1.bf16.msra.mxu0 %v8254
    %9302 = vmatprep.subr.bf16.mxu0 0
    %9303 = vmatpush1.bf16.msra.mxu0 %v8255
    %9304 = vmatprep.subr.bf16.mxu0 0
    %9305 = vmatpush1.bf16.msra.mxu0 %v8256
    %9306 = vmatprep.subr.bf16.mxu0 0
    %9307 = vmatpush1.bf16.msra.mxu0 %v8257
    %9308 = vmatprep.subr.bf16.mxu0 0
    %9309 = vmatpush1.bf16.msra.mxu0 %v8258
    %9310 = vmatprep.mubr.bf16.mxu0 %v7148
    %9311 = vmatmul.mubr.bf16.gmra.mrb[0].mxu0 %v7147
    %v9312 = vpop.f32.mrb[0].mxu0
    %v9313 = vadd.f32 %v9264, %v9312
    %v9314 = vpop.f32.mrb[0].mxu0
    %v9315 = vpop.f32.mrb[0].mxu0
    %v9316 = vadd.f32 %v9267, %v9315
    %v9317 = vpop.f32.mrb[0].mxu0
    %9318 = vmatprep.mubr.bf16.mxu0 %v7160
    %9319 = vmatmul.mubr.bf16.gmra.mrb[0].mxu0 %v7159
    %v9320 = vpop.f32.mrb[0].mxu0
    %v9321 = vadd.f32 %v9272, %v9320
    %v9322 = vpop.f32.mrb[0].mxu0
    %v9323 = vpop.f32.mrb[0].mxu0
    %v9324 = vadd.f32 %v9275, %v9323
    %v9325 = vpop.f32.mrb[0].mxu0
    %9326 = vdwg.mxu0
    %9327 = vmatprep.subr.bf16.mxu0 0
    %9328 = vmatpush1.bf16.msra.mxu0 %v8259
    %9329 = vmatprep.subr.bf16.mxu0 0
    %9330 = vmatpush1.bf16.msra.mxu0 %v8260
    %9331 = vmatprep.subr.bf16.mxu0 0
    %9332 = vmatpush1.bf16.msra.mxu0 %v8261
    %9333 = vmatprep.subr.bf16.mxu0 0
    %9334 = vmatpush1.bf16.msra.mxu0 %v8262
    %9335 = vmatprep.subr.bf16.mxu0 0
    %9336 = vmatpush1.bf16.msra.mxu0 %v8263
    %9337 = vmatprep.subr.bf16.mxu0 0
    %9338 = vmatpush1.bf16.msra.mxu0 %v8264
    %9339 = vmatprep.subr.bf16.mxu0 0
    %9340 = vmatpush1.bf16.msra.mxu0 %v8265
    %9341 = vmatprep.subr.bf16.mxu0 0
    %9342 = vmatpush1.bf16.msra.mxu0 %v8266
    %9343 = vmatprep.subr.bf16.mxu0 0
    %9344 = vmatpush1.bf16.msra.mxu0 %v8267
    %9345 = vmatprep.subr.bf16.mxu0 0
    %9346 = vmatpush1.bf16.msra.mxu0 %v8268
    %9347 = vmatprep.subr.bf16.mxu0 0
    %9348 = vmatpush1.bf16.msra.mxu0 %v8269
    %9349 = vmatprep.subr.bf16.mxu0 0
    %9350 = vmatpush1.bf16.msra.mxu0 %v8270
    %9351 = vmatprep.subr.bf16.mxu0 0
    %9352 = vmatpush1.bf16.msra.mxu0 %v8271
    %9353 = vmatprep.subr.bf16.mxu0 0
    %9354 = vmatpush1.bf16.msra.mxu0 %v8272
    %9355 = vmatprep.subr.bf16.mxu0 0
    %9356 = vmatpush1.bf16.msra.mxu0 %v8273
    %9357 = vmatprep.subr.bf16.mxu0 0
    %9358 = vmatpush1.bf16.msra.mxu0 %v8274
    %9359 = vmatprep.mubr.bf16.mxu0 %v7150
    %9360 = vmatmul.mubr.bf16.gmra.mrb[0].mxu0 %v7149
    %v9361 = vpop.f32.mrb[0].mxu0
    %v9362 = vadd.f32 %v9313, %v9361
    %v9363 = vpop.f32.mrb[0].mxu0
    %v9364 = vpop.f32.mrb[0].mxu0
    %v9365 = vadd.f32 %v9316, %v9364
    %v9366 = vpop.f32.mrb[0].mxu0
    %9367 = vmatprep.mubr.bf16.mxu0 %v7162
    %9368 = vmatmul.mubr.bf16.gmra.mrb[0].mxu0 %v7161
    %v9369 = vpop.f32.mrb[0].mxu0
    %v9370 = vadd.f32 %v9321, %v9369
    %v9371 = vpop.f32.mrb[0].mxu0
    %v9372 = vpop.f32.mrb[0].mxu0
    %v9373 = vadd.f32 %v9324, %v9372
    %v9374 = vpop.f32.mrb[0].mxu0
    %9375 = vdwg.mxu0
    %v9376 = vadd.f32 %v9215, %v9362
    %v9377 = vadd.f32 %v9218, %v9365
    %v9378 = vadd.f32 %v9223, %v9370
    %v9379 = vadd.f32 %v9226, %v9373
    %v9380 = vtanh.pop %v9376
    %v9381 = vtanh.pop %v9377
    %v9382 = vtanh.pop %v9378
    %v9383 = vtanh.pop %v9379
    %9384 = vst [vmem:[#allocation13 + $0x10] sm:$0xff] %v9380
    %9385 = vst [vmem:[#allocation13 + $0x30] sm:$0xff] %v9381
    %9386 = vst [vmem:[#allocation13 + $0x50] sm:$0xff] %v9382
    %9387 = vst [vmem:[#allocation13 + $0x70] sm:$0xff] %v9383
    %9388 = vmatprep.subr.bf16.mxu0 0
    %9389 = vmatpush1.bf16.msra.mxu0 %v7357
    %9390 = vmatprep.subr.bf16.mxu0 0
    %9391 = vmatpush1.bf16.msra.mxu0 %v7358
    %9392 = vmatprep.subr.bf16.mxu0 0
    %9393 = vmatpush1.bf16.msra.mxu0 %v7359
    %9394 = vmatprep.subr.bf16.mxu0 0
    %9395 = vmatpush1.bf16.msra.mxu0 %v7360
    %9396 = vmatprep.subr.bf16.mxu0 0
    %9397 = vmatpush1.bf16.msra.mxu0 %v7361
    %9398 = vmatprep.subr.bf16.mxu0 0
    %9399 = vmatpush1.bf16.msra.mxu0 %v7362
    %9400 = vmatprep.subr.bf16.mxu0 0
    %9401 = vmatpush1.bf16.msra.mxu0 %v7363
    %9402 = vmatprep.subr.bf16.mxu0 0
    %9403 = vmatpush1.bf16.msra.mxu0 %v7364
    %9404 = vmatprep.subr.bf16.mxu0 0
    %9405 = vmatpush1.bf16.msra.mxu0 %v7365
    %9406 = vmatprep.subr.bf16.mxu0 0
    %9407 = vmatpush1.bf16.msra.mxu0 %v7366
    %9408 = vmatprep.subr.bf16.mxu0 0
    %9409 = vmatpush1.bf16.msra.mxu0 %v7367
    %9410 = vmatprep.subr.bf16.mxu0 0
    %9411 = vmatpush1.bf16.msra.mxu0 %v7368
    %9412 = vmatprep.subr.bf16.mxu0 0
    %9413 = vmatpush1.bf16.msra.mxu0 %v7369
    %9414 = vmatprep.subr.bf16.mxu0 0
    %9415 = vmatpush1.bf16.msra.mxu0 %v7370
    %9416 = vmatprep.subr.bf16.mxu0 0
    %9417 = vmatpush1.bf16.msra.mxu0 %v7371
    %9418 = vmatprep.subr.bf16.mxu0 0
    %9419 = vmatpush1.bf16.msra.mxu0 %v7372
    %9420 = vmatprep.mubr.bf16.mxu0 %v6548
    %9421 = vmatmul.mubr.bf16.gmra.mrb[0].mxu0 %v6547
    %v9422 = vpop.f32.mrb[0].mxu0
    %v9423 = vadd.f32 0.0, %v9422
    %v9424 = vpop.f32.mrb[0].mxu0
    %v9425 = vpop.f32.mrb[0].mxu0
    %v9426 = vadd.f32 0.0, %v9425
    %v9427 = vpop.f32.mrb[0].mxu0
    %9428 = vmatprep.mubr.bf16.mxu0 %v6560
    %9429 = vmatmul.mubr.bf16.gmra.mrb[0].mxu0 %v6559
    %v9430 = vpop.f32.mrb[0].mxu0
    %v9431 = vadd.f32 0.0, %v9430
    %v9432 = vpop.f32.mrb[0].mxu0
    %v9433 = vpop.f32.mrb[0].mxu0
    %v9434 = vadd.f32 0.0, %v9433
    %v9435 = vpop.f32.mrb[0].mxu0
    %9436 = vdwg.mxu0
    %9437 = vmatprep.subr.bf16.mxu0 0
    %9438 = vmatpush1.bf16.msra.mxu0 %v7373
    %9439 = vmatprep.subr.bf16.mxu0 0
    %9440 = vmatpush1.bf16.msra.mxu0 %v7374
    %9441 = vmatprep.subr.bf16.mxu0 0
    %9442 = vmatpush1.bf16.msra.mxu0 %v7375
    %9443 = vmatprep.subr.bf16.mxu0 0
    %9444 = vmatpush1.bf16.msra.mxu0 %v7376
    %9445 = vmatprep.subr.bf16.mxu0 0
    %9446 = vmatpush1.bf16.msra.mxu0 %v7377
    %9447 = vmatprep.subr.bf16.mxu0 0
    %9448 = vmatpush1.bf16.msra.mxu0 %v7378
    %9449 = vmatprep.subr.bf16.mxu0 0
    %9450 = vmatpush1.bf16.msra.mxu0 %v7379
    %9451 = vmatprep.subr.bf16.mxu0 0
    %9452 = vmatpush1.bf16.msra.mxu0 %v7380
    %9453 = vmatprep.subr.bf16.mxu0 0
    %9454 = vmatpush1.bf16.msra.mxu0 %v7381
    %9455 = vmatprep.subr.bf16.mxu0 0
    %9456 = vmatpush1.bf16.msra.mxu0 %v7382
    %9457 = vmatprep.subr.bf16.mxu0 0
    %9458 = vmatpush1.bf16.msra.mxu0 %v7383
    %9459 = vmatprep.subr.bf16.mxu0 0
    %9460 = vmatpush1.bf16.msra.mxu0 %v7384
    %9461 = vmatprep.subr.bf16.mxu0 0
    %9462 = vmatpush1.bf16.msra.mxu0 %v7385
    %9463 = vmatprep.subr.bf16.mxu0 0
    %9464 = vmatpush1.bf16.msra.mxu0 %v7386
    %9465 = vmatprep.subr.bf16.mxu0 0
    %9466 = vmatpush1.bf16.msra.mxu0 %v7387
    %9467 = vmatprep.subr.bf16.mxu0 0
    %9468 = vmatpush1.bf16.msra.mxu0 %v7388
    %9469 = vmatprep.mubr.bf16.mxu0 %v6550
    %9470 = vmatmul.mubr.bf16.gmra.mrb[0].mxu0 %v6549
    %v9471 = vpop.f32.mrb[0].mxu0
    %v9472 = vadd.f32 %v9423, %v9471
    %v9473 = vpop.f32.mrb[0].mxu0
    %v9474 = vpop.f32.mrb[0].mxu0
    %v9475 = vadd.f32 %v9426, %v9474
    %v9476 = vpop.f32.mrb[0].mxu0
    %9477 = vmatprep.mubr.bf16.mxu0 %v6562
    %9478 = vmatmul.mubr.bf16.gmra.mrb[0].mxu0 %v6561
    %v9479 = vpop.f32.mrb[0].mxu0
    %v9480 = vadd.f32 %v9431, %v9479
    %v9481 = vpop.f32.mrb[0].mxu0
    %v9482 = vpop.f32.mrb[0].mxu0
    %v9483 = vadd.f32 %v9434, %v9482
    %v9484 = vpop.f32.mrb[0].mxu0
    %9485 = vdwg.mxu0
    %9486 = vmatprep.subr.bf16.mxu0 0
    %9487 = vmatpush1.bf16.msra.mxu0 %v7389
    %9488 = vmatprep.subr.bf16.mxu0 0
    %9489 = vmatpush1.bf16.msra.mxu0 %v7390
    %9490 = vmatprep.subr.bf16.mxu0 0
    %9491 = vmatpush1.bf16.msra.mxu0 %v7391
    %9492 = vmatprep.subr.bf16.mxu0 0
    %9493 = vmatpush1.bf16.msra.mxu0 %v7392
    %9494 = vmatprep.subr.bf16.mxu0 0
    %9495 = vmatpush1.bf16.msra.mxu0 %v7393
    %9496 = vmatprep.subr.bf16.mxu0 0
    %9497 = vmatpush1.bf16.msra.mxu0 %v7394
    %9498 = vmatprep.subr.bf16.mxu0 0
    %9499 = vmatpush1.bf16.msra.mxu0 %v7395
    %9500 = vmatprep.subr.bf16.mxu0 0
    %9501 = vmatpush1.bf16.msra.mxu0 %v7396
    %9502 = vmatprep.subr.bf16.mxu0 0
    %9503 = vmatpush1.bf16.msra.mxu0 %v7397
    %9504 = vmatprep.subr.bf16.mxu0 0
    %9505 = vmatpush1.bf16.msra.mxu0 %v7398
    %9506 = vmatprep.subr.bf16.mxu0 0
    %9507 = vmatpush1.bf16.msra.mxu0 %v7399
    %9508 = vmatprep.subr.bf16.mxu0 0
    %9509 = vmatpush1.bf16.msra.mxu0 %v7400
    %9510 = vmatprep.subr.bf16.mxu0 0
    %9511 = vmatpush1.bf16.msra.mxu0 %v7401
    %9512 = vmatprep.subr.bf16.mxu0 0
    %9513 = vmatpush1.bf16.msra.mxu0 %v7402
    %9514 = vmatprep.subr.bf16.mxu0 0
    %9515 = vmatpush1.bf16.msra.mxu0 %v7403
    %9516 = vmatprep.subr.bf16.mxu0 0
    %9517 = vmatpush1.bf16.msra.mxu0 %v7404
    %9518 = vmatprep.mubr.bf16.mxu0 %v6552
    %9519 = vmatmul.mubr.bf16.gmra.mrb[0].mxu0 %v6551
    %v9520 = vpop.f32.mrb[0].mxu0
    %v9521 = vadd.f32 %v9472, %v9520
    %v9522 = vpop.f32.mrb[0].mxu0
    %v9523 = vpop.f32.mrb[0].mxu0
    %v9524 = vadd.f32 %v9475, %v9523
    %v9525 = vpop.f32.mrb[0].mxu0
    %9526 = vmatprep.mubr.bf16.mxu0 %v6564
    %9527 = vmatmul.mubr.bf16.gmra.mrb[0].mxu0 %v6563
    %v9528 = vpop.f32.mrb[0].mxu0
    %v9529 = vadd.f32 %v9480, %v9528
    %v9530 = vpop.f32.mrb[0].mxu0
    %v9531 = vpop.f32.mrb[0].mxu0
    %v9532 = vadd.f32 %v9483, %v9531
    %v9533 = vpop.f32.mrb[0].mxu0
    %9534 = vdwg.mxu0
    %9535 = vmatprep.subr.bf16.mxu0 0
    %9536 = vmatpush1.bf16.msra.mxu0 %v7792
    %9537 = vmatprep.subr.bf16.mxu0 0
    %9538 = vmatpush1.bf16.msra.mxu0 %v7793
    %9539 = vmatprep.subr.bf16.mxu0 0
    %9540 = vmatpush1.bf16.msra.mxu0 %v7794
    %9541 = vmatprep.subr.bf16.mxu0 0
    %9542 = vmatpush1.bf16.msra.mxu0 %v7795
    %9543 = vmatprep.subr.bf16.mxu0 0
    %9544 = vmatpush1.bf16.msra.mxu0 %v7796
    %9545 = vmatprep.subr.bf16.mxu0 0
    %9546 = vmatpush1.bf16.msra.mxu0 %v7797
    %9547 = vmatprep.subr.bf16.mxu0 0
    %9548 = vmatpush1.bf16.msra.mxu0 %v7798
    %9549 = vmatprep.subr.bf16.mxu0 0
    %9550 = vmatpush1.bf16.msra.mxu0 %v7799
    %9551 = vmatprep.subr.bf16.mxu0 0
    %9552 = vmatpush1.bf16.msra.mxu0 %v7800
    %9553 = vmatprep.subr.bf16.mxu0 0
    %9554 = vmatpush1.bf16.msra.mxu0 %v7801
    %9555 = vmatprep.subr.bf16.mxu0 0
    %9556 = vmatpush1.bf16.msra.mxu0 %v7802
    %9557 = vmatprep.subr.bf16.mxu0 0
    %9558 = vmatpush1.bf16.msra.mxu0 %v7803
    %9559 = vmatprep.subr.bf16.mxu0 0
    %9560 = vmatpush1.bf16.msra.mxu0 %v7804
    %9561 = vmatprep.subr.bf16.mxu0 0
    %9562 = vmatpush1.bf16.msra.mxu0 %v7805
    %9563 = vmatprep.subr.bf16.mxu0 0
    %9564 = vmatpush1.bf16.msra.mxu0 %v7806
    %9565 = vmatprep.subr.bf16.mxu0 0
    %9566 = vmatpush1.bf16.msra.mxu0 %v7807
    %9567 = vmatprep.mubr.bf16.mxu0 %v5948
    %9568 = vmatmul.mubr.bf16.gmra.mrb[0].mxu0 %v5947
    %v9569 = vpop.f32.mrb[0].mxu0
    %v9570 = vadd.f32 %v9521, %v9569
    %v9571 = vpop.f32.mrb[0].mxu0
    %v9572 = vpop.f32.mrb[0].mxu0
    %v9573 = vadd.f32 %v9524, %v9572
    %v9574 = vpop.f32.mrb[0].mxu0
    %9575 = vmatprep.mubr.bf16.mxu0 %v5960
    %9576 = vmatmul.mubr.bf16.gmra.mrb[0].mxu0 %v5959
    %v9577 = vpop.f32.mrb[0].mxu0
    %v9578 = vadd.f32 %v9529, %v9577
    %v9579 = vpop.f32.mrb[0].mxu0
    %v9580 = vpop.f32.mrb[0].mxu0
    %v9581 = vadd.f32 %v9532, %v9580
    %v9582 = vpop.f32.mrb[0].mxu0
    %9583 = vdwg.mxu0
    %9584 = vmatprep.subr.bf16.mxu0 0
    %9585 = vmatpush1.bf16.msra.mxu0 %v7808
    %9586 = vmatprep.subr.bf16.mxu0 0
    %9587 = vmatpush1.bf16.msra.mxu0 %v7809
    %9588 = vmatprep.subr.bf16.mxu0 0
    %9589 = vmatpush1.bf16.msra.mxu0 %v7810
    %9590 = vmatprep.subr.bf16.mxu0 0
    %9591 = vmatpush1.bf16.msra.mxu0 %v7811
    %9592 = vmatprep.subr.bf16.mxu0 0
    %9593 = vmatpush1.bf16.msra.mxu0 %v7812
    %9594 = vmatprep.subr.bf16.mxu0 0
    %9595 = vmatpush1.bf16.msra.mxu0 %v7813
    %9596 = vmatprep.subr.bf16.mxu0 0
    %9597 = vmatpush1.bf16.msra.mxu0 %v7814
    %9598 = vmatprep.subr.bf16.mxu0 0
    %9599 = vmatpush1.bf16.msra.mxu0 %v7815
    %9600 = vmatprep.subr.bf16.mxu0 0
    %9601 = vmatpush1.bf16.msra.mxu0 %v7816
    %9602 = vmatprep.subr.bf16.mxu0 0
    %9603 = vmatpush1.bf16.msra.mxu0 %v7817
    %9604 = vmatprep.subr.bf16.mxu0 0
    %9605 = vmatpush1.bf16.msra.mxu0 %v7818
    %9606 = vmatprep.subr.bf16.mxu0 0
    %9607 = vmatpush1.bf16.msra.mxu0 %v7819
    %9608 = vmatprep.subr.bf16.mxu0 0
    %9609 = vmatpush1.bf16.msra.mxu0 %v7820
    %9610 = vmatprep.subr.bf16.mxu0 0
    %9611 = vmatpush1.bf16.msra.mxu0 %v7821
    %9612 = vmatprep.subr.bf16.mxu0 0
    %9613 = vmatpush1.bf16.msra.mxu0 %v7822
    %9614 = vmatprep.subr.bf16.mxu0 0
    %9615 = vmatpush1.bf16.msra.mxu0 %v7823
    %9616 = vmatprep.mubr.bf16.mxu0 %v5950
    %9617 = vmatmul.mubr.bf16.gmra.mrb[0].mxu0 %v5949
    %v9618 = vpop.f32.mrb[0].mxu0
    %v9619 = vadd.f32 %v9570, %v9618
    %v9620 = vpop.f32.mrb[0].mxu0
    %v9621 = vpop.f32.mrb[0].mxu0
    %v9622 = vadd.f32 %v9573, %v9621
    %v9623 = vpop.f32.mrb[0].mxu0
    %9624 = vmatprep.mubr.bf16.mxu0 %v5962
    %9625 = vmatmul.mubr.bf16.gmra.mrb[0].mxu0 %v5961
    %v9626 = vpop.f32.mrb[0].mxu0
    %v9627 = vadd.f32 %v9578, %v9626
    %v9628 = vpop.f32.mrb[0].mxu0
    %v9629 = vpop.f32.mrb[0].mxu0
    %v9630 = vadd.f32 %v9581, %v9629
    %v9631 = vpop.f32.mrb[0].mxu0
    %9632 = vdwg.mxu0
    %9633 = vmatprep.subr.bf16.mxu0 0
    %9634 = vmatpush1.bf16.msra.mxu0 %v7824
    %9635 = vmatprep.subr.bf16.mxu0 0
    %9636 = vmatpush1.bf16.msra.mxu0 %v7825
    %9637 = vmatprep.subr.bf16.mxu0 0
    %9638 = vmatpush1.bf16.msra.mxu0 %v7826
    %9639 = vmatprep.subr.bf16.mxu0 0
    %9640 = vmatpush1.bf16.msra.mxu0 %v7827
    %9641 = vmatprep.subr.bf16.mxu0 0
    %9642 = vmatpush1.bf16.msra.mxu0 %v7828
    %9643 = vmatprep.subr.bf16.mxu0 0
    %9644 = vmatpush1.bf16.msra.mxu0 %v7829
    %9645 = vmatprep.subr.bf16.mxu0 0
    %9646 = vmatpush1.bf16.msra.mxu0 %v7830
    %9647 = vmatprep.subr.bf16.mxu0 0
    %9648 = vmatpush1.bf16.msra.mxu0 %v7831
    %9649 = vmatprep.subr.bf16.mxu0 0
    %9650 = vmatpush1.bf16.msra.mxu0 %v7832
    %9651 = vmatprep.subr.bf16.mxu0 0
    %9652 = vmatpush1.bf16.msra.mxu0 %v7833
    %9653 = vmatprep.subr.bf16.mxu0 0
    %9654 = vmatpush1.bf16.msra.mxu0 %v7834
    %9655 = vmatprep.subr.bf16.mxu0 0
    %9656 = vmatpush1.bf16.msra.mxu0 %v7835
    %9657 = vmatprep.subr.bf16.mxu0 0
    %9658 = vmatpush1.bf16.msra.mxu0 %v7836
    %9659 = vmatprep.subr.bf16.mxu0 0
    %9660 = vmatpush1.bf16.msra.mxu0 %v7837
    %9661 = vmatprep.subr.bf16.mxu0 0
    %9662 = vmatpush1.bf16.msra.mxu0 %v7838
    %9663 = vmatprep.subr.bf16.mxu0 0
    %9664 = vmatpush1.bf16.msra.mxu0 %v7839
    %9665 = vmatprep.mubr.bf16.mxu0 %v5952
    %9666 = vmatmul.mubr.bf16.gmra.mrb[0].mxu0 %v5951
    %v9667 = vpop.f32.mrb[0].mxu0
    %v9668 = vadd.f32 %v9619, %v9667
    %v9669 = vpop.f32.mrb[0].mxu0
    %v9670 = vpop.f32.mrb[0].mxu0
    %v9671 = vadd.f32 %v9622, %v9670
    %v9672 = vpop.f32.mrb[0].mxu0
    %9673 = vmatprep.mubr.bf16.mxu0 %v5964
    %9674 = vmatmul.mubr.bf16.gmra.mrb[0].mxu0 %v5963
    %v9675 = vpop.f32.mrb[0].mxu0
    %v9676 = vadd.f32 %v9627, %v9675
    %v9677 = vpop.f32.mrb[0].mxu0
    %v9678 = vpop.f32.mrb[0].mxu0
    %v9679 = vadd.f32 %v9630, %v9678
    %v9680 = vpop.f32.mrb[0].mxu0
    %9681 = vdwg.mxu0
    %9682 = vmatprep.subr.bf16.mxu0 0
    %9683 = vmatpush1.bf16.msra.mxu0 %v8227
    %9684 = vmatprep.subr.bf16.mxu0 0
    %9685 = vmatpush1.bf16.msra.mxu0 %v8228
    %9686 = vmatprep.subr.bf16.mxu0 0
    %9687 = vmatpush1.bf16.msra.mxu0 %v8229
    %9688 = vmatprep.subr.bf16.mxu0 0
    %9689 = vmatpush1.bf16.msra.mxu0 %v8230
    %9690 = vmatprep.subr.bf16.mxu0 0
    %9691 = vmatpush1.bf16.msra.mxu0 %v8231
    %9692 = vmatprep.subr.bf16.mxu0 0
    %9693 = vmatpush1.bf16.msra.mxu0 %v8232
    %9694 = vmatprep.subr.bf16.mxu0 0
    %9695 = vmatpush1.bf16.msra.mxu0 %v8233
    %9696 = vmatprep.subr.bf16.mxu0 0
    %9697 = vmatpush1.bf16.msra.mxu0 %v8234
    %9698 = vmatprep.subr.bf16.mxu0 0
    %9699 = vmatpush1.bf16.msra.mxu0 %v8235
    %9700 = vmatprep.subr.bf16.mxu0 0
    %9701 = vmatpush1.bf16.msra.mxu0 %v8236
    %9702 = vmatprep.subr.bf16.mxu0 0
    %9703 = vmatpush1.bf16.msra.mxu0 %v8237
    %9704 = vmatprep.subr.bf16.mxu0 0
    %9705 = vmatpush1.bf16.msra.mxu0 %v8238
    %9706 = vmatprep.subr.bf16.mxu0 0
    %9707 = vmatpush1.bf16.msra.mxu0 %v8239
    %9708 = vmatprep.subr.bf16.mxu0 0
    %9709 = vmatpush1.bf16.msra.mxu0 %v8240
    %9710 = vmatprep.subr.bf16.mxu0 0
    %9711 = vmatpush1.bf16.msra.mxu0 %v8241
    %9712 = vmatprep.subr.bf16.mxu0 0
    %9713 = vmatpush1.bf16.msra.mxu0 %v8242
    %9714 = vmatprep.mubr.bf16.mxu0 %v7148
    %9715 = vmatmul.mubr.bf16.gmra.mrb[0].mxu0 %v7147
    %v9716 = vpop.f32.mrb[0].mxu0
    %v9717 = vadd.f32 0.0, %v9716
    %v9718 = vpop.f32.mrb[0].mxu0
    %v9719 = vpop.f32.mrb[0].mxu0
    %v9720 = vadd.f32 0.0, %v9719
    %v9721 = vpop.f32.mrb[0].mxu0
    %9722 = vmatprep.mubr.bf16.mxu0 %v7160
    %9723 = vmatmul.mubr.bf16.gmra.mrb[0].mxu0 %v7159
    %v9724 = vpop.f32.mrb[0].mxu0
    %v9725 = vadd.f32 0.0, %v9724
    %v9726 = vpop.f32.mrb[0].mxu0
    %v9727 = vpop.f32.mrb[0].mxu0
    %v9728 = vadd.f32 0.0, %v9727
    %v9729 = vpop.f32.mrb[0].mxu0
    %9730 = vdwg.mxu0
    %9731 = vmatprep.subr.bf16.mxu0 0
    %9732 = vmatpush1.bf16.msra.mxu0 %v8243
    %9733 = vmatprep.subr.bf16.mxu0 0
    %9734 = vmatpush1.bf16.msra.mxu0 %v8244
    %9735 = vmatprep.subr.bf16.mxu0 0
    %9736 = vmatpush1.bf16.msra.mxu0 %v8245
    %9737 = vmatprep.subr.bf16.mxu0 0
    %9738 = vmatpush1.bf16.msra.mxu0 %v8246
    %9739 = vmatprep.subr.bf16.mxu0 0
    %9740 = vmatpush1.bf16.msra.mxu0 %v8247
    %9741 = vmatprep.subr.bf16.mxu0 0
    %9742 = vmatpush1.bf16.msra.mxu0 %v8248
    %9743 = vmatprep.subr.bf16.mxu0 0
    %9744 = vmatpush1.bf16.msra.mxu0 %v8249
    %9745 = vmatprep.subr.bf16.mxu0 0
    %9746 = vmatpush1.bf16.msra.mxu0 %v8250
    %9747 = vmatprep.subr.bf16.mxu0 0
    %9748 = vmatpush1.bf16.msra.mxu0 %v8251
    %9749 = vmatprep.subr.bf16.mxu0 0
    %9750 = vmatpush1.bf16.msra.mxu0 %v8252
    %9751 = vmatprep.subr.bf16.mxu0 0
    %9752 = vmatpush1.bf16.msra.mxu0 %v8253
    %9753 = vmatprep.subr.bf16.mxu0 0
    %9754 = vmatpush1.bf16.msra.mxu0 %v8254
    %9755 = vmatprep.subr.bf16.mxu0 0
    %9756 = vmatpush1.bf16.msra.mxu0 %v8255
    %9757 = vmatprep.subr.bf16.mxu0 0
    %9758 = vmatpush1.bf16.msra.mxu0 %v8256
    %9759 = vmatprep.subr.bf16.mxu0 0
    %9760 = vmatpush1.bf16.msra.mxu0 %v8257
    %9761 = vmatprep.subr.bf16.mxu0 0
    %9762 = vmatpush1.bf16.msra.mxu0 %v8258
    %9763 = vmatprep.mubr.bf16.mxu0 %v7150
    %9764 = vmatmul.mubr.bf16.gmra.mrb[0].mxu0 %v7149
    %v9765 = vpop.f32.mrb[0].mxu0
    %v9766 = vadd.f32 %v9717, %v9765
    %v9767 = vpop.f32.mrb[0].mxu0
    %v9768 = vpop.f32.mrb[0].mxu0
    %v9769 = vadd.f32 %v9720, %v9768
    %v9770 = vpop.f32.mrb[0].mxu0
    %9771 = vmatprep.mubr.bf16.mxu0 %v7162
    %9772 = vmatmul.mubr.bf16.gmra.mrb[0].mxu0 %v7161
    %v9773 = vpop.f32.mrb[0].mxu0
    %v9774 = vadd.f32 %v9725, %v9773
    %v9775 = vpop.f32.mrb[0].mxu0
    %v9776 = vpop.f32.mrb[0].mxu0
    %v9777 = vadd.f32 %v9728, %v9776
    %v9778 = vpop.f32.mrb[0].mxu0
    %9779 = vdwg.mxu0
    %9780 = vmatprep.subr.bf16.mxu0 0
    %9781 = vmatpush1.bf16.msra.mxu0 %v8259
    %9782 = vmatprep.subr.bf16.mxu0 0
    %9783 = vmatpush1.bf16.msra.mxu0 %v8260
    %9784 = vmatprep.subr.bf16.mxu0 0
    %9785 = vmatpush1.bf16.msra.mxu0 %v8261
    %9786 = vmatprep.subr.bf16.mxu0 0
    %9787 = vmatpush1.bf16.msra.mxu0 %v8262
    %9788 = vmatprep.subr.bf16.mxu0 0
    %9789 = vmatpush1.bf16.msra.mxu0 %v8263
    %9790 = vmatprep.subr.bf16.mxu0 0
    %9791 = vmatpush1.bf16.msra.mxu0 %v8264
    %9792 = vmatprep.subr.bf16.mxu0 0
    %9793 = vmatpush1.bf16.msra.mxu0 %v8265
    %9794 = vmatprep.subr.bf16.mxu0 0
    %9795 = vmatpush1.bf16.msra.mxu0 %v8266
    %9796 = vmatprep.subr.bf16.mxu0 0
    %9797 = vmatpush1.bf16.msra.mxu0 %v8267
    %9798 = vmatprep.subr.bf16.mxu0 0
    %9799 = vmatpush1.bf16.msra.mxu0 %v8268
    %9800 = vmatprep.subr.bf16.mxu0 0
    %9801 = vmatpush1.bf16.msra.mxu0 %v8269
    %9802 = vmatprep.subr.bf16.mxu0 0
    %9803 = vmatpush1.bf16.msra.mxu0 %v8270
    %9804 = vmatprep.subr.bf16.mxu0 0
    %9805 = vmatpush1.bf16.msra.mxu0 %v8271
    %9806 = vmatprep.subr.bf16.mxu0 0
    %9807 = vmatpush1.bf16.msra.mxu0 %v8272
    %9808 = vmatprep.subr.bf16.mxu0 0
    %9809 = vmatpush1.bf16.msra.mxu0 %v8273
    %9810 = vmatprep.subr.bf16.mxu0 0
    %9811 = vmatpush1.bf16.msra.mxu0 %v8274
    %9812 = vmatprep.mubr.bf16.mxu0 %v7152
    %9813 = vmatmul.mubr.bf16.gmra.mrb[0].mxu0 %v7151
    %v9814 = vpop.f32.mrb[0].mxu0
    %v9815 = vadd.f32 %v9766, %v9814
    %v9816 = vpop.f32.mrb[0].mxu0
    %v9817 = vpop.f32.mrb[0].mxu0
    %v9818 = vadd.f32 %v9769, %v9817
    %v9819 = vpop.f32.mrb[0].mxu0
    %9820 = vmatprep.mubr.bf16.mxu0 %v7164
    %9821 = vmatmul.mubr.bf16.gmra.mrb[0].mxu0 %v7163
    %v9822 = vpop.f32.mrb[0].mxu0
    %v9823 = vadd.f32 %v9774, %v9822
    %v9824 = vpop.f32.mrb[0].mxu0
    %v9825 = vpop.f32.mrb[0].mxu0
    %v9826 = vadd.f32 %v9777, %v9825
    %v9827 = vpop.f32.mrb[0].mxu0
    %9828 = vdwg.mxu0
    %v9829 = vadd.f32 %v9668, %v9815
    %v9830 = vadd.f32 %v9671, %v9818
    %v9831 = vadd.f32 %v9676, %v9823
    %v9832 = vadd.f32 %v9679, %v9826
    %v9833 = vtanh.pop %v9829
    %v9834 = vtanh.pop %v9830
    %v9835 = vtanh.pop %v9831
    %v9836 = vtanh.pop %v9832
    %9837 = vst [vmem:[#allocation13 + $0x18] sm:$0xff] %v9833
    %9838 = vst [vmem:[#allocation13 + $0x38] sm:$0xff] %v9834
    %9839 = vst [vmem:[#allocation13 + $0x58] sm:$0xff] %v9835
    %9840 = vst [vmem:[#allocation13 + $0x78] sm:$0xff] %v9836
    // Predicated region
    $region46: #{tpu_custom_call.1} parent=1 // pred_check
      _
    $region47: #{tpu_custom_call.1} parent=1 // pred_check_branch
      %9842 = sbr.rel (0) target = $region49
    $region48: #{tpu_custom_call.1} parent=1 // pred_region
      %s9844 = ssub.s32 2048, 2048
      %9845 = vsyncadd [#allocation6], %s9844
      %s9846 = sshll.u32 [#allocation13], 4
      %s9847 = int_to_ptr.vmem [resolvable:$true] %s9846
      %9852 = dma.vmem_to_hbm [thread:$0]  %s9847, 2048, %s6, [#allocation6], 512, 512, 32
    $region49: #{tpu_custom_call.1} parent=1 // pred_fallthru
      _
    // Predicated region
    $region50: #{tpu_custom_call.1} parent=1 // pred_check
      _
    $region51: #{tpu_custom_call.1} parent=1 // pred_check_branch
      %9854 = sbr.rel (0) target = $region53
    $region52: #{tpu_custom_call.1} parent=1 // pred_region
      %9855 = dma.done [#allocation6], 2048
    $region53: #{tpu_custom_call.1} parent=1 // pred_fallthru
      _
    %9856 = vsyncpa [#allocation5], 1
    %9857 = vsyncpa [#allocation8], 1
    %9858 = vsyncpa [#allocation11], 1
    %9859 = vsyncpa [#allocation6], 1

</llo_original>
